<compile_context>
chip_gen: v7x
topology: tpu7x:2x2x1
jax: 0.10.0
libtpu: 0.0.40
codegen_flags: <defaults>
</compile_context>

<pallas_src>
import jax
import jax.numpy as jnp
from jax.experimental import pallas as pl
from jax.experimental.pallas import tpu as pltpu


MM_DTYPE = jnp.bfloat16   # MXU operand dtype (accumulation stays float32)


def _round_up(x, m):
    return (x + m - 1) // m * m


# ------------------------------ fused BasicBlock kernel ------------------------------
def _make_fused_block_kernel(H, W, Cin, Cout, Cp, has_shortcut_conv):
    HW = H * W
    Hp, Wp = H + 2, W + 2

    def kernel(x_ref, w1s_ref, w2_ref, aff_ref, o_ref, xpad_ref, hpad_ref, acc_ref):
        # x_ref:   (1, H, W, Cin) f32   one batch element
        # w1s_ref: (9*Cin, Ncomb) bf16  conv1 [+ shortcut] im2col weights, rows=(kh,kw,ci)
        # w2_ref:  (9, Cp, Cp)    bf16  conv2 weights, one (Cp, Cp) matrix per 3x3 tap
        # aff_ref: (8, Cp)        f32   rows: [s1, b1, s2, b2, s_sc, b_sc, 0, 0]
        # o_ref:   (1, H, W, Cout)      un-padded output block (masked store epilogue)
        # scratch: xpad (Hp, Wp, Cin) f32, hpad (Hp, Wp, Cp) f32, acc (HW, Cp) f32

        # ---- zero ONLY the 1-pixel halo ring (interior fully rewritten below) ----
        xpad_ref[0:1, :, :] = jnp.zeros((1, Wp, Cin), jnp.float32)
        xpad_ref[H + 1:H + 2, :, :] = jnp.zeros((1, Wp, Cin), jnp.float32)
        xpad_ref[1:H + 1, 0:1, :] = jnp.zeros((H, 1, Cin), jnp.float32)
        xpad_ref[1:H + 1, W + 1:W + 2, :] = jnp.zeros((H, 1, Cin), jnp.float32)
        hpad_ref[0:1, :, :] = jnp.zeros((1, Wp, Cp), jnp.float32)
        hpad_ref[H + 1:H + 2, :, :] = jnp.zeros((1, Wp, Cp), jnp.float32)
        hpad_ref[1:H + 1, 0:1, :] = jnp.zeros((H, 1, Cp), jnp.float32)
        hpad_ref[1:H + 1, W + 1:W + 2, :] = jnp.zeros((H, 1, Cp), jnp.float32)

        # ---- padded input interior (halo built in VMEM, no wrapper-side jnp.pad) ----
        xpad_ref[1:H + 1, 1:W + 1, :] = x_ref[0]

        # ---- conv1 (+ conv-shortcut) as ONE im2col matmul + fused BN + ReLU ----
        slabs = []
        for kh in range(3):
            for kw in range(3):
                slabs.append(xpad_ref[kh:kh + H, kw:kw + W, :].reshape(HW, Cin))
        cols = jnp.concatenate(slabs, axis=-1).astype(MM_DTYPE)       # (HW, 9*Cin)
        z = jnp.dot(cols, w1s_ref[...], preferred_element_type=jnp.float32)

        h1 = jnp.maximum(z[:, :Cp] * aff_ref[0:1, :] + aff_ref[1:2, :], 0.0)
        if has_shortcut_conv:
            sc = jnp.maximum(z[:, Cp:] * aff_ref[4:5, :] + aff_ref[5:6, :], 0.0)

        # ---- conv2: 9 accumulating K=Cp matmuls straight from the padded h1 ----
        hpad_ref[1:H + 1, 1:W + 1, :] = h1.reshape(H, W, Cp)
        for kh in range(3):
            for kw in range(3):
                k = kh * 3 + kw
                slab = hpad_ref[kh:kh + H, kw:kw + W, :].reshape(HW, Cp).astype(MM_DTYPE)
                part = jnp.dot(slab, w2_ref[k], preferred_element_type=jnp.float32)
                if k == 0:
                    acc_ref[...] = part
                else:
                    acc_ref[...] = acc_ref[...] + part

        h2 = jnp.maximum(acc_ref[...] * aff_ref[2:3, :] + aff_ref[3:4, :], 0.0)

        # ---- residual add + channel un-padding fused into the epilogue store ----
        if has_shortcut_conv:
            res = (h2 + sc).reshape(H, W, Cp)[:, :, :Cout]
        else:
            # identity shortcut => Cin == Cout by construction; add original f32 x.
            res = h2.reshape(H, W, Cp)[:, :, :Cout] + x_ref[0]
        o_ref[...] = res.reshape(1, H, W, Cout).astype(o_ref.dtype)

    return kernel


def _fused_basic_block_call(x_nhwc, w1s, w2p, affine, Cout, has_shortcut_conv):
    N, H, W, Cin = x_nhwc.shape
    Cp = w2p.shape[-1]
    Hp, Wp = H + 2, W + 2
    HW = H * W
    K1, Ncomb = w1s.shape
    if not has_shortcut_conv:
        assert Cin == Cout, "identity shortcut requires in_channels == channels"

    kernel = _make_fused_block_kernel(H, W, Cin, Cout, Cp, has_shortcut_conv)

    # Advisory cost estimate so XLA can overlap the surrounding transposes.
    flops = 2 * N * HW * (K1 * Ncomb + 9 * Cp * Cp)
    bytes_accessed = (x_nhwc.size * 4 + w1s.size * 2 + w2p.size * 2 + affine.size * 4
                      + N * H * W * Cout * 4)

    # Generation-aware VMEM limit: actual scratch + (double-buffered) blocks + weights.
    scratch_bytes = Hp * Wp * Cin * 4 + Hp * Wp * Cp * 4 + HW * Cp * 4
    weight_bytes = w1s.size * 2 + w2p.size * 2 + affine.size * 4
    block_bytes = 2 * (H * W * Cin * 4 + H * W * Cout * 4)   # double-buffered in/out
    vmem_needed = scratch_bytes + 2 * weight_bytes + block_bytes
    try:
        vmem_cap = int(pltpu.get_tpu_info().vmem_capacity_bytes)
    except Exception:
        vmem_cap = 64 * 1024 * 1024
    vmem_limit = min(max(32 * 1024 * 1024, int(vmem_needed * 1.5) + (1 << 20)),
                     vmem_cap * 3 // 4)

    return pl.pallas_call(
        kernel,
        out_shape=jax.ShapeDtypeStruct((N, H, W, Cout), x_nhwc.dtype),
        grid=(N,),
        in_specs=[
            pl.BlockSpec((1, H, W, Cin), lambda n: (n, 0, 0, 0)),
            pl.BlockSpec((K1, Ncomb), lambda n: (0, 0)),
            pl.BlockSpec((9, Cp, Cp), lambda n: (0, 0, 0)),
            pl.BlockSpec((8, Cp), lambda n: (0, 0)),
        ],
        out_specs=pl.BlockSpec((1, H, W, Cout), lambda n: (n, 0, 0, 0)),
        scratch_shapes=[
            pltpu.VMEM((Hp, Wp, Cin), jnp.float32),   # zero-padded input (halo in VMEM)
            pltpu.VMEM((Hp, Wp, Cp), jnp.float32),    # zero-padded conv1 output
            pltpu.VMEM((HW, Cp), jnp.float32),        # conv2 f32 accumulator
        ],
        compiler_params=pltpu.CompilerParams(
            dimension_semantics=("parallel",),        # shard batch across v7x's 2 TCs
            vmem_limit_bytes=vmem_limit,
        ),
        cost_estimate=pl.CostEstimate(flops=flops, transcendentals=0,
                                      bytes_accessed=bytes_accessed),
    )(x_nhwc, w1s, w2p, affine)


# ------------------------------ parameter preparation ------------------------------
def _prep_block_params(params, cp):
    """Fold BN into scale/shift, pad channels to cp, build fused-kernel weight tensors."""
    w1, s1, b1 = params["conv1"]
    w2, s2, b2 = params["conv2"]
    KH, KW, Cin, Cout = w1.shape

    def pad_cout(v):
        return jnp.pad(v.astype(jnp.float32), (0, cp - Cout))

    def im2col_w(w):   # (3,3,Cin,Cout) -> (9*Cin, cp), rows ordered (kh, kw, cin)
        return jnp.pad(w.reshape(KH * KW * Cin, Cout), ((0, 0), (0, cp - Cout)))

    has_sc = params["shortcut"] is not None
    w1m = im2col_w(w1)
    if has_sc:
        ws, ss, bs = params["shortcut"]
        w1s = jnp.concatenate([w1m, im2col_w(ws)], axis=1)     # (9*Cin, 2*cp)
        ssp, bsp = pad_cout(ss), pad_cout(bs)
    else:
        w1s = w1m                                              # (9*Cin, cp)
        ssp = jnp.zeros((cp,), jnp.float32)
        bsp = jnp.zeros((cp,), jnp.float32)
    w1s = w1s.astype(MM_DTYPE)

    # conv2: per-tap (cp, cp) matrices; padded input/output channels carry zero weights.
    w2p = jnp.pad(w2, ((0, 0), (0, 0), (0, cp - Cout), (0, cp - Cout)))
    w2p = w2p.reshape(KH * KW, cp, cp).astype(MM_DTYPE)

    zero = jnp.zeros((cp,), jnp.float32)
    affine = jnp.stack([pad_cout(s1), pad_cout(b1), pad_cout(s2), pad_cout(b2),
                        ssp, bsp, zero, zero], axis=0)
    return w1s, w2p, affine, has_sc


def make_conv_bn_params(key, cin, cout, kernel_size=3, eps=1e-5):
    """Deterministic synthetic parameters for one ConvNormAct (conv weight + folded BN)."""
    kw_, kg, kb, km, kv = jax.random.split(key, 5)
    # conv weight stored as (KH, KW, Cin, Cout)  (PyTorch stores (Cout, Cin, KH, KW))
    w = jax.random.normal(kw_, (kernel_size, kernel_size, cin, cout), jnp.float32) * 0.1
    gamma = 1.0 + 0.1 * jax.random.normal(kg, (cout,), jnp.float32)
    beta = 0.1 * jax.random.normal(kb, (cout,), jnp.float32)
    running_mean = 0.1 * jax.random.normal(km, (cout,), jnp.float32)
    running_var = 1.0 + 0.1 * jax.random.uniform(kv, (cout,), jnp.float32)
    scale = gamma / jnp.sqrt(running_var + eps)
    shift = beta - running_mean * scale
    return w, scale, shift


def make_basic_block_params(key, in_channels, channels, stride=1):
    k1, k2, k3 = jax.random.split(key, 3)
    params = {
        "conv1": make_conv_bn_params(k1, in_channels, channels),
        "conv2": make_conv_bn_params(k2, channels, channels),
    }
    if in_channels != channels or stride != 1:
        params["shortcut"] = make_conv_bn_params(k3, in_channels, channels)
    else:
        params["shortcut"] = None
    return params


# ------------------------------------ forward ------------------------------------
def basic_block_forward(x_nchw, params):
    """BasicBlock.forward: conv2(conv1(x)) + shortcut(x); NCHW in/out (PyTorch layout)."""
    x = jnp.transpose(x_nchw, (0, 2, 3, 1))                 # NCHW -> NHWC
    Cout = params["conv1"][0].shape[-1]
    Cp = _round_up(Cout, 128)                               # MXU-friendly channel padding
    w1s, w2p, affine, has_sc = _prep_block_params(params, Cp)
    out = _fused_basic_block_call(x, w1s, w2p, affine, Cout, has_sc)
    return jnp.transpose(out, (0, 3, 1, 2))                 # NHWC -> NCHW


# ----------------------------- reference (pure JAX, f32) -----------------------------
def _ref_conv_bn_relu(x_nhwc, w, scale, shift):
    y = jax.lax.conv_general_dilated(
        x_nhwc, w, window_strides=(1, 1), padding="SAME",
        dimension_numbers=("NHWC", "HWIO", "NHWC"))
    y = y * scale[None, None, None, :] + shift[None, None, None, :]
    return jnp.maximum(y, 0.0)


def _ref_basic_block(x_nchw, params):
    x = jnp.transpose(x_nchw, (0, 2, 3, 1))
    sc = x if params["shortcut"] is None else _ref_conv_bn_relu(x, *params["shortcut"])
    h = _ref_conv_bn_relu(x, *params["conv1"])
    h = _ref_conv_bn_relu(h, *params["conv2"])
    return jnp.transpose(h + sc, (0, 3, 1, 2))


if __name__ == "__main__":
    key = jax.random.PRNGKey(0)
    kx, kp, kx2, kp2 = jax.random.split(key, 4)

    # Config 1: BasicBlock(4, 8, stride=1) -> conv-shortcut path is exercised.
    N, Cin, H, W = 2, 4, 16, 16
    Cout = 8
    x = jax.random.normal(kx, (N, Cin, H, W), jnp.float32)
    params = make_basic_block_params(kp, Cin, Cout, stride=1)
    out = jax.block_until_ready(jax.jit(basic_block_forward)(x, params))
    ref = _ref_basic_block(x, params)
    assert out.shape == (N, Cout, H, W), out.shape
    # bf16 MXU operands (f32 accumulation) -> bf16-appropriate tolerances vs f32 ref.
    assert jnp.allclose(out, ref, rtol=3e-2, atol=3e-2), (
        "mismatch (conv-shortcut), max abs err = "
        f"{float(jnp.max(jnp.abs(out - ref)))}")

    # Config 2: BasicBlock(8, 8, stride=1) -> identity shortcut, residual add fused in-kernel.
    x2 = jax.random.normal(kx2, (N, Cout, H, W), jnp.float32)
    params2 = make_basic_block_params(kp2, Cout, Cout, stride=1)
    out2 = jax.block_until_ready(jax.jit(basic_block_forward)(x2, params2))
    ref2 = _ref_basic_block(x2, params2)
    assert out2.shape == (N, Cout, H, W), out2.shape
    assert jnp.allclose(out2, ref2, rtol=3e-2, atol=3e-2), (
        "mismatch (identity shortcut), max abs err = "
        f"{float(jnp.max(jnp.abs(out2 - ref2)))}")

    print("KERNEL_OK")
</pallas_src>

<mosaic_0001>
module attributes {stable_mosaic.version = 11 : i64} {
  func.func @kernel(%arg0: i32, %arg1: memref<1x16x16x4xf32, #tpu.memory_space<vmem>>, %arg2: memref<36x256xbf16, #tpu.memory_space<vmem>>, %arg3: memref<9x128x128xbf16, #tpu.memory_space<vmem>>, %arg4: memref<8x128xf32, #tpu.memory_space<vmem>>, %arg5: memref<1x16x16x8xf32, #tpu.memory_space<vmem>>, %arg6: memref<18x18x4xf32, #tpu.memory_space<vmem>>, %arg7: memref<18x18x128xf32, #tpu.memory_space<vmem>>, %arg8: memref<256x128xf32, #tpu.memory_space<vmem>>) attributes {dimension_semantics = [#tpu.dimension_semantics<parallel>], iteration_bounds = array<i64: 2>, scalar_prefetch = 0 : i64, scratch_operands = 3 : i64, tpu.core_type = #tpu.core_type<tc>, window_params = [{transform_indices = @transform_0, window_bounds = array<i64: 1, 16, 16, 4>}, {pipeline_mode = #tpu.pipeline_mode<synchronous>, transform_indices = @transform_1, window_bounds = array<i64: 36, 256>}, {pipeline_mode = #tpu.pipeline_mode<synchronous>, transform_indices = @transform_2, window_bounds = array<i64: 9, 128, 128>}, {pipeline_mode = #tpu.pipeline_mode<synchronous>, transform_indices = @transform_3, window_bounds = array<i64: 8, 128>}, {transform_indices = @transform_4, window_bounds = array<i64: 1, 16, 16, 8>}]} {
    %cst = arith.constant 0.000000e+00 : f32
    %0 = vector.broadcast %cst : f32 to vector<1x18x4xf32>
    %c0 = arith.constant 0 : index
    %c0_0 = arith.constant 0 : index
    %c0_1 = arith.constant 0 : index
    %1 = vector.load %arg6[%c0, %c0_0, %c0_1] : memref<18x18x4xf32, #tpu.memory_space<vmem>>, vector<1x18x4xf32>
    tpu.vector_store %arg6[%c0, %c0_0, %c0_1], %0 {strides = array<i32>} : memref<18x18x4xf32, #tpu.memory_space<vmem>>, vector<1x18x4xf32>,
    %cst_2 = arith.constant 0.000000e+00 : f32
    %2 = vector.broadcast %cst_2 : f32 to vector<1x18x4xf32>
    %c17 = arith.constant 17 : index
    %c0_3 = arith.constant 0 : index
    %c0_4 = arith.constant 0 : index
    %3 = vector.load %arg6[%c17, %c0_3, %c0_4] : memref<18x18x4xf32, #tpu.memory_space<vmem>>, vector<1x18x4xf32>
    tpu.vector_store %arg6[%c17, %c0_3, %c0_4], %2 {strides = array<i32>} : memref<18x18x4xf32, #tpu.memory_space<vmem>>, vector<1x18x4xf32>,
    %cst_5 = arith.constant 0.000000e+00 : f32
    %4 = vector.broadcast %cst_5 : f32 to vector<16x1x4xf32>
    %c1 = arith.constant 1 : index
    %c0_6 = arith.constant 0 : index
    %c0_7 = arith.constant 0 : index
    %5 = vector.load %arg6[%c1, %c0_6, %c0_7] : memref<18x18x4xf32, #tpu.memory_space<vmem>>, vector<16x1x4xf32>
    tpu.vector_store %arg6[%c1, %c0_6, %c0_7], %4 {strides = array<i32>} : memref<18x18x4xf32, #tpu.memory_space<vmem>>, vector<16x1x4xf32>,
    %cst_8 = arith.constant 0.000000e+00 : f32
    %6 = vector.broadcast %cst_8 : f32 to vector<16x1x4xf32>
    %c1_9 = arith.constant 1 : index
    %c17_10 = arith.constant 17 : index
    %c0_11 = arith.constant 0 : index
    %7 = vector.load %arg6[%c1_9, %c17_10, %c0_11] : memref<18x18x4xf32, #tpu.memory_space<vmem>>, vector<16x1x4xf32>
    tpu.vector_store %arg6[%c1_9, %c17_10, %c0_11], %6 {strides = array<i32>} : memref<18x18x4xf32, #tpu.memory_space<vmem>>, vector<16x1x4xf32>,
    %cst_12 = arith.constant 0.000000e+00 : f32
    %8 = vector.broadcast %cst_12 : f32 to vector<1x18x128xf32>
    %c0_13 = arith.constant 0 : index
    %c0_14 = arith.constant 0 : index
    %c0_15 = arith.constant 0 : index
    %9 = vector.load %arg7[%c0_13, %c0_14, %c0_15] : memref<18x18x128xf32, #tpu.memory_space<vmem>>, vector<1x18x128xf32>
    tpu.vector_store %arg7[%c0_13, %c0_14, %c0_15], %8 {strides = array<i32>} : memref<18x18x128xf32, #tpu.memory_space<vmem>>, vector<1x18x128xf32>,
    %cst_16 = arith.constant 0.000000e+00 : f32
    %10 = vector.broadcast %cst_16 : f32 to vector<1x18x128xf32>
    %c17_17 = arith.constant 17 : index
    %c0_18 = arith.constant 0 : index
    %c0_19 = arith.constant 0 : index
    %11 = vector.load %arg7[%c17_17, %c0_18, %c0_19] : memref<18x18x128xf32, #tpu.memory_space<vmem>>, vector<1x18x128xf32>
    tpu.vector_store %arg7[%c17_17, %c0_18, %c0_19], %10 {strides = array<i32>} : memref<18x18x128xf32, #tpu.memory_space<vmem>>, vector<1x18x128xf32>,
    %cst_20 = arith.constant 0.000000e+00 : f32
    %12 = vector.broadcast %cst_20 : f32 to vector<16x1x128xf32>
    %c1_21 = arith.constant 1 : index
    %c0_22 = arith.constant 0 : index
    %c0_23 = arith.constant 0 : index
    %13 = vector.load %arg7[%c1_21, %c0_22, %c0_23] : memref<18x18x128xf32, #tpu.memory_space<vmem>>, vector<16x1x128xf32>
    tpu.vector_store %arg7[%c1_21, %c0_22, %c0_23], %12 {strides = array<i32>} : memref<18x18x128xf32, #tpu.memory_space<vmem>>, vector<16x1x128xf32>,
    %cst_24 = arith.constant 0.000000e+00 : f32
    %14 = vector.broadcast %cst_24 : f32 to vector<16x1x128xf32>
    %c1_25 = arith.constant 1 : index
    %c17_26 = arith.constant 17 : index
    %c0_27 = arith.constant 0 : index
    %15 = vector.load %arg7[%c1_25, %c17_26, %c0_27] : memref<18x18x128xf32, #tpu.memory_space<vmem>>, vector<16x1x128xf32>
    tpu.vector_store %arg7[%c1_25, %c17_26, %c0_27], %14 {strides = array<i32>} : memref<18x18x128xf32, #tpu.memory_space<vmem>>, vector<16x1x128xf32>,
    %c0_28 = arith.constant 0 : index
    %c0_29 = arith.constant 0 : index
    %c0_30 = arith.constant 0 : index
    %c0_31 = arith.constant 0 : index
    %16 = vector.load %arg1[%c0_28, %c0_29, %c0_30, %c0_31] : memref<1x16x16x4xf32, #tpu.memory_space<vmem>>, vector<1x16x16x4xf32>
    %17 = vector.shape_cast %16 : vector<1x16x16x4xf32> to vector<16x16x4xf32>
    %c1_32 = arith.constant 1 : index
    %c1_33 = arith.constant 1 : index
    %c0_34 = arith.constant 0 : index
    %18 = vector.load %arg6[%c1_32, %c1_33, %c0_34] : memref<18x18x4xf32, #tpu.memory_space<vmem>>, vector<16x16x4xf32>
    tpu.vector_store %arg6[%c1_32, %c1_33, %c0_34], %17 {strides = array<i32>} : memref<18x18x4xf32, #tpu.memory_space<vmem>>, vector<16x16x4xf32>,
    %c0_35 = arith.constant 0 : index
    %c0_36 = arith.constant 0 : index
    %c0_37 = arith.constant 0 : index
    %19 = vector.load %arg6[%c0_35, %c0_36, %c0_37] : memref<18x18x4xf32, #tpu.memory_space<vmem>>, vector<16x16x4xf32>
    %20 = vector.shape_cast %19 : vector<16x16x4xf32> to vector<256x4xf32>
    %c0_38 = arith.constant 0 : index
    %c1_39 = arith.constant 1 : index
    %c0_40 = arith.constant 0 : index
    %21 = vector.load %arg6[%c0_38, %c1_39, %c0_40] : memref<18x18x4xf32, #tpu.memory_space<vmem>>, vector<16x16x4xf32>
    %22 = vector.shape_cast %21 : vector<16x16x4xf32> to vector<256x4xf32>
    %c0_41 = arith.constant 0 : index
    %c2 = arith.constant 2 : index
    %c0_42 = arith.constant 0 : index
    %23 = vector.load %arg6[%c0_41, %c2, %c0_42] : memref<18x18x4xf32, #tpu.memory_space<vmem>>, vector<16x16x4xf32>
    %24 = vector.shape_cast %23 : vector<16x16x4xf32> to vector<256x4xf32>
    %c1_43 = arith.constant 1 : index
    %c0_44 = arith.constant 0 : index
    %c0_45 = arith.constant 0 : index
    %25 = vector.load %arg6[%c1_43, %c0_44, %c0_45] : memref<18x18x4xf32, #tpu.memory_space<vmem>>, vector<16x16x4xf32>
    %26 = vector.shape_cast %25 : vector<16x16x4xf32> to vector<256x4xf32>
    %c1_46 = arith.constant 1 : index
    %c1_47 = arith.constant 1 : index
    %c0_48 = arith.constant 0 : index
    %27 = vector.load %arg6[%c1_46, %c1_47, %c0_48] : memref<18x18x4xf32, #tpu.memory_space<vmem>>, vector<16x16x4xf32>
    %28 = vector.shape_cast %27 : vector<16x16x4xf32> to vector<256x4xf32>
    %c1_49 = arith.constant 1 : index
    %c2_50 = arith.constant 2 : index
    %c0_51 = arith.constant 0 : index
    %29 = vector.load %arg6[%c1_49, %c2_50, %c0_51] : memref<18x18x4xf32, #tpu.memory_space<vmem>>, vector<16x16x4xf32>
    %30 = vector.shape_cast %29 : vector<16x16x4xf32> to vector<256x4xf32>
    %c2_52 = arith.constant 2 : index
    %c0_53 = arith.constant 0 : index
    %c0_54 = arith.constant 0 : index
    %31 = vector.load %arg6[%c2_52, %c0_53, %c0_54] : memref<18x18x4xf32, #tpu.memory_space<vmem>>, vector<16x16x4xf32>
    %32 = vector.shape_cast %31 : vector<16x16x4xf32> to vector<256x4xf32>
    %c2_55 = arith.constant 2 : index
    %c1_56 = arith.constant 1 : index
    %c0_57 = arith.constant 0 : index
    %33 = vector.load %arg6[%c2_55, %c1_56, %c0_57] : memref<18x18x4xf32, #tpu.memory_space<vmem>>, vector<16x16x4xf32>
    %34 = vector.shape_cast %33 : vector<16x16x4xf32> to vector<256x4xf32>
    %c2_58 = arith.constant 2 : index
    %c2_59 = arith.constant 2 : index
    %c0_60 = arith.constant 0 : index
    %35 = vector.load %arg6[%c2_58, %c2_59, %c0_60] : memref<18x18x4xf32, #tpu.memory_space<vmem>>, vector<16x16x4xf32>
    %36 = vector.shape_cast %35 : vector<16x16x4xf32> to vector<256x4xf32>
    %37 = tpu.concatenate %20, %22, %24, %26, %28, %30, %32, %34, %36 in 1 : vector<256x4xf32>, vector<256x4xf32>, vector<256x4xf32>, vector<256x4xf32>, vector<256x4xf32>, vector<256x4xf32>, vector<256x4xf32>, vector<256x4xf32>, vector<256x4xf32> -> vector<256x36xf32>
    %38 = arith.truncf %37 : vector<256x36xf32> to vector<256x36xbf16>
    %c0_61 = arith.constant 0 : index
    %c0_62 = arith.constant 0 : index
    %39 = vector.load %arg2[%c0_61, %c0_62] : memref<36x256xbf16, #tpu.memory_space<vmem>>, vector<36x256xbf16>
    %cst_63 = arith.constant dense<0.000000e+00> : vector<256x256xf32>
    %40 = tpu.matmul %38, %39, %cst_63 {dimension_numbers = #tpu.dot_dimension_numbers<[1], [0], [0], [1], [0, 0, 1, 1], [], []>} : vector<256x36xbf16>, vector<36x256xbf16>, vector<256x256xf32> -> vector<256x256xf32>
    %41 = vector.extract_strided_slice %40 {offsets = [0, 0], sizes = [256, 128], strides = [1, 1]} : vector<256x256xf32> to vector<256x128xf32>
    %c0_64 = arith.constant 0 : index
    %c0_65 = arith.constant 0 : index
    %42 = vector.load %arg4[%c0_64, %c0_65] : memref<8x128xf32, #tpu.memory_space<vmem>>, vector<1x128xf32>
    %43 = vector.broadcast %42 : vector<1x128xf32> to vector<256x128xf32>
    %44 = arith.mulf %41, %43 : vector<256x128xf32>
    %c1_66 = arith.constant 1 : index
    %c0_67 = arith.constant 0 : index
    %45 = vector.load %arg4[%c1_66, %c0_67] : memref<8x128xf32, #tpu.memory_space<vmem>>, vector<1x128xf32>
    %46 = vector.broadcast %45 : vector<1x128xf32> to vector<256x128xf32>
    %47 = arith.addf %44, %46 : vector<256x128xf32>
    %cst_68 = arith.constant 0.000000e+00 : f32
    %48 = vector.broadcast %cst_68 : f32 to vector<256x128xf32>
    %49 = arith.maximumf %47, %48 : vector<256x128xf32>
    %50 = vector.extract_strided_slice %40 {offsets = [0, 128], sizes = [256, 128], strides = [1, 1]} : vector<256x256xf32> to vector<256x128xf32>
    %c4 = arith.constant 4 : index
    %c0_69 = arith.constant 0 : index
    %51 = vector.load %arg4[%c4, %c0_69] : memref<8x128xf32, #tpu.memory_space<vmem>>, vector<1x128xf32>
    %52 = vector.broadcast %51 : vector<1x128xf32> to vector<256x128xf32>
    %53 = arith.mulf %50, %52 : vector<256x128xf32>
    %c5 = arith.constant 5 : index
    %c0_70 = arith.constant 0 : index
    %54 = vector.load %arg4[%c5, %c0_70] : memref<8x128xf32, #tpu.memory_space<vmem>>, vector<1x128xf32>
    %55 = vector.broadcast %54 : vector<1x128xf32> to vector<256x128xf32>
    %56 = arith.addf %53, %55 : vector<256x128xf32>
    %cst_71 = arith.constant 0.000000e+00 : f32
    %57 = vector.broadcast %cst_71 : f32 to vector<256x128xf32>
    %58 = arith.maximumf %56, %57 : vector<256x128xf32>
    %59 = vector.shape_cast %49 : vector<256x128xf32> to vector<16x16x128xf32>
    %c1_72 = arith.constant 1 : index
    %c1_73 = arith.constant 1 : index
    %c0_74 = arith.constant 0 : index
    %60 = vector.load %arg7[%c1_72, %c1_73, %c0_74] : memref<18x18x128xf32, #tpu.memory_space<vmem>>, vector<16x16x128xf32>
    tpu.vector_store %arg7[%c1_72, %c1_73, %c0_74], %59 {strides = array<i32>} : memref<18x18x128xf32, #tpu.memory_space<vmem>>, vector<16x16x128xf32>,
    %c0_75 = arith.constant 0 : index
    %c0_76 = arith.constant 0 : index
    %c0_77 = arith.constant 0 : index
    %61 = vector.load %arg7[%c0_75, %c0_76, %c0_77] : memref<18x18x128xf32, #tpu.memory_space<vmem>>, vector<16x16x128xf32>
    %62 = vector.shape_cast %61 : vector<16x16x128xf32> to vector<256x128xf32>
    %63 = arith.truncf %62 : vector<256x128xf32> to vector<256x128xbf16>
    %c0_78 = arith.constant 0 : index
    %c0_79 = arith.constant 0 : index
    %c0_80 = arith.constant 0 : index
    %64 = vector.load %arg3[%c0_78, %c0_79, %c0_80] : memref<9x128x128xbf16, #tpu.memory_space<vmem>>, vector<1x128x128xbf16>
    %65 = vector.shape_cast %64 : vector<1x128x128xbf16> to vector<128x128xbf16>
    %cst_81 = arith.constant dense<0.000000e+00> : vector<256x128xf32>
    %66 = tpu.matmul %63, %65, %cst_81 {dimension_numbers = #tpu.dot_dimension_numbers<[1], [0], [0], [1], [0, 0, 1, 1], [], []>} : vector<256x128xbf16>, vector<128x128xbf16>, vector<256x128xf32> -> vector<256x128xf32>
    %c0_82 = arith.constant 0 : index
    %c0_83 = arith.constant 0 : index
    %67 = vector.load %arg8[%c0_82, %c0_83] : memref<256x128xf32, #tpu.memory_space<vmem>>, vector<256x128xf32>
    tpu.vector_store %arg8[%c0_82, %c0_83], %66 {strides = array<i32>} : memref<256x128xf32, #tpu.memory_space<vmem>>, vector<256x128xf32>,
    %c0_84 = arith.constant 0 : index
    %c1_85 = arith.constant 1 : index
    %c0_86 = arith.constant 0 : index
    %68 = vector.load %arg7[%c0_84, %c1_85, %c0_86] : memref<18x18x128xf32, #tpu.memory_space<vmem>>, vector<16x16x128xf32>
    %69 = vector.shape_cast %68 : vector<16x16x128xf32> to vector<256x128xf32>
    %70 = arith.truncf %69 : vector<256x128xf32> to vector<256x128xbf16>
    %c1_87 = arith.constant 1 : index
    %c0_88 = arith.constant 0 : index
    %c0_89 = arith.constant 0 : index
    %71 = vector.load %arg3[%c1_87, %c0_88, %c0_89] : memref<9x128x128xbf16, #tpu.memory_space<vmem>>, vector<1x128x128xbf16>
    %72 = vector.shape_cast %71 : vector<1x128x128xbf16> to vector<128x128xbf16>
    %cst_90 = arith.constant dense<0.000000e+00> : vector<256x128xf32>
    %73 = tpu.matmul %70, %72, %cst_90 {dimension_numbers = #tpu.dot_dimension_numbers<[1], [0], [0], [1], [0, 0, 1, 1], [], []>} : vector<256x128xbf16>, vector<128x128xbf16>, vector<256x128xf32> -> vector<256x128xf32>
    %c0_91 = arith.constant 0 : index
    %c0_92 = arith.constant 0 : index
    %74 = vector.load %arg8[%c0_91, %c0_92] : memref<256x128xf32, #tpu.memory_space<vmem>>, vector<256x128xf32>
    %75 = arith.addf %74, %73 : vector<256x128xf32>
    %c0_93 = arith.constant 0 : index
    %c0_94 = arith.constant 0 : index
    %76 = vector.load %arg8[%c0_93, %c0_94] : memref<256x128xf32, #tpu.memory_space<vmem>>, vector<256x128xf32>
    tpu.vector_store %arg8[%c0_93, %c0_94], %75 {strides = array<i32>} : memref<256x128xf32, #tpu.memory_space<vmem>>, vector<256x128xf32>,
    %c0_95 = arith.constant 0 : index
    %c2_96 = arith.constant 2 : index
    %c0_97 = arith.constant 0 : index
    %77 = vector.load %arg7[%c0_95, %c2_96, %c0_97] : memref<18x18x128xf32, #tpu.memory_space<vmem>>, vector<16x16x128xf32>
    %78 = vector.shape_cast %77 : vector<16x16x128xf32> to vector<256x128xf32>
    %79 = arith.truncf %78 : vector<256x128xf32> to vector<256x128xbf16>
    %c2_98 = arith.constant 2 : index
    %c0_99 = arith.constant 0 : index
    %c0_100 = arith.constant 0 : index
    %80 = vector.load %arg3[%c2_98, %c0_99, %c0_100] : memref<9x128x128xbf16, #tpu.memory_space<vmem>>, vector<1x128x128xbf16>
    %81 = vector.shape_cast %80 : vector<1x128x128xbf16> to vector<128x128xbf16>
    %cst_101 = arith.constant dense<0.000000e+00> : vector<256x128xf32>
    %82 = tpu.matmul %79, %81, %cst_101 {dimension_numbers = #tpu.dot_dimension_numbers<[1], [0], [0], [1], [0, 0, 1, 1], [], []>} : vector<256x128xbf16>, vector<128x128xbf16>, vector<256x128xf32> -> vector<256x128xf32>
    %c0_102 = arith.constant 0 : index
    %c0_103 = arith.constant 0 : index
    %83 = vector.load %arg8[%c0_102, %c0_103] : memref<256x128xf32, #tpu.memory_space<vmem>>, vector<256x128xf32>
    %84 = arith.addf %83, %82 : vector<256x128xf32>
    %c0_104 = arith.constant 0 : index
    %c0_105 = arith.constant 0 : index
    %85 = vector.load %arg8[%c0_104, %c0_105] : memref<256x128xf32, #tpu.memory_space<vmem>>, vector<256x128xf32>
    tpu.vector_store %arg8[%c0_104, %c0_105], %84 {strides = array<i32>} : memref<256x128xf32, #tpu.memory_space<vmem>>, vector<256x128xf32>,
    %c1_106 = arith.constant 1 : index
    %c0_107 = arith.constant 0 : index
    %c0_108 = arith.constant 0 : index
    %86 = vector.load %arg7[%c1_106, %c0_107, %c0_108] : memref<18x18x128xf32, #tpu.memory_space<vmem>>, vector<16x16x128xf32>
    %87 = vector.shape_cast %86 : vector<16x16x128xf32> to vector<256x128xf32>
    %88 = arith.truncf %87 : vector<256x128xf32> to vector<256x128xbf16>
    %c3 = arith.constant 3 : index
    %c0_109 = arith.constant 0 : index
    %c0_110 = arith.constant 0 : index
    %89 = vector.load %arg3[%c3, %c0_109, %c0_110] : memref<9x128x128xbf16, #tpu.memory_space<vmem>>, vector<1x128x128xbf16>
    %90 = vector.shape_cast %89 : vector<1x128x128xbf16> to vector<128x128xbf16>
    %cst_111 = arith.constant dense<0.000000e+00> : vector<256x128xf32>
    %91 = tpu.matmul %88, %90, %cst_111 {dimension_numbers = #tpu.dot_dimension_numbers<[1], [0], [0], [1], [0, 0, 1, 1], [], []>} : vector<256x128xbf16>, vector<128x128xbf16>, vector<256x128xf32> -> vector<256x128xf32>
    %c0_112 = arith.constant 0 : index
    %c0_113 = arith.constant 0 : index
    %92 = vector.load %arg8[%c0_112, %c0_113] : memref<256x128xf32, #tpu.memory_space<vmem>>, vector<256x128xf32>
    %93 = arith.addf %92, %91 : vector<256x128xf32>
    %c0_114 = arith.constant 0 : index
    %c0_115 = arith.constant 0 : index
    %94 = vector.load %arg8[%c0_114, %c0_115] : memref<256x128xf32, #tpu.memory_space<vmem>>, vector<256x128xf32>
    tpu.vector_store %arg8[%c0_114, %c0_115], %93 {strides = array<i32>} : memref<256x128xf32, #tpu.memory_space<vmem>>, vector<256x128xf32>,
    %c1_116 = arith.constant 1 : index
    %c1_117 = arith.constant 1 : index
    %c0_118 = arith.constant 0 : index
    %95 = vector.load %arg7[%c1_116, %c1_117, %c0_118] : memref<18x18x128xf32, #tpu.memory_space<vmem>>, vector<16x16x128xf32>
    %96 = vector.shape_cast %95 : vector<16x16x128xf32> to vector<256x128xf32>
    %97 = arith.truncf %96 : vector<256x128xf32> to vector<256x128xbf16>
    %c4_119 = arith.constant 4 : index
    %c0_120 = arith.constant 0 : index
    %c0_121 = arith.constant 0 : index
    %98 = vector.load %arg3[%c4_119, %c0_120, %c0_121] : memref<9x128x128xbf16, #tpu.memory_space<vmem>>, vector<1x128x128xbf16>
    %99 = vector.shape_cast %98 : vector<1x128x128xbf16> to vector<128x128xbf16>
    %cst_122 = arith.constant dense<0.000000e+00> : vector<256x128xf32>
    %100 = tpu.matmul %97, %99, %cst_122 {dimension_numbers = #tpu.dot_dimension_numbers<[1], [0], [0], [1], [0, 0, 1, 1], [], []>} : vector<256x128xbf16>, vector<128x128xbf16>, vector<256x128xf32> -> vector<256x128xf32>
    %c0_123 = arith.constant 0 : index
    %c0_124 = arith.constant 0 : index
    %101 = vector.load %arg8[%c0_123, %c0_124] : memref<256x128xf32, #tpu.memory_space<vmem>>, vector<256x128xf32>
    %102 = arith.addf %101, %100 : vector<256x128xf32>
    %c0_125 = arith.constant 0 : index
    %c0_126 = arith.constant 0 : index
    %103 = vector.load %arg8[%c0_125, %c0_126] : memref<256x128xf32, #tpu.memory_space<vmem>>, vector<256x128xf32>
    tpu.vector_store %arg8[%c0_125, %c0_126], %102 {strides = array<i32>} : memref<256x128xf32, #tpu.memory_space<vmem>>, vector<256x128xf32>,
    %c1_127 = arith.constant 1 : index
    %c2_128 = arith.constant 2 : index
    %c0_129 = arith.constant 0 : index
    %104 = vector.load %arg7[%c1_127, %c2_128, %c0_129] : memref<18x18x128xf32, #tpu.memory_space<vmem>>, vector<16x16x128xf32>
    %105 = vector.shape_cast %104 : vector<16x16x128xf32> to vector<256x128xf32>
    %106 = arith.truncf %105 : vector<256x128xf32> to vector<256x128xbf16>
    %c5_130 = arith.constant 5 : index
    %c0_131 = arith.constant 0 : index
    %c0_132 = arith.constant 0 : index
    %107 = vector.load %arg3[%c5_130, %c0_131, %c0_132] : memref<9x128x128xbf16, #tpu.memory_space<vmem>>, vector<1x128x128xbf16>
    %108 = vector.shape_cast %107 : vector<1x128x128xbf16> to vector<128x128xbf16>
    %cst_133 = arith.constant dense<0.000000e+00> : vector<256x128xf32>
    %109 = tpu.matmul %106, %108, %cst_133 {dimension_numbers = #tpu.dot_dimension_numbers<[1], [0], [0], [1], [0, 0, 1, 1], [], []>} : vector<256x128xbf16>, vector<128x128xbf16>, vector<256x128xf32> -> vector<256x128xf32>
    %c0_134 = arith.constant 0 : index
    %c0_135 = arith.constant 0 : index
    %110 = vector.load %arg8[%c0_134, %c0_135] : memref<256x128xf32, #tpu.memory_space<vmem>>, vector<256x128xf32>
    %111 = arith.addf %110, %109 : vector<256x128xf32>
    %c0_136 = arith.constant 0 : index
    %c0_137 = arith.constant 0 : index
    %112 = vector.load %arg8[%c0_136, %c0_137] : memref<256x128xf32, #tpu.memory_space<vmem>>, vector<256x128xf32>
    tpu.vector_store %arg8[%c0_136, %c0_137], %111 {strides = array<i32>} : memref<256x128xf32, #tpu.memory_space<vmem>>, vector<256x128xf32>,
    %c2_138 = arith.constant 2 : index
    %c0_139 = arith.constant 0 : index
    %c0_140 = arith.constant 0 : index
    %113 = vector.load %arg7[%c2_138, %c0_139, %c0_140] : memref<18x18x128xf32, #tpu.memory_space<vmem>>, vector<16x16x128xf32>
    %114 = vector.shape_cast %113 : vector<16x16x128xf32> to vector<256x128xf32>
    %115 = arith.truncf %114 : vector<256x128xf32> to vector<256x128xbf16>
    %c6 = arith.constant 6 : index
    %c0_141 = arith.constant 0 : index
    %c0_142 = arith.constant 0 : index
    %116 = vector.load %arg3[%c6, %c0_141, %c0_142] : memref<9x128x128xbf16, #tpu.memory_space<vmem>>, vector<1x128x128xbf16>
    %117 = vector.shape_cast %116 : vector<1x128x128xbf16> to vector<128x128xbf16>
    %cst_143 = arith.constant dense<0.000000e+00> : vector<256x128xf32>
    %118 = tpu.matmul %115, %117, %cst_143 {dimension_numbers = #tpu.dot_dimension_numbers<[1], [0], [0], [1], [0, 0, 1, 1], [], []>} : vector<256x128xbf16>, vector<128x128xbf16>, vector<256x128xf32> -> vector<256x128xf32>
    %c0_144 = arith.constant 0 : index
    %c0_145 = arith.constant 0 : index
    %119 = vector.load %arg8[%c0_144, %c0_145] : memref<256x128xf32, #tpu.memory_space<vmem>>, vector<256x128xf32>
    %120 = arith.addf %119, %118 : vector<256x128xf32>
    %c0_146 = arith.constant 0 : index
    %c0_147 = arith.constant 0 : index
    %121 = vector.load %arg8[%c0_146, %c0_147] : memref<256x128xf32, #tpu.memory_space<vmem>>, vector<256x128xf32>
    tpu.vector_store %arg8[%c0_146, %c0_147], %120 {strides = array<i32>} : memref<256x128xf32, #tpu.memory_space<vmem>>, vector<256x128xf32>,
    %c2_148 = arith.constant 2 : index
    %c1_149 = arith.constant 1 : index
    %c0_150 = arith.constant 0 : index
    %122 = vector.load %arg7[%c2_148, %c1_149, %c0_150] : memref<18x18x128xf32, #tpu.memory_space<vmem>>, vector<16x16x128xf32>
    %123 = vector.shape_cast %122 : vector<16x16x128xf32> to vector<256x128xf32>
    %124 = arith.truncf %123 : vector<256x128xf32> to vector<256x128xbf16>
    %c7 = arith.constant 7 : index
    %c0_151 = arith.constant 0 : index
    %c0_152 = arith.constant 0 : index
    %125 = vector.load %arg3[%c7, %c0_151, %c0_152] : memref<9x128x128xbf16, #tpu.memory_space<vmem>>, vector<1x128x128xbf16>
    %126 = vector.shape_cast %125 : vector<1x128x128xbf16> to vector<128x128xbf16>
    %cst_153 = arith.constant dense<0.000000e+00> : vector<256x128xf32>
    %127 = tpu.matmul %124, %126, %cst_153 {dimension_numbers = #tpu.dot_dimension_numbers<[1], [0], [0], [1], [0, 0, 1, 1], [], []>} : vector<256x128xbf16>, vector<128x128xbf16>, vector<256x128xf32> -> vector<256x128xf32>
    %c0_154 = arith.constant 0 : index
    %c0_155 = arith.constant 0 : index
    %128 = vector.load %arg8[%c0_154, %c0_155] : memref<256x128xf32, #tpu.memory_space<vmem>>, vector<256x128xf32>
    %129 = arith.addf %128, %127 : vector<256x128xf32>
    %c0_156 = arith.constant 0 : index
    %c0_157 = arith.constant 0 : index
    %130 = vector.load %arg8[%c0_156, %c0_157] : memref<256x128xf32, #tpu.memory_space<vmem>>, vector<256x128xf32>
    tpu.vector_store %arg8[%c0_156, %c0_157], %129 {strides = array<i32>} : memref<256x128xf32, #tpu.memory_space<vmem>>, vector<256x128xf32>,
    %c2_158 = arith.constant 2 : index
    %c2_159 = arith.constant 2 : index
    %c0_160 = arith.constant 0 : index
    %131 = vector.load %arg7[%c2_158, %c2_159, %c0_160] : memref<18x18x128xf32, #tpu.memory_space<vmem>>, vector<16x16x128xf32>
    %132 = vector.shape_cast %131 : vector<16x16x128xf32> to vector<256x128xf32>
    %133 = arith.truncf %132 : vector<256x128xf32> to vector<256x128xbf16>
    %c8 = arith.constant 8 : index
    %c0_161 = arith.constant 0 : index
    %c0_162 = arith.constant 0 : index
    %134 = vector.load %arg3[%c8, %c0_161, %c0_162] : memref<9x128x128xbf16, #tpu.memory_space<vmem>>, vector<1x128x128xbf16>
    %135 = vector.shape_cast %134 : vector<1x128x128xbf16> to vector<128x128xbf16>
    %cst_163 = arith.constant dense<0.000000e+00> : vector<256x128xf32>
    %136 = tpu.matmul %133, %135, %cst_163 {dimension_numbers = #tpu.dot_dimension_numbers<[1], [0], [0], [1], [0, 0, 1, 1], [], []>} : vector<256x128xbf16>, vector<128x128xbf16>, vector<256x128xf32> -> vector<256x128xf32>
    %c0_164 = arith.constant 0 : index
    %c0_165 = arith.constant 0 : index
    %137 = vector.load %arg8[%c0_164, %c0_165] : memref<256x128xf32, #tpu.memory_space<vmem>>, vector<256x128xf32>
    %138 = arith.addf %137, %136 : vector<256x128xf32>
    %c0_166 = arith.constant 0 : index
    %c0_167 = arith.constant 0 : index
    %139 = vector.load %arg8[%c0_166, %c0_167] : memref<256x128xf32, #tpu.memory_space<vmem>>, vector<256x128xf32>
    tpu.vector_store %arg8[%c0_166, %c0_167], %138 {strides = array<i32>} : memref<256x128xf32, #tpu.memory_space<vmem>>, vector<256x128xf32>,
    %c0_168 = arith.constant 0 : index
    %c0_169 = arith.constant 0 : index
    %140 = vector.load %arg8[%c0_168, %c0_169] : memref<256x128xf32, #tpu.memory_space<vmem>>, vector<256x128xf32>
    %c2_170 = arith.constant 2 : index
    %c0_171 = arith.constant 0 : index
    %141 = vector.load %arg4[%c2_170, %c0_171] : memref<8x128xf32, #tpu.memory_space<vmem>>, vector<1x128xf32>
    %142 = vector.broadcast %141 : vector<1x128xf32> to vector<256x128xf32>
    %143 = arith.mulf %140, %142 : vector<256x128xf32>
    %c3_172 = arith.constant 3 : index
    %c0_173 = arith.constant 0 : index
    %144 = vector.load %arg4[%c3_172, %c0_173] : memref<8x128xf32, #tpu.memory_space<vmem>>, vector<1x128xf32>
    %145 = vector.broadcast %144 : vector<1x128xf32> to vector<256x128xf32>
    %146 = arith.addf %143, %145 : vector<256x128xf32>
    %cst_174 = arith.constant 0.000000e+00 : f32
    %147 = vector.broadcast %cst_174 : f32 to vector<256x128xf32>
    %148 = arith.maximumf %146, %147 : vector<256x128xf32>
    %149 = arith.addf %148, %58 : vector<256x128xf32>
    %150 = vector.shape_cast %149 : vector<256x128xf32> to vector<16x16x128xf32>
    %151 = vector.extract_strided_slice %150 {offsets = [0, 0, 0], sizes = [16, 16, 8], strides = [1, 1, 1]} : vector<16x16x128xf32> to vector<16x16x8xf32>
    %152 = vector.shape_cast %151 : vector<16x16x8xf32> to vector<1x16x16x8xf32>
    %c0_175 = arith.constant 0 : index
    %c0_176 = arith.constant 0 : index
    %c0_177 = arith.constant 0 : index
    %c0_178 = arith.constant 0 : index
    %153 = vector.load %arg5[%c0_175, %c0_176, %c0_177, %c0_178] : memref<1x16x16x8xf32, #tpu.memory_space<vmem>>, vector<1x16x16x8xf32>
    tpu.vector_store %arg5[%c0_175, %c0_176, %c0_177, %c0_178], %152 {strides = array<i32>} : memref<1x16x16x8xf32, #tpu.memory_space<vmem>>, vector<1x16x16x8xf32>,
    return
  }
  func.func @transform_0(%arg0: i32) -> (i32, i32, i32, i32) {
    %c0_i32 = arith.constant 0 : i32
    %c0_i32_0 = arith.constant 0 : i32
    %c0_i32_1 = arith.constant 0 : i32
    %c0_i32_2 = arith.constant 0 : i32
    return %arg0, %c0_i32, %c0_i32_0, %c0_i32_1 : i32, i32, i32, i32
  }
  func.func @transform_1(%arg0: i32) -> (i32, i32) {
    %c0_i32 = arith.constant 0 : i32
    %c0_i32_0 = arith.constant 0 : i32
    %c0_i32_1 = arith.constant 0 : i32
    return %c0_i32, %c0_i32_0 : i32, i32
  }
  func.func @transform_2(%arg0: i32) -> (i32, i32, i32) {
    %c0_i32 = arith.constant 0 : i32
    %c0_i32_0 = arith.constant 0 : i32
    %c0_i32_1 = arith.constant 0 : i32
    %c0_i32_2 = arith.constant 0 : i32
    return %c0_i32, %c0_i32_0, %c0_i32_1 : i32, i32, i32
  }
  func.func @transform_3(%arg0: i32) -> (i32, i32) {
    %c0_i32 = arith.constant 0 : i32
    %c0_i32_0 = arith.constant 0 : i32
    %c0_i32_1 = arith.constant 0 : i32
    return %c0_i32, %c0_i32_0 : i32, i32
  }
  func.func @transform_4(%arg0: i32) -> (i32, i32, i32, i32) {
    %c0_i32 = arith.constant 0 : i32
    %c0_i32_0 = arith.constant 0 : i32
    %c0_i32_1 = arith.constant 0 : i32
    %c0_i32_2 = arith.constant 0 : i32
    return %arg0, %c0_i32, %c0_i32_0, %c0_i32_1 : i32, i32, i32, i32
  }
}

</mosaic_0001>

<llo_original>
// kernel: basic_block_forward.1
$region0: #{basic_block_forward.1}
  #allocation0 [shape = 'u32[]', space=smem, size = 0x4, offset = 0x4, fixed_abs, tag = 'smem constant byte address 0x4 - core index']
  #allocation1 [shape = 'u32[144,128]{1,0:T(1,128)}', space=vmem, size = 0x12000, scoped, tag = 'internal scratch']
  #allocation2 [shape = 'f32[18,18,4]{2,1,0:T(8,128)}', space=vmem, size = 0x36000, scoped, tag = 'scratch operand']
  #allocation3 [shape = 'f32[18,18,128]{2,1,0:T(8,128)}', space=vmem, size = 0x36000, scoped, tag = 'scratch operand']
  #allocation4 [shape = 'f32[256,128]{1,0:T(8,128)}', space=vmem, size = 0x20000, scoped, tag = 'scratch operand']
  %s0 = inlined_call_operand.vmem [shape: f32[2,16,16,4], index: 0, kind: input, shape index: {}]
  %s1 = inlined_call_operand.vmem [shape: bf16[36,256], index: 1, kind: input, shape index: {}]
  %s2 = inlined_call_operand.vmem [shape: bf16[9,128,128], index: 2, kind: input, shape index: {}]
  %s3 = inlined_call_operand.vmem [shape: f32[8,128], index: 3, kind: input, shape index: {}]
  %s4 = inlined_call_operand.vmem [shape: f32[2,16,16,8], index: 4, kind: output, shape index: {}]
  %s5 = sld [smem:[#allocation0]]
  $region49: #{basic_block_forward.1} parent=0
    _
  %s7 = ssub.s32 1, %s5
  %s8 = scalar_select 0, %s7, %s5
  loop: start=0, step=1, limit=4
  $region2: #{basic_block_forward.1} parent=0 // loop_pre_header
    _
  $region3: #{basic_block_forward.1} parent=0 // loop_header
    %s10 = sphi 0, %s14
    %p11 = scmp.ge.s32.totalorder %s10, 4
    %s20 = sphi 0, %s22
    %s23 = sphi 0, %s20
    %s24 = sphi 0, %s23
    %s40 = sphi 0, %s24
    %s44 = sphi 0, %s44
    %s46 = sphi 0, %s44
    %s47 = sphi 0, %s46
    %s61 = sphi 0, %s47
    %s65 = sphi 0, %s65
    %s67 = sphi 0, %s65
    %s68 = sphi 0, %s67
    %s82 = sphi 0, %s68
    %s86 = sphi 0, %s86
    %s88 = sphi 0, %s86
    %s89 = sphi 0, %s88
    %s103 = sphi 0, %s89
    %s109 = sphi 0, %s111
    %s112 = sphi 0, %s109
    %s113 = sphi 0, %s112
    %s129 = sphi 0, %s113
  $region4: #{basic_block_forward.1} parent=0 // loop_header_branch
    %13 = sbr.rel (%p11) target = $region8
  $region5: #{basic_block_forward.1} parent=0 // loop_body
    %s15 = ssub.s32 %s10, 1
    %s16 = ssub.s32 %s10, 2
    %s17 = sadd.s32 %s10, 1
    %s18 = ssub.s32 %s10, %s17
    %p19 = scmp.eq.s32.totalorder %s18, 0
    %s21 = sadd.s32 %s20, 1
    %s22 = scalar_select %p19, %s20, %s21
    %p25 = pneg %p19
    %p26 = scmp.eq.s32.totalorder %s10, 1
    %p27 = por %p25, %p26
    %p28 = scmp.ne.s32.totalorder %s20, %s23
    %p29 = scmp.eq.s32.totalorder %s10, 0
    %p30 = por %p28, %p29
    %p31 = scmp.ne.s32.totalorder %s20, %s23
    %p32 = scmp.eq.s32.totalorder %s15, 1
    %p33 = por %p31, %p32
    %p34 = scmp.ne.s32.totalorder %s23, %s24
    %p35 = scmp.eq.s32.totalorder %s15, 0
    %p36 = por %p34, %p35
    %p37 = scmp.ne.s32.totalorder %s23, %s24
    %p38 = scmp.eq.s32.totalorder %s16, 1
    %p39 = por %p37, %p38
    %p41 = scmp.ne.s32.totalorder %s24, %s40
    %p42 = scmp.eq.s32.totalorder %s16, 0
    %p43 = por %p41, %p42
    %s45 = sadd.s32 %s44, 1
    %p48 = scmp.eq.s32.totalorder %s10, 1
    %p49 = scmp.ne.s32.totalorder %s44, %s46
    %p50 = scmp.eq.s32.totalorder %s10, 0
    %p51 = por %p49, %p50
    %p52 = scmp.ne.s32.totalorder %s44, %s46
    %p53 = scmp.eq.s32.totalorder %s15, 1
    %p54 = por %p52, %p53
    %p55 = scmp.ne.s32.totalorder %s46, %s47
    %p56 = scmp.eq.s32.totalorder %s15, 0
    %p57 = por %p55, %p56
    %p58 = scmp.ne.s32.totalorder %s46, %s47
    %p59 = scmp.eq.s32.totalorder %s16, 1
    %p60 = por %p58, %p59
    %p62 = scmp.ne.s32.totalorder %s47, %s61
    %p63 = scmp.eq.s32.totalorder %s16, 0
    %p64 = por %p62, %p63
    %s66 = sadd.s32 %s65, 1
    %p69 = scmp.eq.s32.totalorder %s10, 1
    %p70 = scmp.ne.s32.totalorder %s65, %s67
    %p71 = scmp.eq.s32.totalorder %s10, 0
    %p72 = por %p70, %p71
    %p73 = scmp.ne.s32.totalorder %s65, %s67
    %p74 = scmp.eq.s32.totalorder %s15, 1
    %p75 = por %p73, %p74
    %p76 = scmp.ne.s32.totalorder %s67, %s68
    %p77 = scmp.eq.s32.totalorder %s15, 0
    %p78 = por %p76, %p77
    %p79 = scmp.ne.s32.totalorder %s67, %s68
    %p80 = scmp.eq.s32.totalorder %s16, 1
    %p81 = por %p79, %p80
    %p83 = scmp.ne.s32.totalorder %s68, %s82
    %p84 = scmp.eq.s32.totalorder %s16, 0
    %p85 = por %p83, %p84
    %s87 = sadd.s32 %s86, 1
    %p90 = scmp.eq.s32.totalorder %s10, 1
    %p91 = scmp.ne.s32.totalorder %s86, %s88
    %p92 = scmp.eq.s32.totalorder %s10, 0
    %p93 = por %p91, %p92
    %p94 = scmp.ne.s32.totalorder %s86, %s88
    %p95 = scmp.eq.s32.totalorder %s15, 1
    %p96 = por %p94, %p95
    %p97 = scmp.ne.s32.totalorder %s88, %s89
    %p98 = scmp.eq.s32.totalorder %s15, 0
    %p99 = por %p97, %p98
    %p100 = scmp.ne.s32.totalorder %s88, %s89
    %p101 = scmp.eq.s32.totalorder %s16, 1
    %p102 = por %p100, %p101
    %p104 = scmp.ne.s32.totalorder %s89, %s103
    %p105 = scmp.eq.s32.totalorder %s16, 0
    %p106 = por %p104, %p105
    %s107 = ssub.s32 %s10, %s17
    %p108 = scmp.eq.s32.totalorder %s107, 0
    %s110 = sadd.s32 %s109, 1
    %s111 = scalar_select %p108, %s109, %s110
    %p114 = pneg %p108
    %p115 = scmp.eq.s32.totalorder %s10, 1
    %p116 = por %p114, %p115
    %p117 = scmp.ne.s32.totalorder %s109, %s112
    %p118 = scmp.eq.s32.totalorder %s10, 0
    %p119 = por %p117, %p118
    %p120 = scmp.ne.s32.totalorder %s109, %s112
    %p121 = scmp.eq.s32.totalorder %s15, 1
    %p122 = por %p120, %p121
    %p123 = scmp.ne.s32.totalorder %s112, %s113
    %p124 = scmp.eq.s32.totalorder %s15, 0
    %p125 = por %p123, %p124
    %p126 = scmp.ne.s32.totalorder %s112, %s113
    %p127 = scmp.eq.s32.totalorder %s16, 1
    %p128 = por %p126, %p127
    %p130 = scmp.ne.s32.totalorder %s113, %s129
    %p131 = scmp.eq.s32.totalorder %s16, 0
    %p132 = por %p130, %p131
    %p133 = scmp.le.s32.totalorder 1, %s10
    %p134 = scmp.lt.s32.totalorder %s10, 3
    %p135 = pnand %p133, %p134
    %p136 = pneg %p135
    // Predicated region
    $region9: #{basic_block_forward.1} parent=5 // pred_check
      _
    $region10: #{basic_block_forward.1} parent=5 // pred_check_branch
      %138 = sbr.rel (%p135) target = $region12
    $region11: #{basic_block_forward.1} parent=5 // pred_region
      %s139 = ssub.s32 %s10, 1
      // Predicated region
      $region13: #{basic_block_forward.1} parent=11 // pred_check
        %p140 = pneg %p57
      $region14: #{basic_block_forward.1} parent=11 // pred_check_branch
        %142 = sbr.rel (%p140) target = $region16
      $region15: #{basic_block_forward.1} parent=11 // pred_region
        _
      $region16: #{basic_block_forward.1} parent=11 // pred_fallthru
        _
      // Predicated region
      $region17: #{basic_block_forward.1} parent=11 // pred_check
        %p143 = pneg %p78
      $region18: #{basic_block_forward.1} parent=11 // pred_check_branch
        %145 = sbr.rel (%p143) target = $region20
      $region19: #{basic_block_forward.1} parent=11 // pred_region
        _
      $region20: #{basic_block_forward.1} parent=11 // pred_fallthru
        _
      // Predicated region
      $region21: #{basic_block_forward.1} parent=11 // pred_check
        %p146 = pneg %p99
      $region22: #{basic_block_forward.1} parent=11 // pred_check_branch
        %148 = sbr.rel (%p146) target = $region24
      $region23: #{basic_block_forward.1} parent=11 // pred_region
        _
      $region24: #{basic_block_forward.1} parent=11 // pred_fallthru
        _
    $region12: #{basic_block_forward.1} parent=5 // pred_fallthru
      _
    %p149 = scmp.lt.s32.totalorder %s10, 2
    // Predicated region
    $region25: #{basic_block_forward.1} parent=5 // pred_check
      %p150 = pneg %p149
    $region26: #{basic_block_forward.1} parent=5 // pred_check_branch
      %152 = sbr.rel (%p150) target = $region28
    $region27: #{basic_block_forward.1} parent=5 // pred_region
      // Predicated region
      $region29: #{basic_block_forward.1} parent=27 // pred_check
        %p153 = pneg %p30
      $region30: #{basic_block_forward.1} parent=27 // pred_check_branch
        %155 = sbr.rel (%p153) target = $region32
      $region31: #{basic_block_forward.1} parent=27 // pred_region
        %p156 = scmp.lt.s32.totalorder %s10, 1
        %s157 = scalar_select %p156, %s10, 1
        %s158 = smul.addr %s157, 32
        %s159 = smul.addr %s158, 8
        %s160 = scalar_lea.vmem %s0, %s159
      $region32: #{basic_block_forward.1} parent=27 // pred_fallthru
        _
    $region28: #{basic_block_forward.1} parent=5 // pred_fallthru
      _
    %p161 = scmp.le.s32.totalorder 1, %s10
    %p162 = scmp.lt.s32.totalorder %s10, 3
    %p163 = pnand %p161, %p162
    %p164 = pneg %p163
    // Predicated region
    $region33: #{basic_block_forward.1} parent=5 // pred_check
      _
    $region34: #{basic_block_forward.1} parent=5 // pred_check_branch
      %166 = sbr.rel (%p163) target = $region36
    $region35: #{basic_block_forward.1} parent=5 // pred_region
      %s167 = ssub.s32 %s10, 1
      %p168 = scmp.lt.s32.totalorder %s15, 1
      %s169 = scalar_select %p168, %s15, 1
      %s170 = smul.addr %s169, 32
      %s171 = smul.addr %s170, 8
      %s172 = scalar_lea.vmem %s0, %s171
      %p173 = pneg %p36
      %p174 = pneg %p33
      %p175 = pneg %p57
      %p176 = pneg %p54
      %p177 = pneg %p78
      %p178 = pneg %p75
      %p179 = pneg %p99
      %p180 = pneg %p96
      %p181 = pneg %p125
      %p182 = pneg %p122
      %p183 = scmp.lt.s32.totalorder %s15, 1
      %s184 = scalar_select %p183, %s15, 1
      %s185 = smul.addr %s184, 32
      %s186 = smul.addr %s185, 8
      %s187 = scalar_lea.vmem %s4, %s186
      %p188 = scmp.lt.s32.totalorder %s15, 1
      %s189 = scalar_select %p188, %s15, 1
      %s190 = smul.addr %s189, 32
      %s191 = smul.addr %s190, 8
      %s192 = scalar_lea.vmem %s0, %s191
      %p193 = scmp.lt.s32.totalorder %s15, 1
      %s194 = scalar_select %p193, %s15, 1
      %s195 = smul.addr %s194, 32
      %s196 = smul.addr %s195, 8
      %s197 = scalar_lea.vmem %s4, %s196
      %vm199 = vcmask 31744
      %200 = vst.msk [vmem:[#allocation2] sm:$0xff] %vm199, 0.0
      %201 = vst.msk [vmem:[#allocation2 + $0x8] sm:$0xff] %vm199, 0.0
      %vm202 = vcmask 25600
      %203 = vst.msk [vmem:[#allocation2 + $0x10] sm:$0x3] %vm202, 0.0
      %s204 = scalar_lea.vmem [#allocation2], 408
      %205 = vst.msk [vmem:[%s204] sm:$0xff] %vm199, 0.0
      %206 = vst.msk [vmem:[%s204 + $0x8] sm:$0xff] %vm199, 0.0
      %207 = vst.msk [vmem:[%s204 + $0x10] sm:$0x3] %vm202, 0.0
      %s208 = scalar_lea.vmem [#allocation2], 24
      %vm209 = vcmask 24576
      %210 = vst.msk [vmem:[%s208] sm:$0x1] %vm209, 0.0
      %211 = vst.msk [vmem:[%s208 + $0x18] sm:$0x1] %vm209, 0.0
      %212 = vst.msk [vmem:[%s208 + $0x30] sm:$0x1] %vm209, 0.0
      %213 = vst.msk [vmem:[%s208 + $0x48] sm:$0x1] %vm209, 0.0
      %214 = vst.msk [vmem:[%s208 + $0x60] sm:$0x1] %vm209, 0.0
      %215 = vst.msk [vmem:[%s208 + $0x78] sm:$0x1] %vm209, 0.0
      %216 = vst.msk [vmem:[%s208 + $0x90] sm:$0x1] %vm209, 0.0
      %217 = vst.msk [vmem:[%s208 + $0xa8] sm:$0x1] %vm209, 0.0
      %218 = vst.msk [vmem:[%s208 + $0xc0] sm:$0x1] %vm209, 0.0
      %219 = vst.msk [vmem:[%s208 + $0xd8] sm:$0x1] %vm209, 0.0
      %220 = vst.msk [vmem:[%s208 + $0xf0] sm:$0x1] %vm209, 0.0
      %221 = vst.msk [vmem:[%s208 + $0x108] sm:$0x1] %vm209, 0.0
      %222 = vst.msk [vmem:[%s208 + $0x120] sm:$0x1] %vm209, 0.0
      %223 = vst.msk [vmem:[%s208 + $0x138] sm:$0x1] %vm209, 0.0
      %224 = vst.msk [vmem:[%s208 + $0x150] sm:$0x1] %vm209, 0.0
      %225 = vst.msk [vmem:[%s208 + $0x168] sm:$0x1] %vm209, 0.0
      %226 = vst.msk [vmem:[%s208 + $0x11] sm:$0x1] %vm209, 0.0
      %227 = vst.msk [vmem:[%s208 + $0x29] sm:$0x1] %vm209, 0.0
      %228 = vst.msk [vmem:[%s208 + $0x41] sm:$0x1] %vm209, 0.0
      %229 = vst.msk [vmem:[%s208 + $0x59] sm:$0x1] %vm209, 0.0
      %230 = vst.msk [vmem:[%s208 + $0x71] sm:$0x1] %vm209, 0.0
      %231 = vst.msk [vmem:[%s208 + $0x89] sm:$0x1] %vm209, 0.0
      %232 = vst.msk [vmem:[%s208 + $0xa1] sm:$0x1] %vm209, 0.0
      %233 = vst.msk [vmem:[%s208 + $0xb9] sm:$0x1] %vm209, 0.0
      %234 = vst.msk [vmem:[%s208 + $0xd1] sm:$0x1] %vm209, 0.0
      %235 = vst.msk [vmem:[%s208 + $0xe9] sm:$0x1] %vm209, 0.0
      %236 = vst.msk [vmem:[%s208 + $0x101] sm:$0x1] %vm209, 0.0
      %237 = vst.msk [vmem:[%s208 + $0x119] sm:$0x1] %vm209, 0.0
      %238 = vst.msk [vmem:[%s208 + $0x131] sm:$0x1] %vm209, 0.0
      %239 = vst.msk [vmem:[%s208 + $0x149] sm:$0x1] %vm209, 0.0
      %240 = vst.msk [vmem:[%s208 + $0x161] sm:$0x1] %vm209, 0.0
      %241 = vst.msk [vmem:[%s208 + $0x179] sm:$0x1] %vm209, 0.0
      %242 = vst [vmem:[#allocation3] sm:$0xff] 0.0
      %243 = vst [vmem:[#allocation3 + $0x8] sm:$0xff] 0.0
      %244 = vst [vmem:[#allocation3 + $0x10] sm:$0x3] 0.0
      %s245 = scalar_lea.vmem [#allocation3], 408
      %246 = vst [vmem:[%s245] sm:$0xff] 0.0
      %247 = vst [vmem:[%s245 + $0x8] sm:$0xff] 0.0
      %248 = vst [vmem:[%s245 + $0x10] sm:$0x3] 0.0
      %s249 = scalar_lea.vmem [#allocation3], 24
      %250 = vst [vmem:[%s249] sm:$0x1] 0.0
      %251 = vst [vmem:[%s249 + $0x18] sm:$0x1] 0.0
      %252 = vst [vmem:[%s249 + $0x30] sm:$0x1] 0.0
      %253 = vst [vmem:[%s249 + $0x48] sm:$0x1] 0.0
      %254 = vst [vmem:[%s249 + $0x60] sm:$0x1] 0.0
      %255 = vst [vmem:[%s249 + $0x78] sm:$0x1] 0.0
      %256 = vst [vmem:[%s249 + $0x90] sm:$0x1] 0.0
      %257 = vst [vmem:[%s249 + $0xa8] sm:$0x1] 0.0
      %258 = vst [vmem:[%s249 + $0xc0] sm:$0x1] 0.0
      %259 = vst [vmem:[%s249 + $0xd8] sm:$0x1] 0.0
      %260 = vst [vmem:[%s249 + $0xf0] sm:$0x1] 0.0
      %261 = vst [vmem:[%s249 + $0x108] sm:$0x1] 0.0
      %262 = vst [vmem:[%s249 + $0x120] sm:$0x1] 0.0
      %263 = vst [vmem:[%s249 + $0x138] sm:$0x1] 0.0
      %264 = vst [vmem:[%s249 + $0x150] sm:$0x1] 0.0
      %265 = vst [vmem:[%s249 + $0x168] sm:$0x1] 0.0
      %266 = vst [vmem:[%s249 + $0x11] sm:$0x1] 0.0
      %267 = vst [vmem:[%s249 + $0x29] sm:$0x1] 0.0
      %268 = vst [vmem:[%s249 + $0x41] sm:$0x1] 0.0
      %269 = vst [vmem:[%s249 + $0x59] sm:$0x1] 0.0
      %270 = vst [vmem:[%s249 + $0x71] sm:$0x1] 0.0
      %271 = vst [vmem:[%s249 + $0x89] sm:$0x1] 0.0
      %272 = vst [vmem:[%s249 + $0xa1] sm:$0x1] 0.0
      %273 = vst [vmem:[%s249 + $0xb9] sm:$0x1] 0.0
      %274 = vst [vmem:[%s249 + $0xd1] sm:$0x1] 0.0
      %275 = vst [vmem:[%s249 + $0xe9] sm:$0x1] 0.0
      %276 = vst [vmem:[%s249 + $0x101] sm:$0x1] 0.0
      %277 = vst [vmem:[%s249 + $0x119] sm:$0x1] 0.0
      %278 = vst [vmem:[%s249 + $0x131] sm:$0x1] 0.0
      %279 = vst [vmem:[%s249 + $0x149] sm:$0x1] 0.0
      %280 = vst [vmem:[%s249 + $0x161] sm:$0x1] 0.0
      %281 = vst [vmem:[%s249 + $0x179] sm:$0x1] 0.0
      %v282 = vld [vmem:[%s192] sm:$0xff]
      %v283 = vld [vmem:[%s192 + $0x8] sm:$0xff]
      %v284 = vld [vmem:[%s192 + $0x10] sm:$0xff]
      %v285 = vld [vmem:[%s192 + $0x18] sm:$0xff]
      %v286 = vld [vmem:[%s192 + $0x20] sm:$0xff]
      %v287 = vld [vmem:[%s192 + $0x28] sm:$0xff]
      %v288 = vld [vmem:[%s192 + $0x30] sm:$0xff]
      %v289 = vld [vmem:[%s192 + $0x38] sm:$0xff]
      %v290 = vld [vmem:[%s192 + $0x40] sm:$0xff]
      %v291 = vld [vmem:[%s192 + $0x48] sm:$0xff]
      %v292 = vld [vmem:[%s192 + $0x50] sm:$0xff]
      %v293 = vld [vmem:[%s192 + $0x58] sm:$0xff]
      %v294 = vld [vmem:[%s192 + $0x60] sm:$0xff]
      %v295 = vld [vmem:[%s192 + $0x68] sm:$0xff]
      %v296 = vld [vmem:[%s192 + $0x70] sm:$0xff]
      %v297 = vld [vmem:[%s192 + $0x78] sm:$0xff]
      %v298 = vld [vmem:[%s192 + $0x80] sm:$0xff]
      %v299 = vld [vmem:[%s192 + $0x88] sm:$0xff]
      %v300 = vld [vmem:[%s192 + $0x90] sm:$0xff]
      %v301 = vld [vmem:[%s192 + $0x98] sm:$0xff]
      %v302 = vld [vmem:[%s192 + $0xa0] sm:$0xff]
      %v303 = vld [vmem:[%s192 + $0xa8] sm:$0xff]
      %v304 = vld [vmem:[%s192 + $0xb0] sm:$0xff]
      %v305 = vld [vmem:[%s192 + $0xb8] sm:$0xff]
      %v306 = vld [vmem:[%s192 + $0xc0] sm:$0xff]
      %v307 = vld [vmem:[%s192 + $0xc8] sm:$0xff]
      %v308 = vld [vmem:[%s192 + $0xd0] sm:$0xff]
      %v309 = vld [vmem:[%s192 + $0xd8] sm:$0xff]
      %v310 = vld [vmem:[%s192 + $0xe0] sm:$0xff]
      %v311 = vld [vmem:[%s192 + $0xe8] sm:$0xff]
      %v312 = vld [vmem:[%s192 + $0xf0] sm:$0xff]
      %v313 = vld [vmem:[%s192 + $0xf8] sm:$0xff]
      %314 = vst.msk [vmem:[%s208 + $0x1] sm:$0xff] %vm199, %v282
      %315 = vst.msk [vmem:[%s208 + $0x9] sm:$0xff] %vm199, %v283
      %316 = vst.msk [vmem:[%s208 + $0x19] sm:$0xff] %vm199, %v284
      %317 = vst.msk [vmem:[%s208 + $0x21] sm:$0xff] %vm199, %v285
      %318 = vst.msk [vmem:[%s208 + $0x31] sm:$0xff] %vm199, %v286
      %319 = vst.msk [vmem:[%s208 + $0x39] sm:$0xff] %vm199, %v287
      %320 = vst.msk [vmem:[%s208 + $0x49] sm:$0xff] %vm199, %v288
      %321 = vst.msk [vmem:[%s208 + $0x51] sm:$0xff] %vm199, %v289
      %322 = vst.msk [vmem:[%s208 + $0x61] sm:$0xff] %vm199, %v290
      %323 = vst.msk [vmem:[%s208 + $0x69] sm:$0xff] %vm199, %v291
      %324 = vst.msk [vmem:[%s208 + $0x79] sm:$0xff] %vm199, %v292
      %325 = vst.msk [vmem:[%s208 + $0x81] sm:$0xff] %vm199, %v293
      %326 = vst.msk [vmem:[%s208 + $0x91] sm:$0xff] %vm199, %v294
      %327 = vst.msk [vmem:[%s208 + $0x99] sm:$0xff] %vm199, %v295
      %328 = vst.msk [vmem:[%s208 + $0xa9] sm:$0xff] %vm199, %v296
      %329 = vst.msk [vmem:[%s208 + $0xb1] sm:$0xff] %vm199, %v297
      %330 = vst.msk [vmem:[%s208 + $0xc1] sm:$0xff] %vm199, %v298
      %331 = vst.msk [vmem:[%s208 + $0xc9] sm:$0xff] %vm199, %v299
      %332 = vst.msk [vmem:[%s208 + $0xd9] sm:$0xff] %vm199, %v300
      %333 = vst.msk [vmem:[%s208 + $0xe1] sm:$0xff] %vm199, %v301
      %334 = vst.msk [vmem:[%s208 + $0xf1] sm:$0xff] %vm199, %v302
      %335 = vst.msk [vmem:[%s208 + $0xf9] sm:$0xff] %vm199, %v303
      %336 = vst.msk [vmem:[%s208 + $0x109] sm:$0xff] %vm199, %v304
      %337 = vst.msk [vmem:[%s208 + $0x111] sm:$0xff] %vm199, %v305
      %338 = vst.msk [vmem:[%s208 + $0x121] sm:$0xff] %vm199, %v306
      %339 = vst.msk [vmem:[%s208 + $0x129] sm:$0xff] %vm199, %v307
      %340 = vst.msk [vmem:[%s208 + $0x139] sm:$0xff] %vm199, %v308
      %341 = vst.msk [vmem:[%s208 + $0x141] sm:$0xff] %vm199, %v309
      %342 = vst.msk [vmem:[%s208 + $0x151] sm:$0xff] %vm199, %v310
      %343 = vst.msk [vmem:[%s208 + $0x159] sm:$0xff] %vm199, %v311
      %344 = vst.msk [vmem:[%s208 + $0x169] sm:$0xff] %vm199, %v312
      %345 = vst.msk [vmem:[%s208 + $0x171] sm:$0xff] %vm199, %v313
      %v346 = vld [vmem:[#allocation2] sm:$0xff]
      %v347 = vld [vmem:[#allocation2 + $0x8] sm:$0xff]
      %v348 = vld [vmem:[#allocation2 + $0x18] sm:$0xff]
      %v349 = vld [vmem:[#allocation2 + $0x20] sm:$0xff]
      %v350 = vld [vmem:[#allocation2 + $0x30] sm:$0xff]
      %v351 = vld [vmem:[#allocation2 + $0x38] sm:$0xff]
      %v352 = vld [vmem:[#allocation2 + $0x48] sm:$0xff]
      %v353 = vld [vmem:[#allocation2 + $0x50] sm:$0xff]
      %v354 = vld [vmem:[#allocation2 + $0x60] sm:$0xff]
      %v355 = vld [vmem:[#allocation2 + $0x68] sm:$0xff]
      %v356 = vld [vmem:[#allocation2 + $0x78] sm:$0xff]
      %v357 = vld [vmem:[#allocation2 + $0x80] sm:$0xff]
      %v358 = vld [vmem:[#allocation2 + $0x90] sm:$0xff]
      %v359 = vld [vmem:[#allocation2 + $0x98] sm:$0xff]
      %v360 = vld [vmem:[#allocation2 + $0xa8] sm:$0xff]
      %v361 = vld [vmem:[#allocation2 + $0xb0] sm:$0xff]
      %v362 = vld [vmem:[#allocation2 + $0xc0] sm:$0xff]
      %v363 = vld [vmem:[#allocation2 + $0xc8] sm:$0xff]
      %v364 = vld [vmem:[#allocation2 + $0xd8] sm:$0xff]
      %v365 = vld [vmem:[#allocation2 + $0xe0] sm:$0xff]
      %v366 = vld [vmem:[#allocation2 + $0xf0] sm:$0xff]
      %v367 = vld [vmem:[#allocation2 + $0xf8] sm:$0xff]
      %v368 = vld [vmem:[#allocation2 + $0x108] sm:$0xff]
      %v369 = vld [vmem:[#allocation2 + $0x110] sm:$0xff]
      %v370 = vld [vmem:[#allocation2 + $0x120] sm:$0xff]
      %v371 = vld [vmem:[#allocation2 + $0x128] sm:$0xff]
      %v372 = vld [vmem:[#allocation2 + $0x138] sm:$0xff]
      %v373 = vld [vmem:[#allocation2 + $0x140] sm:$0xff]
      %v374 = vld [vmem:[#allocation2 + $0x150] sm:$0xff]
      %v375 = vld [vmem:[#allocation2 + $0x158] sm:$0xff]
      %v376 = vld [vmem:[#allocation2 + $0x168] sm:$0xff]
      %v377 = vld [vmem:[#allocation2 + $0x170] sm:$0xff]
      %v378 = vld [vmem:[#allocation2 + $0x1] sm:$0xff]
      %v379 = vld [vmem:[#allocation2 + $0x9] sm:$0xff]
      %v380 = vld [vmem:[#allocation2 + $0x19] sm:$0xff]
      %v381 = vld [vmem:[#allocation2 + $0x21] sm:$0xff]
      %v382 = vld [vmem:[#allocation2 + $0x31] sm:$0xff]
      %v383 = vld [vmem:[#allocation2 + $0x39] sm:$0xff]
      %v384 = vld [vmem:[#allocation2 + $0x49] sm:$0xff]
      %v385 = vld [vmem:[#allocation2 + $0x51] sm:$0xff]
      %v386 = vld [vmem:[#allocation2 + $0x61] sm:$0xff]
      %v387 = vld [vmem:[#allocation2 + $0x69] sm:$0xff]
      %v388 = vld [vmem:[#allocation2 + $0x79] sm:$0xff]
      %v389 = vld [vmem:[#allocation2 + $0x81] sm:$0xff]
      %v390 = vld [vmem:[#allocation2 + $0x91] sm:$0xff]
      %v391 = vld [vmem:[#allocation2 + $0x99] sm:$0xff]
      %v392 = vld [vmem:[#allocation2 + $0xa9] sm:$0xff]
      %v393 = vld [vmem:[#allocation2 + $0xb1] sm:$0xff]
      %v394 = vld [vmem:[#allocation2 + $0xc1] sm:$0xff]
      %v395 = vld [vmem:[#allocation2 + $0xc9] sm:$0xff]
      %v396 = vld [vmem:[#allocation2 + $0xd9] sm:$0xff]
      %v397 = vld [vmem:[#allocation2 + $0xe1] sm:$0xff]
      %v398 = vld [vmem:[#allocation2 + $0xf1] sm:$0xff]
      %v399 = vld [vmem:[#allocation2 + $0xf9] sm:$0xff]
      %v400 = vld [vmem:[#allocation2 + $0x109] sm:$0xff]
      %v401 = vld [vmem:[#allocation2 + $0x111] sm:$0xff]
      %v402 = vld [vmem:[#allocation2 + $0x121] sm:$0xff]
      %v403 = vld [vmem:[#allocation2 + $0x129] sm:$0xff]
      %v404 = vld [vmem:[#allocation2 + $0x139] sm:$0xff]
      %v405 = vld [vmem:[#allocation2 + $0x141] sm:$0xff]
      %v406 = vld [vmem:[#allocation2 + $0x151] sm:$0xff]
      %v407 = vld [vmem:[#allocation2 + $0x159] sm:$0xff]
      %v408 = vld [vmem:[#allocation2 + $0x169] sm:$0xff]
      %v409 = vld [vmem:[#allocation2 + $0x171] sm:$0xff]
      %v410 = vld [vmem:[#allocation2 + $0x2] sm:$0xff]
      %v411 = vld [vmem:[#allocation2 + $0xa] sm:$0xff]
      %v412 = vld [vmem:[#allocation2 + $0x1a] sm:$0xff]
      %v413 = vld [vmem:[#allocation2 + $0x22] sm:$0xff]
      %v414 = vld [vmem:[#allocation2 + $0x32] sm:$0xff]
      %v415 = vld [vmem:[#allocation2 + $0x3a] sm:$0xff]
      %v416 = vld [vmem:[#allocation2 + $0x4a] sm:$0xff]
      %v417 = vld [vmem:[#allocation2 + $0x52] sm:$0xff]
      %v418 = vld [vmem:[#allocation2 + $0x62] sm:$0xff]
      %v419 = vld [vmem:[#allocation2 + $0x6a] sm:$0xff]
      %v420 = vld [vmem:[#allocation2 + $0x7a] sm:$0xff]
      %v421 = vld [vmem:[#allocation2 + $0x82] sm:$0xff]
      %v422 = vld [vmem:[#allocation2 + $0x92] sm:$0xff]
      %v423 = vld [vmem:[#allocation2 + $0x9a] sm:$0xff]
      %v424 = vld [vmem:[#allocation2 + $0xaa] sm:$0xff]
      %v425 = vld [vmem:[#allocation2 + $0xb2] sm:$0xff]
      %v426 = vld [vmem:[#allocation2 + $0xc2] sm:$0xff]
      %v427 = vld [vmem:[#allocation2 + $0xca] sm:$0xff]
      %v428 = vld [vmem:[#allocation2 + $0xda] sm:$0xff]
      %v429 = vld [vmem:[#allocation2 + $0xe2] sm:$0xff]
      %v430 = vld [vmem:[#allocation2 + $0xf2] sm:$0xff]
      %v431 = vld [vmem:[#allocation2 + $0xfa] sm:$0xff]
      %v432 = vld [vmem:[#allocation2 + $0x10a] sm:$0xff]
      %v433 = vld [vmem:[#allocation2 + $0x112] sm:$0xff]
      %v434 = vld [vmem:[#allocation2 + $0x122] sm:$0xff]
      %v435 = vld [vmem:[#allocation2 + $0x12a] sm:$0xff]
      %v436 = vld [vmem:[#allocation2 + $0x13a] sm:$0xff]
      %v437 = vld [vmem:[#allocation2 + $0x142] sm:$0xff]
      %v438 = vld [vmem:[#allocation2 + $0x152] sm:$0xff]
      %v439 = vld [vmem:[#allocation2 + $0x15a] sm:$0xff]
      %v440 = vld [vmem:[#allocation2 + $0x16a] sm:$0xff]
      %v441 = vld [vmem:[#allocation2 + $0x172] sm:$0xff]
      %v442 = vld [vmem:[%s208] sm:$0xff]
      %v443 = vld [vmem:[%s208 + $0x8] sm:$0xff]
      %v444 = vld [vmem:[%s208 + $0x18] sm:$0xff]
      %v445 = vld [vmem:[%s208 + $0x20] sm:$0xff]
      %v446 = vld [vmem:[%s208 + $0x30] sm:$0xff]
      %v447 = vld [vmem:[%s208 + $0x38] sm:$0xff]
      %v448 = vld [vmem:[%s208 + $0x48] sm:$0xff]
      %v449 = vld [vmem:[%s208 + $0x50] sm:$0xff]
      %v450 = vld [vmem:[%s208 + $0x60] sm:$0xff]
      %v451 = vld [vmem:[%s208 + $0x68] sm:$0xff]
      %v452 = vld [vmem:[%s208 + $0x78] sm:$0xff]
      %v453 = vld [vmem:[%s208 + $0x80] sm:$0xff]
      %v454 = vld [vmem:[%s208 + $0x90] sm:$0xff]
      %v455 = vld [vmem:[%s208 + $0x98] sm:$0xff]
      %v456 = vld [vmem:[%s208 + $0xa8] sm:$0xff]
      %v457 = vld [vmem:[%s208 + $0xb0] sm:$0xff]
      %v458 = vld [vmem:[%s208 + $0xc0] sm:$0xff]
      %v459 = vld [vmem:[%s208 + $0xc8] sm:$0xff]
      %v460 = vld [vmem:[%s208 + $0xd8] sm:$0xff]
      %v461 = vld [vmem:[%s208 + $0xe0] sm:$0xff]
      %v462 = vld [vmem:[%s208 + $0xf0] sm:$0xff]
      %v463 = vld [vmem:[%s208 + $0xf8] sm:$0xff]
      %v464 = vld [vmem:[%s208 + $0x108] sm:$0xff]
      %v465 = vld [vmem:[%s208 + $0x110] sm:$0xff]
      %v466 = vld [vmem:[%s208 + $0x120] sm:$0xff]
      %v467 = vld [vmem:[%s208 + $0x128] sm:$0xff]
      %v468 = vld [vmem:[%s208 + $0x138] sm:$0xff]
      %v469 = vld [vmem:[%s208 + $0x140] sm:$0xff]
      %v470 = vld [vmem:[%s208 + $0x150] sm:$0xff]
      %v471 = vld [vmem:[%s208 + $0x158] sm:$0xff]
      %v472 = vld [vmem:[%s208 + $0x168] sm:$0xff]
      %v473 = vld [vmem:[%s208 + $0x170] sm:$0xff]
      %v474 = vld [vmem:[%s208 + $0x1] sm:$0xff]
      %v475 = vld [vmem:[%s208 + $0x9] sm:$0xff]
      %v476 = vld [vmem:[%s208 + $0x19] sm:$0xff]
      %v477 = vld [vmem:[%s208 + $0x21] sm:$0xff]
      %v478 = vld [vmem:[%s208 + $0x31] sm:$0xff]
      %v479 = vld [vmem:[%s208 + $0x39] sm:$0xff]
      %v480 = vld [vmem:[%s208 + $0x49] sm:$0xff]
      %v481 = vld [vmem:[%s208 + $0x51] sm:$0xff]
      %v482 = vld [vmem:[%s208 + $0x61] sm:$0xff]
      %v483 = vld [vmem:[%s208 + $0x69] sm:$0xff]
      %v484 = vld [vmem:[%s208 + $0x79] sm:$0xff]
      %v485 = vld [vmem:[%s208 + $0x81] sm:$0xff]
      %v486 = vld [vmem:[%s208 + $0x91] sm:$0xff]
      %v487 = vld [vmem:[%s208 + $0x99] sm:$0xff]
      %v488 = vld [vmem:[%s208 + $0xa9] sm:$0xff]
      %v489 = vld [vmem:[%s208 + $0xb1] sm:$0xff]
      %v490 = vld [vmem:[%s208 + $0xc1] sm:$0xff]
      %v491 = vld [vmem:[%s208 + $0xc9] sm:$0xff]
      %v492 = vld [vmem:[%s208 + $0xd9] sm:$0xff]
      %v493 = vld [vmem:[%s208 + $0xe1] sm:$0xff]
      %v494 = vld [vmem:[%s208 + $0xf1] sm:$0xff]
      %v495 = vld [vmem:[%s208 + $0xf9] sm:$0xff]
      %v496 = vld [vmem:[%s208 + $0x109] sm:$0xff]
      %v497 = vld [vmem:[%s208 + $0x111] sm:$0xff]
      %v498 = vld [vmem:[%s208 + $0x121] sm:$0xff]
      %v499 = vld [vmem:[%s208 + $0x129] sm:$0xff]
      %v500 = vld [vmem:[%s208 + $0x139] sm:$0xff]
      %v501 = vld [vmem:[%s208 + $0x141] sm:$0xff]
      %v502 = vld [vmem:[%s208 + $0x151] sm:$0xff]
      %v503 = vld [vmem:[%s208 + $0x159] sm:$0xff]
      %v504 = vld [vmem:[%s208 + $0x169] sm:$0xff]
      %v505 = vld [vmem:[%s208 + $0x171] sm:$0xff]
      %v506 = vld [vmem:[%s208 + $0x2] sm:$0xff]
      %v507 = vld [vmem:[%s208 + $0xa] sm:$0xff]
      %v508 = vld [vmem:[%s208 + $0x1a] sm:$0xff]
      %v509 = vld [vmem:[%s208 + $0x22] sm:$0xff]
      %v510 = vld [vmem:[%s208 + $0x32] sm:$0xff]
      %v511 = vld [vmem:[%s208 + $0x3a] sm:$0xff]
      %v512 = vld [vmem:[%s208 + $0x4a] sm:$0xff]
      %v513 = vld [vmem:[%s208 + $0x52] sm:$0xff]
      %v514 = vld [vmem:[%s208 + $0x62] sm:$0xff]
      %v515 = vld [vmem:[%s208 + $0x6a] sm:$0xff]
      %v516 = vld [vmem:[%s208 + $0x7a] sm:$0xff]
      %v517 = vld [vmem:[%s208 + $0x82] sm:$0xff]
      %v518 = vld [vmem:[%s208 + $0x92] sm:$0xff]
      %v519 = vld [vmem:[%s208 + $0x9a] sm:$0xff]
      %v520 = vld [vmem:[%s208 + $0xaa] sm:$0xff]
      %v521 = vld [vmem:[%s208 + $0xb2] sm:$0xff]
      %v522 = vld [vmem:[%s208 + $0xc2] sm:$0xff]
      %v523 = vld [vmem:[%s208 + $0xca] sm:$0xff]
      %v524 = vld [vmem:[%s208 + $0xda] sm:$0xff]
      %v525 = vld [vmem:[%s208 + $0xe2] sm:$0xff]
      %v526 = vld [vmem:[%s208 + $0xf2] sm:$0xff]
      %v527 = vld [vmem:[%s208 + $0xfa] sm:$0xff]
      %v528 = vld [vmem:[%s208 + $0x10a] sm:$0xff]
      %v529 = vld [vmem:[%s208 + $0x112] sm:$0xff]
      %v530 = vld [vmem:[%s208 + $0x122] sm:$0xff]
      %v531 = vld [vmem:[%s208 + $0x12a] sm:$0xff]
      %v532 = vld [vmem:[%s208 + $0x13a] sm:$0xff]
      %v533 = vld [vmem:[%s208 + $0x142] sm:$0xff]
      %v534 = vld [vmem:[%s208 + $0x152] sm:$0xff]
      %v535 = vld [vmem:[%s208 + $0x15a] sm:$0xff]
      %v536 = vld [vmem:[%s208 + $0x16a] sm:$0xff]
      %v537 = vld [vmem:[%s208 + $0x172] sm:$0xff]
      %s538 = scalar_lea.vmem [#allocation2], 48
      %v539 = vld [vmem:[%s538] sm:$0xff]
      %v540 = vld [vmem:[%s538 + $0x8] sm:$0xff]
      %v541 = vld [vmem:[%s538 + $0x18] sm:$0xff]
      %v542 = vld [vmem:[%s538 + $0x20] sm:$0xff]
      %v543 = vld [vmem:[%s538 + $0x30] sm:$0xff]
      %v544 = vld [vmem:[%s538 + $0x38] sm:$0xff]
      %v545 = vld [vmem:[%s538 + $0x48] sm:$0xff]
      %v546 = vld [vmem:[%s538 + $0x50] sm:$0xff]
      %v547 = vld [vmem:[%s538 + $0x60] sm:$0xff]
      %v548 = vld [vmem:[%s538 + $0x68] sm:$0xff]
      %v549 = vld [vmem:[%s538 + $0x78] sm:$0xff]
      %v550 = vld [vmem:[%s538 + $0x80] sm:$0xff]
      %v551 = vld [vmem:[%s538 + $0x90] sm:$0xff]
      %v552 = vld [vmem:[%s538 + $0x98] sm:$0xff]
      %v553 = vld [vmem:[%s538 + $0xa8] sm:$0xff]
      %v554 = vld [vmem:[%s538 + $0xb0] sm:$0xff]
      %v555 = vld [vmem:[%s538 + $0xc0] sm:$0xff]
      %v556 = vld [vmem:[%s538 + $0xc8] sm:$0xff]
      %v557 = vld [vmem:[%s538 + $0xd8] sm:$0xff]
      %v558 = vld [vmem:[%s538 + $0xe0] sm:$0xff]
      %v559 = vld [vmem:[%s538 + $0xf0] sm:$0xff]
      %v560 = vld [vmem:[%s538 + $0xf8] sm:$0xff]
      %v561 = vld [vmem:[%s538 + $0x108] sm:$0xff]
      %v562 = vld [vmem:[%s538 + $0x110] sm:$0xff]
      %v563 = vld [vmem:[%s538 + $0x120] sm:$0xff]
      %v564 = vld [vmem:[%s538 + $0x128] sm:$0xff]
      %v565 = vld [vmem:[%s538 + $0x138] sm:$0xff]
      %v566 = vld [vmem:[%s538 + $0x140] sm:$0xff]
      %v567 = vld [vmem:[%s538 + $0x150] sm:$0xff]
      %v568 = vld [vmem:[%s538 + $0x158] sm:$0xff]
      %v569 = vld [vmem:[%s538 + $0x168] sm:$0xff]
      %v570 = vld [vmem:[%s538 + $0x170] sm:$0xff]
      %v571 = vld [vmem:[%s538 + $0x1] sm:$0xff]
      %v572 = vld [vmem:[%s538 + $0x9] sm:$0xff]
      %v573 = vld [vmem:[%s538 + $0x19] sm:$0xff]
      %v574 = vld [vmem:[%s538 + $0x21] sm:$0xff]
      %v575 = vld [vmem:[%s538 + $0x31] sm:$0xff]
      %v576 = vld [vmem:[%s538 + $0x39] sm:$0xff]
      %v577 = vld [vmem:[%s538 + $0x49] sm:$0xff]
      %v578 = vld [vmem:[%s538 + $0x51] sm:$0xff]
      %v579 = vld [vmem:[%s538 + $0x61] sm:$0xff]
      %v580 = vld [vmem:[%s538 + $0x69] sm:$0xff]
      %v581 = vld [vmem:[%s538 + $0x79] sm:$0xff]
      %v582 = vld [vmem:[%s538 + $0x81] sm:$0xff]
      %v583 = vld [vmem:[%s538 + $0x91] sm:$0xff]
      %v584 = vld [vmem:[%s538 + $0x99] sm:$0xff]
      %v585 = vld [vmem:[%s538 + $0xa9] sm:$0xff]
      %v586 = vld [vmem:[%s538 + $0xb1] sm:$0xff]
      %v587 = vld [vmem:[%s538 + $0xc1] sm:$0xff]
      %v588 = vld [vmem:[%s538 + $0xc9] sm:$0xff]
      %v589 = vld [vmem:[%s538 + $0xd9] sm:$0xff]
      %v590 = vld [vmem:[%s538 + $0xe1] sm:$0xff]
      %v591 = vld [vmem:[%s538 + $0xf1] sm:$0xff]
      %v592 = vld [vmem:[%s538 + $0xf9] sm:$0xff]
      %v593 = vld [vmem:[%s538 + $0x109] sm:$0xff]
      %v594 = vld [vmem:[%s538 + $0x111] sm:$0xff]
      %v595 = vld [vmem:[%s538 + $0x121] sm:$0xff]
      %v596 = vld [vmem:[%s538 + $0x129] sm:$0xff]
      %v597 = vld [vmem:[%s538 + $0x139] sm:$0xff]
      %v598 = vld [vmem:[%s538 + $0x141] sm:$0xff]
      %v599 = vld [vmem:[%s538 + $0x151] sm:$0xff]
      %v600 = vld [vmem:[%s538 + $0x159] sm:$0xff]
      %v601 = vld [vmem:[%s538 + $0x169] sm:$0xff]
      %v602 = vld [vmem:[%s538 + $0x171] sm:$0xff]
      %v603 = vld [vmem:[%s538 + $0x2] sm:$0xff]
      %v604 = vld [vmem:[%s538 + $0xa] sm:$0xff]
      %v605 = vld [vmem:[%s538 + $0x1a] sm:$0xff]
      %v606 = vld [vmem:[%s538 + $0x22] sm:$0xff]
      %v607 = vld [vmem:[%s538 + $0x32] sm:$0xff]
      %v608 = vld [vmem:[%s538 + $0x3a] sm:$0xff]
      %v609 = vld [vmem:[%s538 + $0x4a] sm:$0xff]
      %v610 = vld [vmem:[%s538 + $0x52] sm:$0xff]
      %v611 = vld [vmem:[%s538 + $0x62] sm:$0xff]
      %v612 = vld [vmem:[%s538 + $0x6a] sm:$0xff]
      %v613 = vld [vmem:[%s538 + $0x7a] sm:$0xff]
      %v614 = vld [vmem:[%s538 + $0x82] sm:$0xff]
      %v615 = vld [vmem:[%s538 + $0x92] sm:$0xff]
      %v616 = vld [vmem:[%s538 + $0x9a] sm:$0xff]
      %v617 = vld [vmem:[%s538 + $0xaa] sm:$0xff]
      %v618 = vld [vmem:[%s538 + $0xb2] sm:$0xff]
      %v619 = vld [vmem:[%s538 + $0xc2] sm:$0xff]
      %v620 = vld [vmem:[%s538 + $0xca] sm:$0xff]
      %v621 = vld [vmem:[%s538 + $0xda] sm:$0xff]
      %v622 = vld [vmem:[%s538 + $0xe2] sm:$0xff]
      %v623 = vld [vmem:[%s538 + $0xf2] sm:$0xff]
      %v624 = vld [vmem:[%s538 + $0xfa] sm:$0xff]
      %v625 = vld [vmem:[%s538 + $0x10a] sm:$0xff]
      %v626 = vld [vmem:[%s538 + $0x112] sm:$0xff]
      %v627 = vld [vmem:[%s538 + $0x122] sm:$0xff]
      %v628 = vld [vmem:[%s538 + $0x12a] sm:$0xff]
      %v629 = vld [vmem:[%s538 + $0x13a] sm:$0xff]
      %v630 = vld [vmem:[%s538 + $0x142] sm:$0xff]
      %v631 = vld [vmem:[%s538 + $0x152] sm:$0xff]
      %v632 = vld [vmem:[%s538 + $0x15a] sm:$0xff]
      %v633 = vld [vmem:[%s538 + $0x16a] sm:$0xff]
      %v634 = vld [vmem:[%s538 + $0x172] sm:$0xff]
      %667 = vrot.lane.b32.xlu0 %v378, 4
      %v668 = vpop.permute.xlu0 %667
      %669 = vrot.lane.b32.xlu0 %v379, 4
      %v670 = vpop.permute.xlu0 %669
      %671 = vrot.lane.b32.xlu0 %v380, 4
      %v672 = vpop.permute.xlu0 %671
      %673 = vrot.lane.b32.xlu0 %v381, 4
      %v674 = vpop.permute.xlu0 %673
      %675 = vrot.lane.b32.xlu0 %v382, 4
      %v676 = vpop.permute.xlu0 %675
      %677 = vrot.lane.b32.xlu0 %v383, 4
      %v678 = vpop.permute.xlu0 %677
      %679 = vrot.lane.b32.xlu0 %v384, 4
      %v680 = vpop.permute.xlu0 %679
      %681 = vrot.lane.b32.xlu0 %v385, 4
      %v682 = vpop.permute.xlu0 %681
      %683 = vrot.lane.b32.xlu0 %v386, 4
      %v684 = vpop.permute.xlu0 %683
      %685 = vrot.lane.b32.xlu0 %v387, 4
      %v686 = vpop.permute.xlu0 %685
      %687 = vrot.lane.b32.xlu0 %v388, 4
      %v688 = vpop.permute.xlu0 %687
      %689 = vrot.lane.b32.xlu0 %v389, 4
      %v690 = vpop.permute.xlu0 %689
      %691 = vrot.lane.b32.xlu0 %v390, 4
      %v692 = vpop.permute.xlu0 %691
      %693 = vrot.lane.b32.xlu0 %v391, 4
      %v694 = vpop.permute.xlu0 %693
      %695 = vrot.lane.b32.xlu0 %v392, 4
      %v696 = vpop.permute.xlu0 %695
      %697 = vrot.lane.b32.xlu0 %v393, 4
      %v698 = vpop.permute.xlu0 %697
      %699 = vrot.lane.b32.xlu0 %v394, 4
      %v700 = vpop.permute.xlu0 %699
      %701 = vrot.lane.b32.xlu0 %v395, 4
      %v702 = vpop.permute.xlu0 %701
      %703 = vrot.lane.b32.xlu0 %v396, 4
      %v704 = vpop.permute.xlu0 %703
      %705 = vrot.lane.b32.xlu0 %v397, 4
      %v706 = vpop.permute.xlu0 %705
      %707 = vrot.lane.b32.xlu0 %v398, 4
      %v708 = vpop.permute.xlu0 %707
      %709 = vrot.lane.b32.xlu0 %v399, 4
      %v710 = vpop.permute.xlu0 %709
      %711 = vrot.lane.b32.xlu0 %v400, 4
      %v712 = vpop.permute.xlu0 %711
      %713 = vrot.lane.b32.xlu0 %v401, 4
      %v714 = vpop.permute.xlu0 %713
      %715 = vrot.lane.b32.xlu0 %v402, 4
      %v716 = vpop.permute.xlu0 %715
      %717 = vrot.lane.b32.xlu0 %v403, 4
      %v718 = vpop.permute.xlu0 %717
      %719 = vrot.lane.b32.xlu0 %v404, 4
      %v720 = vpop.permute.xlu0 %719
      %721 = vrot.lane.b32.xlu0 %v405, 4
      %v722 = vpop.permute.xlu0 %721
      %723 = vrot.lane.b32.xlu0 %v406, 4
      %v724 = vpop.permute.xlu0 %723
      %725 = vrot.lane.b32.xlu0 %v407, 4
      %v726 = vpop.permute.xlu0 %725
      %727 = vrot.lane.b32.xlu0 %v408, 4
      %v728 = vpop.permute.xlu0 %727
      %729 = vrot.lane.b32.xlu0 %v409, 4
      %v730 = vpop.permute.xlu0 %729
      %795 = vrot.lane.b32.xlu0 %v410, 8
      %v796 = vpop.permute.xlu0 %795
      %797 = vrot.lane.b32.xlu0 %v411, 8
      %v798 = vpop.permute.xlu0 %797
      %799 = vrot.lane.b32.xlu0 %v412, 8
      %v800 = vpop.permute.xlu0 %799
      %801 = vrot.lane.b32.xlu0 %v413, 8
      %v802 = vpop.permute.xlu0 %801
      %803 = vrot.lane.b32.xlu0 %v414, 8
      %v804 = vpop.permute.xlu0 %803
      %805 = vrot.lane.b32.xlu0 %v415, 8
      %v806 = vpop.permute.xlu0 %805
      %807 = vrot.lane.b32.xlu0 %v416, 8
      %v808 = vpop.permute.xlu0 %807
      %809 = vrot.lane.b32.xlu0 %v417, 8
      %v810 = vpop.permute.xlu0 %809
      %811 = vrot.lane.b32.xlu0 %v418, 8
      %v812 = vpop.permute.xlu0 %811
      %813 = vrot.lane.b32.xlu0 %v419, 8
      %v814 = vpop.permute.xlu0 %813
      %815 = vrot.lane.b32.xlu0 %v420, 8
      %v816 = vpop.permute.xlu0 %815
      %817 = vrot.lane.b32.xlu0 %v421, 8
      %v818 = vpop.permute.xlu0 %817
      %819 = vrot.lane.b32.xlu0 %v422, 8
      %v820 = vpop.permute.xlu0 %819
      %821 = vrot.lane.b32.xlu0 %v423, 8
      %v822 = vpop.permute.xlu0 %821
      %823 = vrot.lane.b32.xlu0 %v424, 8
      %v824 = vpop.permute.xlu0 %823
      %825 = vrot.lane.b32.xlu0 %v425, 8
      %v826 = vpop.permute.xlu0 %825
      %827 = vrot.lane.b32.xlu0 %v426, 8
      %v828 = vpop.permute.xlu0 %827
      %829 = vrot.lane.b32.xlu0 %v427, 8
      %v830 = vpop.permute.xlu0 %829
      %831 = vrot.lane.b32.xlu0 %v428, 8
      %v832 = vpop.permute.xlu0 %831
      %833 = vrot.lane.b32.xlu0 %v429, 8
      %v834 = vpop.permute.xlu0 %833
      %835 = vrot.lane.b32.xlu0 %v430, 8
      %v836 = vpop.permute.xlu0 %835
      %837 = vrot.lane.b32.xlu0 %v431, 8
      %v838 = vpop.permute.xlu0 %837
      %839 = vrot.lane.b32.xlu0 %v432, 8
      %v840 = vpop.permute.xlu0 %839
      %841 = vrot.lane.b32.xlu0 %v433, 8
      %v842 = vpop.permute.xlu0 %841
      %843 = vrot.lane.b32.xlu0 %v434, 8
      %v844 = vpop.permute.xlu0 %843
      %845 = vrot.lane.b32.xlu0 %v435, 8
      %v846 = vpop.permute.xlu0 %845
      %847 = vrot.lane.b32.xlu0 %v436, 8
      %v848 = vpop.permute.xlu0 %847
      %849 = vrot.lane.b32.xlu0 %v437, 8
      %v850 = vpop.permute.xlu0 %849
      %851 = vrot.lane.b32.xlu0 %v438, 8
      %v852 = vpop.permute.xlu0 %851
      %853 = vrot.lane.b32.xlu0 %v439, 8
      %v854 = vpop.permute.xlu0 %853
      %855 = vrot.lane.b32.xlu0 %v440, 8
      %v856 = vpop.permute.xlu0 %855
      %857 = vrot.lane.b32.xlu0 %v441, 8
      %v858 = vpop.permute.xlu0 %857
      %923 = vrot.lane.b32.xlu0 %v442, 12
      %v924 = vpop.permute.xlu0 %923
      %925 = vrot.lane.b32.xlu0 %v443, 12
      %v926 = vpop.permute.xlu0 %925
      %927 = vrot.lane.b32.xlu0 %v444, 12
      %v928 = vpop.permute.xlu0 %927
      %929 = vrot.lane.b32.xlu0 %v445, 12
      %v930 = vpop.permute.xlu0 %929
      %931 = vrot.lane.b32.xlu0 %v446, 12
      %v932 = vpop.permute.xlu0 %931
      %933 = vrot.lane.b32.xlu0 %v447, 12
      %v934 = vpop.permute.xlu0 %933
      %935 = vrot.lane.b32.xlu0 %v448, 12
      %v936 = vpop.permute.xlu0 %935
      %937 = vrot.lane.b32.xlu0 %v449, 12
      %v938 = vpop.permute.xlu0 %937
      %939 = vrot.lane.b32.xlu0 %v450, 12
      %v940 = vpop.permute.xlu0 %939
      %941 = vrot.lane.b32.xlu0 %v451, 12
      %v942 = vpop.permute.xlu0 %941
      %943 = vrot.lane.b32.xlu0 %v452, 12
      %v944 = vpop.permute.xlu0 %943
      %945 = vrot.lane.b32.xlu0 %v453, 12
      %v946 = vpop.permute.xlu0 %945
      %947 = vrot.lane.b32.xlu0 %v454, 12
      %v948 = vpop.permute.xlu0 %947
      %949 = vrot.lane.b32.xlu0 %v455, 12
      %v950 = vpop.permute.xlu0 %949
      %951 = vrot.lane.b32.xlu0 %v456, 12
      %v952 = vpop.permute.xlu0 %951
      %953 = vrot.lane.b32.xlu0 %v457, 12
      %v954 = vpop.permute.xlu0 %953
      %955 = vrot.lane.b32.xlu0 %v458, 12
      %v956 = vpop.permute.xlu0 %955
      %957 = vrot.lane.b32.xlu0 %v459, 12
      %v958 = vpop.permute.xlu0 %957
      %959 = vrot.lane.b32.xlu0 %v460, 12
      %v960 = vpop.permute.xlu0 %959
      %961 = vrot.lane.b32.xlu0 %v461, 12
      %v962 = vpop.permute.xlu0 %961
      %963 = vrot.lane.b32.xlu0 %v462, 12
      %v964 = vpop.permute.xlu0 %963
      %965 = vrot.lane.b32.xlu0 %v463, 12
      %v966 = vpop.permute.xlu0 %965
      %967 = vrot.lane.b32.xlu0 %v464, 12
      %v968 = vpop.permute.xlu0 %967
      %969 = vrot.lane.b32.xlu0 %v465, 12
      %v970 = vpop.permute.xlu0 %969
      %971 = vrot.lane.b32.xlu0 %v466, 12
      %v972 = vpop.permute.xlu0 %971
      %973 = vrot.lane.b32.xlu0 %v467, 12
      %v974 = vpop.permute.xlu0 %973
      %975 = vrot.lane.b32.xlu0 %v468, 12
      %v976 = vpop.permute.xlu0 %975
      %977 = vrot.lane.b32.xlu0 %v469, 12
      %v978 = vpop.permute.xlu0 %977
      %979 = vrot.lane.b32.xlu0 %v470, 12
      %v980 = vpop.permute.xlu0 %979
      %981 = vrot.lane.b32.xlu0 %v471, 12
      %v982 = vpop.permute.xlu0 %981
      %983 = vrot.lane.b32.xlu0 %v472, 12
      %v984 = vpop.permute.xlu0 %983
      %985 = vrot.lane.b32.xlu0 %v473, 12
      %v986 = vpop.permute.xlu0 %985
      %1051 = vrot.lane.b32.xlu0 %v474, 16
      %v1052 = vpop.permute.xlu0 %1051
      %1053 = vrot.lane.b32.xlu0 %v475, 16
      %v1054 = vpop.permute.xlu0 %1053
      %1055 = vrot.lane.b32.xlu0 %v476, 16
      %v1056 = vpop.permute.xlu0 %1055
      %1057 = vrot.lane.b32.xlu0 %v477, 16
      %v1058 = vpop.permute.xlu0 %1057
      %1059 = vrot.lane.b32.xlu0 %v478, 16
      %v1060 = vpop.permute.xlu0 %1059
      %1061 = vrot.lane.b32.xlu0 %v479, 16
      %v1062 = vpop.permute.xlu0 %1061
      %1063 = vrot.lane.b32.xlu0 %v480, 16
      %v1064 = vpop.permute.xlu0 %1063
      %1065 = vrot.lane.b32.xlu0 %v481, 16
      %v1066 = vpop.permute.xlu0 %1065
      %1067 = vrot.lane.b32.xlu0 %v482, 16
      %v1068 = vpop.permute.xlu0 %1067
      %1069 = vrot.lane.b32.xlu0 %v483, 16
      %v1070 = vpop.permute.xlu0 %1069
      %1071 = vrot.lane.b32.xlu0 %v484, 16
      %v1072 = vpop.permute.xlu0 %1071
      %1073 = vrot.lane.b32.xlu0 %v485, 16
      %v1074 = vpop.permute.xlu0 %1073
      %1075 = vrot.lane.b32.xlu0 %v486, 16
      %v1076 = vpop.permute.xlu0 %1075
      %1077 = vrot.lane.b32.xlu0 %v487, 16
      %v1078 = vpop.permute.xlu0 %1077
      %1079 = vrot.lane.b32.xlu0 %v488, 16
      %v1080 = vpop.permute.xlu0 %1079
      %1081 = vrot.lane.b32.xlu0 %v489, 16
      %v1082 = vpop.permute.xlu0 %1081
      %1083 = vrot.lane.b32.xlu0 %v490, 16
      %v1084 = vpop.permute.xlu0 %1083
      %1085 = vrot.lane.b32.xlu0 %v491, 16
      %v1086 = vpop.permute.xlu0 %1085
      %1087 = vrot.lane.b32.xlu0 %v492, 16
      %v1088 = vpop.permute.xlu0 %1087
      %1089 = vrot.lane.b32.xlu0 %v493, 16
      %v1090 = vpop.permute.xlu0 %1089
      %1091 = vrot.lane.b32.xlu0 %v494, 16
      %v1092 = vpop.permute.xlu0 %1091
      %1093 = vrot.lane.b32.xlu0 %v495, 16
      %v1094 = vpop.permute.xlu0 %1093
      %1095 = vrot.lane.b32.xlu0 %v496, 16
      %v1096 = vpop.permute.xlu0 %1095
      %1097 = vrot.lane.b32.xlu0 %v497, 16
      %v1098 = vpop.permute.xlu0 %1097
      %1099 = vrot.lane.b32.xlu0 %v498, 16
      %v1100 = vpop.permute.xlu0 %1099
      %1101 = vrot.lane.b32.xlu0 %v499, 16
      %v1102 = vpop.permute.xlu0 %1101
      %1103 = vrot.lane.b32.xlu0 %v500, 16
      %v1104 = vpop.permute.xlu0 %1103
      %1105 = vrot.lane.b32.xlu0 %v501, 16
      %v1106 = vpop.permute.xlu0 %1105
      %1107 = vrot.lane.b32.xlu0 %v502, 16
      %v1108 = vpop.permute.xlu0 %1107
      %1109 = vrot.lane.b32.xlu0 %v503, 16
      %v1110 = vpop.permute.xlu0 %1109
      %1111 = vrot.lane.b32.xlu0 %v504, 16
      %v1112 = vpop.permute.xlu0 %1111
      %1113 = vrot.lane.b32.xlu0 %v505, 16
      %v1114 = vpop.permute.xlu0 %1113
      %1179 = vrot.lane.b32.xlu0 %v506, 20
      %v1180 = vpop.permute.xlu0 %1179
      %1181 = vrot.lane.b32.xlu0 %v507, 20
      %v1182 = vpop.permute.xlu0 %1181
      %1183 = vrot.lane.b32.xlu0 %v508, 20
      %v1184 = vpop.permute.xlu0 %1183
      %1185 = vrot.lane.b32.xlu0 %v509, 20
      %v1186 = vpop.permute.xlu0 %1185
      %1187 = vrot.lane.b32.xlu0 %v510, 20
      %v1188 = vpop.permute.xlu0 %1187
      %1189 = vrot.lane.b32.xlu0 %v511, 20
      %v1190 = vpop.permute.xlu0 %1189
      %1191 = vrot.lane.b32.xlu0 %v512, 20
      %v1192 = vpop.permute.xlu0 %1191
      %1193 = vrot.lane.b32.xlu0 %v513, 20
      %v1194 = vpop.permute.xlu0 %1193
      %1195 = vrot.lane.b32.xlu0 %v514, 20
      %v1196 = vpop.permute.xlu0 %1195
      %1197 = vrot.lane.b32.xlu0 %v515, 20
      %v1198 = vpop.permute.xlu0 %1197
      %1199 = vrot.lane.b32.xlu0 %v516, 20
      %v1200 = vpop.permute.xlu0 %1199
      %1201 = vrot.lane.b32.xlu0 %v517, 20
      %v1202 = vpop.permute.xlu0 %1201
      %1203 = vrot.lane.b32.xlu0 %v518, 20
      %v1204 = vpop.permute.xlu0 %1203
      %1205 = vrot.lane.b32.xlu0 %v519, 20
      %v1206 = vpop.permute.xlu0 %1205
      %1207 = vrot.lane.b32.xlu0 %v520, 20
      %v1208 = vpop.permute.xlu0 %1207
      %1209 = vrot.lane.b32.xlu0 %v521, 20
      %v1210 = vpop.permute.xlu0 %1209
      %1211 = vrot.lane.b32.xlu0 %v522, 20
      %v1212 = vpop.permute.xlu0 %1211
      %1213 = vrot.lane.b32.xlu0 %v523, 20
      %v1214 = vpop.permute.xlu0 %1213
      %1215 = vrot.lane.b32.xlu0 %v524, 20
      %v1216 = vpop.permute.xlu0 %1215
      %1217 = vrot.lane.b32.xlu0 %v525, 20
      %v1218 = vpop.permute.xlu0 %1217
      %1219 = vrot.lane.b32.xlu0 %v526, 20
      %v1220 = vpop.permute.xlu0 %1219
      %1221 = vrot.lane.b32.xlu0 %v527, 20
      %v1222 = vpop.permute.xlu0 %1221
      %1223 = vrot.lane.b32.xlu0 %v528, 20
      %v1224 = vpop.permute.xlu0 %1223
      %1225 = vrot.lane.b32.xlu0 %v529, 20
      %v1226 = vpop.permute.xlu0 %1225
      %1227 = vrot.lane.b32.xlu0 %v530, 20
      %v1228 = vpop.permute.xlu0 %1227
      %1229 = vrot.lane.b32.xlu0 %v531, 20
      %v1230 = vpop.permute.xlu0 %1229
      %1231 = vrot.lane.b32.xlu0 %v532, 20
      %v1232 = vpop.permute.xlu0 %1231
      %1233 = vrot.lane.b32.xlu0 %v533, 20
      %v1234 = vpop.permute.xlu0 %1233
      %1235 = vrot.lane.b32.xlu0 %v534, 20
      %v1236 = vpop.permute.xlu0 %1235
      %1237 = vrot.lane.b32.xlu0 %v535, 20
      %v1238 = vpop.permute.xlu0 %1237
      %1239 = vrot.lane.b32.xlu0 %v536, 20
      %v1240 = vpop.permute.xlu0 %1239
      %1241 = vrot.lane.b32.xlu0 %v537, 20
      %v1242 = vpop.permute.xlu0 %1241
      %1307 = vrot.lane.b32.xlu0 %v539, 24
      %v1308 = vpop.permute.xlu0 %1307
      %1309 = vrot.lane.b32.xlu0 %v540, 24
      %v1310 = vpop.permute.xlu0 %1309
      %1311 = vrot.lane.b32.xlu0 %v541, 24
      %v1312 = vpop.permute.xlu0 %1311
      %1313 = vrot.lane.b32.xlu0 %v542, 24
      %v1314 = vpop.permute.xlu0 %1313
      %1315 = vrot.lane.b32.xlu0 %v543, 24
      %v1316 = vpop.permute.xlu0 %1315
      %1317 = vrot.lane.b32.xlu0 %v544, 24
      %v1318 = vpop.permute.xlu0 %1317
      %1319 = vrot.lane.b32.xlu0 %v545, 24
      %v1320 = vpop.permute.xlu0 %1319
      %1321 = vrot.lane.b32.xlu0 %v546, 24
      %v1322 = vpop.permute.xlu0 %1321
      %1323 = vrot.lane.b32.xlu0 %v547, 24
      %v1324 = vpop.permute.xlu0 %1323
      %1325 = vrot.lane.b32.xlu0 %v548, 24
      %v1326 = vpop.permute.xlu0 %1325
      %1327 = vrot.lane.b32.xlu0 %v549, 24
      %v1328 = vpop.permute.xlu0 %1327
      %1329 = vrot.lane.b32.xlu0 %v550, 24
      %v1330 = vpop.permute.xlu0 %1329
      %1331 = vrot.lane.b32.xlu0 %v551, 24
      %v1332 = vpop.permute.xlu0 %1331
      %1333 = vrot.lane.b32.xlu0 %v552, 24
      %v1334 = vpop.permute.xlu0 %1333
      %1335 = vrot.lane.b32.xlu0 %v553, 24
      %v1336 = vpop.permute.xlu0 %1335
      %1337 = vrot.lane.b32.xlu0 %v554, 24
      %v1338 = vpop.permute.xlu0 %1337
      %1339 = vrot.lane.b32.xlu0 %v555, 24
      %v1340 = vpop.permute.xlu0 %1339
      %1341 = vrot.lane.b32.xlu0 %v556, 24
      %v1342 = vpop.permute.xlu0 %1341
      %1343 = vrot.lane.b32.xlu0 %v557, 24
      %v1344 = vpop.permute.xlu0 %1343
      %1345 = vrot.lane.b32.xlu0 %v558, 24
      %v1346 = vpop.permute.xlu0 %1345
      %1347 = vrot.lane.b32.xlu0 %v559, 24
      %v1348 = vpop.permute.xlu0 %1347
      %1349 = vrot.lane.b32.xlu0 %v560, 24
      %v1350 = vpop.permute.xlu0 %1349
      %1351 = vrot.lane.b32.xlu0 %v561, 24
      %v1352 = vpop.permute.xlu0 %1351
      %1353 = vrot.lane.b32.xlu0 %v562, 24
      %v1354 = vpop.permute.xlu0 %1353
      %1355 = vrot.lane.b32.xlu0 %v563, 24
      %v1356 = vpop.permute.xlu0 %1355
      %1357 = vrot.lane.b32.xlu0 %v564, 24
      %v1358 = vpop.permute.xlu0 %1357
      %1359 = vrot.lane.b32.xlu0 %v565, 24
      %v1360 = vpop.permute.xlu0 %1359
      %1361 = vrot.lane.b32.xlu0 %v566, 24
      %v1362 = vpop.permute.xlu0 %1361
      %1363 = vrot.lane.b32.xlu0 %v567, 24
      %v1364 = vpop.permute.xlu0 %1363
      %1365 = vrot.lane.b32.xlu0 %v568, 24
      %v1366 = vpop.permute.xlu0 %1365
      %1367 = vrot.lane.b32.xlu0 %v569, 24
      %v1368 = vpop.permute.xlu0 %1367
      %1369 = vrot.lane.b32.xlu0 %v570, 24
      %v1370 = vpop.permute.xlu0 %1369
      %1435 = vrot.lane.b32.xlu0 %v571, 28
      %v1436 = vpop.permute.xlu0 %1435
      %1437 = vrot.lane.b32.xlu0 %v572, 28
      %v1438 = vpop.permute.xlu0 %1437
      %1439 = vrot.lane.b32.xlu0 %v573, 28
      %v1440 = vpop.permute.xlu0 %1439
      %1441 = vrot.lane.b32.xlu0 %v574, 28
      %v1442 = vpop.permute.xlu0 %1441
      %1443 = vrot.lane.b32.xlu0 %v575, 28
      %v1444 = vpop.permute.xlu0 %1443
      %1445 = vrot.lane.b32.xlu0 %v576, 28
      %v1446 = vpop.permute.xlu0 %1445
      %1447 = vrot.lane.b32.xlu0 %v577, 28
      %v1448 = vpop.permute.xlu0 %1447
      %1449 = vrot.lane.b32.xlu0 %v578, 28
      %v1450 = vpop.permute.xlu0 %1449
      %1451 = vrot.lane.b32.xlu0 %v579, 28
      %v1452 = vpop.permute.xlu0 %1451
      %1453 = vrot.lane.b32.xlu0 %v580, 28
      %v1454 = vpop.permute.xlu0 %1453
      %1455 = vrot.lane.b32.xlu0 %v581, 28
      %v1456 = vpop.permute.xlu0 %1455
      %1457 = vrot.lane.b32.xlu0 %v582, 28
      %v1458 = vpop.permute.xlu0 %1457
      %1459 = vrot.lane.b32.xlu0 %v583, 28
      %v1460 = vpop.permute.xlu0 %1459
      %1461 = vrot.lane.b32.xlu0 %v584, 28
      %v1462 = vpop.permute.xlu0 %1461
      %1463 = vrot.lane.b32.xlu0 %v585, 28
      %v1464 = vpop.permute.xlu0 %1463
      %1465 = vrot.lane.b32.xlu0 %v586, 28
      %v1466 = vpop.permute.xlu0 %1465
      %1467 = vrot.lane.b32.xlu0 %v587, 28
      %v1468 = vpop.permute.xlu0 %1467
      %1469 = vrot.lane.b32.xlu0 %v588, 28
      %v1470 = vpop.permute.xlu0 %1469
      %1471 = vrot.lane.b32.xlu0 %v589, 28
      %v1472 = vpop.permute.xlu0 %1471
      %1473 = vrot.lane.b32.xlu0 %v590, 28
      %v1474 = vpop.permute.xlu0 %1473
      %1475 = vrot.lane.b32.xlu0 %v591, 28
      %v1476 = vpop.permute.xlu0 %1475
      %1477 = vrot.lane.b32.xlu0 %v592, 28
      %v1478 = vpop.permute.xlu0 %1477
      %1479 = vrot.lane.b32.xlu0 %v593, 28
      %v1480 = vpop.permute.xlu0 %1479
      %1481 = vrot.lane.b32.xlu0 %v594, 28
      %v1482 = vpop.permute.xlu0 %1481
      %1483 = vrot.lane.b32.xlu0 %v595, 28
      %v1484 = vpop.permute.xlu0 %1483
      %1485 = vrot.lane.b32.xlu0 %v596, 28
      %v1486 = vpop.permute.xlu0 %1485
      %1487 = vrot.lane.b32.xlu0 %v597, 28
      %v1488 = vpop.permute.xlu0 %1487
      %1489 = vrot.lane.b32.xlu0 %v598, 28
      %v1490 = vpop.permute.xlu0 %1489
      %1491 = vrot.lane.b32.xlu0 %v599, 28
      %v1492 = vpop.permute.xlu0 %1491
      %1493 = vrot.lane.b32.xlu0 %v600, 28
      %v1494 = vpop.permute.xlu0 %1493
      %1495 = vrot.lane.b32.xlu0 %v601, 28
      %v1496 = vpop.permute.xlu0 %1495
      %1497 = vrot.lane.b32.xlu0 %v602, 28
      %v1498 = vpop.permute.xlu0 %1497
      %1563 = vrot.lane.b32.xlu0 %v603, 32
      %v1564 = vpop.permute.xlu0 %1563
      %1565 = vrot.lane.b32.xlu0 %v604, 32
      %v1566 = vpop.permute.xlu0 %1565
      %1567 = vrot.lane.b32.xlu0 %v605, 32
      %v1568 = vpop.permute.xlu0 %1567
      %1569 = vrot.lane.b32.xlu0 %v606, 32
      %v1570 = vpop.permute.xlu0 %1569
      %1571 = vrot.lane.b32.xlu0 %v607, 32
      %v1572 = vpop.permute.xlu0 %1571
      %1573 = vrot.lane.b32.xlu0 %v608, 32
      %v1574 = vpop.permute.xlu0 %1573
      %1575 = vrot.lane.b32.xlu0 %v609, 32
      %v1576 = vpop.permute.xlu0 %1575
      %1577 = vrot.lane.b32.xlu0 %v610, 32
      %v1578 = vpop.permute.xlu0 %1577
      %1579 = vrot.lane.b32.xlu0 %v611, 32
      %v1580 = vpop.permute.xlu0 %1579
      %1581 = vrot.lane.b32.xlu0 %v612, 32
      %v1582 = vpop.permute.xlu0 %1581
      %1583 = vrot.lane.b32.xlu0 %v613, 32
      %v1584 = vpop.permute.xlu0 %1583
      %1585 = vrot.lane.b32.xlu0 %v614, 32
      %v1586 = vpop.permute.xlu0 %1585
      %1587 = vrot.lane.b32.xlu0 %v615, 32
      %v1588 = vpop.permute.xlu0 %1587
      %1589 = vrot.lane.b32.xlu0 %v616, 32
      %v1590 = vpop.permute.xlu0 %1589
      %1591 = vrot.lane.b32.xlu0 %v617, 32
      %v1592 = vpop.permute.xlu0 %1591
      %1593 = vrot.lane.b32.xlu0 %v618, 32
      %v1594 = vpop.permute.xlu0 %1593
      %1595 = vrot.lane.b32.xlu0 %v619, 32
      %v1596 = vpop.permute.xlu0 %1595
      %1597 = vrot.lane.b32.xlu0 %v620, 32
      %v1598 = vpop.permute.xlu0 %1597
      %1599 = vrot.lane.b32.xlu0 %v621, 32
      %v1600 = vpop.permute.xlu0 %1599
      %1601 = vrot.lane.b32.xlu0 %v622, 32
      %v1602 = vpop.permute.xlu0 %1601
      %1603 = vrot.lane.b32.xlu0 %v623, 32
      %v1604 = vpop.permute.xlu0 %1603
      %1605 = vrot.lane.b32.xlu0 %v624, 32
      %v1606 = vpop.permute.xlu0 %1605
      %1607 = vrot.lane.b32.xlu0 %v625, 32
      %v1608 = vpop.permute.xlu0 %1607
      %1609 = vrot.lane.b32.xlu0 %v626, 32
      %v1610 = vpop.permute.xlu0 %1609
      %1611 = vrot.lane.b32.xlu0 %v627, 32
      %v1612 = vpop.permute.xlu0 %1611
      %1613 = vrot.lane.b32.xlu0 %v628, 32
      %v1614 = vpop.permute.xlu0 %1613
      %1615 = vrot.lane.b32.xlu0 %v629, 32
      %v1616 = vpop.permute.xlu0 %1615
      %1617 = vrot.lane.b32.xlu0 %v630, 32
      %v1618 = vpop.permute.xlu0 %1617
      %1619 = vrot.lane.b32.xlu0 %v631, 32
      %v1620 = vpop.permute.xlu0 %1619
      %1621 = vrot.lane.b32.xlu0 %v632, 32
      %v1622 = vpop.permute.xlu0 %1621
      %1623 = vrot.lane.b32.xlu0 %v633, 32
      %v1624 = vpop.permute.xlu0 %1623
      %1625 = vrot.lane.b32.xlu0 %v634, 32
      %v1626 = vpop.permute.xlu0 %1625
      %v1659 = vsel %vm199, %v346, %v668
      %v1660 = vsel %vm199, %v347, %v670
      %v1661 = vsel %vm199, %v348, %v672
      %v1662 = vsel %vm199, %v349, %v674
      %v1663 = vsel %vm199, %v350, %v676
      %v1664 = vsel %vm199, %v351, %v678
      %v1665 = vsel %vm199, %v352, %v680
      %v1666 = vsel %vm199, %v353, %v682
      %v1667 = vsel %vm199, %v354, %v684
      %v1668 = vsel %vm199, %v355, %v686
      %v1669 = vsel %vm199, %v356, %v688
      %v1670 = vsel %vm199, %v357, %v690
      %v1671 = vsel %vm199, %v358, %v692
      %v1672 = vsel %vm199, %v359, %v694
      %v1673 = vsel %vm199, %v360, %v696
      %v1674 = vsel %vm199, %v361, %v698
      %v1675 = vsel %vm199, %v362, %v700
      %v1676 = vsel %vm199, %v363, %v702
      %v1677 = vsel %vm199, %v364, %v704
      %v1678 = vsel %vm199, %v365, %v706
      %v1679 = vsel %vm199, %v366, %v708
      %v1680 = vsel %vm199, %v367, %v710
      %v1681 = vsel %vm199, %v368, %v712
      %v1682 = vsel %vm199, %v369, %v714
      %v1683 = vsel %vm199, %v370, %v716
      %v1684 = vsel %vm199, %v371, %v718
      %v1685 = vsel %vm199, %v372, %v720
      %v1686 = vsel %vm199, %v373, %v722
      %v1687 = vsel %vm199, %v374, %v724
      %v1688 = vsel %vm199, %v375, %v726
      %v1689 = vsel %vm199, %v376, %v728
      %v1690 = vsel %vm199, %v377, %v730
      %vm1691 = vcmask 64512
      %v1692 = vsel %vm1691, %v1659, %v796
      %v1693 = vsel %vm1691, %v1660, %v798
      %v1694 = vsel %vm1691, %v1661, %v800
      %v1695 = vsel %vm1691, %v1662, %v802
      %v1696 = vsel %vm1691, %v1663, %v804
      %v1697 = vsel %vm1691, %v1664, %v806
      %v1698 = vsel %vm1691, %v1665, %v808
      %v1699 = vsel %vm1691, %v1666, %v810
      %v1700 = vsel %vm1691, %v1667, %v812
      %v1701 = vsel %vm1691, %v1668, %v814
      %v1702 = vsel %vm1691, %v1669, %v816
      %v1703 = vsel %vm1691, %v1670, %v818
      %v1704 = vsel %vm1691, %v1671, %v820
      %v1705 = vsel %vm1691, %v1672, %v822
      %v1706 = vsel %vm1691, %v1673, %v824
      %v1707 = vsel %vm1691, %v1674, %v826
      %v1708 = vsel %vm1691, %v1675, %v828
      %v1709 = vsel %vm1691, %v1676, %v830
      %v1710 = vsel %vm1691, %v1677, %v832
      %v1711 = vsel %vm1691, %v1678, %v834
      %v1712 = vsel %vm1691, %v1679, %v836
      %v1713 = vsel %vm1691, %v1680, %v838
      %v1714 = vsel %vm1691, %v1681, %v840
      %v1715 = vsel %vm1691, %v1682, %v842
      %v1716 = vsel %vm1691, %v1683, %v844
      %v1717 = vsel %vm1691, %v1684, %v846
      %v1718 = vsel %vm1691, %v1685, %v848
      %v1719 = vsel %vm1691, %v1686, %v850
      %v1720 = vsel %vm1691, %v1687, %v852
      %v1721 = vsel %vm1691, %v1688, %v854
      %v1722 = vsel %vm1691, %v1689, %v856
      %v1723 = vsel %vm1691, %v1690, %v858
      %vm1724 = vcmask 97280
      %v1725 = vsel %vm1724, %v1692, %v924
      %v1726 = vsel %vm1724, %v1693, %v926
      %v1727 = vsel %vm1724, %v1694, %v928
      %v1728 = vsel %vm1724, %v1695, %v930
      %v1729 = vsel %vm1724, %v1696, %v932
      %v1730 = vsel %vm1724, %v1697, %v934
      %v1731 = vsel %vm1724, %v1698, %v936
      %v1732 = vsel %vm1724, %v1699, %v938
      %v1733 = vsel %vm1724, %v1700, %v940
      %v1734 = vsel %vm1724, %v1701, %v942
      %v1735 = vsel %vm1724, %v1702, %v944
      %v1736 = vsel %vm1724, %v1703, %v946
      %v1737 = vsel %vm1724, %v1704, %v948
      %v1738 = vsel %vm1724, %v1705, %v950
      %v1739 = vsel %vm1724, %v1706, %v952
      %v1740 = vsel %vm1724, %v1707, %v954
      %v1741 = vsel %vm1724, %v1708, %v956
      %v1742 = vsel %vm1724, %v1709, %v958
      %v1743 = vsel %vm1724, %v1710, %v960
      %v1744 = vsel %vm1724, %v1711, %v962
      %v1745 = vsel %vm1724, %v1712, %v964
      %v1746 = vsel %vm1724, %v1713, %v966
      %v1747 = vsel %vm1724, %v1714, %v968
      %v1748 = vsel %vm1724, %v1715, %v970
      %v1749 = vsel %vm1724, %v1716, %v972
      %v1750 = vsel %vm1724, %v1717, %v974
      %v1751 = vsel %vm1724, %v1718, %v976
      %v1752 = vsel %vm1724, %v1719, %v978
      %v1753 = vsel %vm1724, %v1720, %v980
      %v1754 = vsel %vm1724, %v1721, %v982
      %v1755 = vsel %vm1724, %v1722, %v984
      %v1756 = vsel %vm1724, %v1723, %v986
      %vm1757 = vcmask 130048
      %v1758 = vsel %vm1757, %v1725, %v1052
      %v1759 = vsel %vm1757, %v1726, %v1054
      %v1760 = vsel %vm1757, %v1727, %v1056
      %v1761 = vsel %vm1757, %v1728, %v1058
      %v1762 = vsel %vm1757, %v1729, %v1060
      %v1763 = vsel %vm1757, %v1730, %v1062
      %v1764 = vsel %vm1757, %v1731, %v1064
      %v1765 = vsel %vm1757, %v1732, %v1066
      %v1766 = vsel %vm1757, %v1733, %v1068
      %v1767 = vsel %vm1757, %v1734, %v1070
      %v1768 = vsel %vm1757, %v1735, %v1072
      %v1769 = vsel %vm1757, %v1736, %v1074
      %v1770 = vsel %vm1757, %v1737, %v1076
      %v1771 = vsel %vm1757, %v1738, %v1078
      %v1772 = vsel %vm1757, %v1739, %v1080
      %v1773 = vsel %vm1757, %v1740, %v1082
      %v1774 = vsel %vm1757, %v1741, %v1084
      %v1775 = vsel %vm1757, %v1742, %v1086
      %v1776 = vsel %vm1757, %v1743, %v1088
      %v1777 = vsel %vm1757, %v1744, %v1090
      %v1778 = vsel %vm1757, %v1745, %v1092
      %v1779 = vsel %vm1757, %v1746, %v1094
      %v1780 = vsel %vm1757, %v1747, %v1096
      %v1781 = vsel %vm1757, %v1748, %v1098
      %v1782 = vsel %vm1757, %v1749, %v1100
      %v1783 = vsel %vm1757, %v1750, %v1102
      %v1784 = vsel %vm1757, %v1751, %v1104
      %v1785 = vsel %vm1757, %v1752, %v1106
      %v1786 = vsel %vm1757, %v1753, %v1108
      %v1787 = vsel %vm1757, %v1754, %v1110
      %v1788 = vsel %vm1757, %v1755, %v1112
      %v1789 = vsel %vm1757, %v1756, %v1114
      %vm1790 = vcmask 162816
      %v1791 = vsel %vm1790, %v1758, %v1180
      %v1792 = vsel %vm1790, %v1759, %v1182
      %v1793 = vsel %vm1790, %v1760, %v1184
      %v1794 = vsel %vm1790, %v1761, %v1186
      %v1795 = vsel %vm1790, %v1762, %v1188
      %v1796 = vsel %vm1790, %v1763, %v1190
      %v1797 = vsel %vm1790, %v1764, %v1192
      %v1798 = vsel %vm1790, %v1765, %v1194
      %v1799 = vsel %vm1790, %v1766, %v1196
      %v1800 = vsel %vm1790, %v1767, %v1198
      %v1801 = vsel %vm1790, %v1768, %v1200
      %v1802 = vsel %vm1790, %v1769, %v1202
      %v1803 = vsel %vm1790, %v1770, %v1204
      %v1804 = vsel %vm1790, %v1771, %v1206
      %v1805 = vsel %vm1790, %v1772, %v1208
      %v1806 = vsel %vm1790, %v1773, %v1210
      %v1807 = vsel %vm1790, %v1774, %v1212
      %v1808 = vsel %vm1790, %v1775, %v1214
      %v1809 = vsel %vm1790, %v1776, %v1216
      %v1810 = vsel %vm1790, %v1777, %v1218
      %v1811 = vsel %vm1790, %v1778, %v1220
      %v1812 = vsel %vm1790, %v1779, %v1222
      %v1813 = vsel %vm1790, %v1780, %v1224
      %v1814 = vsel %vm1790, %v1781, %v1226
      %v1815 = vsel %vm1790, %v1782, %v1228
      %v1816 = vsel %vm1790, %v1783, %v1230
      %v1817 = vsel %vm1790, %v1784, %v1232
      %v1818 = vsel %vm1790, %v1785, %v1234
      %v1819 = vsel %vm1790, %v1786, %v1236
      %v1820 = vsel %vm1790, %v1787, %v1238
      %v1821 = vsel %vm1790, %v1788, %v1240
      %v1822 = vsel %vm1790, %v1789, %v1242
      %vm1823 = vcmask 195584
      %v1824 = vsel %vm1823, %v1791, %v1308
      %v1825 = vsel %vm1823, %v1792, %v1310
      %v1826 = vsel %vm1823, %v1793, %v1312
      %v1827 = vsel %vm1823, %v1794, %v1314
      %v1828 = vsel %vm1823, %v1795, %v1316
      %v1829 = vsel %vm1823, %v1796, %v1318
      %v1830 = vsel %vm1823, %v1797, %v1320
      %v1831 = vsel %vm1823, %v1798, %v1322
      %v1832 = vsel %vm1823, %v1799, %v1324
      %v1833 = vsel %vm1823, %v1800, %v1326
      %v1834 = vsel %vm1823, %v1801, %v1328
      %v1835 = vsel %vm1823, %v1802, %v1330
      %v1836 = vsel %vm1823, %v1803, %v1332
      %v1837 = vsel %vm1823, %v1804, %v1334
      %v1838 = vsel %vm1823, %v1805, %v1336
      %v1839 = vsel %vm1823, %v1806, %v1338
      %v1840 = vsel %vm1823, %v1807, %v1340
      %v1841 = vsel %vm1823, %v1808, %v1342
      %v1842 = vsel %vm1823, %v1809, %v1344
      %v1843 = vsel %vm1823, %v1810, %v1346
      %v1844 = vsel %vm1823, %v1811, %v1348
      %v1845 = vsel %vm1823, %v1812, %v1350
      %v1846 = vsel %vm1823, %v1813, %v1352
      %v1847 = vsel %vm1823, %v1814, %v1354
      %v1848 = vsel %vm1823, %v1815, %v1356
      %v1849 = vsel %vm1823, %v1816, %v1358
      %v1850 = vsel %vm1823, %v1817, %v1360
      %v1851 = vsel %vm1823, %v1818, %v1362
      %v1852 = vsel %vm1823, %v1819, %v1364
      %v1853 = vsel %vm1823, %v1820, %v1366
      %v1854 = vsel %vm1823, %v1821, %v1368
      %v1855 = vsel %vm1823, %v1822, %v1370
      %vm1856 = vcmask 228352
      %v1857 = vsel %vm1856, %v1824, %v1436
      %v1858 = vsel %vm1856, %v1825, %v1438
      %v1859 = vsel %vm1856, %v1826, %v1440
      %v1860 = vsel %vm1856, %v1827, %v1442
      %v1861 = vsel %vm1856, %v1828, %v1444
      %v1862 = vsel %vm1856, %v1829, %v1446
      %v1863 = vsel %vm1856, %v1830, %v1448
      %v1864 = vsel %vm1856, %v1831, %v1450
      %v1865 = vsel %vm1856, %v1832, %v1452
      %v1866 = vsel %vm1856, %v1833, %v1454
      %v1867 = vsel %vm1856, %v1834, %v1456
      %v1868 = vsel %vm1856, %v1835, %v1458
      %v1869 = vsel %vm1856, %v1836, %v1460
      %v1870 = vsel %vm1856, %v1837, %v1462
      %v1871 = vsel %vm1856, %v1838, %v1464
      %v1872 = vsel %vm1856, %v1839, %v1466
      %v1873 = vsel %vm1856, %v1840, %v1468
      %v1874 = vsel %vm1856, %v1841, %v1470
      %v1875 = vsel %vm1856, %v1842, %v1472
      %v1876 = vsel %vm1856, %v1843, %v1474
      %v1877 = vsel %vm1856, %v1844, %v1476
      %v1878 = vsel %vm1856, %v1845, %v1478
      %v1879 = vsel %vm1856, %v1846, %v1480
      %v1880 = vsel %vm1856, %v1847, %v1482
      %v1881 = vsel %vm1856, %v1848, %v1484
      %v1882 = vsel %vm1856, %v1849, %v1486
      %v1883 = vsel %vm1856, %v1850, %v1488
      %v1884 = vsel %vm1856, %v1851, %v1490
      %v1885 = vsel %vm1856, %v1852, %v1492
      %v1886 = vsel %vm1856, %v1853, %v1494
      %v1887 = vsel %vm1856, %v1854, %v1496
      %v1888 = vsel %vm1856, %v1855, %v1498
      %vm1889 = vcmask 261120
      %v1890 = vsel %vm1889, %v1857, %v1564
      %v1891 = vsel %vm1889, %v1858, %v1566
      %v1892 = vsel %vm1889, %v1859, %v1568
      %v1893 = vsel %vm1889, %v1860, %v1570
      %v1894 = vsel %vm1889, %v1861, %v1572
      %v1895 = vsel %vm1889, %v1862, %v1574
      %v1896 = vsel %vm1889, %v1863, %v1576
      %v1897 = vsel %vm1889, %v1864, %v1578
      %v1898 = vsel %vm1889, %v1865, %v1580
      %v1899 = vsel %vm1889, %v1866, %v1582
      %v1900 = vsel %vm1889, %v1867, %v1584
      %v1901 = vsel %vm1889, %v1868, %v1586
      %v1902 = vsel %vm1889, %v1869, %v1588
      %v1903 = vsel %vm1889, %v1870, %v1590
      %v1904 = vsel %vm1889, %v1871, %v1592
      %v1905 = vsel %vm1889, %v1872, %v1594
      %v1906 = vsel %vm1889, %v1873, %v1596
      %v1907 = vsel %vm1889, %v1874, %v1598
      %v1908 = vsel %vm1889, %v1875, %v1600
      %v1909 = vsel %vm1889, %v1876, %v1602
      %v1910 = vsel %vm1889, %v1877, %v1604
      %v1911 = vsel %vm1889, %v1878, %v1606
      %v1912 = vsel %vm1889, %v1879, %v1608
      %v1913 = vsel %vm1889, %v1880, %v1610
      %v1914 = vsel %vm1889, %v1881, %v1612
      %v1915 = vsel %vm1889, %v1882, %v1614
      %v1916 = vsel %vm1889, %v1883, %v1616
      %v1917 = vsel %vm1889, %v1884, %v1618
      %v1918 = vsel %vm1889, %v1885, %v1620
      %v1919 = vsel %vm1889, %v1886, %v1622
      %v1920 = vsel %vm1889, %v1887, %v1624
      %v1921 = vsel %vm1889, %v1888, %v1626
      %v1922 = vpack.c.bf16 %v1891, %v1890
      %v1923 = vpack.c.bf16 %v1893, %v1892
      %v1924 = vpack.c.bf16 %v1895, %v1894
      %v1925 = vpack.c.bf16 %v1897, %v1896
      %v1926 = vpack.c.bf16 %v1899, %v1898
      %v1927 = vpack.c.bf16 %v1901, %v1900
      %v1928 = vpack.c.bf16 %v1903, %v1902
      %v1929 = vpack.c.bf16 %v1905, %v1904
      %v1930 = vpack.c.bf16 %v1907, %v1906
      %v1931 = vpack.c.bf16 %v1909, %v1908
      %v1932 = vpack.c.bf16 %v1911, %v1910
      %v1933 = vpack.c.bf16 %v1913, %v1912
      %v1934 = vpack.c.bf16 %v1915, %v1914
      %v1935 = vpack.c.bf16 %v1917, %v1916
      %v1936 = vpack.c.bf16 %v1919, %v1918
      %v1937 = vpack.c.bf16 %v1921, %v1920
      %v1938 = vld [vmem:[%s1] sm:$0xff]
      %v1939 = vld [vmem:[%s1 + $0x8] sm:$0xff]
      %v1940 = vld [vmem:[%s1 + $0x10] sm:$0xff]
      %v1941 = vld [vmem:[%s1 + $0x18] sm:$0xff]
      %v1942 = vld [vmem:[%s1 + $0x20] sm:$0x33]
      %v1948 = vunpack.c.l.b16 %v1938
      %v1949 = vunpack.c.h.b16 %v1938
      %v1950 = vunpack.c.l.b16 %v1939
      %v1951 = vunpack.c.h.b16 %v1939
      %v1952 = vunpack.c.l.b16 %v1940
      %v1953 = vunpack.c.h.b16 %v1940
      %v1954 = vunpack.c.l.b16 %v1941
      %v1955 = vunpack.c.h.b16 %v1941
      %v1956 = vunpack.c.l.b16 %v1942
      %v1957 = vunpack.c.h.b16 %v1942
      %v1958 = vpack.c.b16 %v1950, %v1948
      %v1959 = vpack.c.b16 %v1951, %v1949
      %v1960 = vpack.c.b16 %v1954, %v1952
      %v1961 = vpack.c.b16 %v1955, %v1953
      %v1962 = vpack.c.b16 %v1956, %v1956
      %v1963 = vpack.c.b16 %v1957, %v1957
      %vm1968 = vcmask 293888
      %v1970 = vsel %vm1968, %v1922, 0
      %v1973 = vsel %vm1968, %v1923, 0
      %v1976 = vsel %vm1968, %v1924, 0
      %v1979 = vsel %vm1968, %v1925, 0
      %v1982 = vsel %vm1968, %v1926, 0
      %v1985 = vsel %vm1968, %v1927, 0
      %v1988 = vsel %vm1968, %v1928, 0
      %v1991 = vsel %vm1968, %v1929, 0
      %v1994 = vsel %vm1968, %v1930, 0
      %v1997 = vsel %vm1968, %v1931, 0
      %v2000 = vsel %vm1968, %v1932, 0
      %v2003 = vsel %vm1968, %v1933, 0
      %v2006 = vsel %vm1968, %v1934, 0
      %v2009 = vsel %vm1968, %v1935, 0
      %v2012 = vsel %vm1968, %v1936, 0
      %v2015 = vsel %vm1968, %v1937, 0
      %vm2017 = vcmask 1041408
      %v2019 = vsel %vm2017, %v1962, 0
      %v2022 = vsel %vm2017, %v1963, 0
      %2024 = vmatprep.subr.bf16.mxu0 %v1959
      %2025 = vmatpush1.bf16.msra.mxu0 %v1958
      %2026 = vmatprep.subr.bf16.mxu0 %v1961
      %2027 = vmatpush1.bf16.msra.mxu0 %v1960
      %2028 = vmatprep.subr.bf16.mxu0 %v2022
      %2029 = vmatpush1.bf16.msra.mxu0 %v2019
      %2030 = vmatprep.subr.bf16.mxu0 0
      %2031 = vmatpush1.bf16.msra.mxu0 0
      %2032 = vmatprep.subr.bf16.mxu0 0
      %2033 = vmatpush1.bf16.msra.mxu0 0
      %2034 = vmatprep.subr.bf16.mxu0 0
      %2035 = vmatpush1.bf16.msra.mxu0 0
      %2036 = vmatprep.subr.bf16.mxu0 0
      %2037 = vmatpush1.bf16.msra.mxu0 0
      %2038 = vmatprep.subr.bf16.mxu0 0
      %2039 = vmatpush1.bf16.msra.mxu0 0
      %2040 = vmatprep.subr.bf16.mxu0 0
      %2041 = vmatpush1.bf16.msra.mxu0 0
      %2042 = vmatprep.subr.bf16.mxu0 0
      %2043 = vmatpush1.bf16.msra.mxu0 0
      %2044 = vmatprep.subr.bf16.mxu0 0
      %2045 = vmatpush1.bf16.msra.mxu0 0
      %2046 = vmatprep.subr.bf16.mxu0 0
      %2047 = vmatpush1.bf16.msra.mxu0 0
      %2048 = vmatprep.subr.bf16.mxu0 0
      %2049 = vmatpush1.bf16.msra.mxu0 0
      %2050 = vmatprep.subr.bf16.mxu0 0
      %2051 = vmatpush1.bf16.msra.mxu0 0
      %2052 = vmatprep.subr.bf16.mxu0 0
      %2053 = vmatpush1.bf16.msra.mxu0 0
      %2054 = vmatprep.subr.bf16.mxu0 0
      %2055 = vmatpush1.bf16.msra.mxu0 0
      %2056 = vmatprep.mubr.bf16.mxu0 0
      %2057 = vmatmul.mubr.bf16.gmra.mrb[0].mxu0 %v1970
      %v2058 = vpop.f32.mrb[0].mxu0
      %v2059 = vadd.f32 0.0, %v2058
      %v2060 = vpop.f32.mrb[0].mxu0
      %v2061 = vadd.f32 0.0, %v2060
      %v2062 = vpop.f32.mrb[0].mxu0
      %v2063 = vadd.f32 0.0, %v2062
      %v2064 = vpop.f32.mrb[0].mxu0
      %v2065 = vadd.f32 0.0, %v2064
      %2066 = vmatprep.mubr.bf16.mxu0 0
      %2067 = vmatmul.mubr.bf16.gmra.mrb[0].mxu0 %v1973
      %v2068 = vpop.f32.mrb[0].mxu0
      %v2069 = vadd.f32 0.0, %v2068
      %v2070 = vpop.f32.mrb[0].mxu0
      %v2071 = vadd.f32 0.0, %v2070
      %v2072 = vpop.f32.mrb[0].mxu0
      %v2073 = vadd.f32 0.0, %v2072
      %v2074 = vpop.f32.mrb[0].mxu0
      %v2075 = vadd.f32 0.0, %v2074
      %2076 = vmatprep.mubr.bf16.mxu0 0
      %2077 = vmatmul.mubr.bf16.gmra.mrb[0].mxu0 %v1976
      %v2078 = vpop.f32.mrb[0].mxu0
      %v2079 = vadd.f32 0.0, %v2078
      %v2080 = vpop.f32.mrb[0].mxu0
      %v2081 = vadd.f32 0.0, %v2080
      %v2082 = vpop.f32.mrb[0].mxu0
      %v2083 = vadd.f32 0.0, %v2082
      %v2084 = vpop.f32.mrb[0].mxu0
      %v2085 = vadd.f32 0.0, %v2084
      %2086 = vmatprep.mubr.bf16.mxu0 0
      %2087 = vmatmul.mubr.bf16.gmra.mrb[0].mxu0 %v1979
      %v2088 = vpop.f32.mrb[0].mxu0
      %v2089 = vadd.f32 0.0, %v2088
      %v2090 = vpop.f32.mrb[0].mxu0
      %v2091 = vadd.f32 0.0, %v2090
      %v2092 = vpop.f32.mrb[0].mxu0
      %v2093 = vadd.f32 0.0, %v2092
      %v2094 = vpop.f32.mrb[0].mxu0
      %v2095 = vadd.f32 0.0, %v2094
      %2096 = vmatprep.mubr.bf16.mxu0 0
      %2097 = vmatmul.mubr.bf16.gmra.mrb[0].mxu0 %v1982
      %v2098 = vpop.f32.mrb[0].mxu0
      %v2099 = vadd.f32 0.0, %v2098
      %v2100 = vpop.f32.mrb[0].mxu0
      %v2101 = vadd.f32 0.0, %v2100
      %v2102 = vpop.f32.mrb[0].mxu0
      %v2103 = vadd.f32 0.0, %v2102
      %v2104 = vpop.f32.mrb[0].mxu0
      %v2105 = vadd.f32 0.0, %v2104
      %2106 = vmatprep.mubr.bf16.mxu0 0
      %2107 = vmatmul.mubr.bf16.gmra.mrb[0].mxu0 %v1985
      %v2108 = vpop.f32.mrb[0].mxu0
      %v2109 = vadd.f32 0.0, %v2108
      %v2110 = vpop.f32.mrb[0].mxu0
      %v2111 = vadd.f32 0.0, %v2110
      %v2112 = vpop.f32.mrb[0].mxu0
      %v2113 = vadd.f32 0.0, %v2112
      %v2114 = vpop.f32.mrb[0].mxu0
      %v2115 = vadd.f32 0.0, %v2114
      %2116 = vmatprep.mubr.bf16.mxu0 0
      %2117 = vmatmul.mubr.bf16.gmra.mrb[0].mxu0 %v1988
      %v2118 = vpop.f32.mrb[0].mxu0
      %v2119 = vadd.f32 0.0, %v2118
      %v2120 = vpop.f32.mrb[0].mxu0
      %v2121 = vadd.f32 0.0, %v2120
      %v2122 = vpop.f32.mrb[0].mxu0
      %v2123 = vadd.f32 0.0, %v2122
      %v2124 = vpop.f32.mrb[0].mxu0
      %v2125 = vadd.f32 0.0, %v2124
      %2126 = vmatprep.mubr.bf16.mxu0 0
      %2127 = vmatmul.mubr.bf16.gmra.mrb[0].mxu0 %v1991
      %v2128 = vpop.f32.mrb[0].mxu0
      %v2129 = vadd.f32 0.0, %v2128
      %v2130 = vpop.f32.mrb[0].mxu0
      %v2131 = vadd.f32 0.0, %v2130
      %v2132 = vpop.f32.mrb[0].mxu0
      %v2133 = vadd.f32 0.0, %v2132
      %v2134 = vpop.f32.mrb[0].mxu0
      %v2135 = vadd.f32 0.0, %v2134
      %2136 = vmatprep.mubr.bf16.mxu0 0
      %2137 = vmatmul.mubr.bf16.gmra.mrb[0].mxu0 %v1994
      %v2138 = vpop.f32.mrb[0].mxu0
      %v2139 = vadd.f32 0.0, %v2138
      %v2140 = vpop.f32.mrb[0].mxu0
      %v2141 = vadd.f32 0.0, %v2140
      %v2142 = vpop.f32.mrb[0].mxu0
      %v2143 = vadd.f32 0.0, %v2142
      %v2144 = vpop.f32.mrb[0].mxu0
      %v2145 = vadd.f32 0.0, %v2144
      %2146 = vmatprep.mubr.bf16.mxu0 0
      %2147 = vmatmul.mubr.bf16.gmra.mrb[0].mxu0 %v1997
      %v2148 = vpop.f32.mrb[0].mxu0
      %v2149 = vadd.f32 0.0, %v2148
      %v2150 = vpop.f32.mrb[0].mxu0
      %v2151 = vadd.f32 0.0, %v2150
      %v2152 = vpop.f32.mrb[0].mxu0
      %v2153 = vadd.f32 0.0, %v2152
      %v2154 = vpop.f32.mrb[0].mxu0
      %v2155 = vadd.f32 0.0, %v2154
      %2156 = vmatprep.mubr.bf16.mxu0 0
      %2157 = vmatmul.mubr.bf16.gmra.mrb[0].mxu0 %v2000
      %v2158 = vpop.f32.mrb[0].mxu0
      %v2159 = vadd.f32 0.0, %v2158
      %v2160 = vpop.f32.mrb[0].mxu0
      %v2161 = vadd.f32 0.0, %v2160
      %v2162 = vpop.f32.mrb[0].mxu0
      %v2163 = vadd.f32 0.0, %v2162
      %v2164 = vpop.f32.mrb[0].mxu0
      %v2165 = vadd.f32 0.0, %v2164
      %2166 = vmatprep.mubr.bf16.mxu0 0
      %2167 = vmatmul.mubr.bf16.gmra.mrb[0].mxu0 %v2003
      %v2168 = vpop.f32.mrb[0].mxu0
      %v2169 = vadd.f32 0.0, %v2168
      %v2170 = vpop.f32.mrb[0].mxu0
      %v2171 = vadd.f32 0.0, %v2170
      %v2172 = vpop.f32.mrb[0].mxu0
      %v2173 = vadd.f32 0.0, %v2172
      %v2174 = vpop.f32.mrb[0].mxu0
      %v2175 = vadd.f32 0.0, %v2174
      %2176 = vmatprep.mubr.bf16.mxu0 0
      %2177 = vmatmul.mubr.bf16.gmra.mrb[0].mxu0 %v2006
      %v2178 = vpop.f32.mrb[0].mxu0
      %v2179 = vadd.f32 0.0, %v2178
      %v2180 = vpop.f32.mrb[0].mxu0
      %v2181 = vadd.f32 0.0, %v2180
      %v2182 = vpop.f32.mrb[0].mxu0
      %v2183 = vadd.f32 0.0, %v2182
      %v2184 = vpop.f32.mrb[0].mxu0
      %v2185 = vadd.f32 0.0, %v2184
      %2186 = vmatprep.mubr.bf16.mxu0 0
      %2187 = vmatmul.mubr.bf16.gmra.mrb[0].mxu0 %v2009
      %v2188 = vpop.f32.mrb[0].mxu0
      %v2189 = vadd.f32 0.0, %v2188
      %v2190 = vpop.f32.mrb[0].mxu0
      %v2191 = vadd.f32 0.0, %v2190
      %v2192 = vpop.f32.mrb[0].mxu0
      %v2193 = vadd.f32 0.0, %v2192
      %v2194 = vpop.f32.mrb[0].mxu0
      %v2195 = vadd.f32 0.0, %v2194
      %2196 = vmatprep.mubr.bf16.mxu0 0
      %2197 = vmatmul.mubr.bf16.gmra.mrb[0].mxu0 %v2012
      %v2198 = vpop.f32.mrb[0].mxu0
      %v2199 = vadd.f32 0.0, %v2198
      %v2200 = vpop.f32.mrb[0].mxu0
      %v2201 = vadd.f32 0.0, %v2200
      %v2202 = vpop.f32.mrb[0].mxu0
      %v2203 = vadd.f32 0.0, %v2202
      %v2204 = vpop.f32.mrb[0].mxu0
      %v2205 = vadd.f32 0.0, %v2204
      %2206 = vmatprep.mubr.bf16.mxu0 0
      %2207 = vmatmul.mubr.bf16.gmra.mrb[0].mxu0 %v2015
      %v2208 = vpop.f32.mrb[0].mxu0
      %v2209 = vadd.f32 0.0, %v2208
      %v2210 = vpop.f32.mrb[0].mxu0
      %v2211 = vadd.f32 0.0, %v2210
      %v2212 = vpop.f32.mrb[0].mxu0
      %v2213 = vadd.f32 0.0, %v2212
      %v2214 = vpop.f32.mrb[0].mxu0
      %v2215 = vadd.f32 0.0, %v2214
      %2216 = vdwg.mxu0
      %v2217 = vld [vmem:[%s3] sm:$0x1]
      %v2218 = vlaneseq
      %v2219 = vshrl.u32 %v2218, 7
      %v2220 = vsub.s32 0, %v2219
      %v2221 = vrot.slane %v2217, %v2220
      %v2222 = vmul.f32 %v2059, %v2221
      %v2223 = vmul.f32 %v2063, %v2221
      %v2224 = vmul.f32 %v2069, %v2221
      %v2225 = vmul.f32 %v2073, %v2221
      %v2226 = vmul.f32 %v2079, %v2221
      %v2227 = vmul.f32 %v2083, %v2221
      %v2228 = vmul.f32 %v2089, %v2221
      %v2229 = vmul.f32 %v2093, %v2221
      %v2230 = vmul.f32 %v2099, %v2221
      %v2231 = vmul.f32 %v2103, %v2221
      %v2232 = vmul.f32 %v2109, %v2221
      %v2233 = vmul.f32 %v2113, %v2221
      %v2234 = vmul.f32 %v2119, %v2221
      %v2235 = vmul.f32 %v2123, %v2221
      %v2236 = vmul.f32 %v2129, %v2221
      %v2237 = vmul.f32 %v2133, %v2221
      %v2238 = vmul.f32 %v2139, %v2221
      %v2239 = vmul.f32 %v2143, %v2221
      %v2240 = vmul.f32 %v2149, %v2221
      %v2241 = vmul.f32 %v2153, %v2221
      %v2242 = vmul.f32 %v2159, %v2221
      %v2243 = vmul.f32 %v2163, %v2221
      %v2244 = vmul.f32 %v2169, %v2221
      %v2245 = vmul.f32 %v2173, %v2221
      %v2246 = vmul.f32 %v2179, %v2221
      %v2247 = vmul.f32 %v2183, %v2221
      %v2248 = vmul.f32 %v2189, %v2221
      %v2249 = vmul.f32 %v2193, %v2221
      %v2250 = vmul.f32 %v2199, %v2221
      %v2251 = vmul.f32 %v2203, %v2221
      %v2252 = vmul.f32 %v2209, %v2221
      %v2253 = vmul.f32 %v2213, %v2221
      %v2254 = vld [vmem:[%s3 + $0x1] sm:$0x1]
      %v2255 = vlaneseq
      %v2256 = vshrl.u32 %v2255, 7
      %v2257 = vsub.s32 0, %v2256
      %v2258 = vrot.slane %v2254, %v2257
      %v2259 = vadd.f32 %v2222, %v2258
      %v2260 = vadd.f32 %v2223, %v2258
      %v2261 = vadd.f32 %v2224, %v2258
      %v2262 = vadd.f32 %v2225, %v2258
      %v2263 = vadd.f32 %v2226, %v2258
      %v2264 = vadd.f32 %v2227, %v2258
      %v2265 = vadd.f32 %v2228, %v2258
      %v2266 = vadd.f32 %v2229, %v2258
      %v2267 = vadd.f32 %v2230, %v2258
      %v2268 = vadd.f32 %v2231, %v2258
      %v2269 = vadd.f32 %v2232, %v2258
      %v2270 = vadd.f32 %v2233, %v2258
      %v2271 = vadd.f32 %v2234, %v2258
      %v2272 = vadd.f32 %v2235, %v2258
      %v2273 = vadd.f32 %v2236, %v2258
      %v2274 = vadd.f32 %v2237, %v2258
      %v2275 = vadd.f32 %v2238, %v2258
      %v2276 = vadd.f32 %v2239, %v2258
      %v2277 = vadd.f32 %v2240, %v2258
      %v2278 = vadd.f32 %v2241, %v2258
      %v2279 = vadd.f32 %v2242, %v2258
      %v2280 = vadd.f32 %v2243, %v2258
      %v2281 = vadd.f32 %v2244, %v2258
      %v2282 = vadd.f32 %v2245, %v2258
      %v2283 = vadd.f32 %v2246, %v2258
      %v2284 = vadd.f32 %v2247, %v2258
      %v2285 = vadd.f32 %v2248, %v2258
      %v2286 = vadd.f32 %v2249, %v2258
      %v2287 = vadd.f32 %v2250, %v2258
      %v2288 = vadd.f32 %v2251, %v2258
      %v2289 = vadd.f32 %v2252, %v2258
      %v2290 = vadd.f32 %v2253, %v2258
      %v2291 = vmax.f32 %v2259, 0.0
      %v2292 = vmax.f32 %v2260, 0.0
      %v2293 = vmax.f32 %v2261, 0.0
      %v2294 = vmax.f32 %v2262, 0.0
      %v2295 = vmax.f32 %v2263, 0.0
      %v2296 = vmax.f32 %v2264, 0.0
      %v2297 = vmax.f32 %v2265, 0.0
      %v2298 = vmax.f32 %v2266, 0.0
      %v2299 = vmax.f32 %v2267, 0.0
      %v2300 = vmax.f32 %v2268, 0.0
      %v2301 = vmax.f32 %v2269, 0.0
      %v2302 = vmax.f32 %v2270, 0.0
      %v2303 = vmax.f32 %v2271, 0.0
      %v2304 = vmax.f32 %v2272, 0.0
      %v2305 = vmax.f32 %v2273, 0.0
      %v2306 = vmax.f32 %v2274, 0.0
      %v2307 = vmax.f32 %v2275, 0.0
      %v2308 = vmax.f32 %v2276, 0.0
      %v2309 = vmax.f32 %v2277, 0.0
      %v2310 = vmax.f32 %v2278, 0.0
      %v2311 = vmax.f32 %v2279, 0.0
      %v2312 = vmax.f32 %v2280, 0.0
      %v2313 = vmax.f32 %v2281, 0.0
      %v2314 = vmax.f32 %v2282, 0.0
      %v2315 = vmax.f32 %v2283, 0.0
      %v2316 = vmax.f32 %v2284, 0.0
      %v2317 = vmax.f32 %v2285, 0.0
      %v2318 = vmax.f32 %v2286, 0.0
      %v2319 = vmax.f32 %v2287, 0.0
      %v2320 = vmax.f32 %v2288, 0.0
      %v2321 = vmax.f32 %v2289, 0.0
      %v2322 = vmax.f32 %v2290, 0.0
      %v2323 = vld [vmem:[%s3 + $0x4] sm:$0x1]
      %v2324 = vlaneseq
      %v2325 = vshrl.u32 %v2324, 7
      %v2326 = vsub.s32 0, %v2325
      %v2327 = vrot.slane %v2323, %v2326
      %v2328 = vmul.f32 %v2061, %v2327
      %v2329 = vmul.f32 %v2065, %v2327
      %v2330 = vmul.f32 %v2071, %v2327
      %v2331 = vmul.f32 %v2075, %v2327
      %v2332 = vmul.f32 %v2081, %v2327
      %v2333 = vmul.f32 %v2085, %v2327
      %v2334 = vmul.f32 %v2091, %v2327
      %v2335 = vmul.f32 %v2095, %v2327
      %v2336 = vmul.f32 %v2101, %v2327
      %v2337 = vmul.f32 %v2105, %v2327
      %v2338 = vmul.f32 %v2111, %v2327
      %v2339 = vmul.f32 %v2115, %v2327
      %v2340 = vmul.f32 %v2121, %v2327
      %v2341 = vmul.f32 %v2125, %v2327
      %v2342 = vmul.f32 %v2131, %v2327
      %v2343 = vmul.f32 %v2135, %v2327
      %v2344 = vmul.f32 %v2141, %v2327
      %v2345 = vmul.f32 %v2145, %v2327
      %v2346 = vmul.f32 %v2151, %v2327
      %v2347 = vmul.f32 %v2155, %v2327
      %v2348 = vmul.f32 %v2161, %v2327
      %v2349 = vmul.f32 %v2165, %v2327
      %v2350 = vmul.f32 %v2171, %v2327
      %v2351 = vmul.f32 %v2175, %v2327
      %v2352 = vmul.f32 %v2181, %v2327
      %v2353 = vmul.f32 %v2185, %v2327
      %v2354 = vmul.f32 %v2191, %v2327
      %v2355 = vmul.f32 %v2195, %v2327
      %v2356 = vmul.f32 %v2201, %v2327
      %v2357 = vmul.f32 %v2205, %v2327
      %v2358 = vmul.f32 %v2211, %v2327
      %v2359 = vmul.f32 %v2215, %v2327
      %v2360 = vld [vmem:[%s3 + $0x5] sm:$0x1]
      %v2361 = vlaneseq
      %v2362 = vshrl.u32 %v2361, 7
      %v2363 = vsub.s32 0, %v2362
      %v2364 = vrot.slane %v2360, %v2363
      %v2365 = vadd.f32 %v2328, %v2364
      %v2366 = vadd.f32 %v2329, %v2364
      %v2367 = vadd.f32 %v2330, %v2364
      %v2368 = vadd.f32 %v2331, %v2364
      %v2369 = vadd.f32 %v2332, %v2364
      %v2370 = vadd.f32 %v2333, %v2364
      %v2371 = vadd.f32 %v2334, %v2364
      %v2372 = vadd.f32 %v2335, %v2364
      %v2373 = vadd.f32 %v2336, %v2364
      %v2374 = vadd.f32 %v2337, %v2364
      %v2375 = vadd.f32 %v2338, %v2364
      %v2376 = vadd.f32 %v2339, %v2364
      %v2377 = vadd.f32 %v2340, %v2364
      %v2378 = vadd.f32 %v2341, %v2364
      %v2379 = vadd.f32 %v2342, %v2364
      %v2380 = vadd.f32 %v2343, %v2364
      %v2381 = vadd.f32 %v2344, %v2364
      %v2382 = vadd.f32 %v2345, %v2364
      %v2383 = vadd.f32 %v2346, %v2364
      %v2384 = vadd.f32 %v2347, %v2364
      %v2385 = vadd.f32 %v2348, %v2364
      %v2386 = vadd.f32 %v2349, %v2364
      %v2387 = vadd.f32 %v2350, %v2364
      %v2388 = vadd.f32 %v2351, %v2364
      %v2389 = vadd.f32 %v2352, %v2364
      %v2390 = vadd.f32 %v2353, %v2364
      %v2391 = vadd.f32 %v2354, %v2364
      %v2392 = vadd.f32 %v2355, %v2364
      %v2393 = vadd.f32 %v2356, %v2364
      %v2394 = vadd.f32 %v2357, %v2364
      %v2395 = vadd.f32 %v2358, %v2364
      %v2396 = vadd.f32 %v2359, %v2364
      %v2397 = vmax.f32 %v2365, 0.0
      %v2398 = vmax.f32 %v2366, 0.0
      %v2399 = vmax.f32 %v2367, 0.0
      %v2400 = vmax.f32 %v2368, 0.0
      %v2401 = vmax.f32 %v2369, 0.0
      %v2402 = vmax.f32 %v2370, 0.0
      %v2403 = vmax.f32 %v2371, 0.0
      %v2404 = vmax.f32 %v2372, 0.0
      %v2405 = vmax.f32 %v2373, 0.0
      %v2406 = vmax.f32 %v2374, 0.0
      %v2407 = vmax.f32 %v2375, 0.0
      %v2408 = vmax.f32 %v2376, 0.0
      %v2409 = vmax.f32 %v2377, 0.0
      %v2410 = vmax.f32 %v2378, 0.0
      %v2411 = vmax.f32 %v2379, 0.0
      %v2412 = vmax.f32 %v2380, 0.0
      %v2413 = vmax.f32 %v2381, 0.0
      %v2414 = vmax.f32 %v2382, 0.0
      %v2415 = vmax.f32 %v2383, 0.0
      %v2416 = vmax.f32 %v2384, 0.0
      %v2417 = vmax.f32 %v2385, 0.0
      %v2418 = vmax.f32 %v2386, 0.0
      %v2419 = vmax.f32 %v2387, 0.0
      %v2420 = vmax.f32 %v2388, 0.0
      %v2421 = vmax.f32 %v2389, 0.0
      %v2422 = vmax.f32 %v2390, 0.0
      %v2423 = vmax.f32 %v2391, 0.0
      %v2424 = vmax.f32 %v2392, 0.0
      %v2425 = vmax.f32 %v2393, 0.0
      %v2426 = vmax.f32 %v2394, 0.0
      %v2427 = vmax.f32 %v2395, 0.0
      %v2428 = vmax.f32 %v2396, 0.0
      %2429 = vst [vmem:[%s249 + $0x1] sm:$0xff] %v2291
      %2430 = vst [vmem:[%s249 + $0x9] sm:$0xff] %v2292
      %2431 = vst [vmem:[%s249 + $0x19] sm:$0xff] %v2293
      %2432 = vst [vmem:[%s249 + $0x21] sm:$0xff] %v2294
      %2433 = vst [vmem:[%s249 + $0x31] sm:$0xff] %v2295
      %2434 = vst [vmem:[%s249 + $0x39] sm:$0xff] %v2296
      %2435 = vst [vmem:[%s249 + $0x49] sm:$0xff] %v2297
      %2436 = vst [vmem:[%s249 + $0x51] sm:$0xff] %v2298
      %2437 = vst [vmem:[%s249 + $0x61] sm:$0xff] %v2299
      %2438 = vst [vmem:[%s249 + $0x69] sm:$0xff] %v2300
      %2439 = vst [vmem:[%s249 + $0x79] sm:$0xff] %v2301
      %2440 = vst [vmem:[%s249 + $0x81] sm:$0xff] %v2302
      %2441 = vst [vmem:[%s249 + $0x91] sm:$0xff] %v2303
      %2442 = vst [vmem:[%s249 + $0x99] sm:$0xff] %v2304
      %2443 = vst [vmem:[%s249 + $0xa9] sm:$0xff] %v2305
      %2444 = vst [vmem:[%s249 + $0xb1] sm:$0xff] %v2306
      %2445 = vst [vmem:[%s249 + $0xc1] sm:$0xff] %v2307
      %2446 = vst [vmem:[%s249 + $0xc9] sm:$0xff] %v2308
      %2447 = vst [vmem:[%s249 + $0xd9] sm:$0xff] %v2309
      %2448 = vst [vmem:[%s249 + $0xe1] sm:$0xff] %v2310
      %2449 = vst [vmem:[%s249 + $0xf1] sm:$0xff] %v2311
      %2450 = vst [vmem:[%s249 + $0xf9] sm:$0xff] %v2312
      %2451 = vst [vmem:[%s249 + $0x109] sm:$0xff] %v2313
      %2452 = vst [vmem:[%s249 + $0x111] sm:$0xff] %v2314
      %2453 = vst [vmem:[%s249 + $0x121] sm:$0xff] %v2315
      %2454 = vst [vmem:[%s249 + $0x129] sm:$0xff] %v2316
      %2455 = vst [vmem:[%s249 + $0x139] sm:$0xff] %v2317
      %2456 = vst [vmem:[%s249 + $0x141] sm:$0xff] %v2318
      %2457 = vst [vmem:[%s249 + $0x151] sm:$0xff] %v2319
      %2458 = vst [vmem:[%s249 + $0x159] sm:$0xff] %v2320
      %2459 = vst [vmem:[%s249 + $0x169] sm:$0xff] %v2321
      %2460 = vst [vmem:[%s249 + $0x171] sm:$0xff] %v2322
      %v2461 = vld [vmem:[#allocation3] sm:$0xff]
      %v2462 = vld [vmem:[#allocation3 + $0x8] sm:$0xff]
      %v2463 = vld [vmem:[#allocation3 + $0x18] sm:$0xff]
      %v2464 = vld [vmem:[#allocation3 + $0x20] sm:$0xff]
      %v2465 = vld [vmem:[#allocation3 + $0x30] sm:$0xff]
      %v2466 = vld [vmem:[#allocation3 + $0x38] sm:$0xff]
      %v2467 = vld [vmem:[#allocation3 + $0x48] sm:$0xff]
      %v2468 = vld [vmem:[#allocation3 + $0x50] sm:$0xff]
      %v2469 = vld [vmem:[#allocation3 + $0x60] sm:$0xff]
      %v2470 = vld [vmem:[#allocation3 + $0x68] sm:$0xff]
      %v2471 = vld [vmem:[#allocation3 + $0x78] sm:$0xff]
      %v2472 = vld [vmem:[#allocation3 + $0x80] sm:$0xff]
      %v2473 = vld [vmem:[#allocation3 + $0x90] sm:$0xff]
      %v2474 = vld [vmem:[#allocation3 + $0x98] sm:$0xff]
      %v2475 = vld [vmem:[#allocation3 + $0xa8] sm:$0xff]
      %v2476 = vld [vmem:[#allocation3 + $0xb0] sm:$0xff]
      %v2477 = vld [vmem:[#allocation3 + $0xc0] sm:$0xff]
      %v2478 = vld [vmem:[#allocation3 + $0xc8] sm:$0xff]
      %v2479 = vld [vmem:[#allocation3 + $0xd8] sm:$0xff]
      %v2480 = vld [vmem:[#allocation3 + $0xe0] sm:$0xff]
      %v2481 = vld [vmem:[#allocation3 + $0xf0] sm:$0xff]
      %v2482 = vld [vmem:[#allocation3 + $0xf8] sm:$0xff]
      %v2483 = vld [vmem:[#allocation3 + $0x108] sm:$0xff]
      %v2484 = vld [vmem:[#allocation3 + $0x110] sm:$0xff]
      %v2485 = vld [vmem:[#allocation3 + $0x120] sm:$0xff]
      %v2486 = vld [vmem:[#allocation3 + $0x128] sm:$0xff]
      %v2487 = vld [vmem:[#allocation3 + $0x138] sm:$0xff]
      %v2488 = vld [vmem:[#allocation3 + $0x140] sm:$0xff]
      %v2489 = vld [vmem:[#allocation3 + $0x150] sm:$0xff]
      %v2490 = vld [vmem:[#allocation3 + $0x158] sm:$0xff]
      %v2491 = vld [vmem:[#allocation3 + $0x168] sm:$0xff]
      %v2492 = vld [vmem:[#allocation3 + $0x170] sm:$0xff]
      %v2493 = vpack.c.bf16 %v2462, %v2461
      %v2494 = vpack.c.bf16 %v2464, %v2463
      %v2495 = vpack.c.bf16 %v2466, %v2465
      %v2496 = vpack.c.bf16 %v2468, %v2467
      %v2497 = vpack.c.bf16 %v2470, %v2469
      %v2498 = vpack.c.bf16 %v2472, %v2471
      %v2499 = vpack.c.bf16 %v2474, %v2473
      %v2500 = vpack.c.bf16 %v2476, %v2475
      %v2501 = vpack.c.bf16 %v2478, %v2477
      %v2502 = vpack.c.bf16 %v2480, %v2479
      %v2503 = vpack.c.bf16 %v2482, %v2481
      %v2504 = vpack.c.bf16 %v2484, %v2483
      %v2505 = vpack.c.bf16 %v2486, %v2485
      %v2506 = vpack.c.bf16 %v2488, %v2487
      %v2507 = vpack.c.bf16 %v2490, %v2489
      %v2508 = vpack.c.bf16 %v2492, %v2491
      %v2509 = vld [vmem:[%s2] sm:$0xf]
      %v2510 = vld [vmem:[%s2 + $0x4] sm:$0xf]
      %v2511 = vld [vmem:[%s2 + $0x8] sm:$0xf]
      %v2512 = vld [vmem:[%s2 + $0xc] sm:$0xf]
      %v2513 = vld [vmem:[%s2 + $0x10] sm:$0xf]
      %v2514 = vld [vmem:[%s2 + $0x14] sm:$0xf]
      %v2515 = vld [vmem:[%s2 + $0x18] sm:$0xf]
      %v2516 = vld [vmem:[%s2 + $0x1c] sm:$0xf]
      %v2517 = vld [vmem:[%s2 + $0x20] sm:$0xf]
      %v2518 = vld [vmem:[%s2 + $0x24] sm:$0xf]
      %v2519 = vld [vmem:[%s2 + $0x28] sm:$0xf]
      %v2520 = vld [vmem:[%s2 + $0x2c] sm:$0xf]
      %v2521 = vld [vmem:[%s2 + $0x30] sm:$0xf]
      %v2522 = vld [vmem:[%s2 + $0x34] sm:$0xf]
      %v2523 = vld [vmem:[%s2 + $0x38] sm:$0xf]
      %v2524 = vld [vmem:[%s2 + $0x3c] sm:$0xf]
      %v2541 = vunpack.c.l.b16 %v2509
      %v2542 = vunpack.c.l.b16 %v2510
      %v2543 = vunpack.c.l.b16 %v2511
      %v2544 = vunpack.c.l.b16 %v2512
      %v2545 = vunpack.c.l.b16 %v2513
      %v2546 = vunpack.c.l.b16 %v2514
      %v2547 = vunpack.c.l.b16 %v2515
      %v2548 = vunpack.c.l.b16 %v2516
      %v2549 = vunpack.c.l.b16 %v2517
      %v2550 = vunpack.c.l.b16 %v2518
      %v2551 = vunpack.c.l.b16 %v2519
      %v2552 = vunpack.c.l.b16 %v2520
      %v2553 = vunpack.c.l.b16 %v2521
      %v2554 = vunpack.c.l.b16 %v2522
      %v2555 = vunpack.c.l.b16 %v2523
      %v2556 = vunpack.c.l.b16 %v2524
      %v2557 = vpack.c.b16 %v2542, %v2541
      %v2558 = vpack.c.b16 %v2544, %v2543
      %v2559 = vpack.c.b16 %v2546, %v2545
      %v2560 = vpack.c.b16 %v2548, %v2547
      %v2561 = vpack.c.b16 %v2550, %v2549
      %v2562 = vpack.c.b16 %v2552, %v2551
      %v2563 = vpack.c.b16 %v2554, %v2553
      %v2564 = vpack.c.b16 %v2556, %v2555
      %2573 = vmatprep.subr.bf16.mxu0 0
      %2574 = vmatpush1.bf16.msra.mxu0 %v2557
      %2575 = vmatprep.subr.bf16.mxu0 0
      %2576 = vmatpush1.bf16.msra.mxu0 %v2558
      %2577 = vmatprep.subr.bf16.mxu0 0
      %2578 = vmatpush1.bf16.msra.mxu0 %v2559
      %2579 = vmatprep.subr.bf16.mxu0 0
      %2580 = vmatpush1.bf16.msra.mxu0 %v2560
      %2581 = vmatprep.subr.bf16.mxu0 0
      %2582 = vmatpush1.bf16.msra.mxu0 %v2561
      %2583 = vmatprep.subr.bf16.mxu0 0
      %2584 = vmatpush1.bf16.msra.mxu0 %v2562
      %2585 = vmatprep.subr.bf16.mxu0 0
      %2586 = vmatpush1.bf16.msra.mxu0 %v2563
      %2587 = vmatprep.subr.bf16.mxu0 0
      %2588 = vmatpush1.bf16.msra.mxu0 %v2564
      %2589 = vmatprep.subr.bf16.mxu0 0
      %2590 = vmatpush1.bf16.msra.mxu0 0
      %2591 = vmatprep.subr.bf16.mxu0 0
      %2592 = vmatpush1.bf16.msra.mxu0 0
      %2593 = vmatprep.subr.bf16.mxu0 0
      %2594 = vmatpush1.bf16.msra.mxu0 0
      %2595 = vmatprep.subr.bf16.mxu0 0
      %2596 = vmatpush1.bf16.msra.mxu0 0
      %2597 = vmatprep.subr.bf16.mxu0 0
      %2598 = vmatpush1.bf16.msra.mxu0 0
      %2599 = vmatprep.subr.bf16.mxu0 0
      %2600 = vmatpush1.bf16.msra.mxu0 0
      %2601 = vmatprep.subr.bf16.mxu0 0
      %2602 = vmatpush1.bf16.msra.mxu0 0
      %2603 = vmatprep.subr.bf16.mxu0 0
      %2604 = vmatpush1.bf16.msra.mxu0 0
      %2605 = vmatprep.mubr.bf16.mxu0 0
      %2606 = vmatmul.mubr.bf16.gmra.mrb[0].mxu0 %v2493
      %v2607 = vpop.f32.mrb[0].mxu0
      %v2608 = vadd.f32 0.0, %v2607
      %v2609 = vpop.f32.mrb[0].mxu0
      %v2610 = vpop.f32.mrb[0].mxu0
      %v2611 = vadd.f32 0.0, %v2610
      %v2612 = vpop.f32.mrb[0].mxu0
      %2613 = vmatprep.mubr.bf16.mxu0 0
      %2614 = vmatmul.mubr.bf16.gmra.mrb[0].mxu0 %v2494
      %v2615 = vpop.f32.mrb[0].mxu0
      %v2616 = vadd.f32 0.0, %v2615
      %v2617 = vpop.f32.mrb[0].mxu0
      %v2618 = vpop.f32.mrb[0].mxu0
      %v2619 = vadd.f32 0.0, %v2618
      %v2620 = vpop.f32.mrb[0].mxu0
      %2621 = vmatprep.mubr.bf16.mxu0 0
      %2622 = vmatmul.mubr.bf16.gmra.mrb[0].mxu0 %v2495
      %v2623 = vpop.f32.mrb[0].mxu0
      %v2624 = vadd.f32 0.0, %v2623
      %v2625 = vpop.f32.mrb[0].mxu0
      %v2626 = vpop.f32.mrb[0].mxu0
      %v2627 = vadd.f32 0.0, %v2626
      %v2628 = vpop.f32.mrb[0].mxu0
      %2629 = vmatprep.mubr.bf16.mxu0 0
      %2630 = vmatmul.mubr.bf16.gmra.mrb[0].mxu0 %v2496
      %v2631 = vpop.f32.mrb[0].mxu0
      %v2632 = vadd.f32 0.0, %v2631
      %v2633 = vpop.f32.mrb[0].mxu0
      %v2634 = vpop.f32.mrb[0].mxu0
      %v2635 = vadd.f32 0.0, %v2634
      %v2636 = vpop.f32.mrb[0].mxu0
      %2637 = vmatprep.mubr.bf16.mxu0 0
      %2638 = vmatmul.mubr.bf16.gmra.mrb[0].mxu0 %v2497
      %v2639 = vpop.f32.mrb[0].mxu0
      %v2640 = vadd.f32 0.0, %v2639
      %v2641 = vpop.f32.mrb[0].mxu0
      %v2642 = vpop.f32.mrb[0].mxu0
      %v2643 = vadd.f32 0.0, %v2642
      %v2644 = vpop.f32.mrb[0].mxu0
      %2645 = vmatprep.mubr.bf16.mxu0 0
      %2646 = vmatmul.mubr.bf16.gmra.mrb[0].mxu0 %v2498
      %v2647 = vpop.f32.mrb[0].mxu0
      %v2648 = vadd.f32 0.0, %v2647
      %v2649 = vpop.f32.mrb[0].mxu0
      %v2650 = vpop.f32.mrb[0].mxu0
      %v2651 = vadd.f32 0.0, %v2650
      %v2652 = vpop.f32.mrb[0].mxu0
      %2653 = vmatprep.mubr.bf16.mxu0 0
      %2654 = vmatmul.mubr.bf16.gmra.mrb[0].mxu0 %v2499
      %v2655 = vpop.f32.mrb[0].mxu0
      %v2656 = vadd.f32 0.0, %v2655
      %v2657 = vpop.f32.mrb[0].mxu0
      %v2658 = vpop.f32.mrb[0].mxu0
      %v2659 = vadd.f32 0.0, %v2658
      %v2660 = vpop.f32.mrb[0].mxu0
      %2661 = vmatprep.mubr.bf16.mxu0 0
      %2662 = vmatmul.mubr.bf16.gmra.mrb[0].mxu0 %v2500
      %v2663 = vpop.f32.mrb[0].mxu0
      %v2664 = vadd.f32 0.0, %v2663
      %v2665 = vpop.f32.mrb[0].mxu0
      %v2666 = vpop.f32.mrb[0].mxu0
      %v2667 = vadd.f32 0.0, %v2666
      %v2668 = vpop.f32.mrb[0].mxu0
      %2669 = vmatprep.mubr.bf16.mxu0 0
      %2670 = vmatmul.mubr.bf16.gmra.mrb[0].mxu0 %v2501
      %v2671 = vpop.f32.mrb[0].mxu0
      %v2672 = vadd.f32 0.0, %v2671
      %v2673 = vpop.f32.mrb[0].mxu0
      %v2674 = vpop.f32.mrb[0].mxu0
      %v2675 = vadd.f32 0.0, %v2674
      %v2676 = vpop.f32.mrb[0].mxu0
      %2677 = vmatprep.mubr.bf16.mxu0 0
      %2678 = vmatmul.mubr.bf16.gmra.mrb[0].mxu0 %v2502
      %v2679 = vpop.f32.mrb[0].mxu0
      %v2680 = vadd.f32 0.0, %v2679
      %v2681 = vpop.f32.mrb[0].mxu0
      %v2682 = vpop.f32.mrb[0].mxu0
      %v2683 = vadd.f32 0.0, %v2682
      %v2684 = vpop.f32.mrb[0].mxu0
      %2685 = vmatprep.mubr.bf16.mxu0 0
      %2686 = vmatmul.mubr.bf16.gmra.mrb[0].mxu0 %v2503
      %v2687 = vpop.f32.mrb[0].mxu0
      %v2688 = vadd.f32 0.0, %v2687
      %v2689 = vpop.f32.mrb[0].mxu0
      %v2690 = vpop.f32.mrb[0].mxu0
      %v2691 = vadd.f32 0.0, %v2690
      %v2692 = vpop.f32.mrb[0].mxu0
      %2693 = vmatprep.mubr.bf16.mxu0 0
      %2694 = vmatmul.mubr.bf16.gmra.mrb[0].mxu0 %v2504
      %v2695 = vpop.f32.mrb[0].mxu0
      %v2696 = vadd.f32 0.0, %v2695
      %v2697 = vpop.f32.mrb[0].mxu0
      %v2698 = vpop.f32.mrb[0].mxu0
      %v2699 = vadd.f32 0.0, %v2698
      %v2700 = vpop.f32.mrb[0].mxu0
      %2701 = vmatprep.mubr.bf16.mxu0 0
      %2702 = vmatmul.mubr.bf16.gmra.mrb[0].mxu0 %v2505
      %v2703 = vpop.f32.mrb[0].mxu0
      %v2704 = vadd.f32 0.0, %v2703
      %v2705 = vpop.f32.mrb[0].mxu0
      %v2706 = vpop.f32.mrb[0].mxu0
      %v2707 = vadd.f32 0.0, %v2706
      %v2708 = vpop.f32.mrb[0].mxu0
      %2709 = vmatprep.mubr.bf16.mxu0 0
      %2710 = vmatmul.mubr.bf16.gmra.mrb[0].mxu0 %v2506
      %v2711 = vpop.f32.mrb[0].mxu0
      %v2712 = vadd.f32 0.0, %v2711
      %v2713 = vpop.f32.mrb[0].mxu0
      %v2714 = vpop.f32.mrb[0].mxu0
      %v2715 = vadd.f32 0.0, %v2714
      %v2716 = vpop.f32.mrb[0].mxu0
      %2717 = vmatprep.mubr.bf16.mxu0 0
      %2718 = vmatmul.mubr.bf16.gmra.mrb[0].mxu0 %v2507
      %v2719 = vpop.f32.mrb[0].mxu0
      %v2720 = vadd.f32 0.0, %v2719
      %v2721 = vpop.f32.mrb[0].mxu0
      %v2722 = vpop.f32.mrb[0].mxu0
      %v2723 = vadd.f32 0.0, %v2722
      %v2724 = vpop.f32.mrb[0].mxu0
      %2725 = vmatprep.mubr.bf16.mxu0 0
      %2726 = vmatmul.mubr.bf16.gmra.mrb[0].mxu0 %v2508
      %v2727 = vpop.f32.mrb[0].mxu0
      %v2728 = vadd.f32 0.0, %v2727
      %v2729 = vpop.f32.mrb[0].mxu0
      %v2730 = vpop.f32.mrb[0].mxu0
      %v2731 = vadd.f32 0.0, %v2730
      %v2732 = vpop.f32.mrb[0].mxu0
      %2733 = vdwg.mxu0
      %2734 = vst [vmem:[#allocation4] sm:$0xff] %v2608
      %2735 = vst [vmem:[#allocation4 + $0x8] sm:$0xff] %v2611
      %2736 = vst [vmem:[#allocation4 + $0x10] sm:$0xff] %v2616
      %2737 = vst [vmem:[#allocation4 + $0x18] sm:$0xff] %v2619
      %2738 = vst [vmem:[#allocation4 + $0x20] sm:$0xff] %v2624
      %2739 = vst [vmem:[#allocation4 + $0x28] sm:$0xff] %v2627
      %2740 = vst [vmem:[#allocation4 + $0x30] sm:$0xff] %v2632
      %2741 = vst [vmem:[#allocation4 + $0x38] sm:$0xff] %v2635
      %2742 = vst [vmem:[#allocation4 + $0x40] sm:$0xff] %v2640
      %2743 = vst [vmem:[#allocation4 + $0x48] sm:$0xff] %v2643
      %2744 = vst [vmem:[#allocation4 + $0x50] sm:$0xff] %v2648
      %2745 = vst [vmem:[#allocation4 + $0x58] sm:$0xff] %v2651
      %2746 = vst [vmem:[#allocation4 + $0x60] sm:$0xff] %v2656
      %2747 = vst [vmem:[#allocation4 + $0x68] sm:$0xff] %v2659
      %2748 = vst [vmem:[#allocation4 + $0x70] sm:$0xff] %v2664
      %2749 = vst [vmem:[#allocation4 + $0x78] sm:$0xff] %v2667
      %2750 = vst [vmem:[#allocation4 + $0x80] sm:$0xff] %v2672
      %2751 = vst [vmem:[#allocation4 + $0x88] sm:$0xff] %v2675
      %2752 = vst [vmem:[#allocation4 + $0x90] sm:$0xff] %v2680
      %2753 = vst [vmem:[#allocation4 + $0x98] sm:$0xff] %v2683
      %2754 = vst [vmem:[#allocation4 + $0xa0] sm:$0xff] %v2688
      %2755 = vst [vmem:[#allocation4 + $0xa8] sm:$0xff] %v2691
      %2756 = vst [vmem:[#allocation4 + $0xb0] sm:$0xff] %v2696
      %2757 = vst [vmem:[#allocation4 + $0xb8] sm:$0xff] %v2699
      %2758 = vst [vmem:[#allocation4 + $0xc0] sm:$0xff] %v2704
      %2759 = vst [vmem:[#allocation4 + $0xc8] sm:$0xff] %v2707
      %2760 = vst [vmem:[#allocation4 + $0xd0] sm:$0xff] %v2712
      %2761 = vst [vmem:[#allocation4 + $0xd8] sm:$0xff] %v2715
      %2762 = vst [vmem:[#allocation4 + $0xe0] sm:$0xff] %v2720
      %2763 = vst [vmem:[#allocation4 + $0xe8] sm:$0xff] %v2723
      %2764 = vst [vmem:[#allocation4 + $0xf0] sm:$0xff] %v2728
      %2765 = vst [vmem:[#allocation4 + $0xf8] sm:$0xff] %v2731
      %v2766 = vld [vmem:[#allocation3 + $0x1] sm:$0xff]
      %v2767 = vld [vmem:[#allocation3 + $0x9] sm:$0xff]
      %v2768 = vld [vmem:[#allocation3 + $0x19] sm:$0xff]
      %v2769 = vld [vmem:[#allocation3 + $0x21] sm:$0xff]
      %v2770 = vld [vmem:[#allocation3 + $0x31] sm:$0xff]
      %v2771 = vld [vmem:[#allocation3 + $0x39] sm:$0xff]
      %v2772 = vld [vmem:[#allocation3 + $0x49] sm:$0xff]
      %v2773 = vld [vmem:[#allocation3 + $0x51] sm:$0xff]
      %v2774 = vld [vmem:[#allocation3 + $0x61] sm:$0xff]
      %v2775 = vld [vmem:[#allocation3 + $0x69] sm:$0xff]
      %v2776 = vld [vmem:[#allocation3 + $0x79] sm:$0xff]
      %v2777 = vld [vmem:[#allocation3 + $0x81] sm:$0xff]
      %v2778 = vld [vmem:[#allocation3 + $0x91] sm:$0xff]
      %v2779 = vld [vmem:[#allocation3 + $0x99] sm:$0xff]
      %v2780 = vld [vmem:[#allocation3 + $0xa9] sm:$0xff]
      %v2781 = vld [vmem:[#allocation3 + $0xb1] sm:$0xff]
      %v2782 = vld [vmem:[#allocation3 + $0xc1] sm:$0xff]
      %v2783 = vld [vmem:[#allocation3 + $0xc9] sm:$0xff]
      %v2784 = vld [vmem:[#allocation3 + $0xd9] sm:$0xff]
      %v2785 = vld [vmem:[#allocation3 + $0xe1] sm:$0xff]
      %v2786 = vld [vmem:[#allocation3 + $0xf1] sm:$0xff]
      %v2787 = vld [vmem:[#allocation3 + $0xf9] sm:$0xff]
      %v2788 = vld [vmem:[#allocation3 + $0x109] sm:$0xff]
      %v2789 = vld [vmem:[#allocation3 + $0x111] sm:$0xff]
      %v2790 = vld [vmem:[#allocation3 + $0x121] sm:$0xff]
      %v2791 = vld [vmem:[#allocation3 + $0x129] sm:$0xff]
      %v2792 = vld [vmem:[#allocation3 + $0x139] sm:$0xff]
      %v2793 = vld [vmem:[#allocation3 + $0x141] sm:$0xff]
      %v2794 = vld [vmem:[#allocation3 + $0x151] sm:$0xff]
      %v2795 = vld [vmem:[#allocation3 + $0x159] sm:$0xff]
      %v2796 = vld [vmem:[#allocation3 + $0x169] sm:$0xff]
      %v2797 = vld [vmem:[#allocation3 + $0x171] sm:$0xff]
      %v2798 = vpack.c.bf16 %v2767, %v2766
      %v2799 = vpack.c.bf16 %v2769, %v2768
      %v2800 = vpack.c.bf16 %v2771, %v2770
      %v2801 = vpack.c.bf16 %v2773, %v2772
      %v2802 = vpack.c.bf16 %v2775, %v2774
      %v2803 = vpack.c.bf16 %v2777, %v2776
      %v2804 = vpack.c.bf16 %v2779, %v2778
      %v2805 = vpack.c.bf16 %v2781, %v2780
      %v2806 = vpack.c.bf16 %v2783, %v2782
      %v2807 = vpack.c.bf16 %v2785, %v2784
      %v2808 = vpack.c.bf16 %v2787, %v2786
      %v2809 = vpack.c.bf16 %v2789, %v2788
      %v2810 = vpack.c.bf16 %v2791, %v2790
      %v2811 = vpack.c.bf16 %v2793, %v2792
      %v2812 = vpack.c.bf16 %v2795, %v2794
      %v2813 = vpack.c.bf16 %v2797, %v2796
      %s2814 = scalar_lea.vmem %s2, 64
      %v2815 = vld [vmem:[%s2814] sm:$0xf]
      %v2816 = vld [vmem:[%s2814 + $0x4] sm:$0xf]
      %v2817 = vld [vmem:[%s2814 + $0x8] sm:$0xf]
      %v2818 = vld [vmem:[%s2814 + $0xc] sm:$0xf]
      %v2819 = vld [vmem:[%s2814 + $0x10] sm:$0xf]
      %v2820 = vld [vmem:[%s2814 + $0x14] sm:$0xf]
      %v2821 = vld [vmem:[%s2814 + $0x18] sm:$0xf]
      %v2822 = vld [vmem:[%s2814 + $0x1c] sm:$0xf]
      %v2823 = vld [vmem:[%s2814 + $0x20] sm:$0xf]
      %v2824 = vld [vmem:[%s2814 + $0x24] sm:$0xf]
      %v2825 = vld [vmem:[%s2814 + $0x28] sm:$0xf]
      %v2826 = vld [vmem:[%s2814 + $0x2c] sm:$0xf]
      %v2827 = vld [vmem:[%s2814 + $0x30] sm:$0xf]
      %v2828 = vld [vmem:[%s2814 + $0x34] sm:$0xf]
      %v2829 = vld [vmem:[%s2814 + $0x38] sm:$0xf]
      %v2830 = vld [vmem:[%s2814 + $0x3c] sm:$0xf]
      %v2847 = vunpack.c.l.b16 %v2815
      %v2848 = vunpack.c.l.b16 %v2816
      %v2849 = vunpack.c.l.b16 %v2817
      %v2850 = vunpack.c.l.b16 %v2818
      %v2851 = vunpack.c.l.b16 %v2819
      %v2852 = vunpack.c.l.b16 %v2820
      %v2853 = vunpack.c.l.b16 %v2821
      %v2854 = vunpack.c.l.b16 %v2822
      %v2855 = vunpack.c.l.b16 %v2823
      %v2856 = vunpack.c.l.b16 %v2824
      %v2857 = vunpack.c.l.b16 %v2825
      %v2858 = vunpack.c.l.b16 %v2826
      %v2859 = vunpack.c.l.b16 %v2827
      %v2860 = vunpack.c.l.b16 %v2828
      %v2861 = vunpack.c.l.b16 %v2829
      %v2862 = vunpack.c.l.b16 %v2830
      %v2863 = vpack.c.b16 %v2848, %v2847
      %v2864 = vpack.c.b16 %v2850, %v2849
      %v2865 = vpack.c.b16 %v2852, %v2851
      %v2866 = vpack.c.b16 %v2854, %v2853
      %v2867 = vpack.c.b16 %v2856, %v2855
      %v2868 = vpack.c.b16 %v2858, %v2857
      %v2869 = vpack.c.b16 %v2860, %v2859
      %v2870 = vpack.c.b16 %v2862, %v2861
      %2879 = vmatprep.subr.bf16.mxu0 0
      %2880 = vmatpush1.bf16.msra.mxu0 %v2863
      %2881 = vmatprep.subr.bf16.mxu0 0
      %2882 = vmatpush1.bf16.msra.mxu0 %v2864
      %2883 = vmatprep.subr.bf16.mxu0 0
      %2884 = vmatpush1.bf16.msra.mxu0 %v2865
      %2885 = vmatprep.subr.bf16.mxu0 0
      %2886 = vmatpush1.bf16.msra.mxu0 %v2866
      %2887 = vmatprep.subr.bf16.mxu0 0
      %2888 = vmatpush1.bf16.msra.mxu0 %v2867
      %2889 = vmatprep.subr.bf16.mxu0 0
      %2890 = vmatpush1.bf16.msra.mxu0 %v2868
      %2891 = vmatprep.subr.bf16.mxu0 0
      %2892 = vmatpush1.bf16.msra.mxu0 %v2869
      %2893 = vmatprep.subr.bf16.mxu0 0
      %2894 = vmatpush1.bf16.msra.mxu0 %v2870
      %2895 = vmatprep.subr.bf16.mxu0 0
      %2896 = vmatpush1.bf16.msra.mxu0 0
      %2897 = vmatprep.subr.bf16.mxu0 0
      %2898 = vmatpush1.bf16.msra.mxu0 0
      %2899 = vmatprep.subr.bf16.mxu0 0
      %2900 = vmatpush1.bf16.msra.mxu0 0
      %2901 = vmatprep.subr.bf16.mxu0 0
      %2902 = vmatpush1.bf16.msra.mxu0 0
      %2903 = vmatprep.subr.bf16.mxu0 0
      %2904 = vmatpush1.bf16.msra.mxu0 0
      %2905 = vmatprep.subr.bf16.mxu0 0
      %2906 = vmatpush1.bf16.msra.mxu0 0
      %2907 = vmatprep.subr.bf16.mxu0 0
      %2908 = vmatpush1.bf16.msra.mxu0 0
      %2909 = vmatprep.subr.bf16.mxu0 0
      %2910 = vmatpush1.bf16.msra.mxu0 0
      %2911 = vmatprep.mubr.bf16.mxu0 0
      %2912 = vmatmul.mubr.bf16.gmra.mrb[0].mxu0 %v2798
      %v2913 = vpop.f32.mrb[0].mxu0
      %v2914 = vadd.f32 0.0, %v2913
      %v2915 = vpop.f32.mrb[0].mxu0
      %v2916 = vpop.f32.mrb[0].mxu0
      %v2917 = vadd.f32 0.0, %v2916
      %v2918 = vpop.f32.mrb[0].mxu0
      %2919 = vmatprep.mubr.bf16.mxu0 0
      %2920 = vmatmul.mubr.bf16.gmra.mrb[0].mxu0 %v2799
      %v2921 = vpop.f32.mrb[0].mxu0
      %v2922 = vadd.f32 0.0, %v2921
      %v2923 = vpop.f32.mrb[0].mxu0
      %v2924 = vpop.f32.mrb[0].mxu0
      %v2925 = vadd.f32 0.0, %v2924
      %v2926 = vpop.f32.mrb[0].mxu0
      %2927 = vmatprep.mubr.bf16.mxu0 0
      %2928 = vmatmul.mubr.bf16.gmra.mrb[0].mxu0 %v2800
      %v2929 = vpop.f32.mrb[0].mxu0
      %v2930 = vadd.f32 0.0, %v2929
      %v2931 = vpop.f32.mrb[0].mxu0
      %v2932 = vpop.f32.mrb[0].mxu0
      %v2933 = vadd.f32 0.0, %v2932
      %v2934 = vpop.f32.mrb[0].mxu0
      %2935 = vmatprep.mubr.bf16.mxu0 0
      %2936 = vmatmul.mubr.bf16.gmra.mrb[0].mxu0 %v2801
      %v2937 = vpop.f32.mrb[0].mxu0
      %v2938 = vadd.f32 0.0, %v2937
      %v2939 = vpop.f32.mrb[0].mxu0
      %v2940 = vpop.f32.mrb[0].mxu0
      %v2941 = vadd.f32 0.0, %v2940
      %v2942 = vpop.f32.mrb[0].mxu0
      %2943 = vmatprep.mubr.bf16.mxu0 0
      %2944 = vmatmul.mubr.bf16.gmra.mrb[0].mxu0 %v2802
      %v2945 = vpop.f32.mrb[0].mxu0
      %v2946 = vadd.f32 0.0, %v2945
      %v2947 = vpop.f32.mrb[0].mxu0
      %v2948 = vpop.f32.mrb[0].mxu0
      %v2949 = vadd.f32 0.0, %v2948
      %v2950 = vpop.f32.mrb[0].mxu0
      %2951 = vmatprep.mubr.bf16.mxu0 0
      %2952 = vmatmul.mubr.bf16.gmra.mrb[0].mxu0 %v2803
      %v2953 = vpop.f32.mrb[0].mxu0
      %v2954 = vadd.f32 0.0, %v2953
      %v2955 = vpop.f32.mrb[0].mxu0
      %v2956 = vpop.f32.mrb[0].mxu0
      %v2957 = vadd.f32 0.0, %v2956
      %v2958 = vpop.f32.mrb[0].mxu0
      %2959 = vmatprep.mubr.bf16.mxu0 0
      %2960 = vmatmul.mubr.bf16.gmra.mrb[0].mxu0 %v2804
      %v2961 = vpop.f32.mrb[0].mxu0
      %v2962 = vadd.f32 0.0, %v2961
      %v2963 = vpop.f32.mrb[0].mxu0
      %v2964 = vpop.f32.mrb[0].mxu0
      %v2965 = vadd.f32 0.0, %v2964
      %v2966 = vpop.f32.mrb[0].mxu0
      %2967 = vmatprep.mubr.bf16.mxu0 0
      %2968 = vmatmul.mubr.bf16.gmra.mrb[0].mxu0 %v2805
      %v2969 = vpop.f32.mrb[0].mxu0
      %v2970 = vadd.f32 0.0, %v2969
      %v2971 = vpop.f32.mrb[0].mxu0
      %v2972 = vpop.f32.mrb[0].mxu0
      %v2973 = vadd.f32 0.0, %v2972
      %v2974 = vpop.f32.mrb[0].mxu0
      %2975 = vmatprep.mubr.bf16.mxu0 0
      %2976 = vmatmul.mubr.bf16.gmra.mrb[0].mxu0 %v2806
      %v2977 = vpop.f32.mrb[0].mxu0
      %v2978 = vadd.f32 0.0, %v2977
      %v2979 = vpop.f32.mrb[0].mxu0
      %v2980 = vpop.f32.mrb[0].mxu0
      %v2981 = vadd.f32 0.0, %v2980
      %v2982 = vpop.f32.mrb[0].mxu0
      %2983 = vmatprep.mubr.bf16.mxu0 0
      %2984 = vmatmul.mubr.bf16.gmra.mrb[0].mxu0 %v2807
      %v2985 = vpop.f32.mrb[0].mxu0
      %v2986 = vadd.f32 0.0, %v2985
      %v2987 = vpop.f32.mrb[0].mxu0
      %v2988 = vpop.f32.mrb[0].mxu0
      %v2989 = vadd.f32 0.0, %v2988
      %v2990 = vpop.f32.mrb[0].mxu0
      %2991 = vmatprep.mubr.bf16.mxu0 0
      %2992 = vmatmul.mubr.bf16.gmra.mrb[0].mxu0 %v2808
      %v2993 = vpop.f32.mrb[0].mxu0
      %v2994 = vadd.f32 0.0, %v2993
      %v2995 = vpop.f32.mrb[0].mxu0
      %v2996 = vpop.f32.mrb[0].mxu0
      %v2997 = vadd.f32 0.0, %v2996
      %v2998 = vpop.f32.mrb[0].mxu0
      %2999 = vmatprep.mubr.bf16.mxu0 0
      %3000 = vmatmul.mubr.bf16.gmra.mrb[0].mxu0 %v2809
      %v3001 = vpop.f32.mrb[0].mxu0
      %v3002 = vadd.f32 0.0, %v3001
      %v3003 = vpop.f32.mrb[0].mxu0
      %v3004 = vpop.f32.mrb[0].mxu0
      %v3005 = vadd.f32 0.0, %v3004
      %v3006 = vpop.f32.mrb[0].mxu0
      %3007 = vmatprep.mubr.bf16.mxu0 0
      %3008 = vmatmul.mubr.bf16.gmra.mrb[0].mxu0 %v2810
      %v3009 = vpop.f32.mrb[0].mxu0
      %v3010 = vadd.f32 0.0, %v3009
      %v3011 = vpop.f32.mrb[0].mxu0
      %v3012 = vpop.f32.mrb[0].mxu0
      %v3013 = vadd.f32 0.0, %v3012
      %v3014 = vpop.f32.mrb[0].mxu0
      %3015 = vmatprep.mubr.bf16.mxu0 0
      %3016 = vmatmul.mubr.bf16.gmra.mrb[0].mxu0 %v2811
      %v3017 = vpop.f32.mrb[0].mxu0
      %v3018 = vadd.f32 0.0, %v3017
      %v3019 = vpop.f32.mrb[0].mxu0
      %v3020 = vpop.f32.mrb[0].mxu0
      %v3021 = vadd.f32 0.0, %v3020
      %v3022 = vpop.f32.mrb[0].mxu0
      %3023 = vmatprep.mubr.bf16.mxu0 0
      %3024 = vmatmul.mubr.bf16.gmra.mrb[0].mxu0 %v2812
      %v3025 = vpop.f32.mrb[0].mxu0
      %v3026 = vadd.f32 0.0, %v3025
      %v3027 = vpop.f32.mrb[0].mxu0
      %v3028 = vpop.f32.mrb[0].mxu0
      %v3029 = vadd.f32 0.0, %v3028
      %v3030 = vpop.f32.mrb[0].mxu0
      %3031 = vmatprep.mubr.bf16.mxu0 0
      %3032 = vmatmul.mubr.bf16.gmra.mrb[0].mxu0 %v2813
      %v3033 = vpop.f32.mrb[0].mxu0
      %v3034 = vadd.f32 0.0, %v3033
      %v3035 = vpop.f32.mrb[0].mxu0
      %v3036 = vpop.f32.mrb[0].mxu0
      %v3037 = vadd.f32 0.0, %v3036
      %v3038 = vpop.f32.mrb[0].mxu0
      %3039 = vdwg.mxu0
      %v3040 = vld [vmem:[#allocation4] sm:$0xff]
      %v3041 = vld [vmem:[#allocation4 + $0x8] sm:$0xff]
      %v3042 = vld [vmem:[#allocation4 + $0x10] sm:$0xff]
      %v3043 = vld [vmem:[#allocation4 + $0x18] sm:$0xff]
      %v3044 = vld [vmem:[#allocation4 + $0x20] sm:$0xff]
      %v3045 = vld [vmem:[#allocation4 + $0x28] sm:$0xff]
      %v3046 = vld [vmem:[#allocation4 + $0x30] sm:$0xff]
      %v3047 = vld [vmem:[#allocation4 + $0x38] sm:$0xff]
      %v3048 = vld [vmem:[#allocation4 + $0x40] sm:$0xff]
      %v3049 = vld [vmem:[#allocation4 + $0x48] sm:$0xff]
      %v3050 = vld [vmem:[#allocation4 + $0x50] sm:$0xff]
      %v3051 = vld [vmem:[#allocation4 + $0x58] sm:$0xff]
      %v3052 = vld [vmem:[#allocation4 + $0x60] sm:$0xff]
      %v3053 = vld [vmem:[#allocation4 + $0x68] sm:$0xff]
      %v3054 = vld [vmem:[#allocation4 + $0x70] sm:$0xff]
      %v3055 = vld [vmem:[#allocation4 + $0x78] sm:$0xff]
      %v3056 = vld [vmem:[#allocation4 + $0x80] sm:$0xff]
      %v3057 = vld [vmem:[#allocation4 + $0x88] sm:$0xff]
      %v3058 = vld [vmem:[#allocation4 + $0x90] sm:$0xff]
      %v3059 = vld [vmem:[#allocation4 + $0x98] sm:$0xff]
      %v3060 = vld [vmem:[#allocation4 + $0xa0] sm:$0xff]
      %v3061 = vld [vmem:[#allocation4 + $0xa8] sm:$0xff]
      %v3062 = vld [vmem:[#allocation4 + $0xb0] sm:$0xff]
      %v3063 = vld [vmem:[#allocation4 + $0xb8] sm:$0xff]
      %v3064 = vld [vmem:[#allocation4 + $0xc0] sm:$0xff]
      %v3065 = vld [vmem:[#allocation4 + $0xc8] sm:$0xff]
      %v3066 = vld [vmem:[#allocation4 + $0xd0] sm:$0xff]
      %v3067 = vld [vmem:[#allocation4 + $0xd8] sm:$0xff]
      %v3068 = vld [vmem:[#allocation4 + $0xe0] sm:$0xff]
      %v3069 = vld [vmem:[#allocation4 + $0xe8] sm:$0xff]
      %v3070 = vld [vmem:[#allocation4 + $0xf0] sm:$0xff]
      %v3071 = vld [vmem:[#allocation4 + $0xf8] sm:$0xff]
      %v3072 = vadd.f32 %v3040, %v2914
      %v3073 = vadd.f32 %v3041, %v2917
      %v3074 = vadd.f32 %v3042, %v2922
      %v3075 = vadd.f32 %v3043, %v2925
      %v3076 = vadd.f32 %v3044, %v2930
      %v3077 = vadd.f32 %v3045, %v2933
      %v3078 = vadd.f32 %v3046, %v2938
      %v3079 = vadd.f32 %v3047, %v2941
      %v3080 = vadd.f32 %v3048, %v2946
      %v3081 = vadd.f32 %v3049, %v2949
      %v3082 = vadd.f32 %v3050, %v2954
      %v3083 = vadd.f32 %v3051, %v2957
      %v3084 = vadd.f32 %v3052, %v2962
      %v3085 = vadd.f32 %v3053, %v2965
      %v3086 = vadd.f32 %v3054, %v2970
      %v3087 = vadd.f32 %v3055, %v2973
      %v3088 = vadd.f32 %v3056, %v2978
      %v3089 = vadd.f32 %v3057, %v2981
      %v3090 = vadd.f32 %v3058, %v2986
      %v3091 = vadd.f32 %v3059, %v2989
      %v3092 = vadd.f32 %v3060, %v2994
      %v3093 = vadd.f32 %v3061, %v2997
      %v3094 = vadd.f32 %v3062, %v3002
      %v3095 = vadd.f32 %v3063, %v3005
      %v3096 = vadd.f32 %v3064, %v3010
      %v3097 = vadd.f32 %v3065, %v3013
      %v3098 = vadd.f32 %v3066, %v3018
      %v3099 = vadd.f32 %v3067, %v3021
      %v3100 = vadd.f32 %v3068, %v3026
      %v3101 = vadd.f32 %v3069, %v3029
      %v3102 = vadd.f32 %v3070, %v3034
      %v3103 = vadd.f32 %v3071, %v3037
      %3104 = vst [vmem:[#allocation4] sm:$0xff] %v3072
      %3105 = vst [vmem:[#allocation4 + $0x8] sm:$0xff] %v3073
      %3106 = vst [vmem:[#allocation4 + $0x10] sm:$0xff] %v3074
      %3107 = vst [vmem:[#allocation4 + $0x18] sm:$0xff] %v3075
      %3108 = vst [vmem:[#allocation4 + $0x20] sm:$0xff] %v3076
      %3109 = vst [vmem:[#allocation4 + $0x28] sm:$0xff] %v3077
      %3110 = vst [vmem:[#allocation4 + $0x30] sm:$0xff] %v3078
      %3111 = vst [vmem:[#allocation4 + $0x38] sm:$0xff] %v3079
      %3112 = vst [vmem:[#allocation4 + $0x40] sm:$0xff] %v3080
      %3113 = vst [vmem:[#allocation4 + $0x48] sm:$0xff] %v3081
      %3114 = vst [vmem:[#allocation4 + $0x50] sm:$0xff] %v3082
      %3115 = vst [vmem:[#allocation4 + $0x58] sm:$0xff] %v3083
      %3116 = vst [vmem:[#allocation4 + $0x60] sm:$0xff] %v3084
      %3117 = vst [vmem:[#allocation4 + $0x68] sm:$0xff] %v3085
      %3118 = vst [vmem:[#allocation4 + $0x70] sm:$0xff] %v3086
      %3119 = vst [vmem:[#allocation4 + $0x78] sm:$0xff] %v3087
      %3120 = vst [vmem:[#allocation4 + $0x80] sm:$0xff] %v3088
      %3121 = vst [vmem:[#allocation4 + $0x88] sm:$0xff] %v3089
      %3122 = vst [vmem:[#allocation4 + $0x90] sm:$0xff] %v3090
      %3123 = vst [vmem:[#allocation4 + $0x98] sm:$0xff] %v3091
      %3124 = vst [vmem:[#allocation4 + $0xa0] sm:$0xff] %v3092
      %3125 = vst [vmem:[#allocation4 + $0xa8] sm:$0xff] %v3093
      %3126 = vst [vmem:[#allocation4 + $0xb0] sm:$0xff] %v3094
      %3127 = vst [vmem:[#allocation4 + $0xb8] sm:$0xff] %v3095
      %3128 = vst [vmem:[#allocation4 + $0xc0] sm:$0xff] %v3096
      %3129 = vst [vmem:[#allocation4 + $0xc8] sm:$0xff] %v3097
      %3130 = vst [vmem:[#allocation4 + $0xd0] sm:$0xff] %v3098
      %3131 = vst [vmem:[#allocation4 + $0xd8] sm:$0xff] %v3099
      %3132 = vst [vmem:[#allocation4 + $0xe0] sm:$0xff] %v3100
      %3133 = vst [vmem:[#allocation4 + $0xe8] sm:$0xff] %v3101
      %3134 = vst [vmem:[#allocation4 + $0xf0] sm:$0xff] %v3102
      %3135 = vst [vmem:[#allocation4 + $0xf8] sm:$0xff] %v3103
      %v3136 = vld [vmem:[#allocation3 + $0x2] sm:$0xff]
      %v3137 = vld [vmem:[#allocation3 + $0xa] sm:$0xff]
      %v3138 = vld [vmem:[#allocation3 + $0x1a] sm:$0xff]
      %v3139 = vld [vmem:[#allocation3 + $0x22] sm:$0xff]
      %v3140 = vld [vmem:[#allocation3 + $0x32] sm:$0xff]
      %v3141 = vld [vmem:[#allocation3 + $0x3a] sm:$0xff]
      %v3142 = vld [vmem:[#allocation3 + $0x4a] sm:$0xff]
      %v3143 = vld [vmem:[#allocation3 + $0x52] sm:$0xff]
      %v3144 = vld [vmem:[#allocation3 + $0x62] sm:$0xff]
      %v3145 = vld [vmem:[#allocation3 + $0x6a] sm:$0xff]
      %v3146 = vld [vmem:[#allocation3 + $0x7a] sm:$0xff]
      %v3147 = vld [vmem:[#allocation3 + $0x82] sm:$0xff]
      %v3148 = vld [vmem:[#allocation3 + $0x92] sm:$0xff]
      %v3149 = vld [vmem:[#allocation3 + $0x9a] sm:$0xff]
      %v3150 = vld [vmem:[#allocation3 + $0xaa] sm:$0xff]
      %v3151 = vld [vmem:[#allocation3 + $0xb2] sm:$0xff]
      %v3152 = vld [vmem:[#allocation3 + $0xc2] sm:$0xff]
      %v3153 = vld [vmem:[#allocation3 + $0xca] sm:$0xff]
      %v3154 = vld [vmem:[#allocation3 + $0xda] sm:$0xff]
      %v3155 = vld [vmem:[#allocation3 + $0xe2] sm:$0xff]
      %v3156 = vld [vmem:[#allocation3 + $0xf2] sm:$0xff]
      %v3157 = vld [vmem:[#allocation3 + $0xfa] sm:$0xff]
      %v3158 = vld [vmem:[#allocation3 + $0x10a] sm:$0xff]
      %v3159 = vld [vmem:[#allocation3 + $0x112] sm:$0xff]
      %v3160 = vld [vmem:[#allocation3 + $0x122] sm:$0xff]
      %v3161 = vld [vmem:[#allocation3 + $0x12a] sm:$0xff]
      %v3162 = vld [vmem:[#allocation3 + $0x13a] sm:$0xff]
      %v3163 = vld [vmem:[#allocation3 + $0x142] sm:$0xff]
      %v3164 = vld [vmem:[#allocation3 + $0x152] sm:$0xff]
      %v3165 = vld [vmem:[#allocation3 + $0x15a] sm:$0xff]
      %v3166 = vld [vmem:[#allocation3 + $0x16a] sm:$0xff]
      %v3167 = vld [vmem:[#allocation3 + $0x172] sm:$0xff]
      %v3168 = vpack.c.bf16 %v3137, %v3136
      %v3169 = vpack.c.bf16 %v3139, %v3138
      %v3170 = vpack.c.bf16 %v3141, %v3140
      %v3171 = vpack.c.bf16 %v3143, %v3142
      %v3172 = vpack.c.bf16 %v3145, %v3144
      %v3173 = vpack.c.bf16 %v3147, %v3146
      %v3174 = vpack.c.bf16 %v3149, %v3148
      %v3175 = vpack.c.bf16 %v3151, %v3150
      %v3176 = vpack.c.bf16 %v3153, %v3152
      %v3177 = vpack.c.bf16 %v3155, %v3154
      %v3178 = vpack.c.bf16 %v3157, %v3156
      %v3179 = vpack.c.bf16 %v3159, %v3158
      %v3180 = vpack.c.bf16 %v3161, %v3160
      %v3181 = vpack.c.bf16 %v3163, %v3162
      %v3182 = vpack.c.bf16 %v3165, %v3164
      %v3183 = vpack.c.bf16 %v3167, %v3166
      %s3184 = scalar_lea.vmem %s2, 128
      %v3185 = vld [vmem:[%s3184] sm:$0xf]
      %v3186 = vld [vmem:[%s3184 + $0x4] sm:$0xf]
      %v3187 = vld [vmem:[%s3184 + $0x8] sm:$0xf]
      %v3188 = vld [vmem:[%s3184 + $0xc] sm:$0xf]
      %v3189 = vld [vmem:[%s3184 + $0x10] sm:$0xf]
      %v3190 = vld [vmem:[%s3184 + $0x14] sm:$0xf]
      %v3191 = vld [vmem:[%s3184 + $0x18] sm:$0xf]
      %v3192 = vld [vmem:[%s3184 + $0x1c] sm:$0xf]
      %v3193 = vld [vmem:[%s3184 + $0x20] sm:$0xf]
      %v3194 = vld [vmem:[%s3184 + $0x24] sm:$0xf]
      %v3195 = vld [vmem:[%s3184 + $0x28] sm:$0xf]
      %v3196 = vld [vmem:[%s3184 + $0x2c] sm:$0xf]
      %v3197 = vld [vmem:[%s3184 + $0x30] sm:$0xf]
      %v3198 = vld [vmem:[%s3184 + $0x34] sm:$0xf]
      %v3199 = vld [vmem:[%s3184 + $0x38] sm:$0xf]
      %v3200 = vld [vmem:[%s3184 + $0x3c] sm:$0xf]
      %v3217 = vunpack.c.l.b16 %v3185
      %v3218 = vunpack.c.l.b16 %v3186
      %v3219 = vunpack.c.l.b16 %v3187
      %v3220 = vunpack.c.l.b16 %v3188
      %v3221 = vunpack.c.l.b16 %v3189
      %v3222 = vunpack.c.l.b16 %v3190
      %v3223 = vunpack.c.l.b16 %v3191
      %v3224 = vunpack.c.l.b16 %v3192
      %v3225 = vunpack.c.l.b16 %v3193
      %v3226 = vunpack.c.l.b16 %v3194
      %v3227 = vunpack.c.l.b16 %v3195
      %v3228 = vunpack.c.l.b16 %v3196
      %v3229 = vunpack.c.l.b16 %v3197
      %v3230 = vunpack.c.l.b16 %v3198
      %v3231 = vunpack.c.l.b16 %v3199
      %v3232 = vunpack.c.l.b16 %v3200
      %v3233 = vpack.c.b16 %v3218, %v3217
      %v3234 = vpack.c.b16 %v3220, %v3219
      %v3235 = vpack.c.b16 %v3222, %v3221
      %v3236 = vpack.c.b16 %v3224, %v3223
      %v3237 = vpack.c.b16 %v3226, %v3225
      %v3238 = vpack.c.b16 %v3228, %v3227
      %v3239 = vpack.c.b16 %v3230, %v3229
      %v3240 = vpack.c.b16 %v3232, %v3231
      %3249 = vmatprep.subr.bf16.mxu0 0
      %3250 = vmatpush1.bf16.msra.mxu0 %v3233
      %3251 = vmatprep.subr.bf16.mxu0 0
      %3252 = vmatpush1.bf16.msra.mxu0 %v3234
      %3253 = vmatprep.subr.bf16.mxu0 0
      %3254 = vmatpush1.bf16.msra.mxu0 %v3235
      %3255 = vmatprep.subr.bf16.mxu0 0
      %3256 = vmatpush1.bf16.msra.mxu0 %v3236
      %3257 = vmatprep.subr.bf16.mxu0 0
      %3258 = vmatpush1.bf16.msra.mxu0 %v3237
      %3259 = vmatprep.subr.bf16.mxu0 0
      %3260 = vmatpush1.bf16.msra.mxu0 %v3238
      %3261 = vmatprep.subr.bf16.mxu0 0
      %3262 = vmatpush1.bf16.msra.mxu0 %v3239
      %3263 = vmatprep.subr.bf16.mxu0 0
      %3264 = vmatpush1.bf16.msra.mxu0 %v3240
      %3265 = vmatprep.subr.bf16.mxu0 0
      %3266 = vmatpush1.bf16.msra.mxu0 0
      %3267 = vmatprep.subr.bf16.mxu0 0
      %3268 = vmatpush1.bf16.msra.mxu0 0
      %3269 = vmatprep.subr.bf16.mxu0 0
      %3270 = vmatpush1.bf16.msra.mxu0 0
      %3271 = vmatprep.subr.bf16.mxu0 0
      %3272 = vmatpush1.bf16.msra.mxu0 0
      %3273 = vmatprep.subr.bf16.mxu0 0
      %3274 = vmatpush1.bf16.msra.mxu0 0
      %3275 = vmatprep.subr.bf16.mxu0 0
      %3276 = vmatpush1.bf16.msra.mxu0 0
      %3277 = vmatprep.subr.bf16.mxu0 0
      %3278 = vmatpush1.bf16.msra.mxu0 0
      %3279 = vmatprep.subr.bf16.mxu0 0
      %3280 = vmatpush1.bf16.msra.mxu0 0
      %3281 = vmatprep.mubr.bf16.mxu0 0
      %3282 = vmatmul.mubr.bf16.gmra.mrb[0].mxu0 %v3168
      %v3283 = vpop.f32.mrb[0].mxu0
      %v3284 = vadd.f32 0.0, %v3283
      %v3285 = vpop.f32.mrb[0].mxu0
      %v3286 = vpop.f32.mrb[0].mxu0
      %v3287 = vadd.f32 0.0, %v3286
      %v3288 = vpop.f32.mrb[0].mxu0
      %3289 = vmatprep.mubr.bf16.mxu0 0
      %3290 = vmatmul.mubr.bf16.gmra.mrb[0].mxu0 %v3169
      %v3291 = vpop.f32.mrb[0].mxu0
      %v3292 = vadd.f32 0.0, %v3291
      %v3293 = vpop.f32.mrb[0].mxu0
      %v3294 = vpop.f32.mrb[0].mxu0
      %v3295 = vadd.f32 0.0, %v3294
      %v3296 = vpop.f32.mrb[0].mxu0
      %3297 = vmatprep.mubr.bf16.mxu0 0
      %3298 = vmatmul.mubr.bf16.gmra.mrb[0].mxu0 %v3170
      %v3299 = vpop.f32.mrb[0].mxu0
      %v3300 = vadd.f32 0.0, %v3299
      %v3301 = vpop.f32.mrb[0].mxu0
      %v3302 = vpop.f32.mrb[0].mxu0
      %v3303 = vadd.f32 0.0, %v3302
      %v3304 = vpop.f32.mrb[0].mxu0
      %3305 = vmatprep.mubr.bf16.mxu0 0
      %3306 = vmatmul.mubr.bf16.gmra.mrb[0].mxu0 %v3171
      %v3307 = vpop.f32.mrb[0].mxu0
      %v3308 = vadd.f32 0.0, %v3307
      %v3309 = vpop.f32.mrb[0].mxu0
      %v3310 = vpop.f32.mrb[0].mxu0
      %v3311 = vadd.f32 0.0, %v3310
      %v3312 = vpop.f32.mrb[0].mxu0
      %3313 = vmatprep.mubr.bf16.mxu0 0
      %3314 = vmatmul.mubr.bf16.gmra.mrb[0].mxu0 %v3172
      %v3315 = vpop.f32.mrb[0].mxu0
      %v3316 = vadd.f32 0.0, %v3315
      %v3317 = vpop.f32.mrb[0].mxu0
      %v3318 = vpop.f32.mrb[0].mxu0
      %v3319 = vadd.f32 0.0, %v3318
      %v3320 = vpop.f32.mrb[0].mxu0
      %3321 = vmatprep.mubr.bf16.mxu0 0
      %3322 = vmatmul.mubr.bf16.gmra.mrb[0].mxu0 %v3173
      %v3323 = vpop.f32.mrb[0].mxu0
      %v3324 = vadd.f32 0.0, %v3323
      %v3325 = vpop.f32.mrb[0].mxu0
      %v3326 = vpop.f32.mrb[0].mxu0
      %v3327 = vadd.f32 0.0, %v3326
      %v3328 = vpop.f32.mrb[0].mxu0
      %3329 = vmatprep.mubr.bf16.mxu0 0
      %3330 = vmatmul.mubr.bf16.gmra.mrb[0].mxu0 %v3174
      %v3331 = vpop.f32.mrb[0].mxu0
      %v3332 = vadd.f32 0.0, %v3331
      %v3333 = vpop.f32.mrb[0].mxu0
      %v3334 = vpop.f32.mrb[0].mxu0
      %v3335 = vadd.f32 0.0, %v3334
      %v3336 = vpop.f32.mrb[0].mxu0
      %3337 = vmatprep.mubr.bf16.mxu0 0
      %3338 = vmatmul.mubr.bf16.gmra.mrb[0].mxu0 %v3175
      %v3339 = vpop.f32.mrb[0].mxu0
      %v3340 = vadd.f32 0.0, %v3339
      %v3341 = vpop.f32.mrb[0].mxu0
      %v3342 = vpop.f32.mrb[0].mxu0
      %v3343 = vadd.f32 0.0, %v3342
      %v3344 = vpop.f32.mrb[0].mxu0
      %3345 = vmatprep.mubr.bf16.mxu0 0
      %3346 = vmatmul.mubr.bf16.gmra.mrb[0].mxu0 %v3176
      %v3347 = vpop.f32.mrb[0].mxu0
      %v3348 = vadd.f32 0.0, %v3347
      %v3349 = vpop.f32.mrb[0].mxu0
      %v3350 = vpop.f32.mrb[0].mxu0
      %v3351 = vadd.f32 0.0, %v3350
      %v3352 = vpop.f32.mrb[0].mxu0
      %3353 = vmatprep.mubr.bf16.mxu0 0
      %3354 = vmatmul.mubr.bf16.gmra.mrb[0].mxu0 %v3177
      %v3355 = vpop.f32.mrb[0].mxu0
      %v3356 = vadd.f32 0.0, %v3355
      %v3357 = vpop.f32.mrb[0].mxu0
      %v3358 = vpop.f32.mrb[0].mxu0
      %v3359 = vadd.f32 0.0, %v3358
      %v3360 = vpop.f32.mrb[0].mxu0
      %3361 = vmatprep.mubr.bf16.mxu0 0
      %3362 = vmatmul.mubr.bf16.gmra.mrb[0].mxu0 %v3178
      %v3363 = vpop.f32.mrb[0].mxu0
      %v3364 = vadd.f32 0.0, %v3363
      %v3365 = vpop.f32.mrb[0].mxu0
      %v3366 = vpop.f32.mrb[0].mxu0
      %v3367 = vadd.f32 0.0, %v3366
      %v3368 = vpop.f32.mrb[0].mxu0
      %3369 = vmatprep.mubr.bf16.mxu0 0
      %3370 = vmatmul.mubr.bf16.gmra.mrb[0].mxu0 %v3179
      %v3371 = vpop.f32.mrb[0].mxu0
      %v3372 = vadd.f32 0.0, %v3371
      %v3373 = vpop.f32.mrb[0].mxu0
      %v3374 = vpop.f32.mrb[0].mxu0
      %v3375 = vadd.f32 0.0, %v3374
      %v3376 = vpop.f32.mrb[0].mxu0
      %3377 = vmatprep.mubr.bf16.mxu0 0
      %3378 = vmatmul.mubr.bf16.gmra.mrb[0].mxu0 %v3180
      %v3379 = vpop.f32.mrb[0].mxu0
      %v3380 = vadd.f32 0.0, %v3379
      %v3381 = vpop.f32.mrb[0].mxu0
      %v3382 = vpop.f32.mrb[0].mxu0
      %v3383 = vadd.f32 0.0, %v3382
      %v3384 = vpop.f32.mrb[0].mxu0
      %3385 = vmatprep.mubr.bf16.mxu0 0
      %3386 = vmatmul.mubr.bf16.gmra.mrb[0].mxu0 %v3181
      %v3387 = vpop.f32.mrb[0].mxu0
      %v3388 = vadd.f32 0.0, %v3387
      %v3389 = vpop.f32.mrb[0].mxu0
      %v3390 = vpop.f32.mrb[0].mxu0
      %v3391 = vadd.f32 0.0, %v3390
      %v3392 = vpop.f32.mrb[0].mxu0
      %3393 = vmatprep.mubr.bf16.mxu0 0
      %3394 = vmatmul.mubr.bf16.gmra.mrb[0].mxu0 %v3182
      %v3395 = vpop.f32.mrb[0].mxu0
      %v3396 = vadd.f32 0.0, %v3395
      %v3397 = vpop.f32.mrb[0].mxu0
      %v3398 = vpop.f32.mrb[0].mxu0
      %v3399 = vadd.f32 0.0, %v3398
      %v3400 = vpop.f32.mrb[0].mxu0
      %3401 = vmatprep.mubr.bf16.mxu0 0
      %3402 = vmatmul.mubr.bf16.gmra.mrb[0].mxu0 %v3183
      %v3403 = vpop.f32.mrb[0].mxu0
      %v3404 = vadd.f32 0.0, %v3403
      %v3405 = vpop.f32.mrb[0].mxu0
      %v3406 = vpop.f32.mrb[0].mxu0
      %v3407 = vadd.f32 0.0, %v3406
      %v3408 = vpop.f32.mrb[0].mxu0
      %3409 = vdwg.mxu0
      %v3410 = vld [vmem:[#allocation4] sm:$0xff]
      %v3411 = vld [vmem:[#allocation4 + $0x8] sm:$0xff]
      %v3412 = vld [vmem:[#allocation4 + $0x10] sm:$0xff]
      %v3413 = vld [vmem:[#allocation4 + $0x18] sm:$0xff]
      %v3414 = vld [vmem:[#allocation4 + $0x20] sm:$0xff]
      %v3415 = vld [vmem:[#allocation4 + $0x28] sm:$0xff]
      %v3416 = vld [vmem:[#allocation4 + $0x30] sm:$0xff]
      %v3417 = vld [vmem:[#allocation4 + $0x38] sm:$0xff]
      %v3418 = vld [vmem:[#allocation4 + $0x40] sm:$0xff]
      %v3419 = vld [vmem:[#allocation4 + $0x48] sm:$0xff]
      %v3420 = vld [vmem:[#allocation4 + $0x50] sm:$0xff]
      %v3421 = vld [vmem:[#allocation4 + $0x58] sm:$0xff]
      %v3422 = vld [vmem:[#allocation4 + $0x60] sm:$0xff]
      %v3423 = vld [vmem:[#allocation4 + $0x68] sm:$0xff]
      %v3424 = vld [vmem:[#allocation4 + $0x70] sm:$0xff]
      %v3425 = vld [vmem:[#allocation4 + $0x78] sm:$0xff]
      %v3426 = vld [vmem:[#allocation4 + $0x80] sm:$0xff]
      %v3427 = vld [vmem:[#allocation4 + $0x88] sm:$0xff]
      %v3428 = vld [vmem:[#allocation4 + $0x90] sm:$0xff]
      %v3429 = vld [vmem:[#allocation4 + $0x98] sm:$0xff]
      %v3430 = vld [vmem:[#allocation4 + $0xa0] sm:$0xff]
      %v3431 = vld [vmem:[#allocation4 + $0xa8] sm:$0xff]
      %v3432 = vld [vmem:[#allocation4 + $0xb0] sm:$0xff]
      %v3433 = vld [vmem:[#allocation4 + $0xb8] sm:$0xff]
      %v3434 = vld [vmem:[#allocation4 + $0xc0] sm:$0xff]
      %v3435 = vld [vmem:[#allocation4 + $0xc8] sm:$0xff]
      %v3436 = vld [vmem:[#allocation4 + $0xd0] sm:$0xff]
      %v3437 = vld [vmem:[#allocation4 + $0xd8] sm:$0xff]
      %v3438 = vld [vmem:[#allocation4 + $0xe0] sm:$0xff]
      %v3439 = vld [vmem:[#allocation4 + $0xe8] sm:$0xff]
      %v3440 = vld [vmem:[#allocation4 + $0xf0] sm:$0xff]
      %v3441 = vld [vmem:[#allocation4 + $0xf8] sm:$0xff]
      %v3442 = vadd.f32 %v3410, %v3284
      %v3443 = vadd.f32 %v3411, %v3287
      %v3444 = vadd.f32 %v3412, %v3292
      %v3445 = vadd.f32 %v3413, %v3295
      %v3446 = vadd.f32 %v3414, %v3300
      %v3447 = vadd.f32 %v3415, %v3303
      %v3448 = vadd.f32 %v3416, %v3308
      %v3449 = vadd.f32 %v3417, %v3311
      %v3450 = vadd.f32 %v3418, %v3316
      %v3451 = vadd.f32 %v3419, %v3319
      %v3452 = vadd.f32 %v3420, %v3324
      %v3453 = vadd.f32 %v3421, %v3327
      %v3454 = vadd.f32 %v3422, %v3332
      %v3455 = vadd.f32 %v3423, %v3335
      %v3456 = vadd.f32 %v3424, %v3340
      %v3457 = vadd.f32 %v3425, %v3343
      %v3458 = vadd.f32 %v3426, %v3348
      %v3459 = vadd.f32 %v3427, %v3351
      %v3460 = vadd.f32 %v3428, %v3356
      %v3461 = vadd.f32 %v3429, %v3359
      %v3462 = vadd.f32 %v3430, %v3364
      %v3463 = vadd.f32 %v3431, %v3367
      %v3464 = vadd.f32 %v3432, %v3372
      %v3465 = vadd.f32 %v3433, %v3375
      %v3466 = vadd.f32 %v3434, %v3380
      %v3467 = vadd.f32 %v3435, %v3383
      %v3468 = vadd.f32 %v3436, %v3388
      %v3469 = vadd.f32 %v3437, %v3391
      %v3470 = vadd.f32 %v3438, %v3396
      %v3471 = vadd.f32 %v3439, %v3399
      %v3472 = vadd.f32 %v3440, %v3404
      %v3473 = vadd.f32 %v3441, %v3407
      %3474 = vst [vmem:[#allocation4] sm:$0xff] %v3442
      %3475 = vst [vmem:[#allocation4 + $0x8] sm:$0xff] %v3443
      %3476 = vst [vmem:[#allocation4 + $0x10] sm:$0xff] %v3444
      %3477 = vst [vmem:[#allocation4 + $0x18] sm:$0xff] %v3445
      %3478 = vst [vmem:[#allocation4 + $0x20] sm:$0xff] %v3446
      %3479 = vst [vmem:[#allocation4 + $0x28] sm:$0xff] %v3447
      %3480 = vst [vmem:[#allocation4 + $0x30] sm:$0xff] %v3448
      %3481 = vst [vmem:[#allocation4 + $0x38] sm:$0xff] %v3449
      %3482 = vst [vmem:[#allocation4 + $0x40] sm:$0xff] %v3450
      %3483 = vst [vmem:[#allocation4 + $0x48] sm:$0xff] %v3451
      %3484 = vst [vmem:[#allocation4 + $0x50] sm:$0xff] %v3452
      %3485 = vst [vmem:[#allocation4 + $0x58] sm:$0xff] %v3453
      %3486 = vst [vmem:[#allocation4 + $0x60] sm:$0xff] %v3454
      %3487 = vst [vmem:[#allocation4 + $0x68] sm:$0xff] %v3455
      %3488 = vst [vmem:[#allocation4 + $0x70] sm:$0xff] %v3456
      %3489 = vst [vmem:[#allocation4 + $0x78] sm:$0xff] %v3457
      %3490 = vst [vmem:[#allocation4 + $0x80] sm:$0xff] %v3458
      %3491 = vst [vmem:[#allocation4 + $0x88] sm:$0xff] %v3459
      %3492 = vst [vmem:[#allocation4 + $0x90] sm:$0xff] %v3460
      %3493 = vst [vmem:[#allocation4 + $0x98] sm:$0xff] %v3461
      %3494 = vst [vmem:[#allocation4 + $0xa0] sm:$0xff] %v3462
      %3495 = vst [vmem:[#allocation4 + $0xa8] sm:$0xff] %v3463
      %3496 = vst [vmem:[#allocation4 + $0xb0] sm:$0xff] %v3464
      %3497 = vst [vmem:[#allocation4 + $0xb8] sm:$0xff] %v3465
      %3498 = vst [vmem:[#allocation4 + $0xc0] sm:$0xff] %v3466
      %3499 = vst [vmem:[#allocation4 + $0xc8] sm:$0xff] %v3467
      %3500 = vst [vmem:[#allocation4 + $0xd0] sm:$0xff] %v3468
      %3501 = vst [vmem:[#allocation4 + $0xd8] sm:$0xff] %v3469
      %3502 = vst [vmem:[#allocation4 + $0xe0] sm:$0xff] %v3470
      %3503 = vst [vmem:[#allocation4 + $0xe8] sm:$0xff] %v3471
      %3504 = vst [vmem:[#allocation4 + $0xf0] sm:$0xff] %v3472
      %3505 = vst [vmem:[#allocation4 + $0xf8] sm:$0xff] %v3473
      %v3506 = vld [vmem:[%s249] sm:$0xff]
      %v3507 = vld [vmem:[%s249 + $0x8] sm:$0xff]
      %v3508 = vld [vmem:[%s249 + $0x18] sm:$0xff]
      %v3509 = vld [vmem:[%s249 + $0x20] sm:$0xff]
      %v3510 = vld [vmem:[%s249 + $0x30] sm:$0xff]
      %v3511 = vld [vmem:[%s249 + $0x38] sm:$0xff]
      %v3512 = vld [vmem:[%s249 + $0x48] sm:$0xff]
      %v3513 = vld [vmem:[%s249 + $0x50] sm:$0xff]
      %v3514 = vld [vmem:[%s249 + $0x60] sm:$0xff]
      %v3515 = vld [vmem:[%s249 + $0x68] sm:$0xff]
      %v3516 = vld [vmem:[%s249 + $0x78] sm:$0xff]
      %v3517 = vld [vmem:[%s249 + $0x80] sm:$0xff]
      %v3518 = vld [vmem:[%s249 + $0x90] sm:$0xff]
      %v3519 = vld [vmem:[%s249 + $0x98] sm:$0xff]
      %v3520 = vld [vmem:[%s249 + $0xa8] sm:$0xff]
      %v3521 = vld [vmem:[%s249 + $0xb0] sm:$0xff]
      %v3522 = vld [vmem:[%s249 + $0xc0] sm:$0xff]
      %v3523 = vld [vmem:[%s249 + $0xc8] sm:$0xff]
      %v3524 = vld [vmem:[%s249 + $0xd8] sm:$0xff]
      %v3525 = vld [vmem:[%s249 + $0xe0] sm:$0xff]
      %v3526 = vld [vmem:[%s249 + $0xf0] sm:$0xff]
      %v3527 = vld [vmem:[%s249 + $0xf8] sm:$0xff]
      %v3528 = vld [vmem:[%s249 + $0x108] sm:$0xff]
      %v3529 = vld [vmem:[%s249 + $0x110] sm:$0xff]
      %v3530 = vld [vmem:[%s249 + $0x120] sm:$0xff]
      %v3531 = vld [vmem:[%s249 + $0x128] sm:$0xff]
      %v3532 = vld [vmem:[%s249 + $0x138] sm:$0xff]
      %v3533 = vld [vmem:[%s249 + $0x140] sm:$0xff]
      %v3534 = vld [vmem:[%s249 + $0x150] sm:$0xff]
      %v3535 = vld [vmem:[%s249 + $0x158] sm:$0xff]
      %v3536 = vld [vmem:[%s249 + $0x168] sm:$0xff]
      %v3537 = vld [vmem:[%s249 + $0x170] sm:$0xff]
      %v3538 = vpack.c.bf16 %v3507, %v3506
      %v3539 = vpack.c.bf16 %v3509, %v3508
      %v3540 = vpack.c.bf16 %v3511, %v3510
      %v3541 = vpack.c.bf16 %v3513, %v3512
      %v3542 = vpack.c.bf16 %v3515, %v3514
      %v3543 = vpack.c.bf16 %v3517, %v3516
      %v3544 = vpack.c.bf16 %v3519, %v3518
      %v3545 = vpack.c.bf16 %v3521, %v3520
      %v3546 = vpack.c.bf16 %v3523, %v3522
      %v3547 = vpack.c.bf16 %v3525, %v3524
      %v3548 = vpack.c.bf16 %v3527, %v3526
      %v3549 = vpack.c.bf16 %v3529, %v3528
      %v3550 = vpack.c.bf16 %v3531, %v3530
      %v3551 = vpack.c.bf16 %v3533, %v3532
      %v3552 = vpack.c.bf16 %v3535, %v3534
      %v3553 = vpack.c.bf16 %v3537, %v3536
      %s3554 = scalar_lea.vmem %s2, 192
      %v3555 = vld [vmem:[%s3554] sm:$0xf]
      %v3556 = vld [vmem:[%s3554 + $0x4] sm:$0xf]
      %v3557 = vld [vmem:[%s3554 + $0x8] sm:$0xf]
      %v3558 = vld [vmem:[%s3554 + $0xc] sm:$0xf]
      %v3559 = vld [vmem:[%s3554 + $0x10] sm:$0xf]
      %v3560 = vld [vmem:[%s3554 + $0x14] sm:$0xf]
      %v3561 = vld [vmem:[%s3554 + $0x18] sm:$0xf]
      %v3562 = vld [vmem:[%s3554 + $0x1c] sm:$0xf]
      %v3563 = vld [vmem:[%s3554 + $0x20] sm:$0xf]
      %v3564 = vld [vmem:[%s3554 + $0x24] sm:$0xf]
      %v3565 = vld [vmem:[%s3554 + $0x28] sm:$0xf]
      %v3566 = vld [vmem:[%s3554 + $0x2c] sm:$0xf]
      %v3567 = vld [vmem:[%s3554 + $0x30] sm:$0xf]
      %v3568 = vld [vmem:[%s3554 + $0x34] sm:$0xf]
      %v3569 = vld [vmem:[%s3554 + $0x38] sm:$0xf]
      %v3570 = vld [vmem:[%s3554 + $0x3c] sm:$0xf]
      %v3587 = vunpack.c.l.b16 %v3555
      %v3588 = vunpack.c.l.b16 %v3556
      %v3589 = vunpack.c.l.b16 %v3557
      %v3590 = vunpack.c.l.b16 %v3558
      %v3591 = vunpack.c.l.b16 %v3559
      %v3592 = vunpack.c.l.b16 %v3560
      %v3593 = vunpack.c.l.b16 %v3561
      %v3594 = vunpack.c.l.b16 %v3562
      %v3595 = vunpack.c.l.b16 %v3563
      %v3596 = vunpack.c.l.b16 %v3564
      %v3597 = vunpack.c.l.b16 %v3565
      %v3598 = vunpack.c.l.b16 %v3566
      %v3599 = vunpack.c.l.b16 %v3567
      %v3600 = vunpack.c.l.b16 %v3568
      %v3601 = vunpack.c.l.b16 %v3569
      %v3602 = vunpack.c.l.b16 %v3570
      %v3603 = vpack.c.b16 %v3588, %v3587
      %v3604 = vpack.c.b16 %v3590, %v3589
      %v3605 = vpack.c.b16 %v3592, %v3591
      %v3606 = vpack.c.b16 %v3594, %v3593
      %v3607 = vpack.c.b16 %v3596, %v3595
      %v3608 = vpack.c.b16 %v3598, %v3597
      %v3609 = vpack.c.b16 %v3600, %v3599
      %v3610 = vpack.c.b16 %v3602, %v3601
      %3619 = vmatprep.subr.bf16.mxu0 0
      %3620 = vmatpush1.bf16.msra.mxu0 %v3603
      %3621 = vmatprep.subr.bf16.mxu0 0
      %3622 = vmatpush1.bf16.msra.mxu0 %v3604
      %3623 = vmatprep.subr.bf16.mxu0 0
      %3624 = vmatpush1.bf16.msra.mxu0 %v3605
      %3625 = vmatprep.subr.bf16.mxu0 0
      %3626 = vmatpush1.bf16.msra.mxu0 %v3606
      %3627 = vmatprep.subr.bf16.mxu0 0
      %3628 = vmatpush1.bf16.msra.mxu0 %v3607
      %3629 = vmatprep.subr.bf16.mxu0 0
      %3630 = vmatpush1.bf16.msra.mxu0 %v3608
      %3631 = vmatprep.subr.bf16.mxu0 0
      %3632 = vmatpush1.bf16.msra.mxu0 %v3609
      %3633 = vmatprep.subr.bf16.mxu0 0
      %3634 = vmatpush1.bf16.msra.mxu0 %v3610
      %3635 = vmatprep.subr.bf16.mxu0 0
      %3636 = vmatpush1.bf16.msra.mxu0 0
      %3637 = vmatprep.subr.bf16.mxu0 0
      %3638 = vmatpush1.bf16.msra.mxu0 0
      %3639 = vmatprep.subr.bf16.mxu0 0
      %3640 = vmatpush1.bf16.msra.mxu0 0
      %3641 = vmatprep.subr.bf16.mxu0 0
      %3642 = vmatpush1.bf16.msra.mxu0 0
      %3643 = vmatprep.subr.bf16.mxu0 0
      %3644 = vmatpush1.bf16.msra.mxu0 0
      %3645 = vmatprep.subr.bf16.mxu0 0
      %3646 = vmatpush1.bf16.msra.mxu0 0
      %3647 = vmatprep.subr.bf16.mxu0 0
      %3648 = vmatpush1.bf16.msra.mxu0 0
      %3649 = vmatprep.subr.bf16.mxu0 0
      %3650 = vmatpush1.bf16.msra.mxu0 0
      %3651 = vmatprep.mubr.bf16.mxu0 0
      %3652 = vmatmul.mubr.bf16.gmra.mrb[0].mxu0 %v3538
      %v3653 = vpop.f32.mrb[0].mxu0
      %v3654 = vadd.f32 0.0, %v3653
      %v3655 = vpop.f32.mrb[0].mxu0
      %v3656 = vpop.f32.mrb[0].mxu0
      %v3657 = vadd.f32 0.0, %v3656
      %v3658 = vpop.f32.mrb[0].mxu0
      %3659 = vmatprep.mubr.bf16.mxu0 0
      %3660 = vmatmul.mubr.bf16.gmra.mrb[0].mxu0 %v3539
      %v3661 = vpop.f32.mrb[0].mxu0
      %v3662 = vadd.f32 0.0, %v3661
      %v3663 = vpop.f32.mrb[0].mxu0
      %v3664 = vpop.f32.mrb[0].mxu0
      %v3665 = vadd.f32 0.0, %v3664
      %v3666 = vpop.f32.mrb[0].mxu0
      %3667 = vmatprep.mubr.bf16.mxu0 0
      %3668 = vmatmul.mubr.bf16.gmra.mrb[0].mxu0 %v3540
      %v3669 = vpop.f32.mrb[0].mxu0
      %v3670 = vadd.f32 0.0, %v3669
      %v3671 = vpop.f32.mrb[0].mxu0
      %v3672 = vpop.f32.mrb[0].mxu0
      %v3673 = vadd.f32 0.0, %v3672
      %v3674 = vpop.f32.mrb[0].mxu0
      %3675 = vmatprep.mubr.bf16.mxu0 0
      %3676 = vmatmul.mubr.bf16.gmra.mrb[0].mxu0 %v3541
      %v3677 = vpop.f32.mrb[0].mxu0
      %v3678 = vadd.f32 0.0, %v3677
      %v3679 = vpop.f32.mrb[0].mxu0
      %v3680 = vpop.f32.mrb[0].mxu0
      %v3681 = vadd.f32 0.0, %v3680
      %v3682 = vpop.f32.mrb[0].mxu0
      %3683 = vmatprep.mubr.bf16.mxu0 0
      %3684 = vmatmul.mubr.bf16.gmra.mrb[0].mxu0 %v3542
      %v3685 = vpop.f32.mrb[0].mxu0
      %v3686 = vadd.f32 0.0, %v3685
      %v3687 = vpop.f32.mrb[0].mxu0
      %v3688 = vpop.f32.mrb[0].mxu0
      %v3689 = vadd.f32 0.0, %v3688
      %v3690 = vpop.f32.mrb[0].mxu0
      %3691 = vmatprep.mubr.bf16.mxu0 0
      %3692 = vmatmul.mubr.bf16.gmra.mrb[0].mxu0 %v3543
      %v3693 = vpop.f32.mrb[0].mxu0
      %v3694 = vadd.f32 0.0, %v3693
      %v3695 = vpop.f32.mrb[0].mxu0
      %v3696 = vpop.f32.mrb[0].mxu0
      %v3697 = vadd.f32 0.0, %v3696
      %v3698 = vpop.f32.mrb[0].mxu0
      %3699 = vmatprep.mubr.bf16.mxu0 0
      %3700 = vmatmul.mubr.bf16.gmra.mrb[0].mxu0 %v3544
      %v3701 = vpop.f32.mrb[0].mxu0
      %v3702 = vadd.f32 0.0, %v3701
      %v3703 = vpop.f32.mrb[0].mxu0
      %v3704 = vpop.f32.mrb[0].mxu0
      %v3705 = vadd.f32 0.0, %v3704
      %v3706 = vpop.f32.mrb[0].mxu0
      %3707 = vmatprep.mubr.bf16.mxu0 0
      %3708 = vmatmul.mubr.bf16.gmra.mrb[0].mxu0 %v3545
      %v3709 = vpop.f32.mrb[0].mxu0
      %v3710 = vadd.f32 0.0, %v3709
      %v3711 = vpop.f32.mrb[0].mxu0
      %v3712 = vpop.f32.mrb[0].mxu0
      %v3713 = vadd.f32 0.0, %v3712
      %v3714 = vpop.f32.mrb[0].mxu0
      %3715 = vmatprep.mubr.bf16.mxu0 0
      %3716 = vmatmul.mubr.bf16.gmra.mrb[0].mxu0 %v3546
      %v3717 = vpop.f32.mrb[0].mxu0
      %v3718 = vadd.f32 0.0, %v3717
      %v3719 = vpop.f32.mrb[0].mxu0
      %v3720 = vpop.f32.mrb[0].mxu0
      %v3721 = vadd.f32 0.0, %v3720
      %v3722 = vpop.f32.mrb[0].mxu0
      %3723 = vmatprep.mubr.bf16.mxu0 0
      %3724 = vmatmul.mubr.bf16.gmra.mrb[0].mxu0 %v3547
      %v3725 = vpop.f32.mrb[0].mxu0
      %v3726 = vadd.f32 0.0, %v3725
      %v3727 = vpop.f32.mrb[0].mxu0
      %v3728 = vpop.f32.mrb[0].mxu0
      %v3729 = vadd.f32 0.0, %v3728
      %v3730 = vpop.f32.mrb[0].mxu0
      %3731 = vmatprep.mubr.bf16.mxu0 0
      %3732 = vmatmul.mubr.bf16.gmra.mrb[0].mxu0 %v3548
      %v3733 = vpop.f32.mrb[0].mxu0
      %v3734 = vadd.f32 0.0, %v3733
      %v3735 = vpop.f32.mrb[0].mxu0
      %v3736 = vpop.f32.mrb[0].mxu0
      %v3737 = vadd.f32 0.0, %v3736
      %v3738 = vpop.f32.mrb[0].mxu0
      %3739 = vmatprep.mubr.bf16.mxu0 0
      %3740 = vmatmul.mubr.bf16.gmra.mrb[0].mxu0 %v3549
      %v3741 = vpop.f32.mrb[0].mxu0
      %v3742 = vadd.f32 0.0, %v3741
      %v3743 = vpop.f32.mrb[0].mxu0
      %v3744 = vpop.f32.mrb[0].mxu0
      %v3745 = vadd.f32 0.0, %v3744
      %v3746 = vpop.f32.mrb[0].mxu0
      %3747 = vmatprep.mubr.bf16.mxu0 0
      %3748 = vmatmul.mubr.bf16.gmra.mrb[0].mxu0 %v3550
      %v3749 = vpop.f32.mrb[0].mxu0
      %v3750 = vadd.f32 0.0, %v3749
      %v3751 = vpop.f32.mrb[0].mxu0
      %v3752 = vpop.f32.mrb[0].mxu0
      %v3753 = vadd.f32 0.0, %v3752
      %v3754 = vpop.f32.mrb[0].mxu0
      %3755 = vmatprep.mubr.bf16.mxu0 0
      %3756 = vmatmul.mubr.bf16.gmra.mrb[0].mxu0 %v3551
      %v3757 = vpop.f32.mrb[0].mxu0
      %v3758 = vadd.f32 0.0, %v3757
      %v3759 = vpop.f32.mrb[0].mxu0
      %v3760 = vpop.f32.mrb[0].mxu0
      %v3761 = vadd.f32 0.0, %v3760
      %v3762 = vpop.f32.mrb[0].mxu0
      %3763 = vmatprep.mubr.bf16.mxu0 0
      %3764 = vmatmul.mubr.bf16.gmra.mrb[0].mxu0 %v3552
      %v3765 = vpop.f32.mrb[0].mxu0
      %v3766 = vadd.f32 0.0, %v3765
      %v3767 = vpop.f32.mrb[0].mxu0
      %v3768 = vpop.f32.mrb[0].mxu0
      %v3769 = vadd.f32 0.0, %v3768
      %v3770 = vpop.f32.mrb[0].mxu0
      %3771 = vmatprep.mubr.bf16.mxu0 0
      %3772 = vmatmul.mubr.bf16.gmra.mrb[0].mxu0 %v3553
      %v3773 = vpop.f32.mrb[0].mxu0
      %v3774 = vadd.f32 0.0, %v3773
      %v3775 = vpop.f32.mrb[0].mxu0
      %v3776 = vpop.f32.mrb[0].mxu0
      %v3777 = vadd.f32 0.0, %v3776
      %v3778 = vpop.f32.mrb[0].mxu0
      %3779 = vdwg.mxu0
      %v3780 = vld [vmem:[#allocation4] sm:$0xff]
      %v3781 = vld [vmem:[#allocation4 + $0x8] sm:$0xff]
      %v3782 = vld [vmem:[#allocation4 + $0x10] sm:$0xff]
      %v3783 = vld [vmem:[#allocation4 + $0x18] sm:$0xff]
      %v3784 = vld [vmem:[#allocation4 + $0x20] sm:$0xff]
      %v3785 = vld [vmem:[#allocation4 + $0x28] sm:$0xff]
      %v3786 = vld [vmem:[#allocation4 + $0x30] sm:$0xff]
      %v3787 = vld [vmem:[#allocation4 + $0x38] sm:$0xff]
      %v3788 = vld [vmem:[#allocation4 + $0x40] sm:$0xff]
      %v3789 = vld [vmem:[#allocation4 + $0x48] sm:$0xff]
      %v3790 = vld [vmem:[#allocation4 + $0x50] sm:$0xff]
      %v3791 = vld [vmem:[#allocation4 + $0x58] sm:$0xff]
      %v3792 = vld [vmem:[#allocation4 + $0x60] sm:$0xff]
      %v3793 = vld [vmem:[#allocation4 + $0x68] sm:$0xff]
      %v3794 = vld [vmem:[#allocation4 + $0x70] sm:$0xff]
      %v3795 = vld [vmem:[#allocation4 + $0x78] sm:$0xff]
      %v3796 = vld [vmem:[#allocation4 + $0x80] sm:$0xff]
      %v3797 = vld [vmem:[#allocation4 + $0x88] sm:$0xff]
      %v3798 = vld [vmem:[#allocation4 + $0x90] sm:$0xff]
      %v3799 = vld [vmem:[#allocation4 + $0x98] sm:$0xff]
      %v3800 = vld [vmem:[#allocation4 + $0xa0] sm:$0xff]
      %v3801 = vld [vmem:[#allocation4 + $0xa8] sm:$0xff]
      %v3802 = vld [vmem:[#allocation4 + $0xb0] sm:$0xff]
      %v3803 = vld [vmem:[#allocation4 + $0xb8] sm:$0xff]
      %v3804 = vld [vmem:[#allocation4 + $0xc0] sm:$0xff]
      %v3805 = vld [vmem:[#allocation4 + $0xc8] sm:$0xff]
      %v3806 = vld [vmem:[#allocation4 + $0xd0] sm:$0xff]
      %v3807 = vld [vmem:[#allocation4 + $0xd8] sm:$0xff]
      %v3808 = vld [vmem:[#allocation4 + $0xe0] sm:$0xff]
      %v3809 = vld [vmem:[#allocation4 + $0xe8] sm:$0xff]
      %v3810 = vld [vmem:[#allocation4 + $0xf0] sm:$0xff]
      %v3811 = vld [vmem:[#allocation4 + $0xf8] sm:$0xff]
      %v3812 = vadd.f32 %v3780, %v3654
      %v3813 = vadd.f32 %v3781, %v3657
      %v3814 = vadd.f32 %v3782, %v3662
      %v3815 = vadd.f32 %v3783, %v3665
      %v3816 = vadd.f32 %v3784, %v3670
      %v3817 = vadd.f32 %v3785, %v3673
      %v3818 = vadd.f32 %v3786, %v3678
      %v3819 = vadd.f32 %v3787, %v3681
      %v3820 = vadd.f32 %v3788, %v3686
      %v3821 = vadd.f32 %v3789, %v3689
      %v3822 = vadd.f32 %v3790, %v3694
      %v3823 = vadd.f32 %v3791, %v3697
      %v3824 = vadd.f32 %v3792, %v3702
      %v3825 = vadd.f32 %v3793, %v3705
      %v3826 = vadd.f32 %v3794, %v3710
      %v3827 = vadd.f32 %v3795, %v3713
      %v3828 = vadd.f32 %v3796, %v3718
      %v3829 = vadd.f32 %v3797, %v3721
      %v3830 = vadd.f32 %v3798, %v3726
      %v3831 = vadd.f32 %v3799, %v3729
      %v3832 = vadd.f32 %v3800, %v3734
      %v3833 = vadd.f32 %v3801, %v3737
      %v3834 = vadd.f32 %v3802, %v3742
      %v3835 = vadd.f32 %v3803, %v3745
      %v3836 = vadd.f32 %v3804, %v3750
      %v3837 = vadd.f32 %v3805, %v3753
      %v3838 = vadd.f32 %v3806, %v3758
      %v3839 = vadd.f32 %v3807, %v3761
      %v3840 = vadd.f32 %v3808, %v3766
      %v3841 = vadd.f32 %v3809, %v3769
      %v3842 = vadd.f32 %v3810, %v3774
      %v3843 = vadd.f32 %v3811, %v3777
      %3844 = vst [vmem:[#allocation4] sm:$0xff] %v3812
      %3845 = vst [vmem:[#allocation4 + $0x8] sm:$0xff] %v3813
      %3846 = vst [vmem:[#allocation4 + $0x10] sm:$0xff] %v3814
      %3847 = vst [vmem:[#allocation4 + $0x18] sm:$0xff] %v3815
      %3848 = vst [vmem:[#allocation4 + $0x20] sm:$0xff] %v3816
      %3849 = vst [vmem:[#allocation4 + $0x28] sm:$0xff] %v3817
      %3850 = vst [vmem:[#allocation4 + $0x30] sm:$0xff] %v3818
      %3851 = vst [vmem:[#allocation4 + $0x38] sm:$0xff] %v3819
      %3852 = vst [vmem:[#allocation4 + $0x40] sm:$0xff] %v3820
      %3853 = vst [vmem:[#allocation4 + $0x48] sm:$0xff] %v3821
      %3854 = vst [vmem:[#allocation4 + $0x50] sm:$0xff] %v3822
      %3855 = vst [vmem:[#allocation4 + $0x58] sm:$0xff] %v3823
      %3856 = vst [vmem:[#allocation4 + $0x60] sm:$0xff] %v3824
      %3857 = vst [vmem:[#allocation4 + $0x68] sm:$0xff] %v3825
      %3858 = vst [vmem:[#allocation4 + $0x70] sm:$0xff] %v3826
      %3859 = vst [vmem:[#allocation4 + $0x78] sm:$0xff] %v3827
      %3860 = vst [vmem:[#allocation4 + $0x80] sm:$0xff] %v3828
      %3861 = vst [vmem:[#allocation4 + $0x88] sm:$0xff] %v3829
      %3862 = vst [vmem:[#allocation4 + $0x90] sm:$0xff] %v3830
      %3863 = vst [vmem:[#allocation4 + $0x98] sm:$0xff] %v3831
      %3864 = vst [vmem:[#allocation4 + $0xa0] sm:$0xff] %v3832
      %3865 = vst [vmem:[#allocation4 + $0xa8] sm:$0xff] %v3833
      %3866 = vst [vmem:[#allocation4 + $0xb0] sm:$0xff] %v3834
      %3867 = vst [vmem:[#allocation4 + $0xb8] sm:$0xff] %v3835
      %3868 = vst [vmem:[#allocation4 + $0xc0] sm:$0xff] %v3836
      %3869 = vst [vmem:[#allocation4 + $0xc8] sm:$0xff] %v3837
      %3870 = vst [vmem:[#allocation4 + $0xd0] sm:$0xff] %v3838
      %3871 = vst [vmem:[#allocation4 + $0xd8] sm:$0xff] %v3839
      %3872 = vst [vmem:[#allocation4 + $0xe0] sm:$0xff] %v3840
      %3873 = vst [vmem:[#allocation4 + $0xe8] sm:$0xff] %v3841
      %3874 = vst [vmem:[#allocation4 + $0xf0] sm:$0xff] %v3842
      %3875 = vst [vmem:[#allocation4 + $0xf8] sm:$0xff] %v3843
      %v3876 = vld [vmem:[%s249 + $0x1] sm:$0xff]
      %v3877 = vld [vmem:[%s249 + $0x9] sm:$0xff]
      %v3878 = vld [vmem:[%s249 + $0x19] sm:$0xff]
      %v3879 = vld [vmem:[%s249 + $0x21] sm:$0xff]
      %v3880 = vld [vmem:[%s249 + $0x31] sm:$0xff]
      %v3881 = vld [vmem:[%s249 + $0x39] sm:$0xff]
      %v3882 = vld [vmem:[%s249 + $0x49] sm:$0xff]
      %v3883 = vld [vmem:[%s249 + $0x51] sm:$0xff]
      %v3884 = vld [vmem:[%s249 + $0x61] sm:$0xff]
      %v3885 = vld [vmem:[%s249 + $0x69] sm:$0xff]
      %v3886 = vld [vmem:[%s249 + $0x79] sm:$0xff]
      %v3887 = vld [vmem:[%s249 + $0x81] sm:$0xff]
      %v3888 = vld [vmem:[%s249 + $0x91] sm:$0xff]
      %v3889 = vld [vmem:[%s249 + $0x99] sm:$0xff]
      %v3890 = vld [vmem:[%s249 + $0xa9] sm:$0xff]
      %v3891 = vld [vmem:[%s249 + $0xb1] sm:$0xff]
      %v3892 = vld [vmem:[%s249 + $0xc1] sm:$0xff]
      %v3893 = vld [vmem:[%s249 + $0xc9] sm:$0xff]
      %v3894 = vld [vmem:[%s249 + $0xd9] sm:$0xff]
      %v3895 = vld [vmem:[%s249 + $0xe1] sm:$0xff]
      %v3896 = vld [vmem:[%s249 + $0xf1] sm:$0xff]
      %v3897 = vld [vmem:[%s249 + $0xf9] sm:$0xff]
      %v3898 = vld [vmem:[%s249 + $0x109] sm:$0xff]
      %v3899 = vld [vmem:[%s249 + $0x111] sm:$0xff]
      %v3900 = vld [vmem:[%s249 + $0x121] sm:$0xff]
      %v3901 = vld [vmem:[%s249 + $0x129] sm:$0xff]
      %v3902 = vld [vmem:[%s249 + $0x139] sm:$0xff]
      %v3903 = vld [vmem:[%s249 + $0x141] sm:$0xff]
      %v3904 = vld [vmem:[%s249 + $0x151] sm:$0xff]
      %v3905 = vld [vmem:[%s249 + $0x159] sm:$0xff]
      %v3906 = vld [vmem:[%s249 + $0x169] sm:$0xff]
      %v3907 = vld [vmem:[%s249 + $0x171] sm:$0xff]
      %v3908 = vpack.c.bf16 %v3877, %v3876
      %v3909 = vpack.c.bf16 %v3879, %v3878
      %v3910 = vpack.c.bf16 %v3881, %v3880
      %v3911 = vpack.c.bf16 %v3883, %v3882
      %v3912 = vpack.c.bf16 %v3885, %v3884
      %v3913 = vpack.c.bf16 %v3887, %v3886
      %v3914 = vpack.c.bf16 %v3889, %v3888
      %v3915 = vpack.c.bf16 %v3891, %v3890
      %v3916 = vpack.c.bf16 %v3893, %v3892
      %v3917 = vpack.c.bf16 %v3895, %v3894
      %v3918 = vpack.c.bf16 %v3897, %v3896
      %v3919 = vpack.c.bf16 %v3899, %v3898
      %v3920 = vpack.c.bf16 %v3901, %v3900
      %v3921 = vpack.c.bf16 %v3903, %v3902
      %v3922 = vpack.c.bf16 %v3905, %v3904
      %v3923 = vpack.c.bf16 %v3907, %v3906
      %s3924 = scalar_lea.vmem %s2, 256
      %v3925 = vld [vmem:[%s3924] sm:$0xf]
      %v3926 = vld [vmem:[%s3924 + $0x4] sm:$0xf]
      %v3927 = vld [vmem:[%s3924 + $0x8] sm:$0xf]
      %v3928 = vld [vmem:[%s3924 + $0xc] sm:$0xf]
      %v3929 = vld [vmem:[%s3924 + $0x10] sm:$0xf]
      %v3930 = vld [vmem:[%s3924 + $0x14] sm:$0xf]
      %v3931 = vld [vmem:[%s3924 + $0x18] sm:$0xf]
      %v3932 = vld [vmem:[%s3924 + $0x1c] sm:$0xf]
      %v3933 = vld [vmem:[%s3924 + $0x20] sm:$0xf]
      %v3934 = vld [vmem:[%s3924 + $0x24] sm:$0xf]
      %v3935 = vld [vmem:[%s3924 + $0x28] sm:$0xf]
      %v3936 = vld [vmem:[%s3924 + $0x2c] sm:$0xf]
      %v3937 = vld [vmem:[%s3924 + $0x30] sm:$0xf]
      %v3938 = vld [vmem:[%s3924 + $0x34] sm:$0xf]
      %v3939 = vld [vmem:[%s3924 + $0x38] sm:$0xf]
      %v3940 = vld [vmem:[%s3924 + $0x3c] sm:$0xf]
      %v3957 = vunpack.c.l.b16 %v3925
      %v3958 = vunpack.c.l.b16 %v3926
      %v3959 = vunpack.c.l.b16 %v3927
      %v3960 = vunpack.c.l.b16 %v3928
      %v3961 = vunpack.c.l.b16 %v3929
      %v3962 = vunpack.c.l.b16 %v3930
      %v3963 = vunpack.c.l.b16 %v3931
      %v3964 = vunpack.c.l.b16 %v3932
      %v3965 = vunpack.c.l.b16 %v3933
      %v3966 = vunpack.c.l.b16 %v3934
      %v3967 = vunpack.c.l.b16 %v3935
      %v3968 = vunpack.c.l.b16 %v3936
      %v3969 = vunpack.c.l.b16 %v3937
      %v3970 = vunpack.c.l.b16 %v3938
      %v3971 = vunpack.c.l.b16 %v3939
      %v3972 = vunpack.c.l.b16 %v3940
      %v3973 = vpack.c.b16 %v3958, %v3957
      %v3974 = vpack.c.b16 %v3960, %v3959
      %v3975 = vpack.c.b16 %v3962, %v3961
      %v3976 = vpack.c.b16 %v3964, %v3963
      %v3977 = vpack.c.b16 %v3966, %v3965
      %v3978 = vpack.c.b16 %v3968, %v3967
      %v3979 = vpack.c.b16 %v3970, %v3969
      %v3980 = vpack.c.b16 %v3972, %v3971
      %3989 = vmatprep.subr.bf16.mxu0 0
      %3990 = vmatpush1.bf16.msra.mxu0 %v3973
      %3991 = vmatprep.subr.bf16.mxu0 0
      %3992 = vmatpush1.bf16.msra.mxu0 %v3974
      %3993 = vmatprep.subr.bf16.mxu0 0
      %3994 = vmatpush1.bf16.msra.mxu0 %v3975
      %3995 = vmatprep.subr.bf16.mxu0 0
      %3996 = vmatpush1.bf16.msra.mxu0 %v3976
      %3997 = vmatprep.subr.bf16.mxu0 0
      %3998 = vmatpush1.bf16.msra.mxu0 %v3977
      %3999 = vmatprep.subr.bf16.mxu0 0
      %4000 = vmatpush1.bf16.msra.mxu0 %v3978
      %4001 = vmatprep.subr.bf16.mxu0 0
      %4002 = vmatpush1.bf16.msra.mxu0 %v3979
      %4003 = vmatprep.subr.bf16.mxu0 0
      %4004 = vmatpush1.bf16.msra.mxu0 %v3980
      %4005 = vmatprep.subr.bf16.mxu0 0
      %4006 = vmatpush1.bf16.msra.mxu0 0
      %4007 = vmatprep.subr.bf16.mxu0 0
      %4008 = vmatpush1.bf16.msra.mxu0 0
      %4009 = vmatprep.subr.bf16.mxu0 0
      %4010 = vmatpush1.bf16.msra.mxu0 0
      %4011 = vmatprep.subr.bf16.mxu0 0
      %4012 = vmatpush1.bf16.msra.mxu0 0
      %4013 = vmatprep.subr.bf16.mxu0 0
      %4014 = vmatpush1.bf16.msra.mxu0 0
      %4015 = vmatprep.subr.bf16.mxu0 0
      %4016 = vmatpush1.bf16.msra.mxu0 0
      %4017 = vmatprep.subr.bf16.mxu0 0
      %4018 = vmatpush1.bf16.msra.mxu0 0
      %4019 = vmatprep.subr.bf16.mxu0 0
      %4020 = vmatpush1.bf16.msra.mxu0 0
      %4021 = vmatprep.mubr.bf16.mxu0 0
      %4022 = vmatmul.mubr.bf16.gmra.mrb[0].mxu0 %v3908
      %v4023 = vpop.f32.mrb[0].mxu0
      %v4024 = vadd.f32 0.0, %v4023
      %v4025 = vpop.f32.mrb[0].mxu0
      %v4026 = vpop.f32.mrb[0].mxu0
      %v4027 = vadd.f32 0.0, %v4026
      %v4028 = vpop.f32.mrb[0].mxu0
      %4029 = vmatprep.mubr.bf16.mxu0 0
      %4030 = vmatmul.mubr.bf16.gmra.mrb[0].mxu0 %v3909
      %v4031 = vpop.f32.mrb[0].mxu0
      %v4032 = vadd.f32 0.0, %v4031
      %v4033 = vpop.f32.mrb[0].mxu0
      %v4034 = vpop.f32.mrb[0].mxu0
      %v4035 = vadd.f32 0.0, %v4034
      %v4036 = vpop.f32.mrb[0].mxu0
      %4037 = vmatprep.mubr.bf16.mxu0 0
      %4038 = vmatmul.mubr.bf16.gmra.mrb[0].mxu0 %v3910
      %v4039 = vpop.f32.mrb[0].mxu0
      %v4040 = vadd.f32 0.0, %v4039
      %v4041 = vpop.f32.mrb[0].mxu0
      %v4042 = vpop.f32.mrb[0].mxu0
      %v4043 = vadd.f32 0.0, %v4042
      %v4044 = vpop.f32.mrb[0].mxu0
      %4045 = vmatprep.mubr.bf16.mxu0 0
      %4046 = vmatmul.mubr.bf16.gmra.mrb[0].mxu0 %v3911
      %v4047 = vpop.f32.mrb[0].mxu0
      %v4048 = vadd.f32 0.0, %v4047
      %v4049 = vpop.f32.mrb[0].mxu0
      %v4050 = vpop.f32.mrb[0].mxu0
      %v4051 = vadd.f32 0.0, %v4050
      %v4052 = vpop.f32.mrb[0].mxu0
      %4053 = vmatprep.mubr.bf16.mxu0 0
      %4054 = vmatmul.mubr.bf16.gmra.mrb[0].mxu0 %v3912
      %v4055 = vpop.f32.mrb[0].mxu0
      %v4056 = vadd.f32 0.0, %v4055
      %v4057 = vpop.f32.mrb[0].mxu0
      %v4058 = vpop.f32.mrb[0].mxu0
      %v4059 = vadd.f32 0.0, %v4058
      %v4060 = vpop.f32.mrb[0].mxu0
      %4061 = vmatprep.mubr.bf16.mxu0 0
      %4062 = vmatmul.mubr.bf16.gmra.mrb[0].mxu0 %v3913
      %v4063 = vpop.f32.mrb[0].mxu0
      %v4064 = vadd.f32 0.0, %v4063
      %v4065 = vpop.f32.mrb[0].mxu0
      %v4066 = vpop.f32.mrb[0].mxu0
      %v4067 = vadd.f32 0.0, %v4066
      %v4068 = vpop.f32.mrb[0].mxu0
      %4069 = vmatprep.mubr.bf16.mxu0 0
      %4070 = vmatmul.mubr.bf16.gmra.mrb[0].mxu0 %v3914
      %v4071 = vpop.f32.mrb[0].mxu0
      %v4072 = vadd.f32 0.0, %v4071
      %v4073 = vpop.f32.mrb[0].mxu0
      %v4074 = vpop.f32.mrb[0].mxu0
      %v4075 = vadd.f32 0.0, %v4074
      %v4076 = vpop.f32.mrb[0].mxu0
      %4077 = vmatprep.mubr.bf16.mxu0 0
      %4078 = vmatmul.mubr.bf16.gmra.mrb[0].mxu0 %v3915
      %v4079 = vpop.f32.mrb[0].mxu0
      %v4080 = vadd.f32 0.0, %v4079
      %v4081 = vpop.f32.mrb[0].mxu0
      %v4082 = vpop.f32.mrb[0].mxu0
      %v4083 = vadd.f32 0.0, %v4082
      %v4084 = vpop.f32.mrb[0].mxu0
      %4085 = vmatprep.mubr.bf16.mxu0 0
      %4086 = vmatmul.mubr.bf16.gmra.mrb[0].mxu0 %v3916
      %v4087 = vpop.f32.mrb[0].mxu0
      %v4088 = vadd.f32 0.0, %v4087
      %v4089 = vpop.f32.mrb[0].mxu0
      %v4090 = vpop.f32.mrb[0].mxu0
      %v4091 = vadd.f32 0.0, %v4090
      %v4092 = vpop.f32.mrb[0].mxu0
      %4093 = vmatprep.mubr.bf16.mxu0 0
      %4094 = vmatmul.mubr.bf16.gmra.mrb[0].mxu0 %v3917
      %v4095 = vpop.f32.mrb[0].mxu0
      %v4096 = vadd.f32 0.0, %v4095
      %v4097 = vpop.f32.mrb[0].mxu0
      %v4098 = vpop.f32.mrb[0].mxu0
      %v4099 = vadd.f32 0.0, %v4098
      %v4100 = vpop.f32.mrb[0].mxu0
      %4101 = vmatprep.mubr.bf16.mxu0 0
      %4102 = vmatmul.mubr.bf16.gmra.mrb[0].mxu0 %v3918
      %v4103 = vpop.f32.mrb[0].mxu0
      %v4104 = vadd.f32 0.0, %v4103
      %v4105 = vpop.f32.mrb[0].mxu0
      %v4106 = vpop.f32.mrb[0].mxu0
      %v4107 = vadd.f32 0.0, %v4106
      %v4108 = vpop.f32.mrb[0].mxu0
      %4109 = vmatprep.mubr.bf16.mxu0 0
      %4110 = vmatmul.mubr.bf16.gmra.mrb[0].mxu0 %v3919
      %v4111 = vpop.f32.mrb[0].mxu0
      %v4112 = vadd.f32 0.0, %v4111
      %v4113 = vpop.f32.mrb[0].mxu0
      %v4114 = vpop.f32.mrb[0].mxu0
      %v4115 = vadd.f32 0.0, %v4114
      %v4116 = vpop.f32.mrb[0].mxu0
      %4117 = vmatprep.mubr.bf16.mxu0 0
      %4118 = vmatmul.mubr.bf16.gmra.mrb[0].mxu0 %v3920
      %v4119 = vpop.f32.mrb[0].mxu0
      %v4120 = vadd.f32 0.0, %v4119
      %v4121 = vpop.f32.mrb[0].mxu0
      %v4122 = vpop.f32.mrb[0].mxu0
      %v4123 = vadd.f32 0.0, %v4122
      %v4124 = vpop.f32.mrb[0].mxu0
      %4125 = vmatprep.mubr.bf16.mxu0 0
      %4126 = vmatmul.mubr.bf16.gmra.mrb[0].mxu0 %v3921
      %v4127 = vpop.f32.mrb[0].mxu0
      %v4128 = vadd.f32 0.0, %v4127
      %v4129 = vpop.f32.mrb[0].mxu0
      %v4130 = vpop.f32.mrb[0].mxu0
      %v4131 = vadd.f32 0.0, %v4130
      %v4132 = vpop.f32.mrb[0].mxu0
      %4133 = vmatprep.mubr.bf16.mxu0 0
      %4134 = vmatmul.mubr.bf16.gmra.mrb[0].mxu0 %v3922
      %v4135 = vpop.f32.mrb[0].mxu0
      %v4136 = vadd.f32 0.0, %v4135
      %v4137 = vpop.f32.mrb[0].mxu0
      %v4138 = vpop.f32.mrb[0].mxu0
      %v4139 = vadd.f32 0.0, %v4138
      %v4140 = vpop.f32.mrb[0].mxu0
      %4141 = vmatprep.mubr.bf16.mxu0 0
      %4142 = vmatmul.mubr.bf16.gmra.mrb[0].mxu0 %v3923
      %v4143 = vpop.f32.mrb[0].mxu0
      %v4144 = vadd.f32 0.0, %v4143
      %v4145 = vpop.f32.mrb[0].mxu0
      %v4146 = vpop.f32.mrb[0].mxu0
      %v4147 = vadd.f32 0.0, %v4146
      %v4148 = vpop.f32.mrb[0].mxu0
      %4149 = vdwg.mxu0
      %v4150 = vld [vmem:[#allocation4] sm:$0xff]
      %v4151 = vld [vmem:[#allocation4 + $0x8] sm:$0xff]
      %v4152 = vld [vmem:[#allocation4 + $0x10] sm:$0xff]
      %v4153 = vld [vmem:[#allocation4 + $0x18] sm:$0xff]
      %v4154 = vld [vmem:[#allocation4 + $0x20] sm:$0xff]
      %v4155 = vld [vmem:[#allocation4 + $0x28] sm:$0xff]
      %v4156 = vld [vmem:[#allocation4 + $0x30] sm:$0xff]
      %v4157 = vld [vmem:[#allocation4 + $0x38] sm:$0xff]
      %v4158 = vld [vmem:[#allocation4 + $0x40] sm:$0xff]
      %v4159 = vld [vmem:[#allocation4 + $0x48] sm:$0xff]
      %v4160 = vld [vmem:[#allocation4 + $0x50] sm:$0xff]
      %v4161 = vld [vmem:[#allocation4 + $0x58] sm:$0xff]
      %v4162 = vld [vmem:[#allocation4 + $0x60] sm:$0xff]
      %v4163 = vld [vmem:[#allocation4 + $0x68] sm:$0xff]
      %v4164 = vld [vmem:[#allocation4 + $0x70] sm:$0xff]
      %v4165 = vld [vmem:[#allocation4 + $0x78] sm:$0xff]
      %v4166 = vld [vmem:[#allocation4 + $0x80] sm:$0xff]
      %v4167 = vld [vmem:[#allocation4 + $0x88] sm:$0xff]
      %v4168 = vld [vmem:[#allocation4 + $0x90] sm:$0xff]
      %v4169 = vld [vmem:[#allocation4 + $0x98] sm:$0xff]
      %v4170 = vld [vmem:[#allocation4 + $0xa0] sm:$0xff]
      %v4171 = vld [vmem:[#allocation4 + $0xa8] sm:$0xff]
      %v4172 = vld [vmem:[#allocation4 + $0xb0] sm:$0xff]
      %v4173 = vld [vmem:[#allocation4 + $0xb8] sm:$0xff]
      %v4174 = vld [vmem:[#allocation4 + $0xc0] sm:$0xff]
      %v4175 = vld [vmem:[#allocation4 + $0xc8] sm:$0xff]
      %v4176 = vld [vmem:[#allocation4 + $0xd0] sm:$0xff]
      %v4177 = vld [vmem:[#allocation4 + $0xd8] sm:$0xff]
      %v4178 = vld [vmem:[#allocation4 + $0xe0] sm:$0xff]
      %v4179 = vld [vmem:[#allocation4 + $0xe8] sm:$0xff]
      %v4180 = vld [vmem:[#allocation4 + $0xf0] sm:$0xff]
      %v4181 = vld [vmem:[#allocation4 + $0xf8] sm:$0xff]
      %v4182 = vadd.f32 %v4150, %v4024
      %v4183 = vadd.f32 %v4151, %v4027
      %v4184 = vadd.f32 %v4152, %v4032
      %v4185 = vadd.f32 %v4153, %v4035
      %v4186 = vadd.f32 %v4154, %v4040
      %v4187 = vadd.f32 %v4155, %v4043
      %v4188 = vadd.f32 %v4156, %v4048
      %v4189 = vadd.f32 %v4157, %v4051
      %v4190 = vadd.f32 %v4158, %v4056
      %v4191 = vadd.f32 %v4159, %v4059
      %v4192 = vadd.f32 %v4160, %v4064
      %v4193 = vadd.f32 %v4161, %v4067
      %v4194 = vadd.f32 %v4162, %v4072
      %v4195 = vadd.f32 %v4163, %v4075
      %v4196 = vadd.f32 %v4164, %v4080
      %v4197 = vadd.f32 %v4165, %v4083
      %v4198 = vadd.f32 %v4166, %v4088
      %v4199 = vadd.f32 %v4167, %v4091
      %v4200 = vadd.f32 %v4168, %v4096
      %v4201 = vadd.f32 %v4169, %v4099
      %v4202 = vadd.f32 %v4170, %v4104
      %v4203 = vadd.f32 %v4171, %v4107
      %v4204 = vadd.f32 %v4172, %v4112
      %v4205 = vadd.f32 %v4173, %v4115
      %v4206 = vadd.f32 %v4174, %v4120
      %v4207 = vadd.f32 %v4175, %v4123
      %v4208 = vadd.f32 %v4176, %v4128
      %v4209 = vadd.f32 %v4177, %v4131
      %v4210 = vadd.f32 %v4178, %v4136
      %v4211 = vadd.f32 %v4179, %v4139
      %v4212 = vadd.f32 %v4180, %v4144
      %v4213 = vadd.f32 %v4181, %v4147
      %4214 = vst [vmem:[#allocation4] sm:$0xff] %v4182
      %4215 = vst [vmem:[#allocation4 + $0x8] sm:$0xff] %v4183
      %4216 = vst [vmem:[#allocation4 + $0x10] sm:$0xff] %v4184
      %4217 = vst [vmem:[#allocation4 + $0x18] sm:$0xff] %v4185
      %4218 = vst [vmem:[#allocation4 + $0x20] sm:$0xff] %v4186
      %4219 = vst [vmem:[#allocation4 + $0x28] sm:$0xff] %v4187
      %4220 = vst [vmem:[#allocation4 + $0x30] sm:$0xff] %v4188
      %4221 = vst [vmem:[#allocation4 + $0x38] sm:$0xff] %v4189
      %4222 = vst [vmem:[#allocation4 + $0x40] sm:$0xff] %v4190
      %4223 = vst [vmem:[#allocation4 + $0x48] sm:$0xff] %v4191
      %4224 = vst [vmem:[#allocation4 + $0x50] sm:$0xff] %v4192
      %4225 = vst [vmem:[#allocation4 + $0x58] sm:$0xff] %v4193
      %4226 = vst [vmem:[#allocation4 + $0x60] sm:$0xff] %v4194
      %4227 = vst [vmem:[#allocation4 + $0x68] sm:$0xff] %v4195
      %4228 = vst [vmem:[#allocation4 + $0x70] sm:$0xff] %v4196
      %4229 = vst [vmem:[#allocation4 + $0x78] sm:$0xff] %v4197
      %4230 = vst [vmem:[#allocation4 + $0x80] sm:$0xff] %v4198
      %4231 = vst [vmem:[#allocation4 + $0x88] sm:$0xff] %v4199
      %4232 = vst [vmem:[#allocation4 + $0x90] sm:$0xff] %v4200
      %4233 = vst [vmem:[#allocation4 + $0x98] sm:$0xff] %v4201
      %4234 = vst [vmem:[#allocation4 + $0xa0] sm:$0xff] %v4202
      %4235 = vst [vmem:[#allocation4 + $0xa8] sm:$0xff] %v4203
      %4236 = vst [vmem:[#allocation4 + $0xb0] sm:$0xff] %v4204
      %4237 = vst [vmem:[#allocation4 + $0xb8] sm:$0xff] %v4205
      %4238 = vst [vmem:[#allocation4 + $0xc0] sm:$0xff] %v4206
      %4239 = vst [vmem:[#allocation4 + $0xc8] sm:$0xff] %v4207
      %4240 = vst [vmem:[#allocation4 + $0xd0] sm:$0xff] %v4208
      %4241 = vst [vmem:[#allocation4 + $0xd8] sm:$0xff] %v4209
      %4242 = vst [vmem:[#allocation4 + $0xe0] sm:$0xff] %v4210
      %4243 = vst [vmem:[#allocation4 + $0xe8] sm:$0xff] %v4211
      %4244 = vst [vmem:[#allocation4 + $0xf0] sm:$0xff] %v4212
      %4245 = vst [vmem:[#allocation4 + $0xf8] sm:$0xff] %v4213
      %v4246 = vld [vmem:[%s249 + $0x2] sm:$0xff]
      %v4247 = vld [vmem:[%s249 + $0xa] sm:$0xff]
      %v4248 = vld [vmem:[%s249 + $0x1a] sm:$0xff]
      %v4249 = vld [vmem:[%s249 + $0x22] sm:$0xff]
      %v4250 = vld [vmem:[%s249 + $0x32] sm:$0xff]
      %v4251 = vld [vmem:[%s249 + $0x3a] sm:$0xff]
      %v4252 = vld [vmem:[%s249 + $0x4a] sm:$0xff]
      %v4253 = vld [vmem:[%s249 + $0x52] sm:$0xff]
      %v4254 = vld [vmem:[%s249 + $0x62] sm:$0xff]
      %v4255 = vld [vmem:[%s249 + $0x6a] sm:$0xff]
      %v4256 = vld [vmem:[%s249 + $0x7a] sm:$0xff]
      %v4257 = vld [vmem:[%s249 + $0x82] sm:$0xff]
      %v4258 = vld [vmem:[%s249 + $0x92] sm:$0xff]
      %v4259 = vld [vmem:[%s249 + $0x9a] sm:$0xff]
      %v4260 = vld [vmem:[%s249 + $0xaa] sm:$0xff]
      %v4261 = vld [vmem:[%s249 + $0xb2] sm:$0xff]
      %v4262 = vld [vmem:[%s249 + $0xc2] sm:$0xff]
      %v4263 = vld [vmem:[%s249 + $0xca] sm:$0xff]
      %v4264 = vld [vmem:[%s249 + $0xda] sm:$0xff]
      %v4265 = vld [vmem:[%s249 + $0xe2] sm:$0xff]
      %v4266 = vld [vmem:[%s249 + $0xf2] sm:$0xff]
      %v4267 = vld [vmem:[%s249 + $0xfa] sm:$0xff]
      %v4268 = vld [vmem:[%s249 + $0x10a] sm:$0xff]
      %v4269 = vld [vmem:[%s249 + $0x112] sm:$0xff]
      %v4270 = vld [vmem:[%s249 + $0x122] sm:$0xff]
      %v4271 = vld [vmem:[%s249 + $0x12a] sm:$0xff]
      %v4272 = vld [vmem:[%s249 + $0x13a] sm:$0xff]
      %v4273 = vld [vmem:[%s249 + $0x142] sm:$0xff]
      %v4274 = vld [vmem:[%s249 + $0x152] sm:$0xff]
      %v4275 = vld [vmem:[%s249 + $0x15a] sm:$0xff]
      %v4276 = vld [vmem:[%s249 + $0x16a] sm:$0xff]
      %v4277 = vld [vmem:[%s249 + $0x172] sm:$0xff]
      %v4278 = vpack.c.bf16 %v4247, %v4246
      %v4279 = vpack.c.bf16 %v4249, %v4248
      %v4280 = vpack.c.bf16 %v4251, %v4250
      %v4281 = vpack.c.bf16 %v4253, %v4252
      %v4282 = vpack.c.bf16 %v4255, %v4254
      %v4283 = vpack.c.bf16 %v4257, %v4256
      %v4284 = vpack.c.bf16 %v4259, %v4258
      %v4285 = vpack.c.bf16 %v4261, %v4260
      %v4286 = vpack.c.bf16 %v4263, %v4262
      %v4287 = vpack.c.bf16 %v4265, %v4264
      %v4288 = vpack.c.bf16 %v4267, %v4266
      %v4289 = vpack.c.bf16 %v4269, %v4268
      %v4290 = vpack.c.bf16 %v4271, %v4270
      %v4291 = vpack.c.bf16 %v4273, %v4272
      %v4292 = vpack.c.bf16 %v4275, %v4274
      %v4293 = vpack.c.bf16 %v4277, %v4276
      %s4294 = scalar_lea.vmem %s2, 320
      %v4295 = vld [vmem:[%s4294] sm:$0xf]
      %v4296 = vld [vmem:[%s4294 + $0x4] sm:$0xf]
      %v4297 = vld [vmem:[%s4294 + $0x8] sm:$0xf]
      %v4298 = vld [vmem:[%s4294 + $0xc] sm:$0xf]
      %v4299 = vld [vmem:[%s4294 + $0x10] sm:$0xf]
      %v4300 = vld [vmem:[%s4294 + $0x14] sm:$0xf]
      %v4301 = vld [vmem:[%s4294 + $0x18] sm:$0xf]
      %v4302 = vld [vmem:[%s4294 + $0x1c] sm:$0xf]
      %v4303 = vld [vmem:[%s4294 + $0x20] sm:$0xf]
      %v4304 = vld [vmem:[%s4294 + $0x24] sm:$0xf]
      %v4305 = vld [vmem:[%s4294 + $0x28] sm:$0xf]
      %v4306 = vld [vmem:[%s4294 + $0x2c] sm:$0xf]
      %v4307 = vld [vmem:[%s4294 + $0x30] sm:$0xf]
      %v4308 = vld [vmem:[%s4294 + $0x34] sm:$0xf]
      %v4309 = vld [vmem:[%s4294 + $0x38] sm:$0xf]
      %v4310 = vld [vmem:[%s4294 + $0x3c] sm:$0xf]
      %v4327 = vunpack.c.l.b16 %v4295
      %v4328 = vunpack.c.l.b16 %v4296
      %v4329 = vunpack.c.l.b16 %v4297
      %v4330 = vunpack.c.l.b16 %v4298
      %v4331 = vunpack.c.l.b16 %v4299
      %v4332 = vunpack.c.l.b16 %v4300
      %v4333 = vunpack.c.l.b16 %v4301
      %v4334 = vunpack.c.l.b16 %v4302
      %v4335 = vunpack.c.l.b16 %v4303
      %v4336 = vunpack.c.l.b16 %v4304
      %v4337 = vunpack.c.l.b16 %v4305
      %v4338 = vunpack.c.l.b16 %v4306
      %v4339 = vunpack.c.l.b16 %v4307
      %v4340 = vunpack.c.l.b16 %v4308
      %v4341 = vunpack.c.l.b16 %v4309
      %v4342 = vunpack.c.l.b16 %v4310
      %v4343 = vpack.c.b16 %v4328, %v4327
      %v4344 = vpack.c.b16 %v4330, %v4329
      %v4345 = vpack.c.b16 %v4332, %v4331
      %v4346 = vpack.c.b16 %v4334, %v4333
      %v4347 = vpack.c.b16 %v4336, %v4335
      %v4348 = vpack.c.b16 %v4338, %v4337
      %v4349 = vpack.c.b16 %v4340, %v4339
      %v4350 = vpack.c.b16 %v4342, %v4341
      %4359 = vmatprep.subr.bf16.mxu0 0
      %4360 = vmatpush1.bf16.msra.mxu0 %v4343
      %4361 = vmatprep.subr.bf16.mxu0 0
      %4362 = vmatpush1.bf16.msra.mxu0 %v4344
      %4363 = vmatprep.subr.bf16.mxu0 0
      %4364 = vmatpush1.bf16.msra.mxu0 %v4345
      %4365 = vmatprep.subr.bf16.mxu0 0
      %4366 = vmatpush1.bf16.msra.mxu0 %v4346
      %4367 = vmatprep.subr.bf16.mxu0 0
      %4368 = vmatpush1.bf16.msra.mxu0 %v4347
      %4369 = vmatprep.subr.bf16.mxu0 0
      %4370 = vmatpush1.bf16.msra.mxu0 %v4348
      %4371 = vmatprep.subr.bf16.mxu0 0
      %4372 = vmatpush1.bf16.msra.mxu0 %v4349
      %4373 = vmatprep.subr.bf16.mxu0 0
      %4374 = vmatpush1.bf16.msra.mxu0 %v4350
      %4375 = vmatprep.subr.bf16.mxu0 0
      %4376 = vmatpush1.bf16.msra.mxu0 0
      %4377 = vmatprep.subr.bf16.mxu0 0
      %4378 = vmatpush1.bf16.msra.mxu0 0
      %4379 = vmatprep.subr.bf16.mxu0 0
      %4380 = vmatpush1.bf16.msra.mxu0 0
      %4381 = vmatprep.subr.bf16.mxu0 0
      %4382 = vmatpush1.bf16.msra.mxu0 0
      %4383 = vmatprep.subr.bf16.mxu0 0
      %4384 = vmatpush1.bf16.msra.mxu0 0
      %4385 = vmatprep.subr.bf16.mxu0 0
      %4386 = vmatpush1.bf16.msra.mxu0 0
      %4387 = vmatprep.subr.bf16.mxu0 0
      %4388 = vmatpush1.bf16.msra.mxu0 0
      %4389 = vmatprep.subr.bf16.mxu0 0
      %4390 = vmatpush1.bf16.msra.mxu0 0
      %4391 = vmatprep.mubr.bf16.mxu0 0
      %4392 = vmatmul.mubr.bf16.gmra.mrb[0].mxu0 %v4278
      %v4393 = vpop.f32.mrb[0].mxu0
      %v4394 = vadd.f32 0.0, %v4393
      %v4395 = vpop.f32.mrb[0].mxu0
      %v4396 = vpop.f32.mrb[0].mxu0
      %v4397 = vadd.f32 0.0, %v4396
      %v4398 = vpop.f32.mrb[0].mxu0
      %4399 = vmatprep.mubr.bf16.mxu0 0
      %4400 = vmatmul.mubr.bf16.gmra.mrb[0].mxu0 %v4279
      %v4401 = vpop.f32.mrb[0].mxu0
      %v4402 = vadd.f32 0.0, %v4401
      %v4403 = vpop.f32.mrb[0].mxu0
      %v4404 = vpop.f32.mrb[0].mxu0
      %v4405 = vadd.f32 0.0, %v4404
      %v4406 = vpop.f32.mrb[0].mxu0
      %4407 = vmatprep.mubr.bf16.mxu0 0
      %4408 = vmatmul.mubr.bf16.gmra.mrb[0].mxu0 %v4280
      %v4409 = vpop.f32.mrb[0].mxu0
      %v4410 = vadd.f32 0.0, %v4409
      %v4411 = vpop.f32.mrb[0].mxu0
      %v4412 = vpop.f32.mrb[0].mxu0
      %v4413 = vadd.f32 0.0, %v4412
      %v4414 = vpop.f32.mrb[0].mxu0
      %4415 = vmatprep.mubr.bf16.mxu0 0
      %4416 = vmatmul.mubr.bf16.gmra.mrb[0].mxu0 %v4281
      %v4417 = vpop.f32.mrb[0].mxu0
      %v4418 = vadd.f32 0.0, %v4417
      %v4419 = vpop.f32.mrb[0].mxu0
      %v4420 = vpop.f32.mrb[0].mxu0
      %v4421 = vadd.f32 0.0, %v4420
      %v4422 = vpop.f32.mrb[0].mxu0
      %4423 = vmatprep.mubr.bf16.mxu0 0
      %4424 = vmatmul.mubr.bf16.gmra.mrb[0].mxu0 %v4282
      %v4425 = vpop.f32.mrb[0].mxu0
      %v4426 = vadd.f32 0.0, %v4425
      %v4427 = vpop.f32.mrb[0].mxu0
      %v4428 = vpop.f32.mrb[0].mxu0
      %v4429 = vadd.f32 0.0, %v4428
      %v4430 = vpop.f32.mrb[0].mxu0
      %4431 = vmatprep.mubr.bf16.mxu0 0
      %4432 = vmatmul.mubr.bf16.gmra.mrb[0].mxu0 %v4283
      %v4433 = vpop.f32.mrb[0].mxu0
      %v4434 = vadd.f32 0.0, %v4433
      %v4435 = vpop.f32.mrb[0].mxu0
      %v4436 = vpop.f32.mrb[0].mxu0
      %v4437 = vadd.f32 0.0, %v4436
      %v4438 = vpop.f32.mrb[0].mxu0
      %4439 = vmatprep.mubr.bf16.mxu0 0
      %4440 = vmatmul.mubr.bf16.gmra.mrb[0].mxu0 %v4284
      %v4441 = vpop.f32.mrb[0].mxu0
      %v4442 = vadd.f32 0.0, %v4441
      %v4443 = vpop.f32.mrb[0].mxu0
      %v4444 = vpop.f32.mrb[0].mxu0
      %v4445 = vadd.f32 0.0, %v4444
      %v4446 = vpop.f32.mrb[0].mxu0
      %4447 = vmatprep.mubr.bf16.mxu0 0
      %4448 = vmatmul.mubr.bf16.gmra.mrb[0].mxu0 %v4285
      %v4449 = vpop.f32.mrb[0].mxu0
      %v4450 = vadd.f32 0.0, %v4449
      %v4451 = vpop.f32.mrb[0].mxu0
      %v4452 = vpop.f32.mrb[0].mxu0
      %v4453 = vadd.f32 0.0, %v4452
      %v4454 = vpop.f32.mrb[0].mxu0
      %4455 = vmatprep.mubr.bf16.mxu0 0
      %4456 = vmatmul.mubr.bf16.gmra.mrb[0].mxu0 %v4286
      %v4457 = vpop.f32.mrb[0].mxu0
      %v4458 = vadd.f32 0.0, %v4457
      %v4459 = vpop.f32.mrb[0].mxu0
      %v4460 = vpop.f32.mrb[0].mxu0
      %v4461 = vadd.f32 0.0, %v4460
      %v4462 = vpop.f32.mrb[0].mxu0
      %4463 = vmatprep.mubr.bf16.mxu0 0
      %4464 = vmatmul.mubr.bf16.gmra.mrb[0].mxu0 %v4287
      %v4465 = vpop.f32.mrb[0].mxu0
      %v4466 = vadd.f32 0.0, %v4465
      %v4467 = vpop.f32.mrb[0].mxu0
      %v4468 = vpop.f32.mrb[0].mxu0
      %v4469 = vadd.f32 0.0, %v4468
      %v4470 = vpop.f32.mrb[0].mxu0
      %4471 = vmatprep.mubr.bf16.mxu0 0
      %4472 = vmatmul.mubr.bf16.gmra.mrb[0].mxu0 %v4288
      %v4473 = vpop.f32.mrb[0].mxu0
      %v4474 = vadd.f32 0.0, %v4473
      %v4475 = vpop.f32.mrb[0].mxu0
      %v4476 = vpop.f32.mrb[0].mxu0
      %v4477 = vadd.f32 0.0, %v4476
      %v4478 = vpop.f32.mrb[0].mxu0
      %4479 = vmatprep.mubr.bf16.mxu0 0
      %4480 = vmatmul.mubr.bf16.gmra.mrb[0].mxu0 %v4289
      %v4481 = vpop.f32.mrb[0].mxu0
      %v4482 = vadd.f32 0.0, %v4481
      %v4483 = vpop.f32.mrb[0].mxu0
      %v4484 = vpop.f32.mrb[0].mxu0
      %v4485 = vadd.f32 0.0, %v4484
      %v4486 = vpop.f32.mrb[0].mxu0
      %4487 = vmatprep.mubr.bf16.mxu0 0
      %4488 = vmatmul.mubr.bf16.gmra.mrb[0].mxu0 %v4290
      %v4489 = vpop.f32.mrb[0].mxu0
      %v4490 = vadd.f32 0.0, %v4489
      %v4491 = vpop.f32.mrb[0].mxu0
      %v4492 = vpop.f32.mrb[0].mxu0
      %v4493 = vadd.f32 0.0, %v4492
      %v4494 = vpop.f32.mrb[0].mxu0
      %4495 = vmatprep.mubr.bf16.mxu0 0
      %4496 = vmatmul.mubr.bf16.gmra.mrb[0].mxu0 %v4291
      %v4497 = vpop.f32.mrb[0].mxu0
      %v4498 = vadd.f32 0.0, %v4497
      %v4499 = vpop.f32.mrb[0].mxu0
      %v4500 = vpop.f32.mrb[0].mxu0
      %v4501 = vadd.f32 0.0, %v4500
      %v4502 = vpop.f32.mrb[0].mxu0
      %4503 = vmatprep.mubr.bf16.mxu0 0
      %4504 = vmatmul.mubr.bf16.gmra.mrb[0].mxu0 %v4292
      %v4505 = vpop.f32.mrb[0].mxu0
      %v4506 = vadd.f32 0.0, %v4505
      %v4507 = vpop.f32.mrb[0].mxu0
      %v4508 = vpop.f32.mrb[0].mxu0
      %v4509 = vadd.f32 0.0, %v4508
      %v4510 = vpop.f32.mrb[0].mxu0
      %4511 = vmatprep.mubr.bf16.mxu0 0
      %4512 = vmatmul.mubr.bf16.gmra.mrb[0].mxu0 %v4293
      %v4513 = vpop.f32.mrb[0].mxu0
      %v4514 = vadd.f32 0.0, %v4513
      %v4515 = vpop.f32.mrb[0].mxu0
      %v4516 = vpop.f32.mrb[0].mxu0
      %v4517 = vadd.f32 0.0, %v4516
      %v4518 = vpop.f32.mrb[0].mxu0
      %4519 = vdwg.mxu0
      %v4520 = vld [vmem:[#allocation4] sm:$0xff]
      %v4521 = vld [vmem:[#allocation4 + $0x8] sm:$0xff]
      %v4522 = vld [vmem:[#allocation4 + $0x10] sm:$0xff]
      %v4523 = vld [vmem:[#allocation4 + $0x18] sm:$0xff]
      %v4524 = vld [vmem:[#allocation4 + $0x20] sm:$0xff]
      %v4525 = vld [vmem:[#allocation4 + $0x28] sm:$0xff]
      %v4526 = vld [vmem:[#allocation4 + $0x30] sm:$0xff]
      %v4527 = vld [vmem:[#allocation4 + $0x38] sm:$0xff]
      %v4528 = vld [vmem:[#allocation4 + $0x40] sm:$0xff]
      %v4529 = vld [vmem:[#allocation4 + $0x48] sm:$0xff]
      %v4530 = vld [vmem:[#allocation4 + $0x50] sm:$0xff]
      %v4531 = vld [vmem:[#allocation4 + $0x58] sm:$0xff]
      %v4532 = vld [vmem:[#allocation4 + $0x60] sm:$0xff]
      %v4533 = vld [vmem:[#allocation4 + $0x68] sm:$0xff]
      %v4534 = vld [vmem:[#allocation4 + $0x70] sm:$0xff]
      %v4535 = vld [vmem:[#allocation4 + $0x78] sm:$0xff]
      %v4536 = vld [vmem:[#allocation4 + $0x80] sm:$0xff]
      %v4537 = vld [vmem:[#allocation4 + $0x88] sm:$0xff]
      %v4538 = vld [vmem:[#allocation4 + $0x90] sm:$0xff]
      %v4539 = vld [vmem:[#allocation4 + $0x98] sm:$0xff]
      %v4540 = vld [vmem:[#allocation4 + $0xa0] sm:$0xff]
      %v4541 = vld [vmem:[#allocation4 + $0xa8] sm:$0xff]
      %v4542 = vld [vmem:[#allocation4 + $0xb0] sm:$0xff]
      %v4543 = vld [vmem:[#allocation4 + $0xb8] sm:$0xff]
      %v4544 = vld [vmem:[#allocation4 + $0xc0] sm:$0xff]
      %v4545 = vld [vmem:[#allocation4 + $0xc8] sm:$0xff]
      %v4546 = vld [vmem:[#allocation4 + $0xd0] sm:$0xff]
      %v4547 = vld [vmem:[#allocation4 + $0xd8] sm:$0xff]
      %v4548 = vld [vmem:[#allocation4 + $0xe0] sm:$0xff]
      %v4549 = vld [vmem:[#allocation4 + $0xe8] sm:$0xff]
      %v4550 = vld [vmem:[#allocation4 + $0xf0] sm:$0xff]
      %v4551 = vld [vmem:[#allocation4 + $0xf8] sm:$0xff]
      %v4552 = vadd.f32 %v4520, %v4394
      %v4553 = vadd.f32 %v4521, %v4397
      %v4554 = vadd.f32 %v4522, %v4402
      %v4555 = vadd.f32 %v4523, %v4405
      %v4556 = vadd.f32 %v4524, %v4410
      %v4557 = vadd.f32 %v4525, %v4413
      %v4558 = vadd.f32 %v4526, %v4418
      %v4559 = vadd.f32 %v4527, %v4421
      %v4560 = vadd.f32 %v4528, %v4426
      %v4561 = vadd.f32 %v4529, %v4429
      %v4562 = vadd.f32 %v4530, %v4434
      %v4563 = vadd.f32 %v4531, %v4437
      %v4564 = vadd.f32 %v4532, %v4442
      %v4565 = vadd.f32 %v4533, %v4445
      %v4566 = vadd.f32 %v4534, %v4450
      %v4567 = vadd.f32 %v4535, %v4453
      %v4568 = vadd.f32 %v4536, %v4458
      %v4569 = vadd.f32 %v4537, %v4461
      %v4570 = vadd.f32 %v4538, %v4466
      %v4571 = vadd.f32 %v4539, %v4469
      %v4572 = vadd.f32 %v4540, %v4474
      %v4573 = vadd.f32 %v4541, %v4477
      %v4574 = vadd.f32 %v4542, %v4482
      %v4575 = vadd.f32 %v4543, %v4485
      %v4576 = vadd.f32 %v4544, %v4490
      %v4577 = vadd.f32 %v4545, %v4493
      %v4578 = vadd.f32 %v4546, %v4498
      %v4579 = vadd.f32 %v4547, %v4501
      %v4580 = vadd.f32 %v4548, %v4506
      %v4581 = vadd.f32 %v4549, %v4509
      %v4582 = vadd.f32 %v4550, %v4514
      %v4583 = vadd.f32 %v4551, %v4517
      %4584 = vst [vmem:[#allocation4] sm:$0xff] %v4552
      %4585 = vst [vmem:[#allocation4 + $0x8] sm:$0xff] %v4553
      %4586 = vst [vmem:[#allocation4 + $0x10] sm:$0xff] %v4554
      %4587 = vst [vmem:[#allocation4 + $0x18] sm:$0xff] %v4555
      %4588 = vst [vmem:[#allocation4 + $0x20] sm:$0xff] %v4556
      %4589 = vst [vmem:[#allocation4 + $0x28] sm:$0xff] %v4557
      %4590 = vst [vmem:[#allocation4 + $0x30] sm:$0xff] %v4558
      %4591 = vst [vmem:[#allocation4 + $0x38] sm:$0xff] %v4559
      %4592 = vst [vmem:[#allocation4 + $0x40] sm:$0xff] %v4560
      %4593 = vst [vmem:[#allocation4 + $0x48] sm:$0xff] %v4561
      %4594 = vst [vmem:[#allocation4 + $0x50] sm:$0xff] %v4562
      %4595 = vst [vmem:[#allocation4 + $0x58] sm:$0xff] %v4563
      %4596 = vst [vmem:[#allocation4 + $0x60] sm:$0xff] %v4564
      %4597 = vst [vmem:[#allocation4 + $0x68] sm:$0xff] %v4565
      %4598 = vst [vmem:[#allocation4 + $0x70] sm:$0xff] %v4566
      %4599 = vst [vmem:[#allocation4 + $0x78] sm:$0xff] %v4567
      %4600 = vst [vmem:[#allocation4 + $0x80] sm:$0xff] %v4568
      %4601 = vst [vmem:[#allocation4 + $0x88] sm:$0xff] %v4569
      %4602 = vst [vmem:[#allocation4 + $0x90] sm:$0xff] %v4570
      %4603 = vst [vmem:[#allocation4 + $0x98] sm:$0xff] %v4571
      %4604 = vst [vmem:[#allocation4 + $0xa0] sm:$0xff] %v4572
      %4605 = vst [vmem:[#allocation4 + $0xa8] sm:$0xff] %v4573
      %4606 = vst [vmem:[#allocation4 + $0xb0] sm:$0xff] %v4574
      %4607 = vst [vmem:[#allocation4 + $0xb8] sm:$0xff] %v4575
      %4608 = vst [vmem:[#allocation4 + $0xc0] sm:$0xff] %v4576
      %4609 = vst [vmem:[#allocation4 + $0xc8] sm:$0xff] %v4577
      %4610 = vst [vmem:[#allocation4 + $0xd0] sm:$0xff] %v4578
      %4611 = vst [vmem:[#allocation4 + $0xd8] sm:$0xff] %v4579
      %4612 = vst [vmem:[#allocation4 + $0xe0] sm:$0xff] %v4580
      %4613 = vst [vmem:[#allocation4 + $0xe8] sm:$0xff] %v4581
      %4614 = vst [vmem:[#allocation4 + $0xf0] sm:$0xff] %v4582
      %4615 = vst [vmem:[#allocation4 + $0xf8] sm:$0xff] %v4583
      %s4616 = scalar_lea.vmem [#allocation3], 48
      %v4617 = vld [vmem:[%s4616] sm:$0xff]
      %v4618 = vld [vmem:[%s4616 + $0x8] sm:$0xff]
      %v4619 = vld [vmem:[%s4616 + $0x18] sm:$0xff]
      %v4620 = vld [vmem:[%s4616 + $0x20] sm:$0xff]
      %v4621 = vld [vmem:[%s4616 + $0x30] sm:$0xff]
      %v4622 = vld [vmem:[%s4616 + $0x38] sm:$0xff]
      %v4623 = vld [vmem:[%s4616 + $0x48] sm:$0xff]
      %v4624 = vld [vmem:[%s4616 + $0x50] sm:$0xff]
      %v4625 = vld [vmem:[%s4616 + $0x60] sm:$0xff]
      %v4626 = vld [vmem:[%s4616 + $0x68] sm:$0xff]
      %v4627 = vld [vmem:[%s4616 + $0x78] sm:$0xff]
      %v4628 = vld [vmem:[%s4616 + $0x80] sm:$0xff]
      %v4629 = vld [vmem:[%s4616 + $0x90] sm:$0xff]
      %v4630 = vld [vmem:[%s4616 + $0x98] sm:$0xff]
      %v4631 = vld [vmem:[%s4616 + $0xa8] sm:$0xff]
      %v4632 = vld [vmem:[%s4616 + $0xb0] sm:$0xff]
      %v4633 = vld [vmem:[%s4616 + $0xc0] sm:$0xff]
      %v4634 = vld [vmem:[%s4616 + $0xc8] sm:$0xff]
      %v4635 = vld [vmem:[%s4616 + $0xd8] sm:$0xff]
      %v4636 = vld [vmem:[%s4616 + $0xe0] sm:$0xff]
      %v4637 = vld [vmem:[%s4616 + $0xf0] sm:$0xff]
      %v4638 = vld [vmem:[%s4616 + $0xf8] sm:$0xff]
      %v4639 = vld [vmem:[%s4616 + $0x108] sm:$0xff]
      %v4640 = vld [vmem:[%s4616 + $0x110] sm:$0xff]
      %v4641 = vld [vmem:[%s4616 + $0x120] sm:$0xff]
      %v4642 = vld [vmem:[%s4616 + $0x128] sm:$0xff]
      %v4643 = vld [vmem:[%s4616 + $0x138] sm:$0xff]
      %v4644 = vld [vmem:[%s4616 + $0x140] sm:$0xff]
      %v4645 = vld [vmem:[%s4616 + $0x150] sm:$0xff]
      %v4646 = vld [vmem:[%s4616 + $0x158] sm:$0xff]
      %v4647 = vld [vmem:[%s4616 + $0x168] sm:$0xff]
      %v4648 = vld [vmem:[%s4616 + $0x170] sm:$0xff]
      %v4649 = vpack.c.bf16 %v4618, %v4617
      %v4650 = vpack.c.bf16 %v4620, %v4619
      %v4651 = vpack.c.bf16 %v4622, %v4621
      %v4652 = vpack.c.bf16 %v4624, %v4623
      %v4653 = vpack.c.bf16 %v4626, %v4625
      %v4654 = vpack.c.bf16 %v4628, %v4627
      %v4655 = vpack.c.bf16 %v4630, %v4629
      %v4656 = vpack.c.bf16 %v4632, %v4631
      %v4657 = vpack.c.bf16 %v4634, %v4633
      %v4658 = vpack.c.bf16 %v4636, %v4635
      %v4659 = vpack.c.bf16 %v4638, %v4637
      %v4660 = vpack.c.bf16 %v4640, %v4639
      %v4661 = vpack.c.bf16 %v4642, %v4641
      %v4662 = vpack.c.bf16 %v4644, %v4643
      %v4663 = vpack.c.bf16 %v4646, %v4645
      %v4664 = vpack.c.bf16 %v4648, %v4647
      %s4665 = scalar_lea.vmem %s2, 384
      %v4666 = vld [vmem:[%s4665] sm:$0xf]
      %v4667 = vld [vmem:[%s4665 + $0x4] sm:$0xf]
      %v4668 = vld [vmem:[%s4665 + $0x8] sm:$0xf]
      %v4669 = vld [vmem:[%s4665 + $0xc] sm:$0xf]
      %v4670 = vld [vmem:[%s4665 + $0x10] sm:$0xf]
      %v4671 = vld [vmem:[%s4665 + $0x14] sm:$0xf]
      %v4672 = vld [vmem:[%s4665 + $0x18] sm:$0xf]
      %v4673 = vld [vmem:[%s4665 + $0x1c] sm:$0xf]
      %v4674 = vld [vmem:[%s4665 + $0x20] sm:$0xf]
      %v4675 = vld [vmem:[%s4665 + $0x24] sm:$0xf]
      %v4676 = vld [vmem:[%s4665 + $0x28] sm:$0xf]
      %v4677 = vld [vmem:[%s4665 + $0x2c] sm:$0xf]
      %v4678 = vld [vmem:[%s4665 + $0x30] sm:$0xf]
      %v4679 = vld [vmem:[%s4665 + $0x34] sm:$0xf]
      %v4680 = vld [vmem:[%s4665 + $0x38] sm:$0xf]
      %v4681 = vld [vmem:[%s4665 + $0x3c] sm:$0xf]
      %v4698 = vunpack.c.l.b16 %v4666
      %v4699 = vunpack.c.l.b16 %v4667
      %v4700 = vunpack.c.l.b16 %v4668
      %v4701 = vunpack.c.l.b16 %v4669
      %v4702 = vunpack.c.l.b16 %v4670
      %v4703 = vunpack.c.l.b16 %v4671
      %v4704 = vunpack.c.l.b16 %v4672
      %v4705 = vunpack.c.l.b16 %v4673
      %v4706 = vunpack.c.l.b16 %v4674
      %v4707 = vunpack.c.l.b16 %v4675
      %v4708 = vunpack.c.l.b16 %v4676
      %v4709 = vunpack.c.l.b16 %v4677
      %v4710 = vunpack.c.l.b16 %v4678
      %v4711 = vunpack.c.l.b16 %v4679
      %v4712 = vunpack.c.l.b16 %v4680
      %v4713 = vunpack.c.l.b16 %v4681
      %v4714 = vpack.c.b16 %v4699, %v4698
      %v4715 = vpack.c.b16 %v4701, %v4700
      %v4716 = vpack.c.b16 %v4703, %v4702
      %v4717 = vpack.c.b16 %v4705, %v4704
      %v4718 = vpack.c.b16 %v4707, %v4706
      %v4719 = vpack.c.b16 %v4709, %v4708
      %v4720 = vpack.c.b16 %v4711, %v4710
      %v4721 = vpack.c.b16 %v4713, %v4712
      %4730 = vmatprep.subr.bf16.mxu0 0
      %4731 = vmatpush1.bf16.msra.mxu0 %v4714
      %4732 = vmatprep.subr.bf16.mxu0 0
      %4733 = vmatpush1.bf16.msra.mxu0 %v4715
      %4734 = vmatprep.subr.bf16.mxu0 0
      %4735 = vmatpush1.bf16.msra.mxu0 %v4716
      %4736 = vmatprep.subr.bf16.mxu0 0
      %4737 = vmatpush1.bf16.msra.mxu0 %v4717
      %4738 = vmatprep.subr.bf16.mxu0 0
      %4739 = vmatpush1.bf16.msra.mxu0 %v4718
      %4740 = vmatprep.subr.bf16.mxu0 0
      %4741 = vmatpush1.bf16.msra.mxu0 %v4719
      %4742 = vmatprep.subr.bf16.mxu0 0
      %4743 = vmatpush1.bf16.msra.mxu0 %v4720
      %4744 = vmatprep.subr.bf16.mxu0 0
      %4745 = vmatpush1.bf16.msra.mxu0 %v4721
      %4746 = vmatprep.subr.bf16.mxu0 0
      %4747 = vmatpush1.bf16.msra.mxu0 0
      %4748 = vmatprep.subr.bf16.mxu0 0
      %4749 = vmatpush1.bf16.msra.mxu0 0
      %4750 = vmatprep.subr.bf16.mxu0 0
      %4751 = vmatpush1.bf16.msra.mxu0 0
      %4752 = vmatprep.subr.bf16.mxu0 0
      %4753 = vmatpush1.bf16.msra.mxu0 0
      %4754 = vmatprep.subr.bf16.mxu0 0
      %4755 = vmatpush1.bf16.msra.mxu0 0
      %4756 = vmatprep.subr.bf16.mxu0 0
      %4757 = vmatpush1.bf16.msra.mxu0 0
      %4758 = vmatprep.subr.bf16.mxu0 0
      %4759 = vmatpush1.bf16.msra.mxu0 0
      %4760 = vmatprep.subr.bf16.mxu0 0
      %4761 = vmatpush1.bf16.msra.mxu0 0
      %4762 = vmatprep.mubr.bf16.mxu0 0
      %4763 = vmatmul.mubr.bf16.gmra.mrb[0].mxu0 %v4649
      %v4764 = vpop.f32.mrb[0].mxu0
      %v4765 = vadd.f32 0.0, %v4764
      %v4766 = vpop.f32.mrb[0].mxu0
      %v4767 = vpop.f32.mrb[0].mxu0
      %v4768 = vadd.f32 0.0, %v4767
      %v4769 = vpop.f32.mrb[0].mxu0
      %4770 = vmatprep.mubr.bf16.mxu0 0
      %4771 = vmatmul.mubr.bf16.gmra.mrb[0].mxu0 %v4650
      %v4772 = vpop.f32.mrb[0].mxu0
      %v4773 = vadd.f32 0.0, %v4772
      %v4774 = vpop.f32.mrb[0].mxu0
      %v4775 = vpop.f32.mrb[0].mxu0
      %v4776 = vadd.f32 0.0, %v4775
      %v4777 = vpop.f32.mrb[0].mxu0
      %4778 = vmatprep.mubr.bf16.mxu0 0
      %4779 = vmatmul.mubr.bf16.gmra.mrb[0].mxu0 %v4651
      %v4780 = vpop.f32.mrb[0].mxu0
      %v4781 = vadd.f32 0.0, %v4780
      %v4782 = vpop.f32.mrb[0].mxu0
      %v4783 = vpop.f32.mrb[0].mxu0
      %v4784 = vadd.f32 0.0, %v4783
      %v4785 = vpop.f32.mrb[0].mxu0
      %4786 = vmatprep.mubr.bf16.mxu0 0
      %4787 = vmatmul.mubr.bf16.gmra.mrb[0].mxu0 %v4652
      %v4788 = vpop.f32.mrb[0].mxu0
      %v4789 = vadd.f32 0.0, %v4788
      %v4790 = vpop.f32.mrb[0].mxu0
      %v4791 = vpop.f32.mrb[0].mxu0
      %v4792 = vadd.f32 0.0, %v4791
      %v4793 = vpop.f32.mrb[0].mxu0
      %4794 = vmatprep.mubr.bf16.mxu0 0
      %4795 = vmatmul.mubr.bf16.gmra.mrb[0].mxu0 %v4653
      %v4796 = vpop.f32.mrb[0].mxu0
      %v4797 = vadd.f32 0.0, %v4796
      %v4798 = vpop.f32.mrb[0].mxu0
      %v4799 = vpop.f32.mrb[0].mxu0
      %v4800 = vadd.f32 0.0, %v4799
      %v4801 = vpop.f32.mrb[0].mxu0
      %4802 = vmatprep.mubr.bf16.mxu0 0
      %4803 = vmatmul.mubr.bf16.gmra.mrb[0].mxu0 %v4654
      %v4804 = vpop.f32.mrb[0].mxu0
      %v4805 = vadd.f32 0.0, %v4804
      %v4806 = vpop.f32.mrb[0].mxu0
      %v4807 = vpop.f32.mrb[0].mxu0
      %v4808 = vadd.f32 0.0, %v4807
      %v4809 = vpop.f32.mrb[0].mxu0
      %4810 = vmatprep.mubr.bf16.mxu0 0
      %4811 = vmatmul.mubr.bf16.gmra.mrb[0].mxu0 %v4655
      %v4812 = vpop.f32.mrb[0].mxu0
      %v4813 = vadd.f32 0.0, %v4812
      %v4814 = vpop.f32.mrb[0].mxu0
      %v4815 = vpop.f32.mrb[0].mxu0
      %v4816 = vadd.f32 0.0, %v4815
      %v4817 = vpop.f32.mrb[0].mxu0
      %4818 = vmatprep.mubr.bf16.mxu0 0
      %4819 = vmatmul.mubr.bf16.gmra.mrb[0].mxu0 %v4656
      %v4820 = vpop.f32.mrb[0].mxu0
      %v4821 = vadd.f32 0.0, %v4820
      %v4822 = vpop.f32.mrb[0].mxu0
      %v4823 = vpop.f32.mrb[0].mxu0
      %v4824 = vadd.f32 0.0, %v4823
      %v4825 = vpop.f32.mrb[0].mxu0
      %4826 = vmatprep.mubr.bf16.mxu0 0
      %4827 = vmatmul.mubr.bf16.gmra.mrb[0].mxu0 %v4657
      %v4828 = vpop.f32.mrb[0].mxu0
      %v4829 = vadd.f32 0.0, %v4828
      %v4830 = vpop.f32.mrb[0].mxu0
      %v4831 = vpop.f32.mrb[0].mxu0
      %v4832 = vadd.f32 0.0, %v4831
      %v4833 = vpop.f32.mrb[0].mxu0
      %4834 = vmatprep.mubr.bf16.mxu0 0
      %4835 = vmatmul.mubr.bf16.gmra.mrb[0].mxu0 %v4658
      %v4836 = vpop.f32.mrb[0].mxu0
      %v4837 = vadd.f32 0.0, %v4836
      %v4838 = vpop.f32.mrb[0].mxu0
      %v4839 = vpop.f32.mrb[0].mxu0
      %v4840 = vadd.f32 0.0, %v4839
      %v4841 = vpop.f32.mrb[0].mxu0
      %4842 = vmatprep.mubr.bf16.mxu0 0
      %4843 = vmatmul.mubr.bf16.gmra.mrb[0].mxu0 %v4659
      %v4844 = vpop.f32.mrb[0].mxu0
      %v4845 = vadd.f32 0.0, %v4844
      %v4846 = vpop.f32.mrb[0].mxu0
      %v4847 = vpop.f32.mrb[0].mxu0
      %v4848 = vadd.f32 0.0, %v4847
      %v4849 = vpop.f32.mrb[0].mxu0
      %4850 = vmatprep.mubr.bf16.mxu0 0
      %4851 = vmatmul.mubr.bf16.gmra.mrb[0].mxu0 %v4660
      %v4852 = vpop.f32.mrb[0].mxu0
      %v4853 = vadd.f32 0.0, %v4852
      %v4854 = vpop.f32.mrb[0].mxu0
      %v4855 = vpop.f32.mrb[0].mxu0
      %v4856 = vadd.f32 0.0, %v4855
      %v4857 = vpop.f32.mrb[0].mxu0
      %4858 = vmatprep.mubr.bf16.mxu0 0
      %4859 = vmatmul.mubr.bf16.gmra.mrb[0].mxu0 %v4661
      %v4860 = vpop.f32.mrb[0].mxu0
      %v4861 = vadd.f32 0.0, %v4860
      %v4862 = vpop.f32.mrb[0].mxu0
      %v4863 = vpop.f32.mrb[0].mxu0
      %v4864 = vadd.f32 0.0, %v4863
      %v4865 = vpop.f32.mrb[0].mxu0
      %4866 = vmatprep.mubr.bf16.mxu0 0
      %4867 = vmatmul.mubr.bf16.gmra.mrb[0].mxu0 %v4662
      %v4868 = vpop.f32.mrb[0].mxu0
      %v4869 = vadd.f32 0.0, %v4868
      %v4870 = vpop.f32.mrb[0].mxu0
      %v4871 = vpop.f32.mrb[0].mxu0
      %v4872 = vadd.f32 0.0, %v4871
      %v4873 = vpop.f32.mrb[0].mxu0
      %4874 = vmatprep.mubr.bf16.mxu0 0
      %4875 = vmatmul.mubr.bf16.gmra.mrb[0].mxu0 %v4663
      %v4876 = vpop.f32.mrb[0].mxu0
      %v4877 = vadd.f32 0.0, %v4876
      %v4878 = vpop.f32.mrb[0].mxu0
      %v4879 = vpop.f32.mrb[0].mxu0
      %v4880 = vadd.f32 0.0, %v4879
      %v4881 = vpop.f32.mrb[0].mxu0
      %4882 = vmatprep.mubr.bf16.mxu0 0
      %4883 = vmatmul.mubr.bf16.gmra.mrb[0].mxu0 %v4664
      %v4884 = vpop.f32.mrb[0].mxu0
      %v4885 = vadd.f32 0.0, %v4884
      %v4886 = vpop.f32.mrb[0].mxu0
      %v4887 = vpop.f32.mrb[0].mxu0
      %v4888 = vadd.f32 0.0, %v4887
      %v4889 = vpop.f32.mrb[0].mxu0
      %4890 = vdwg.mxu0
      %v4891 = vld [vmem:[#allocation4] sm:$0xff]
      %v4892 = vld [vmem:[#allocation4 + $0x8] sm:$0xff]
      %v4893 = vld [vmem:[#allocation4 + $0x10] sm:$0xff]
      %v4894 = vld [vmem:[#allocation4 + $0x18] sm:$0xff]
      %v4895 = vld [vmem:[#allocation4 + $0x20] sm:$0xff]
      %v4896 = vld [vmem:[#allocation4 + $0x28] sm:$0xff]
      %v4897 = vld [vmem:[#allocation4 + $0x30] sm:$0xff]
      %v4898 = vld [vmem:[#allocation4 + $0x38] sm:$0xff]
      %v4899 = vld [vmem:[#allocation4 + $0x40] sm:$0xff]
      %v4900 = vld [vmem:[#allocation4 + $0x48] sm:$0xff]
      %v4901 = vld [vmem:[#allocation4 + $0x50] sm:$0xff]
      %v4902 = vld [vmem:[#allocation4 + $0x58] sm:$0xff]
      %v4903 = vld [vmem:[#allocation4 + $0x60] sm:$0xff]
      %v4904 = vld [vmem:[#allocation4 + $0x68] sm:$0xff]
      %v4905 = vld [vmem:[#allocation4 + $0x70] sm:$0xff]
      %v4906 = vld [vmem:[#allocation4 + $0x78] sm:$0xff]
      %v4907 = vld [vmem:[#allocation4 + $0x80] sm:$0xff]
      %v4908 = vld [vmem:[#allocation4 + $0x88] sm:$0xff]
      %v4909 = vld [vmem:[#allocation4 + $0x90] sm:$0xff]
      %v4910 = vld [vmem:[#allocation4 + $0x98] sm:$0xff]
      %v4911 = vld [vmem:[#allocation4 + $0xa0] sm:$0xff]
      %v4912 = vld [vmem:[#allocation4 + $0xa8] sm:$0xff]
      %v4913 = vld [vmem:[#allocation4 + $0xb0] sm:$0xff]
      %v4914 = vld [vmem:[#allocation4 + $0xb8] sm:$0xff]
      %v4915 = vld [vmem:[#allocation4 + $0xc0] sm:$0xff]
      %v4916 = vld [vmem:[#allocation4 + $0xc8] sm:$0xff]
      %v4917 = vld [vmem:[#allocation4 + $0xd0] sm:$0xff]
      %v4918 = vld [vmem:[#allocation4 + $0xd8] sm:$0xff]
      %v4919 = vld [vmem:[#allocation4 + $0xe0] sm:$0xff]
      %v4920 = vld [vmem:[#allocation4 + $0xe8] sm:$0xff]
      %v4921 = vld [vmem:[#allocation4 + $0xf0] sm:$0xff]
      %v4922 = vld [vmem:[#allocation4 + $0xf8] sm:$0xff]
      %v4923 = vadd.f32 %v4891, %v4765
      %v4924 = vadd.f32 %v4892, %v4768
      %v4925 = vadd.f32 %v4893, %v4773
      %v4926 = vadd.f32 %v4894, %v4776
      %v4927 = vadd.f32 %v4895, %v4781
      %v4928 = vadd.f32 %v4896, %v4784
      %v4929 = vadd.f32 %v4897, %v4789
      %v4930 = vadd.f32 %v4898, %v4792
      %v4931 = vadd.f32 %v4899, %v4797
      %v4932 = vadd.f32 %v4900, %v4800
      %v4933 = vadd.f32 %v4901, %v4805
      %v4934 = vadd.f32 %v4902, %v4808
      %v4935 = vadd.f32 %v4903, %v4813
      %v4936 = vadd.f32 %v4904, %v4816
      %v4937 = vadd.f32 %v4905, %v4821
      %v4938 = vadd.f32 %v4906, %v4824
      %v4939 = vadd.f32 %v4907, %v4829
      %v4940 = vadd.f32 %v4908, %v4832
      %v4941 = vadd.f32 %v4909, %v4837
      %v4942 = vadd.f32 %v4910, %v4840
      %v4943 = vadd.f32 %v4911, %v4845
      %v4944 = vadd.f32 %v4912, %v4848
      %v4945 = vadd.f32 %v4913, %v4853
      %v4946 = vadd.f32 %v4914, %v4856
      %v4947 = vadd.f32 %v4915, %v4861
      %v4948 = vadd.f32 %v4916, %v4864
      %v4949 = vadd.f32 %v4917, %v4869
      %v4950 = vadd.f32 %v4918, %v4872
      %v4951 = vadd.f32 %v4919, %v4877
      %v4952 = vadd.f32 %v4920, %v4880
      %v4953 = vadd.f32 %v4921, %v4885
      %v4954 = vadd.f32 %v4922, %v4888
      %4955 = vst [vmem:[#allocation4] sm:$0xff] %v4923
      %4956 = vst [vmem:[#allocation4 + $0x8] sm:$0xff] %v4924
      %4957 = vst [vmem:[#allocation4 + $0x10] sm:$0xff] %v4925
      %4958 = vst [vmem:[#allocation4 + $0x18] sm:$0xff] %v4926
      %4959 = vst [vmem:[#allocation4 + $0x20] sm:$0xff] %v4927
      %4960 = vst [vmem:[#allocation4 + $0x28] sm:$0xff] %v4928
      %4961 = vst [vmem:[#allocation4 + $0x30] sm:$0xff] %v4929
      %4962 = vst [vmem:[#allocation4 + $0x38] sm:$0xff] %v4930
      %4963 = vst [vmem:[#allocation4 + $0x40] sm:$0xff] %v4931
      %4964 = vst [vmem:[#allocation4 + $0x48] sm:$0xff] %v4932
      %4965 = vst [vmem:[#allocation4 + $0x50] sm:$0xff] %v4933
      %4966 = vst [vmem:[#allocation4 + $0x58] sm:$0xff] %v4934
      %4967 = vst [vmem:[#allocation4 + $0x60] sm:$0xff] %v4935
      %4968 = vst [vmem:[#allocation4 + $0x68] sm:$0xff] %v4936
      %4969 = vst [vmem:[#allocation4 + $0x70] sm:$0xff] %v4937
      %4970 = vst [vmem:[#allocation4 + $0x78] sm:$0xff] %v4938
      %4971 = vst [vmem:[#allocation4 + $0x80] sm:$0xff] %v4939
      %4972 = vst [vmem:[#allocation4 + $0x88] sm:$0xff] %v4940
      %4973 = vst [vmem:[#allocation4 + $0x90] sm:$0xff] %v4941
      %4974 = vst [vmem:[#allocation4 + $0x98] sm:$0xff] %v4942
      %4975 = vst [vmem:[#allocation4 + $0xa0] sm:$0xff] %v4943
      %4976 = vst [vmem:[#allocation4 + $0xa8] sm:$0xff] %v4944
      %4977 = vst [vmem:[#allocation4 + $0xb0] sm:$0xff] %v4945
      %4978 = vst [vmem:[#allocation4 + $0xb8] sm:$0xff] %v4946
      %4979 = vst [vmem:[#allocation4 + $0xc0] sm:$0xff] %v4947
      %4980 = vst [vmem:[#allocation4 + $0xc8] sm:$0xff] %v4948
      %4981 = vst [vmem:[#allocation4 + $0xd0] sm:$0xff] %v4949
      %4982 = vst [vmem:[#allocation4 + $0xd8] sm:$0xff] %v4950
      %4983 = vst [vmem:[#allocation4 + $0xe0] sm:$0xff] %v4951
      %4984 = vst [vmem:[#allocation4 + $0xe8] sm:$0xff] %v4952
      %4985 = vst [vmem:[#allocation4 + $0xf0] sm:$0xff] %v4953
      %4986 = vst [vmem:[#allocation4 + $0xf8] sm:$0xff] %v4954
      %v4987 = vld [vmem:[%s4616 + $0x1] sm:$0xff]
      %v4988 = vld [vmem:[%s4616 + $0x9] sm:$0xff]
      %v4989 = vld [vmem:[%s4616 + $0x19] sm:$0xff]
      %v4990 = vld [vmem:[%s4616 + $0x21] sm:$0xff]
      %v4991 = vld [vmem:[%s4616 + $0x31] sm:$0xff]
      %v4992 = vld [vmem:[%s4616 + $0x39] sm:$0xff]
      %v4993 = vld [vmem:[%s4616 + $0x49] sm:$0xff]
      %v4994 = vld [vmem:[%s4616 + $0x51] sm:$0xff]
      %v4995 = vld [vmem:[%s4616 + $0x61] sm:$0xff]
      %v4996 = vld [vmem:[%s4616 + $0x69] sm:$0xff]
      %v4997 = vld [vmem:[%s4616 + $0x79] sm:$0xff]
      %v4998 = vld [vmem:[%s4616 + $0x81] sm:$0xff]
      %v4999 = vld [vmem:[%s4616 + $0x91] sm:$0xff]
      %v5000 = vld [vmem:[%s4616 + $0x99] sm:$0xff]
      %v5001 = vld [vmem:[%s4616 + $0xa9] sm:$0xff]
      %v5002 = vld [vmem:[%s4616 + $0xb1] sm:$0xff]
      %v5003 = vld [vmem:[%s4616 + $0xc1] sm:$0xff]
      %v5004 = vld [vmem:[%s4616 + $0xc9] sm:$0xff]
      %v5005 = vld [vmem:[%s4616 + $0xd9] sm:$0xff]
      %v5006 = vld [vmem:[%s4616 + $0xe1] sm:$0xff]
      %v5007 = vld [vmem:[%s4616 + $0xf1] sm:$0xff]
      %v5008 = vld [vmem:[%s4616 + $0xf9] sm:$0xff]
      %v5009 = vld [vmem:[%s4616 + $0x109] sm:$0xff]
      %v5010 = vld [vmem:[%s4616 + $0x111] sm:$0xff]
      %v5011 = vld [vmem:[%s4616 + $0x121] sm:$0xff]
      %v5012 = vld [vmem:[%s4616 + $0x129] sm:$0xff]
      %v5013 = vld [vmem:[%s4616 + $0x139] sm:$0xff]
      %v5014 = vld [vmem:[%s4616 + $0x141] sm:$0xff]
      %v5015 = vld [vmem:[%s4616 + $0x151] sm:$0xff]
      %v5016 = vld [vmem:[%s4616 + $0x159] sm:$0xff]
      %v5017 = vld [vmem:[%s4616 + $0x169] sm:$0xff]
      %v5018 = vld [vmem:[%s4616 + $0x171] sm:$0xff]
      %v5019 = vpack.c.bf16 %v4988, %v4987
      %v5020 = vpack.c.bf16 %v4990, %v4989
      %v5021 = vpack.c.bf16 %v4992, %v4991
      %v5022 = vpack.c.bf16 %v4994, %v4993
      %v5023 = vpack.c.bf16 %v4996, %v4995
      %v5024 = vpack.c.bf16 %v4998, %v4997
      %v5025 = vpack.c.bf16 %v5000, %v4999
      %v5026 = vpack.c.bf16 %v5002, %v5001
      %v5027 = vpack.c.bf16 %v5004, %v5003
      %v5028 = vpack.c.bf16 %v5006, %v5005
      %v5029 = vpack.c.bf16 %v5008, %v5007
      %v5030 = vpack.c.bf16 %v5010, %v5009
      %v5031 = vpack.c.bf16 %v5012, %v5011
      %v5032 = vpack.c.bf16 %v5014, %v5013
      %v5033 = vpack.c.bf16 %v5016, %v5015
      %v5034 = vpack.c.bf16 %v5018, %v5017
      %s5035 = scalar_lea.vmem %s2, 448
      %v5036 = vld [vmem:[%s5035] sm:$0xf]
      %v5037 = vld [vmem:[%s5035 + $0x4] sm:$0xf]
      %v5038 = vld [vmem:[%s5035 + $0x8] sm:$0xf]
      %v5039 = vld [vmem:[%s5035 + $0xc] sm:$0xf]
      %v5040 = vld [vmem:[%s5035 + $0x10] sm:$0xf]
      %v5041 = vld [vmem:[%s5035 + $0x14] sm:$0xf]
      %v5042 = vld [vmem:[%s5035 + $0x18] sm:$0xf]
      %v5043 = vld [vmem:[%s5035 + $0x1c] sm:$0xf]
      %v5044 = vld [vmem:[%s5035 + $0x20] sm:$0xf]
      %v5045 = vld [vmem:[%s5035 + $0x24] sm:$0xf]
      %v5046 = vld [vmem:[%s5035 + $0x28] sm:$0xf]
      %v5047 = vld [vmem:[%s5035 + $0x2c] sm:$0xf]
      %v5048 = vld [vmem:[%s5035 + $0x30] sm:$0xf]
      %v5049 = vld [vmem:[%s5035 + $0x34] sm:$0xf]
      %v5050 = vld [vmem:[%s5035 + $0x38] sm:$0xf]
      %v5051 = vld [vmem:[%s5035 + $0x3c] sm:$0xf]
      %v5068 = vunpack.c.l.b16 %v5036
      %v5069 = vunpack.c.l.b16 %v5037
      %v5070 = vunpack.c.l.b16 %v5038
      %v5071 = vunpack.c.l.b16 %v5039
      %v5072 = vunpack.c.l.b16 %v5040
      %v5073 = vunpack.c.l.b16 %v5041
      %v5074 = vunpack.c.l.b16 %v5042
      %v5075 = vunpack.c.l.b16 %v5043
      %v5076 = vunpack.c.l.b16 %v5044
      %v5077 = vunpack.c.l.b16 %v5045
      %v5078 = vunpack.c.l.b16 %v5046
      %v5079 = vunpack.c.l.b16 %v5047
      %v5080 = vunpack.c.l.b16 %v5048
      %v5081 = vunpack.c.l.b16 %v5049
      %v5082 = vunpack.c.l.b16 %v5050
      %v5083 = vunpack.c.l.b16 %v5051
      %v5084 = vpack.c.b16 %v5069, %v5068
      %v5085 = vpack.c.b16 %v5071, %v5070
      %v5086 = vpack.c.b16 %v5073, %v5072
      %v5087 = vpack.c.b16 %v5075, %v5074
      %v5088 = vpack.c.b16 %v5077, %v5076
      %v5089 = vpack.c.b16 %v5079, %v5078
      %v5090 = vpack.c.b16 %v5081, %v5080
      %v5091 = vpack.c.b16 %v5083, %v5082
      %5100 = vmatprep.subr.bf16.mxu0 0
      %5101 = vmatpush1.bf16.msra.mxu0 %v5084
      %5102 = vmatprep.subr.bf16.mxu0 0
      %5103 = vmatpush1.bf16.msra.mxu0 %v5085
      %5104 = vmatprep.subr.bf16.mxu0 0
      %5105 = vmatpush1.bf16.msra.mxu0 %v5086
      %5106 = vmatprep.subr.bf16.mxu0 0
      %5107 = vmatpush1.bf16.msra.mxu0 %v5087
      %5108 = vmatprep.subr.bf16.mxu0 0
      %5109 = vmatpush1.bf16.msra.mxu0 %v5088
      %5110 = vmatprep.subr.bf16.mxu0 0
      %5111 = vmatpush1.bf16.msra.mxu0 %v5089
      %5112 = vmatprep.subr.bf16.mxu0 0
      %5113 = vmatpush1.bf16.msra.mxu0 %v5090
      %5114 = vmatprep.subr.bf16.mxu0 0
      %5115 = vmatpush1.bf16.msra.mxu0 %v5091
      %5116 = vmatprep.subr.bf16.mxu0 0
      %5117 = vmatpush1.bf16.msra.mxu0 0
      %5118 = vmatprep.subr.bf16.mxu0 0
      %5119 = vmatpush1.bf16.msra.mxu0 0
      %5120 = vmatprep.subr.bf16.mxu0 0
      %5121 = vmatpush1.bf16.msra.mxu0 0
      %5122 = vmatprep.subr.bf16.mxu0 0
      %5123 = vmatpush1.bf16.msra.mxu0 0
      %5124 = vmatprep.subr.bf16.mxu0 0
      %5125 = vmatpush1.bf16.msra.mxu0 0
      %5126 = vmatprep.subr.bf16.mxu0 0
      %5127 = vmatpush1.bf16.msra.mxu0 0
      %5128 = vmatprep.subr.bf16.mxu0 0
      %5129 = vmatpush1.bf16.msra.mxu0 0
      %5130 = vmatprep.subr.bf16.mxu0 0
      %5131 = vmatpush1.bf16.msra.mxu0 0
      %5132 = vmatprep.mubr.bf16.mxu0 0
      %5133 = vmatmul.mubr.bf16.gmra.mrb[0].mxu0 %v5019
      %v5134 = vpop.f32.mrb[0].mxu0
      %v5135 = vadd.f32 0.0, %v5134
      %v5136 = vpop.f32.mrb[0].mxu0
      %v5137 = vpop.f32.mrb[0].mxu0
      %v5138 = vadd.f32 0.0, %v5137
      %v5139 = vpop.f32.mrb[0].mxu0
      %5140 = vmatprep.mubr.bf16.mxu0 0
      %5141 = vmatmul.mubr.bf16.gmra.mrb[0].mxu0 %v5020
      %v5142 = vpop.f32.mrb[0].mxu0
      %v5143 = vadd.f32 0.0, %v5142
      %v5144 = vpop.f32.mrb[0].mxu0
      %v5145 = vpop.f32.mrb[0].mxu0
      %v5146 = vadd.f32 0.0, %v5145
      %v5147 = vpop.f32.mrb[0].mxu0
      %5148 = vmatprep.mubr.bf16.mxu0 0
      %5149 = vmatmul.mubr.bf16.gmra.mrb[0].mxu0 %v5021
      %v5150 = vpop.f32.mrb[0].mxu0
      %v5151 = vadd.f32 0.0, %v5150
      %v5152 = vpop.f32.mrb[0].mxu0
      %v5153 = vpop.f32.mrb[0].mxu0
      %v5154 = vadd.f32 0.0, %v5153
      %v5155 = vpop.f32.mrb[0].mxu0
      %5156 = vmatprep.mubr.bf16.mxu0 0
      %5157 = vmatmul.mubr.bf16.gmra.mrb[0].mxu0 %v5022
      %v5158 = vpop.f32.mrb[0].mxu0
      %v5159 = vadd.f32 0.0, %v5158
      %v5160 = vpop.f32.mrb[0].mxu0
      %v5161 = vpop.f32.mrb[0].mxu0
      %v5162 = vadd.f32 0.0, %v5161
      %v5163 = vpop.f32.mrb[0].mxu0
      %5164 = vmatprep.mubr.bf16.mxu0 0
      %5165 = vmatmul.mubr.bf16.gmra.mrb[0].mxu0 %v5023
      %v5166 = vpop.f32.mrb[0].mxu0
      %v5167 = vadd.f32 0.0, %v5166
      %v5168 = vpop.f32.mrb[0].mxu0
      %v5169 = vpop.f32.mrb[0].mxu0
      %v5170 = vadd.f32 0.0, %v5169
      %v5171 = vpop.f32.mrb[0].mxu0
      %5172 = vmatprep.mubr.bf16.mxu0 0
      %5173 = vmatmul.mubr.bf16.gmra.mrb[0].mxu0 %v5024
      %v5174 = vpop.f32.mrb[0].mxu0
      %v5175 = vadd.f32 0.0, %v5174
      %v5176 = vpop.f32.mrb[0].mxu0
      %v5177 = vpop.f32.mrb[0].mxu0
      %v5178 = vadd.f32 0.0, %v5177
      %v5179 = vpop.f32.mrb[0].mxu0
      %5180 = vmatprep.mubr.bf16.mxu0 0
      %5181 = vmatmul.mubr.bf16.gmra.mrb[0].mxu0 %v5025
      %v5182 = vpop.f32.mrb[0].mxu0
      %v5183 = vadd.f32 0.0, %v5182
      %v5184 = vpop.f32.mrb[0].mxu0
      %v5185 = vpop.f32.mrb[0].mxu0
      %v5186 = vadd.f32 0.0, %v5185
      %v5187 = vpop.f32.mrb[0].mxu0
      %5188 = vmatprep.mubr.bf16.mxu0 0
      %5189 = vmatmul.mubr.bf16.gmra.mrb[0].mxu0 %v5026
      %v5190 = vpop.f32.mrb[0].mxu0
      %v5191 = vadd.f32 0.0, %v5190
      %v5192 = vpop.f32.mrb[0].mxu0
      %v5193 = vpop.f32.mrb[0].mxu0
      %v5194 = vadd.f32 0.0, %v5193
      %v5195 = vpop.f32.mrb[0].mxu0
      %5196 = vmatprep.mubr.bf16.mxu0 0
      %5197 = vmatmul.mubr.bf16.gmra.mrb[0].mxu0 %v5027
      %v5198 = vpop.f32.mrb[0].mxu0
      %v5199 = vadd.f32 0.0, %v5198
      %v5200 = vpop.f32.mrb[0].mxu0
      %v5201 = vpop.f32.mrb[0].mxu0
      %v5202 = vadd.f32 0.0, %v5201
      %v5203 = vpop.f32.mrb[0].mxu0
      %5204 = vmatprep.mubr.bf16.mxu0 0
      %5205 = vmatmul.mubr.bf16.gmra.mrb[0].mxu0 %v5028
      %v5206 = vpop.f32.mrb[0].mxu0
      %v5207 = vadd.f32 0.0, %v5206
      %v5208 = vpop.f32.mrb[0].mxu0
      %v5209 = vpop.f32.mrb[0].mxu0
      %v5210 = vadd.f32 0.0, %v5209
      %v5211 = vpop.f32.mrb[0].mxu0
      %5212 = vmatprep.mubr.bf16.mxu0 0
      %5213 = vmatmul.mubr.bf16.gmra.mrb[0].mxu0 %v5029
      %v5214 = vpop.f32.mrb[0].mxu0
      %v5215 = vadd.f32 0.0, %v5214
      %v5216 = vpop.f32.mrb[0].mxu0
      %v5217 = vpop.f32.mrb[0].mxu0
      %v5218 = vadd.f32 0.0, %v5217
      %v5219 = vpop.f32.mrb[0].mxu0
      %5220 = vmatprep.mubr.bf16.mxu0 0
      %5221 = vmatmul.mubr.bf16.gmra.mrb[0].mxu0 %v5030
      %v5222 = vpop.f32.mrb[0].mxu0
      %v5223 = vadd.f32 0.0, %v5222
      %v5224 = vpop.f32.mrb[0].mxu0
      %v5225 = vpop.f32.mrb[0].mxu0
      %v5226 = vadd.f32 0.0, %v5225
      %v5227 = vpop.f32.mrb[0].mxu0
      %5228 = vmatprep.mubr.bf16.mxu0 0
      %5229 = vmatmul.mubr.bf16.gmra.mrb[0].mxu0 %v5031
      %v5230 = vpop.f32.mrb[0].mxu0
      %v5231 = vadd.f32 0.0, %v5230
      %v5232 = vpop.f32.mrb[0].mxu0
      %v5233 = vpop.f32.mrb[0].mxu0
      %v5234 = vadd.f32 0.0, %v5233
      %v5235 = vpop.f32.mrb[0].mxu0
      %5236 = vmatprep.mubr.bf16.mxu0 0
      %5237 = vmatmul.mubr.bf16.gmra.mrb[0].mxu0 %v5032
      %v5238 = vpop.f32.mrb[0].mxu0
      %v5239 = vadd.f32 0.0, %v5238
      %v5240 = vpop.f32.mrb[0].mxu0
      %v5241 = vpop.f32.mrb[0].mxu0
      %v5242 = vadd.f32 0.0, %v5241
      %v5243 = vpop.f32.mrb[0].mxu0
      %5244 = vmatprep.mubr.bf16.mxu0 0
      %5245 = vmatmul.mubr.bf16.gmra.mrb[0].mxu0 %v5033
      %v5246 = vpop.f32.mrb[0].mxu0
      %v5247 = vadd.f32 0.0, %v5246
      %v5248 = vpop.f32.mrb[0].mxu0
      %v5249 = vpop.f32.mrb[0].mxu0
      %v5250 = vadd.f32 0.0, %v5249
      %v5251 = vpop.f32.mrb[0].mxu0
      %5252 = vmatprep.mubr.bf16.mxu0 0
      %5253 = vmatmul.mubr.bf16.gmra.mrb[0].mxu0 %v5034
      %v5254 = vpop.f32.mrb[0].mxu0
      %v5255 = vadd.f32 0.0, %v5254
      %v5256 = vpop.f32.mrb[0].mxu0
      %v5257 = vpop.f32.mrb[0].mxu0
      %v5258 = vadd.f32 0.0, %v5257
      %v5259 = vpop.f32.mrb[0].mxu0
      %5260 = vdwg.mxu0
      %v5261 = vld [vmem:[#allocation4] sm:$0xff]
      %v5262 = vld [vmem:[#allocation4 + $0x8] sm:$0xff]
      %v5263 = vld [vmem:[#allocation4 + $0x10] sm:$0xff]
      %v5264 = vld [vmem:[#allocation4 + $0x18] sm:$0xff]
      %v5265 = vld [vmem:[#allocation4 + $0x20] sm:$0xff]
      %v5266 = vld [vmem:[#allocation4 + $0x28] sm:$0xff]
      %v5267 = vld [vmem:[#allocation4 + $0x30] sm:$0xff]
      %v5268 = vld [vmem:[#allocation4 + $0x38] sm:$0xff]
      %v5269 = vld [vmem:[#allocation4 + $0x40] sm:$0xff]
      %v5270 = vld [vmem:[#allocation4 + $0x48] sm:$0xff]
      %v5271 = vld [vmem:[#allocation4 + $0x50] sm:$0xff]
      %v5272 = vld [vmem:[#allocation4 + $0x58] sm:$0xff]
      %v5273 = vld [vmem:[#allocation4 + $0x60] sm:$0xff]
      %v5274 = vld [vmem:[#allocation4 + $0x68] sm:$0xff]
      %v5275 = vld [vmem:[#allocation4 + $0x70] sm:$0xff]
      %v5276 = vld [vmem:[#allocation4 + $0x78] sm:$0xff]
      %v5277 = vld [vmem:[#allocation4 + $0x80] sm:$0xff]
      %v5278 = vld [vmem:[#allocation4 + $0x88] sm:$0xff]
      %v5279 = vld [vmem:[#allocation4 + $0x90] sm:$0xff]
      %v5280 = vld [vmem:[#allocation4 + $0x98] sm:$0xff]
      %v5281 = vld [vmem:[#allocation4 + $0xa0] sm:$0xff]
      %v5282 = vld [vmem:[#allocation4 + $0xa8] sm:$0xff]
      %v5283 = vld [vmem:[#allocation4 + $0xb0] sm:$0xff]
      %v5284 = vld [vmem:[#allocation4 + $0xb8] sm:$0xff]
      %v5285 = vld [vmem:[#allocation4 + $0xc0] sm:$0xff]
      %v5286 = vld [vmem:[#allocation4 + $0xc8] sm:$0xff]
      %v5287 = vld [vmem:[#allocation4 + $0xd0] sm:$0xff]
      %v5288 = vld [vmem:[#allocation4 + $0xd8] sm:$0xff]
      %v5289 = vld [vmem:[#allocation4 + $0xe0] sm:$0xff]
      %v5290 = vld [vmem:[#allocation4 + $0xe8] sm:$0xff]
      %v5291 = vld [vmem:[#allocation4 + $0xf0] sm:$0xff]
      %v5292 = vld [vmem:[#allocation4 + $0xf8] sm:$0xff]
      %v5293 = vadd.f32 %v5261, %v5135
      %v5294 = vadd.f32 %v5262, %v5138
      %v5295 = vadd.f32 %v5263, %v5143
      %v5296 = vadd.f32 %v5264, %v5146
      %v5297 = vadd.f32 %v5265, %v5151
      %v5298 = vadd.f32 %v5266, %v5154
      %v5299 = vadd.f32 %v5267, %v5159
      %v5300 = vadd.f32 %v5268, %v5162
      %v5301 = vadd.f32 %v5269, %v5167
      %v5302 = vadd.f32 %v5270, %v5170
      %v5303 = vadd.f32 %v5271, %v5175
      %v5304 = vadd.f32 %v5272, %v5178
      %v5305 = vadd.f32 %v5273, %v5183
      %v5306 = vadd.f32 %v5274, %v5186
      %v5307 = vadd.f32 %v5275, %v5191
      %v5308 = vadd.f32 %v5276, %v5194
      %v5309 = vadd.f32 %v5277, %v5199
      %v5310 = vadd.f32 %v5278, %v5202
      %v5311 = vadd.f32 %v5279, %v5207
      %v5312 = vadd.f32 %v5280, %v5210
      %v5313 = vadd.f32 %v5281, %v5215
      %v5314 = vadd.f32 %v5282, %v5218
      %v5315 = vadd.f32 %v5283, %v5223
      %v5316 = vadd.f32 %v5284, %v5226
      %v5317 = vadd.f32 %v5285, %v5231
      %v5318 = vadd.f32 %v5286, %v5234
      %v5319 = vadd.f32 %v5287, %v5239
      %v5320 = vadd.f32 %v5288, %v5242
      %v5321 = vadd.f32 %v5289, %v5247
      %v5322 = vadd.f32 %v5290, %v5250
      %v5323 = vadd.f32 %v5291, %v5255
      %v5324 = vadd.f32 %v5292, %v5258
      %5325 = vst [vmem:[#allocation4] sm:$0xff] %v5293
      %5326 = vst [vmem:[#allocation4 + $0x8] sm:$0xff] %v5294
      %5327 = vst [vmem:[#allocation4 + $0x10] sm:$0xff] %v5295
      %5328 = vst [vmem:[#allocation4 + $0x18] sm:$0xff] %v5296
      %5329 = vst [vmem:[#allocation4 + $0x20] sm:$0xff] %v5297
      %5330 = vst [vmem:[#allocation4 + $0x28] sm:$0xff] %v5298
      %5331 = vst [vmem:[#allocation4 + $0x30] sm:$0xff] %v5299
      %5332 = vst [vmem:[#allocation4 + $0x38] sm:$0xff] %v5300
      %5333 = vst [vmem:[#allocation4 + $0x40] sm:$0xff] %v5301
      %5334 = vst [vmem:[#allocation4 + $0x48] sm:$0xff] %v5302
      %5335 = vst [vmem:[#allocation4 + $0x50] sm:$0xff] %v5303
      %5336 = vst [vmem:[#allocation4 + $0x58] sm:$0xff] %v5304
      %5337 = vst [vmem:[#allocation4 + $0x60] sm:$0xff] %v5305
      %5338 = vst [vmem:[#allocation4 + $0x68] sm:$0xff] %v5306
      %5339 = vst [vmem:[#allocation4 + $0x70] sm:$0xff] %v5307
      %5340 = vst [vmem:[#allocation4 + $0x78] sm:$0xff] %v5308
      %5341 = vst [vmem:[#allocation4 + $0x80] sm:$0xff] %v5309
      %5342 = vst [vmem:[#allocation4 + $0x88] sm:$0xff] %v5310
      %5343 = vst [vmem:[#allocation4 + $0x90] sm:$0xff] %v5311
      %5344 = vst [vmem:[#allocation4 + $0x98] sm:$0xff] %v5312
      %5345 = vst [vmem:[#allocation4 + $0xa0] sm:$0xff] %v5313
      %5346 = vst [vmem:[#allocation4 + $0xa8] sm:$0xff] %v5314
      %5347 = vst [vmem:[#allocation4 + $0xb0] sm:$0xff] %v5315
      %5348 = vst [vmem:[#allocation4 + $0xb8] sm:$0xff] %v5316
      %5349 = vst [vmem:[#allocation4 + $0xc0] sm:$0xff] %v5317
      %5350 = vst [vmem:[#allocation4 + $0xc8] sm:$0xff] %v5318
      %5351 = vst [vmem:[#allocation4 + $0xd0] sm:$0xff] %v5319
      %5352 = vst [vmem:[#allocation4 + $0xd8] sm:$0xff] %v5320
      %5353 = vst [vmem:[#allocation4 + $0xe0] sm:$0xff] %v5321
      %5354 = vst [vmem:[#allocation4 + $0xe8] sm:$0xff] %v5322
      %5355 = vst [vmem:[#allocation4 + $0xf0] sm:$0xff] %v5323
      %5356 = vst [vmem:[#allocation4 + $0xf8] sm:$0xff] %v5324
      %v5357 = vld [vmem:[%s4616 + $0x2] sm:$0xff]
      %v5358 = vld [vmem:[%s4616 + $0xa] sm:$0xff]
      %v5359 = vld [vmem:[%s4616 + $0x1a] sm:$0xff]
      %v5360 = vld [vmem:[%s4616 + $0x22] sm:$0xff]
      %v5361 = vld [vmem:[%s4616 + $0x32] sm:$0xff]
      %v5362 = vld [vmem:[%s4616 + $0x3a] sm:$0xff]
      %v5363 = vld [vmem:[%s4616 + $0x4a] sm:$0xff]
      %v5364 = vld [vmem:[%s4616 + $0x52] sm:$0xff]
      %v5365 = vld [vmem:[%s4616 + $0x62] sm:$0xff]
      %v5366 = vld [vmem:[%s4616 + $0x6a] sm:$0xff]
      %v5367 = vld [vmem:[%s4616 + $0x7a] sm:$0xff]
      %v5368 = vld [vmem:[%s4616 + $0x82] sm:$0xff]
      %v5369 = vld [vmem:[%s4616 + $0x92] sm:$0xff]
      %v5370 = vld [vmem:[%s4616 + $0x9a] sm:$0xff]
      %v5371 = vld [vmem:[%s4616 + $0xaa] sm:$0xff]
      %v5372 = vld [vmem:[%s4616 + $0xb2] sm:$0xff]
      %v5373 = vld [vmem:[%s4616 + $0xc2] sm:$0xff]
      %v5374 = vld [vmem:[%s4616 + $0xca] sm:$0xff]
      %v5375 = vld [vmem:[%s4616 + $0xda] sm:$0xff]
      %v5376 = vld [vmem:[%s4616 + $0xe2] sm:$0xff]
      %v5377 = vld [vmem:[%s4616 + $0xf2] sm:$0xff]
      %v5378 = vld [vmem:[%s4616 + $0xfa] sm:$0xff]
      %v5379 = vld [vmem:[%s4616 + $0x10a] sm:$0xff]
      %v5380 = vld [vmem:[%s4616 + $0x112] sm:$0xff]
      %v5381 = vld [vmem:[%s4616 + $0x122] sm:$0xff]
      %v5382 = vld [vmem:[%s4616 + $0x12a] sm:$0xff]
      %v5383 = vld [vmem:[%s4616 + $0x13a] sm:$0xff]
      %v5384 = vld [vmem:[%s4616 + $0x142] sm:$0xff]
      %v5385 = vld [vmem:[%s4616 + $0x152] sm:$0xff]
      %v5386 = vld [vmem:[%s4616 + $0x15a] sm:$0xff]
      %v5387 = vld [vmem:[%s4616 + $0x16a] sm:$0xff]
      %v5388 = vld [vmem:[%s4616 + $0x172] sm:$0xff]
      %v5389 = vpack.c.bf16 %v5358, %v5357
      %v5390 = vpack.c.bf16 %v5360, %v5359
      %v5391 = vpack.c.bf16 %v5362, %v5361
      %v5392 = vpack.c.bf16 %v5364, %v5363
      %v5393 = vpack.c.bf16 %v5366, %v5365
      %v5394 = vpack.c.bf16 %v5368, %v5367
      %v5395 = vpack.c.bf16 %v5370, %v5369
      %v5396 = vpack.c.bf16 %v5372, %v5371
      %v5397 = vpack.c.bf16 %v5374, %v5373
      %v5398 = vpack.c.bf16 %v5376, %v5375
      %v5399 = vpack.c.bf16 %v5378, %v5377
      %v5400 = vpack.c.bf16 %v5380, %v5379
      %v5401 = vpack.c.bf16 %v5382, %v5381
      %v5402 = vpack.c.bf16 %v5384, %v5383
      %v5403 = vpack.c.bf16 %v5386, %v5385
      %v5404 = vpack.c.bf16 %v5388, %v5387
      %s5405 = scalar_lea.vmem %s2, 512
      %v5406 = vld [vmem:[%s5405] sm:$0xf]
      %v5407 = vld [vmem:[%s5405 + $0x4] sm:$0xf]
      %v5408 = vld [vmem:[%s5405 + $0x8] sm:$0xf]
      %v5409 = vld [vmem:[%s5405 + $0xc] sm:$0xf]
      %v5410 = vld [vmem:[%s5405 + $0x10] sm:$0xf]
      %v5411 = vld [vmem:[%s5405 + $0x14] sm:$0xf]
      %v5412 = vld [vmem:[%s5405 + $0x18] sm:$0xf]
      %v5413 = vld [vmem:[%s5405 + $0x1c] sm:$0xf]
      %v5414 = vld [vmem:[%s5405 + $0x20] sm:$0xf]
      %v5415 = vld [vmem:[%s5405 + $0x24] sm:$0xf]
      %v5416 = vld [vmem:[%s5405 + $0x28] sm:$0xf]
      %v5417 = vld [vmem:[%s5405 + $0x2c] sm:$0xf]
      %v5418 = vld [vmem:[%s5405 + $0x30] sm:$0xf]
      %v5419 = vld [vmem:[%s5405 + $0x34] sm:$0xf]
      %v5420 = vld [vmem:[%s5405 + $0x38] sm:$0xf]
      %v5421 = vld [vmem:[%s5405 + $0x3c] sm:$0xf]
      %v5438 = vunpack.c.l.b16 %v5406
      %v5439 = vunpack.c.l.b16 %v5407
      %v5440 = vunpack.c.l.b16 %v5408
      %v5441 = vunpack.c.l.b16 %v5409
      %v5442 = vunpack.c.l.b16 %v5410
      %v5443 = vunpack.c.l.b16 %v5411
      %v5444 = vunpack.c.l.b16 %v5412
      %v5445 = vunpack.c.l.b16 %v5413
      %v5446 = vunpack.c.l.b16 %v5414
      %v5447 = vunpack.c.l.b16 %v5415
      %v5448 = vunpack.c.l.b16 %v5416
      %v5449 = vunpack.c.l.b16 %v5417
      %v5450 = vunpack.c.l.b16 %v5418
      %v5451 = vunpack.c.l.b16 %v5419
      %v5452 = vunpack.c.l.b16 %v5420
      %v5453 = vunpack.c.l.b16 %v5421
      %v5454 = vpack.c.b16 %v5439, %v5438
      %v5455 = vpack.c.b16 %v5441, %v5440
      %v5456 = vpack.c.b16 %v5443, %v5442
      %v5457 = vpack.c.b16 %v5445, %v5444
      %v5458 = vpack.c.b16 %v5447, %v5446
      %v5459 = vpack.c.b16 %v5449, %v5448
      %v5460 = vpack.c.b16 %v5451, %v5450
      %v5461 = vpack.c.b16 %v5453, %v5452
      %5470 = vmatprep.subr.bf16.mxu0 0
      %5471 = vmatpush1.bf16.msra.mxu0 %v5454
      %5472 = vmatprep.subr.bf16.mxu0 0
      %5473 = vmatpush1.bf16.msra.mxu0 %v5455
      %5474 = vmatprep.subr.bf16.mxu0 0
      %5475 = vmatpush1.bf16.msra.mxu0 %v5456
      %5476 = vmatprep.subr.bf16.mxu0 0
      %5477 = vmatpush1.bf16.msra.mxu0 %v5457
      %5478 = vmatprep.subr.bf16.mxu0 0
      %5479 = vmatpush1.bf16.msra.mxu0 %v5458
      %5480 = vmatprep.subr.bf16.mxu0 0
      %5481 = vmatpush1.bf16.msra.mxu0 %v5459
      %5482 = vmatprep.subr.bf16.mxu0 0
      %5483 = vmatpush1.bf16.msra.mxu0 %v5460
      %5484 = vmatprep.subr.bf16.mxu0 0
      %5485 = vmatpush1.bf16.msra.mxu0 %v5461
      %5486 = vmatprep.subr.bf16.mxu0 0
      %5487 = vmatpush1.bf16.msra.mxu0 0
      %5488 = vmatprep.subr.bf16.mxu0 0
      %5489 = vmatpush1.bf16.msra.mxu0 0
      %5490 = vmatprep.subr.bf16.mxu0 0
      %5491 = vmatpush1.bf16.msra.mxu0 0
      %5492 = vmatprep.subr.bf16.mxu0 0
      %5493 = vmatpush1.bf16.msra.mxu0 0
      %5494 = vmatprep.subr.bf16.mxu0 0
      %5495 = vmatpush1.bf16.msra.mxu0 0
      %5496 = vmatprep.subr.bf16.mxu0 0
      %5497 = vmatpush1.bf16.msra.mxu0 0
      %5498 = vmatprep.subr.bf16.mxu0 0
      %5499 = vmatpush1.bf16.msra.mxu0 0
      %5500 = vmatprep.subr.bf16.mxu0 0
      %5501 = vmatpush1.bf16.msra.mxu0 0
      %5502 = vmatprep.mubr.bf16.mxu0 0
      %5503 = vmatmul.mubr.bf16.gmra.mrb[0].mxu0 %v5389
      %v5504 = vpop.f32.mrb[0].mxu0
      %v5505 = vadd.f32 0.0, %v5504
      %v5506 = vpop.f32.mrb[0].mxu0
      %v5507 = vpop.f32.mrb[0].mxu0
      %v5508 = vadd.f32 0.0, %v5507
      %v5509 = vpop.f32.mrb[0].mxu0
      %5510 = vmatprep.mubr.bf16.mxu0 0
      %5511 = vmatmul.mubr.bf16.gmra.mrb[0].mxu0 %v5390
      %v5512 = vpop.f32.mrb[0].mxu0
      %v5513 = vadd.f32 0.0, %v5512
      %v5514 = vpop.f32.mrb[0].mxu0
      %v5515 = vpop.f32.mrb[0].mxu0
      %v5516 = vadd.f32 0.0, %v5515
      %v5517 = vpop.f32.mrb[0].mxu0
      %5518 = vmatprep.mubr.bf16.mxu0 0
      %5519 = vmatmul.mubr.bf16.gmra.mrb[0].mxu0 %v5391
      %v5520 = vpop.f32.mrb[0].mxu0
      %v5521 = vadd.f32 0.0, %v5520
      %v5522 = vpop.f32.mrb[0].mxu0
      %v5523 = vpop.f32.mrb[0].mxu0
      %v5524 = vadd.f32 0.0, %v5523
      %v5525 = vpop.f32.mrb[0].mxu0
      %5526 = vmatprep.mubr.bf16.mxu0 0
      %5527 = vmatmul.mubr.bf16.gmra.mrb[0].mxu0 %v5392
      %v5528 = vpop.f32.mrb[0].mxu0
      %v5529 = vadd.f32 0.0, %v5528
      %v5530 = vpop.f32.mrb[0].mxu0
      %v5531 = vpop.f32.mrb[0].mxu0
      %v5532 = vadd.f32 0.0, %v5531
      %v5533 = vpop.f32.mrb[0].mxu0
      %5534 = vmatprep.mubr.bf16.mxu0 0
      %5535 = vmatmul.mubr.bf16.gmra.mrb[0].mxu0 %v5393
      %v5536 = vpop.f32.mrb[0].mxu0
      %v5537 = vadd.f32 0.0, %v5536
      %v5538 = vpop.f32.mrb[0].mxu0
      %v5539 = vpop.f32.mrb[0].mxu0
      %v5540 = vadd.f32 0.0, %v5539
      %v5541 = vpop.f32.mrb[0].mxu0
      %5542 = vmatprep.mubr.bf16.mxu0 0
      %5543 = vmatmul.mubr.bf16.gmra.mrb[0].mxu0 %v5394
      %v5544 = vpop.f32.mrb[0].mxu0
      %v5545 = vadd.f32 0.0, %v5544
      %v5546 = vpop.f32.mrb[0].mxu0
      %v5547 = vpop.f32.mrb[0].mxu0
      %v5548 = vadd.f32 0.0, %v5547
      %v5549 = vpop.f32.mrb[0].mxu0
      %5550 = vmatprep.mubr.bf16.mxu0 0
      %5551 = vmatmul.mubr.bf16.gmra.mrb[0].mxu0 %v5395
      %v5552 = vpop.f32.mrb[0].mxu0
      %v5553 = vadd.f32 0.0, %v5552
      %v5554 = vpop.f32.mrb[0].mxu0
      %v5555 = vpop.f32.mrb[0].mxu0
      %v5556 = vadd.f32 0.0, %v5555
      %v5557 = vpop.f32.mrb[0].mxu0
      %5558 = vmatprep.mubr.bf16.mxu0 0
      %5559 = vmatmul.mubr.bf16.gmra.mrb[0].mxu0 %v5396
      %v5560 = vpop.f32.mrb[0].mxu0
      %v5561 = vadd.f32 0.0, %v5560
      %v5562 = vpop.f32.mrb[0].mxu0
      %v5563 = vpop.f32.mrb[0].mxu0
      %v5564 = vadd.f32 0.0, %v5563
      %v5565 = vpop.f32.mrb[0].mxu0
      %5566 = vmatprep.mubr.bf16.mxu0 0
      %5567 = vmatmul.mubr.bf16.gmra.mrb[0].mxu0 %v5397
      %v5568 = vpop.f32.mrb[0].mxu0
      %v5569 = vadd.f32 0.0, %v5568
      %v5570 = vpop.f32.mrb[0].mxu0
      %v5571 = vpop.f32.mrb[0].mxu0
      %v5572 = vadd.f32 0.0, %v5571
      %v5573 = vpop.f32.mrb[0].mxu0
      %5574 = vmatprep.mubr.bf16.mxu0 0
      %5575 = vmatmul.mubr.bf16.gmra.mrb[0].mxu0 %v5398
      %v5576 = vpop.f32.mrb[0].mxu0
      %v5577 = vadd.f32 0.0, %v5576
      %v5578 = vpop.f32.mrb[0].mxu0
      %v5579 = vpop.f32.mrb[0].mxu0
      %v5580 = vadd.f32 0.0, %v5579
      %v5581 = vpop.f32.mrb[0].mxu0
      %5582 = vmatprep.mubr.bf16.mxu0 0
      %5583 = vmatmul.mubr.bf16.gmra.mrb[0].mxu0 %v5399
      %v5584 = vpop.f32.mrb[0].mxu0
      %v5585 = vadd.f32 0.0, %v5584
      %v5586 = vpop.f32.mrb[0].mxu0
      %v5587 = vpop.f32.mrb[0].mxu0
      %v5588 = vadd.f32 0.0, %v5587
      %v5589 = vpop.f32.mrb[0].mxu0
      %5590 = vmatprep.mubr.bf16.mxu0 0
      %5591 = vmatmul.mubr.bf16.gmra.mrb[0].mxu0 %v5400
      %v5592 = vpop.f32.mrb[0].mxu0
      %v5593 = vadd.f32 0.0, %v5592
      %v5594 = vpop.f32.mrb[0].mxu0
      %v5595 = vpop.f32.mrb[0].mxu0
      %v5596 = vadd.f32 0.0, %v5595
      %v5597 = vpop.f32.mrb[0].mxu0
      %5598 = vmatprep.mubr.bf16.mxu0 0
      %5599 = vmatmul.mubr.bf16.gmra.mrb[0].mxu0 %v5401
      %v5600 = vpop.f32.mrb[0].mxu0
      %v5601 = vadd.f32 0.0, %v5600
      %v5602 = vpop.f32.mrb[0].mxu0
      %v5603 = vpop.f32.mrb[0].mxu0
      %v5604 = vadd.f32 0.0, %v5603
      %v5605 = vpop.f32.mrb[0].mxu0
      %5606 = vmatprep.mubr.bf16.mxu0 0
      %5607 = vmatmul.mubr.bf16.gmra.mrb[0].mxu0 %v5402
      %v5608 = vpop.f32.mrb[0].mxu0
      %v5609 = vadd.f32 0.0, %v5608
      %v5610 = vpop.f32.mrb[0].mxu0
      %v5611 = vpop.f32.mrb[0].mxu0
      %v5612 = vadd.f32 0.0, %v5611
      %v5613 = vpop.f32.mrb[0].mxu0
      %5614 = vmatprep.mubr.bf16.mxu0 0
      %5615 = vmatmul.mubr.bf16.gmra.mrb[0].mxu0 %v5403
      %v5616 = vpop.f32.mrb[0].mxu0
      %v5617 = vadd.f32 0.0, %v5616
      %v5618 = vpop.f32.mrb[0].mxu0
      %v5619 = vpop.f32.mrb[0].mxu0
      %v5620 = vadd.f32 0.0, %v5619
      %v5621 = vpop.f32.mrb[0].mxu0
      %5622 = vmatprep.mubr.bf16.mxu0 0
      %5623 = vmatmul.mubr.bf16.gmra.mrb[0].mxu0 %v5404
      %v5624 = vpop.f32.mrb[0].mxu0
      %v5625 = vadd.f32 0.0, %v5624
      %v5626 = vpop.f32.mrb[0].mxu0
      %v5627 = vpop.f32.mrb[0].mxu0
      %v5628 = vadd.f32 0.0, %v5627
      %v5629 = vpop.f32.mrb[0].mxu0
      %5630 = vdwg.mxu0
      %v5631 = vld [vmem:[#allocation4] sm:$0xff]
      %v5632 = vld [vmem:[#allocation4 + $0x8] sm:$0xff]
      %v5633 = vld [vmem:[#allocation4 + $0x10] sm:$0xff]
      %v5634 = vld [vmem:[#allocation4 + $0x18] sm:$0xff]
      %v5635 = vld [vmem:[#allocation4 + $0x20] sm:$0xff]
      %v5636 = vld [vmem:[#allocation4 + $0x28] sm:$0xff]
      %v5637 = vld [vmem:[#allocation4 + $0x30] sm:$0xff]
      %v5638 = vld [vmem:[#allocation4 + $0x38] sm:$0xff]
      %v5639 = vld [vmem:[#allocation4 + $0x40] sm:$0xff]
      %v5640 = vld [vmem:[#allocation4 + $0x48] sm:$0xff]
      %v5641 = vld [vmem:[#allocation4 + $0x50] sm:$0xff]
      %v5642 = vld [vmem:[#allocation4 + $0x58] sm:$0xff]
      %v5643 = vld [vmem:[#allocation4 + $0x60] sm:$0xff]
      %v5644 = vld [vmem:[#allocation4 + $0x68] sm:$0xff]
      %v5645 = vld [vmem:[#allocation4 + $0x70] sm:$0xff]
      %v5646 = vld [vmem:[#allocation4 + $0x78] sm:$0xff]
      %v5647 = vld [vmem:[#allocation4 + $0x80] sm:$0xff]
      %v5648 = vld [vmem:[#allocation4 + $0x88] sm:$0xff]
      %v5649 = vld [vmem:[#allocation4 + $0x90] sm:$0xff]
      %v5650 = vld [vmem:[#allocation4 + $0x98] sm:$0xff]
      %v5651 = vld [vmem:[#allocation4 + $0xa0] sm:$0xff]
      %v5652 = vld [vmem:[#allocation4 + $0xa8] sm:$0xff]
      %v5653 = vld [vmem:[#allocation4 + $0xb0] sm:$0xff]
      %v5654 = vld [vmem:[#allocation4 + $0xb8] sm:$0xff]
      %v5655 = vld [vmem:[#allocation4 + $0xc0] sm:$0xff]
      %v5656 = vld [vmem:[#allocation4 + $0xc8] sm:$0xff]
      %v5657 = vld [vmem:[#allocation4 + $0xd0] sm:$0xff]
      %v5658 = vld [vmem:[#allocation4 + $0xd8] sm:$0xff]
      %v5659 = vld [vmem:[#allocation4 + $0xe0] sm:$0xff]
      %v5660 = vld [vmem:[#allocation4 + $0xe8] sm:$0xff]
      %v5661 = vld [vmem:[#allocation4 + $0xf0] sm:$0xff]
      %v5662 = vld [vmem:[#allocation4 + $0xf8] sm:$0xff]
      %v5663 = vadd.f32 %v5631, %v5505
      %v5664 = vadd.f32 %v5632, %v5508
      %v5665 = vadd.f32 %v5633, %v5513
      %v5666 = vadd.f32 %v5634, %v5516
      %v5667 = vadd.f32 %v5635, %v5521
      %v5668 = vadd.f32 %v5636, %v5524
      %v5669 = vadd.f32 %v5637, %v5529
      %v5670 = vadd.f32 %v5638, %v5532
      %v5671 = vadd.f32 %v5639, %v5537
      %v5672 = vadd.f32 %v5640, %v5540
      %v5673 = vadd.f32 %v5641, %v5545
      %v5674 = vadd.f32 %v5642, %v5548
      %v5675 = vadd.f32 %v5643, %v5553
      %v5676 = vadd.f32 %v5644, %v5556
      %v5677 = vadd.f32 %v5645, %v5561
      %v5678 = vadd.f32 %v5646, %v5564
      %v5679 = vadd.f32 %v5647, %v5569
      %v5680 = vadd.f32 %v5648, %v5572
      %v5681 = vadd.f32 %v5649, %v5577
      %v5682 = vadd.f32 %v5650, %v5580
      %v5683 = vadd.f32 %v5651, %v5585
      %v5684 = vadd.f32 %v5652, %v5588
      %v5685 = vadd.f32 %v5653, %v5593
      %v5686 = vadd.f32 %v5654, %v5596
      %v5687 = vadd.f32 %v5655, %v5601
      %v5688 = vadd.f32 %v5656, %v5604
      %v5689 = vadd.f32 %v5657, %v5609
      %v5690 = vadd.f32 %v5658, %v5612
      %v5691 = vadd.f32 %v5659, %v5617
      %v5692 = vadd.f32 %v5660, %v5620
      %v5693 = vadd.f32 %v5661, %v5625
      %v5694 = vadd.f32 %v5662, %v5628
      %5695 = vst [vmem:[#allocation4] sm:$0xff] %v5663
      %5696 = vst [vmem:[#allocation4 + $0x8] sm:$0xff] %v5664
      %5697 = vst [vmem:[#allocation4 + $0x10] sm:$0xff] %v5665
      %5698 = vst [vmem:[#allocation4 + $0x18] sm:$0xff] %v5666
      %5699 = vst [vmem:[#allocation4 + $0x20] sm:$0xff] %v5667
      %5700 = vst [vmem:[#allocation4 + $0x28] sm:$0xff] %v5668
      %5701 = vst [vmem:[#allocation4 + $0x30] sm:$0xff] %v5669
      %5702 = vst [vmem:[#allocation4 + $0x38] sm:$0xff] %v5670
      %5703 = vst [vmem:[#allocation4 + $0x40] sm:$0xff] %v5671
      %5704 = vst [vmem:[#allocation4 + $0x48] sm:$0xff] %v5672
      %5705 = vst [vmem:[#allocation4 + $0x50] sm:$0xff] %v5673
      %5706 = vst [vmem:[#allocation4 + $0x58] sm:$0xff] %v5674
      %5707 = vst [vmem:[#allocation4 + $0x60] sm:$0xff] %v5675
      %5708 = vst [vmem:[#allocation4 + $0x68] sm:$0xff] %v5676
      %5709 = vst [vmem:[#allocation4 + $0x70] sm:$0xff] %v5677
      %5710 = vst [vmem:[#allocation4 + $0x78] sm:$0xff] %v5678
      %5711 = vst [vmem:[#allocation4 + $0x80] sm:$0xff] %v5679
      %5712 = vst [vmem:[#allocation4 + $0x88] sm:$0xff] %v5680
      %5713 = vst [vmem:[#allocation4 + $0x90] sm:$0xff] %v5681
      %5714 = vst [vmem:[#allocation4 + $0x98] sm:$0xff] %v5682
      %5715 = vst [vmem:[#allocation4 + $0xa0] sm:$0xff] %v5683
      %5716 = vst [vmem:[#allocation4 + $0xa8] sm:$0xff] %v5684
      %5717 = vst [vmem:[#allocation4 + $0xb0] sm:$0xff] %v5685
      %5718 = vst [vmem:[#allocation4 + $0xb8] sm:$0xff] %v5686
      %5719 = vst [vmem:[#allocation4 + $0xc0] sm:$0xff] %v5687
      %5720 = vst [vmem:[#allocation4 + $0xc8] sm:$0xff] %v5688
      %5721 = vst [vmem:[#allocation4 + $0xd0] sm:$0xff] %v5689
      %5722 = vst [vmem:[#allocation4 + $0xd8] sm:$0xff] %v5690
      %5723 = vst [vmem:[#allocation4 + $0xe0] sm:$0xff] %v5691
      %5724 = vst [vmem:[#allocation4 + $0xe8] sm:$0xff] %v5692
      %5725 = vst [vmem:[#allocation4 + $0xf0] sm:$0xff] %v5693
      %5726 = vst [vmem:[#allocation4 + $0xf8] sm:$0xff] %v5694
      %v5727 = vld [vmem:[#allocation4] sm:$0xff]
      %v5728 = vld [vmem:[#allocation4 + $0x8] sm:$0xff]
      %v5729 = vld [vmem:[#allocation4 + $0x10] sm:$0xff]
      %v5730 = vld [vmem:[#allocation4 + $0x18] sm:$0xff]
      %v5731 = vld [vmem:[#allocation4 + $0x20] sm:$0xff]
      %v5732 = vld [vmem:[#allocation4 + $0x28] sm:$0xff]
      %v5733 = vld [vmem:[#allocation4 + $0x30] sm:$0xff]
      %v5734 = vld [vmem:[#allocation4 + $0x38] sm:$0xff]
      %v5735 = vld [vmem:[#allocation4 + $0x40] sm:$0xff]
      %v5736 = vld [vmem:[#allocation4 + $0x48] sm:$0xff]
      %v5737 = vld [vmem:[#allocation4 + $0x50] sm:$0xff]
      %v5738 = vld [vmem:[#allocation4 + $0x58] sm:$0xff]
      %v5739 = vld [vmem:[#allocation4 + $0x60] sm:$0xff]
      %v5740 = vld [vmem:[#allocation4 + $0x68] sm:$0xff]
      %v5741 = vld [vmem:[#allocation4 + $0x70] sm:$0xff]
      %v5742 = vld [vmem:[#allocation4 + $0x78] sm:$0xff]
      %v5743 = vld [vmem:[#allocation4 + $0x80] sm:$0xff]
      %v5744 = vld [vmem:[#allocation4 + $0x88] sm:$0xff]
      %v5745 = vld [vmem:[#allocation4 + $0x90] sm:$0xff]
      %v5746 = vld [vmem:[#allocation4 + $0x98] sm:$0xff]
      %v5747 = vld [vmem:[#allocation4 + $0xa0] sm:$0xff]
      %v5748 = vld [vmem:[#allocation4 + $0xa8] sm:$0xff]
      %v5749 = vld [vmem:[#allocation4 + $0xb0] sm:$0xff]
      %v5750 = vld [vmem:[#allocation4 + $0xb8] sm:$0xff]
      %v5751 = vld [vmem:[#allocation4 + $0xc0] sm:$0xff]
      %v5752 = vld [vmem:[#allocation4 + $0xc8] sm:$0xff]
      %v5753 = vld [vmem:[#allocation4 + $0xd0] sm:$0xff]
      %v5754 = vld [vmem:[#allocation4 + $0xd8] sm:$0xff]
      %v5755 = vld [vmem:[#allocation4 + $0xe0] sm:$0xff]
      %v5756 = vld [vmem:[#allocation4 + $0xe8] sm:$0xff]
      %v5757 = vld [vmem:[#allocation4 + $0xf0] sm:$0xff]
      %v5758 = vld [vmem:[#allocation4 + $0xf8] sm:$0xff]
      %v5759 = vld [vmem:[%s3 + $0x2] sm:$0x1]
      %v5760 = vlaneseq
      %v5761 = vshrl.u32 %v5760, 7
      %v5762 = vsub.s32 0, %v5761
      %v5763 = vrot.slane %v5759, %v5762
      %v5764 = vmul.f32 %v5727, %v5763
      %v5765 = vmul.f32 %v5728, %v5763
      %v5766 = vmul.f32 %v5729, %v5763
      %v5767 = vmul.f32 %v5730, %v5763
      %v5768 = vmul.f32 %v5731, %v5763
      %v5769 = vmul.f32 %v5732, %v5763
      %v5770 = vmul.f32 %v5733, %v5763
      %v5771 = vmul.f32 %v5734, %v5763
      %v5772 = vmul.f32 %v5735, %v5763
      %v5773 = vmul.f32 %v5736, %v5763
      %v5774 = vmul.f32 %v5737, %v5763
      %v5775 = vmul.f32 %v5738, %v5763
      %v5776 = vmul.f32 %v5739, %v5763
      %v5777 = vmul.f32 %v5740, %v5763
      %v5778 = vmul.f32 %v5741, %v5763
      %v5779 = vmul.f32 %v5742, %v5763
      %v5780 = vmul.f32 %v5743, %v5763
      %v5781 = vmul.f32 %v5744, %v5763
      %v5782 = vmul.f32 %v5745, %v5763
      %v5783 = vmul.f32 %v5746, %v5763
      %v5784 = vmul.f32 %v5747, %v5763
      %v5785 = vmul.f32 %v5748, %v5763
      %v5786 = vmul.f32 %v5749, %v5763
      %v5787 = vmul.f32 %v5750, %v5763
      %v5788 = vmul.f32 %v5751, %v5763
      %v5789 = vmul.f32 %v5752, %v5763
      %v5790 = vmul.f32 %v5753, %v5763
      %v5791 = vmul.f32 %v5754, %v5763
      %v5792 = vmul.f32 %v5755, %v5763
      %v5793 = vmul.f32 %v5756, %v5763
      %v5794 = vmul.f32 %v5757, %v5763
      %v5795 = vmul.f32 %v5758, %v5763
      %v5796 = vld [vmem:[%s3 + $0x3] sm:$0x1]
      %v5797 = vlaneseq
      %v5798 = vshrl.u32 %v5797, 7
      %v5799 = vsub.s32 0, %v5798
      %v5800 = vrot.slane %v5796, %v5799
      %v5801 = vadd.f32 %v5764, %v5800
      %v5802 = vadd.f32 %v5765, %v5800
      %v5803 = vadd.f32 %v5766, %v5800
      %v5804 = vadd.f32 %v5767, %v5800
      %v5805 = vadd.f32 %v5768, %v5800
      %v5806 = vadd.f32 %v5769, %v5800
      %v5807 = vadd.f32 %v5770, %v5800
      %v5808 = vadd.f32 %v5771, %v5800
      %v5809 = vadd.f32 %v5772, %v5800
      %v5810 = vadd.f32 %v5773, %v5800
      %v5811 = vadd.f32 %v5774, %v5800
      %v5812 = vadd.f32 %v5775, %v5800
      %v5813 = vadd.f32 %v5776, %v5800
      %v5814 = vadd.f32 %v5777, %v5800
      %v5815 = vadd.f32 %v5778, %v5800
      %v5816 = vadd.f32 %v5779, %v5800
      %v5817 = vadd.f32 %v5780, %v5800
      %v5818 = vadd.f32 %v5781, %v5800
      %v5819 = vadd.f32 %v5782, %v5800
      %v5820 = vadd.f32 %v5783, %v5800
      %v5821 = vadd.f32 %v5784, %v5800
      %v5822 = vadd.f32 %v5785, %v5800
      %v5823 = vadd.f32 %v5786, %v5800
      %v5824 = vadd.f32 %v5787, %v5800
      %v5825 = vadd.f32 %v5788, %v5800
      %v5826 = vadd.f32 %v5789, %v5800
      %v5827 = vadd.f32 %v5790, %v5800
      %v5828 = vadd.f32 %v5791, %v5800
      %v5829 = vadd.f32 %v5792, %v5800
      %v5830 = vadd.f32 %v5793, %v5800
      %v5831 = vadd.f32 %v5794, %v5800
      %v5832 = vadd.f32 %v5795, %v5800
      %v5833 = vmax.f32 %v5801, 0.0
      %v5834 = vmax.f32 %v5802, 0.0
      %v5835 = vmax.f32 %v5803, 0.0
      %v5836 = vmax.f32 %v5804, 0.0
      %v5837 = vmax.f32 %v5805, 0.0
      %v5838 = vmax.f32 %v5806, 0.0
      %v5839 = vmax.f32 %v5807, 0.0
      %v5840 = vmax.f32 %v5808, 0.0
      %v5841 = vmax.f32 %v5809, 0.0
      %v5842 = vmax.f32 %v5810, 0.0
      %v5843 = vmax.f32 %v5811, 0.0
      %v5844 = vmax.f32 %v5812, 0.0
      %v5845 = vmax.f32 %v5813, 0.0
      %v5846 = vmax.f32 %v5814, 0.0
      %v5847 = vmax.f32 %v5815, 0.0
      %v5848 = vmax.f32 %v5816, 0.0
      %v5849 = vmax.f32 %v5817, 0.0
      %v5850 = vmax.f32 %v5818, 0.0
      %v5851 = vmax.f32 %v5819, 0.0
      %v5852 = vmax.f32 %v5820, 0.0
      %v5853 = vmax.f32 %v5821, 0.0
      %v5854 = vmax.f32 %v5822, 0.0
      %v5855 = vmax.f32 %v5823, 0.0
      %v5856 = vmax.f32 %v5824, 0.0
      %v5857 = vmax.f32 %v5825, 0.0
      %v5858 = vmax.f32 %v5826, 0.0
      %v5859 = vmax.f32 %v5827, 0.0
      %v5860 = vmax.f32 %v5828, 0.0
      %v5861 = vmax.f32 %v5829, 0.0
      %v5862 = vmax.f32 %v5830, 0.0
      %v5863 = vmax.f32 %v5831, 0.0
      %v5864 = vmax.f32 %v5832, 0.0
      %v5865 = vadd.f32 %v5833, %v2397
      %v5866 = vadd.f32 %v5834, %v2398
      %v5867 = vadd.f32 %v5835, %v2399
      %v5868 = vadd.f32 %v5836, %v2400
      %v5869 = vadd.f32 %v5837, %v2401
      %v5870 = vadd.f32 %v5838, %v2402
      %v5871 = vadd.f32 %v5839, %v2403
      %v5872 = vadd.f32 %v5840, %v2404
      %v5873 = vadd.f32 %v5841, %v2405
      %v5874 = vadd.f32 %v5842, %v2406
      %v5875 = vadd.f32 %v5843, %v2407
      %v5876 = vadd.f32 %v5844, %v2408
      %v5877 = vadd.f32 %v5845, %v2409
      %v5878 = vadd.f32 %v5846, %v2410
      %v5879 = vadd.f32 %v5847, %v2411
      %v5880 = vadd.f32 %v5848, %v2412
      %v5881 = vadd.f32 %v5849, %v2413
      %v5882 = vadd.f32 %v5850, %v2414
      %v5883 = vadd.f32 %v5851, %v2415
      %v5884 = vadd.f32 %v5852, %v2416
      %v5885 = vadd.f32 %v5853, %v2417
      %v5886 = vadd.f32 %v5854, %v2418
      %v5887 = vadd.f32 %v5855, %v2419
      %v5888 = vadd.f32 %v5856, %v2420
      %v5889 = vadd.f32 %v5857, %v2421
      %v5890 = vadd.f32 %v5858, %v2422
      %v5891 = vadd.f32 %v5859, %v2423
      %v5892 = vadd.f32 %v5860, %v2424
      %v5893 = vadd.f32 %v5861, %v2425
      %v5894 = vadd.f32 %v5862, %v2426
      %v5895 = vadd.f32 %v5863, %v2427
      %v5896 = vadd.f32 %v5864, %v2428
      %5897 = vst.msk [vmem:[%s197] sm:$0xff] %vm1691, %v5865
      %5898 = vst.msk [vmem:[%s197 + $0x8] sm:$0xff] %vm1691, %v5866
      %5899 = vst.msk [vmem:[%s197 + $0x10] sm:$0xff] %vm1691, %v5867
      %5900 = vst.msk [vmem:[%s197 + $0x18] sm:$0xff] %vm1691, %v5868
      %5901 = vst.msk [vmem:[%s197 + $0x20] sm:$0xff] %vm1691, %v5869
      %5902 = vst.msk [vmem:[%s197 + $0x28] sm:$0xff] %vm1691, %v5870
      %5903 = vst.msk [vmem:[%s197 + $0x30] sm:$0xff] %vm1691, %v5871
      %5904 = vst.msk [vmem:[%s197 + $0x38] sm:$0xff] %vm1691, %v5872
      %5905 = vst.msk [vmem:[%s197 + $0x40] sm:$0xff] %vm1691, %v5873
      %5906 = vst.msk [vmem:[%s197 + $0x48] sm:$0xff] %vm1691, %v5874
      %5907 = vst.msk [vmem:[%s197 + $0x50] sm:$0xff] %vm1691, %v5875
      %5908 = vst.msk [vmem:[%s197 + $0x58] sm:$0xff] %vm1691, %v5876
      %5909 = vst.msk [vmem:[%s197 + $0x60] sm:$0xff] %vm1691, %v5877
      %5910 = vst.msk [vmem:[%s197 + $0x68] sm:$0xff] %vm1691, %v5878
      %5911 = vst.msk [vmem:[%s197 + $0x70] sm:$0xff] %vm1691, %v5879
      %5912 = vst.msk [vmem:[%s197 + $0x78] sm:$0xff] %vm1691, %v5880
      %5913 = vst.msk [vmem:[%s197 + $0x80] sm:$0xff] %vm1691, %v5881
      %5914 = vst.msk [vmem:[%s197 + $0x88] sm:$0xff] %vm1691, %v5882
      %5915 = vst.msk [vmem:[%s197 + $0x90] sm:$0xff] %vm1691, %v5883
      %5916 = vst.msk [vmem:[%s197 + $0x98] sm:$0xff] %vm1691, %v5884
      %5917 = vst.msk [vmem:[%s197 + $0xa0] sm:$0xff] %vm1691, %v5885
      %5918 = vst.msk [vmem:[%s197 + $0xa8] sm:$0xff] %vm1691, %v5886
      %5919 = vst.msk [vmem:[%s197 + $0xb0] sm:$0xff] %vm1691, %v5887
      %5920 = vst.msk [vmem:[%s197 + $0xb8] sm:$0xff] %vm1691, %v5888
      %5921 = vst.msk [vmem:[%s197 + $0xc0] sm:$0xff] %vm1691, %v5889
      %5922 = vst.msk [vmem:[%s197 + $0xc8] sm:$0xff] %vm1691, %v5890
      %5923 = vst.msk [vmem:[%s197 + $0xd0] sm:$0xff] %vm1691, %v5891
      %5924 = vst.msk [vmem:[%s197 + $0xd8] sm:$0xff] %vm1691, %v5892
      %5925 = vst.msk [vmem:[%s197 + $0xe0] sm:$0xff] %vm1691, %v5893
      %5926 = vst.msk [vmem:[%s197 + $0xe8] sm:$0xff] %vm1691, %v5894
      %5927 = vst.msk [vmem:[%s197 + $0xf0] sm:$0xff] %vm1691, %v5895
      %5928 = vst.msk [vmem:[%s197 + $0xf8] sm:$0xff] %vm1691, %v5896
      %p5929 = scmp.lt.s32.totalorder %s15, 1
      %s5930 = scalar_select %p5929, %s15, 1
      %s5931 = smul.addr %s5930, 32
      %s5932 = smul.addr %s5931, 8
      %s5933 = scalar_lea.vmem %s4, %s5932
      // Predicated region
      $region37: #{basic_block_forward.1} parent=35 // pred_check
        %p5934 = pneg %p122
      $region38: #{basic_block_forward.1} parent=35 // pred_check_branch
        %5936 = sbr.rel (%p5934) target = $region40
      $region39: #{basic_block_forward.1} parent=35 // pred_region
        _
      $region40: #{basic_block_forward.1} parent=35 // pred_fallthru
        _
    $region36: #{basic_block_forward.1} parent=5 // pred_fallthru
      _
    %p5937 = scmp.le.s32.totalorder 2, %s10
    // Predicated region
    $region41: #{basic_block_forward.1} parent=5 // pred_check
      %p5938 = pneg %p5937
    $region42: #{basic_block_forward.1} parent=5 // pred_check_branch
      %5940 = sbr.rel (%p5938) target = $region44
    $region43: #{basic_block_forward.1} parent=5 // pred_region
      %s5941 = ssub.s32 %s10, 2
      // Predicated region
      $region45: #{basic_block_forward.1} parent=43 // pred_check
        %p5942 = pneg %p128
      $region46: #{basic_block_forward.1} parent=43 // pred_check_branch
        %5944 = sbr.rel (%p5942) target = $region48
      $region47: #{basic_block_forward.1} parent=43 // pred_region
        %p5945 = scmp.lt.s32.totalorder %s16, 1
        %s5946 = scalar_select %p5945, %s16, 1
        %s5947 = smul.addr %s5946, 32
        %s5948 = smul.addr %s5947, 8
        %s5949 = scalar_lea.vmem %s4, %s5948
      $region48: #{basic_block_forward.1} parent=43 // pred_fallthru
        _
    $region44: #{basic_block_forward.1} parent=5 // pred_fallthru
      _
  $region6: #{basic_block_forward.1} parent=0 // loop_footer
    %s14 = sadd.s32 1, %s10
  $region7: #{basic_block_forward.1} parent=0 // loop_footer_branch
    %9 = sbr.rel target = $region3
  $region8: #{basic_block_forward.1} parent=0 // loop_exit
    _

</llo_original>
